<compile_context>
chip_gen: v6e
topology: v6e:2x2x1
jax: 0.10.0
libtpu: 0.0.40
codegen_flags: <defaults>
</compile_context>

<pallas_src>
import functools
import math

import jax
import jax.numpy as jnp
from jax import lax
from jax.experimental import pallas as pl
from jax.experimental.pallas import tpu as pltpu

# ----------------------------------------------------------------------------
# Config (synthetic TrainingConfig)
# ----------------------------------------------------------------------------
INPUT_CHANNELS = 3
OUTPUT_CHANNELS = 1          # final 1x1 conv is done as a sublane reduction (requires 1)
BASE_CHANNELS = 8
DEPTH = 2
USE_ATTENTION = True
BATCH_NORM = True
BN_EPS = 1e-5

_CIN_PAD = 8                                                    # pad 3 input channels -> 8
_CHANNELS = tuple(BASE_CHANNELS * 2 ** i for i in range(DEPTH + 1))   # (8, 16, 32)
_C_MAX = max(_CHANNELS)                                          # 32


def _param_names():
    names = []
    for lvl in range(DEPTH):
        names += [f"enc{lvl}_w1", f"enc{lvl}_b1", f"enc{lvl}_w2", f"enc{lvl}_b2",
                  f"pool{lvl}_s"]
    names += ["bot_w1", "bot_b1", "bot_w2", "bot_b2"]
    for i in range(DEPTH):
        names += [f"dec{i}_up",
                  f"att{i}_wg", f"att{i}_bg", f"att{i}_wx", f"att{i}_bx",
                  f"att{i}_wps", f"att{i}_bp",
                  f"dec{i}_w1u", f"dec{i}_w1s", f"dec{i}_b1",
                  f"dec{i}_w2", f"dec{i}_b2"]
    names += ["final_w", "final_b"]
    return tuple(names)


# ----------------------------------------------------------------------------
# Fully fused UNet kernel (one grid step == one batch image)
# ----------------------------------------------------------------------------
def _fused_unet_kernel(x_ref, *refs, names, sizes):
    n = len(names)
    p = dict(zip(names, refs[:n]))
    out_ref, xpad_ref, pat_ref = refs[n], refs[n + 1], refs[n + 2]
    bf16 = jnp.bfloat16

    mask_cache = {}

    def col_masks(H, W):
        """(1, HW) boolean lane masks for the left / right conv boundary columns."""
        if (H, W) not in mask_cache:
            col = lax.broadcasted_iota(jnp.int32, (1, H * W), 1) % W
            mask_cache[(H, W)] = (col != 0, col != W - 1)
        return mask_cache[(H, W)]

    def conv3x3(x_f32, w_name, H, W, b_name=None):
        """3x3 'same' conv in (C, H*W) layout as ONE packed-K MXU matmul.

        The 9 taps are static lane-offset slices of a row-padded VMEM copy of the
        image (one zero row above / below), masked at the boundary columns, packed
        contiguously along K -> (Cout, 9C) x (9C, HW) bf16 matmul, f32 accumulation.
        """
        C, HW = x_f32.shape
        not_left, not_right = col_masks(H, W)
        zcol = jnp.zeros((C, W + 1), jnp.float32)
        xpad_ref[0:C, 0:W + 1] = zcol
        xpad_ref[0:C, W + 1:W + 1 + HW] = x_f32
        xpad_ref[0:C, W + 1 + HW:2 * W + 2 + HW] = zcol
        t = 0
        for dy in (-1, 0, 1):
            for dx in (-1, 0, 1):
                start = (dy + 1) * W + dx + 1
                s = xpad_ref[0:C, start:start + HW]
                if dx == -1:
                    s = jnp.where(not_left, s, 0.0)
                elif dx == 1:
                    s = jnp.where(not_right, s, 0.0)
                pat_ref[t * C:(t + 1) * C, 0:HW] = s
                t += 1
        pat = pat_ref[0:9 * C, 0:HW].astype(bf16)
        y = jnp.dot(p[w_name][...], pat, preferred_element_type=jnp.float32)
        if b_name is not None:
            y = y + p[b_name][...]
        return y                                             # (Cout, HW) f32

    def maxpool2x2(x_f32, H, W, s_name):
        """2x2/2 max-pool: 3 lane-shifted maxima + one (C,HW)x(HW,HW/4) select matmul."""
        C, HW = x_f32.shape
        xpad_ref[0:C, 0:HW] = x_f32
        xpad_ref[0:C, HW:HW + W + 1] = jnp.zeros((C, W + 1), jnp.float32)
        a1 = xpad_ref[0:C, 1:1 + HW]                         # x[p + 1]
        a2 = xpad_ref[0:C, W:W + HW]                         # x[p + W]
        a3 = xpad_ref[0:C, W + 1:W + 1 + HW]                 # x[p + W + 1]
        m = jnp.maximum(jnp.maximum(x_f32, a1), jnp.maximum(a2, a3))
        return jnp.dot(m.astype(bf16), p[s_name][...],
                       preferred_element_type=jnp.float32)   # (C, HW/4) f32

    relu = lambda v: jnp.maximum(v, 0.0)

    # ---------------- encoder ----------------
    cur = x_ref[...].astype(jnp.float32)                     # (CIN_PAD, H0*W0)
    skips = []
    for lvl in range(DEPTH):
        H, W = sizes[lvl]
        y1 = relu(conv3x3(cur, f"enc{lvl}_w1", H, W, f"enc{lvl}_b1"))
        y2 = relu(conv3x3(y1, f"enc{lvl}_w2", H, W, f"enc{lvl}_b2"))
        skips.append(y2)                                     # skip connection stays on-chip
        cur = maxpool2x2(y2, H, W, f"pool{lvl}_s")

    # ---------------- bottleneck ----------------
    Hb, Wb = sizes[DEPTH]
    cur = relu(conv3x3(cur, "bot_w1", Hb, Wb, "bot_b1"))
    cur = relu(conv3x3(cur, "bot_w2", Hb, Wb, "bot_b2"))

    # ---------------- decoder ----------------
    y2 = None
    for i in range(DEPTH):
        lvl = DEPTH - 1 - i
        H, W = sizes[lvl]
        skip = skips[lvl]                                    # (Cs, HW) f32

        # bilinear 2x upsample (align_corners=False): one matmul with kron(Mh, Mw)^T
        up = jnp.dot(cur.astype(bf16), p[f"dec{i}_up"][...],
                     preferred_element_type=jnp.float32)     # (Cg, HW) f32

        # attention gate: skip * sigmoid(psi(relu(Wg @ gate + Wx @ skip)))
        g1 = jnp.dot(p[f"att{i}_wg"][...], up.astype(bf16),
                     preferred_element_type=jnp.float32) + p[f"att{i}_bg"][...]
        x1 = jnp.dot(p[f"att{i}_wx"][...], skip.astype(bf16),
                     preferred_element_type=jnp.float32) + p[f"att{i}_bx"][...]
        act = relu(g1 + x1)                                  # (inter, HW)
        psi = jnp.sum(act * p[f"att{i}_wps"][...], axis=0, keepdims=True) \
            + p[f"att{i}_bp"][...]                           # 1x1 psi conv = sublane reduce
        alpha = 1.0 / (1.0 + jnp.exp(-psi))                  # exact sigmoid, (1, HW)
        att = skip * alpha                                   # (Cs, HW) f32

        # torch.cat([up, skip], dim=1) + conv -> split-K accumulation of 2 packed matmuls
        acc = conv3x3(up, f"dec{i}_w1u", H, W)
        acc = acc + conv3x3(att, f"dec{i}_w1s", H, W)
        y1 = relu(acc + p[f"dec{i}_b1"][...])
        y2 = relu(conv3x3(y1, f"dec{i}_w2", H, W, f"dec{i}_b2"))
        cur = y2

    # ---------------- final 1x1 conv (sublane reduction) + exact sigmoid -------------
    logit = jnp.sum(y2 * p["final_w"][...], axis=0, keepdims=True) + p["final_b"][...]
    out_ref[...] = 1.0 / (1.0 + jnp.exp(-logit))             # lane-dense (1, H0*W0)


# ----------------------------------------------------------------------------
# Host-side constant matrices (upsample / pool-select)
# ----------------------------------------------------------------------------
def _interp_matrix(out_size, in_size):
    """1-D bilinear (align_corners=False) interpolation matrix (out_size, in_size)."""
    idx = jnp.arange(out_size, dtype=jnp.float32)
    src = (idx + 0.5) * (in_size / out_size) - 0.5
    i0 = jnp.floor(src)
    frac = src - i0
    i0c = jnp.clip(i0.astype(jnp.int32), 0, in_size - 1)
    i1c = jnp.clip(i0.astype(jnp.int32) + 1, 0, in_size - 1)
    m = jnp.zeros((out_size, in_size), jnp.float32)
    m = m.at[jnp.arange(out_size), i0c].add(1.0 - frac)
    m = m.at[jnp.arange(out_size), i1c].add(frac)
    return m


def _upsample_matrix_t(in_h, in_w, out_h, out_w):
    """kron(Mh, Mw)^T : (in_hw, out_hw) so `up = cur @ Ut` is one matmul (no transposes)."""
    mh = _interp_matrix(out_h, in_h)
    mw = _interp_matrix(out_w, in_w)
    m = (mh[:, None, :, None] * mw[None, :, None, :]).reshape(out_h * out_w,
                                                              in_h * in_w)
    return jnp.transpose(m).astype(jnp.bfloat16)


def _pool_select_matrix(H, W):
    """(HW, HW/4) one-hot selection so 2x2 max-pool = shifted maxima @ S in (C,HW) layout."""
    ho, wo = H // 2, W // 2
    po = jnp.arange(ho * wo)
    yo, xo = po // wo, po % wo
    src = (2 * yo) * W + 2 * xo
    s = jnp.zeros((H * W, ho * wo), jnp.float32).at[src, po].set(1.0)
    return s.astype(jnp.bfloat16)


# ----------------------------------------------------------------------------
# Parameter initialization (kaiming-normal fan_out, eval-mode BN folded in)
# ----------------------------------------------------------------------------
def init_params(key, input_hw=(16, 16)):
    assert OUTPUT_CHANNELS == 1, "final conv is implemented as a sublane reduction"
    H0, W0 = input_hw
    keys = iter(jax.random.split(key, 64))
    bn_scale = 1.0 / math.sqrt(1.0 + BN_EPS) if BATCH_NORM else 1.0

    def kaiming(shape, fan_out):
        return jax.random.normal(next(keys), shape, jnp.float32) * math.sqrt(2.0 / fan_out)

    def conv3x3_w(cin, cout, cin_pad=None):
        # (Cout, Cin, 3, 3) -> packed-K (Cout, 9*Cin_pad); eval-mode BN folded in.
        cin_pad = cin if cin_pad is None else cin_pad
        w = kaiming((cout, 9, cin), cout * 9) * bn_scale
        if cin_pad != cin:
            w = jnp.pad(w, ((0, 0), (0, 0), (0, cin_pad - cin)))
        return w.reshape(cout, 9 * cin_pad).astype(jnp.bfloat16)

    def bias(c):
        return jnp.zeros((c, 1), jnp.float32)

    params = {}
    cin, cin_pad = INPUT_CHANNELS, _CIN_PAD
    for lvl in range(DEPTH):
        cout = _CHANNELS[lvl]
        params[f"enc{lvl}_w1"] = conv3x3_w(cin, cout, cin_pad)
        params[f"enc{lvl}_b1"] = bias(cout)
        params[f"enc{lvl}_w2"] = conv3x3_w(cout, cout)
        params[f"enc{lvl}_b2"] = bias(cout)
        params[f"pool{lvl}_s"] = _pool_select_matrix(H0 >> lvl, W0 >> lvl)
        cin, cin_pad = cout, cout

    cb = _CHANNELS[DEPTH]
    params["bot_w1"] = conv3x3_w(cin, cb)
    params["bot_b1"] = bias(cb)
    params["bot_w2"] = conv3x3_w(cb, cb)
    params["bot_b2"] = bias(cb)

    for i in range(DEPTH):
        lvl = DEPTH - 1 - i
        cg, cs, cout = _CHANNELS[lvl + 1], _CHANNELS[lvl], _CHANNELS[lvl]
        params[f"dec{i}_up"] = _upsample_matrix_t(H0 >> (lvl + 1), W0 >> (lvl + 1),
                                                  H0 >> lvl, W0 >> lvl)
        inter = max(cs // 2, 1)
        params[f"att{i}_wg"] = kaiming((inter, cg), inter).astype(jnp.bfloat16)
        params[f"att{i}_bg"] = bias(inter)
        params[f"att{i}_wx"] = kaiming((inter, cs), inter).astype(jnp.bfloat16)
        params[f"att{i}_bx"] = bias(inter)
        params[f"att{i}_wps"] = kaiming((inter, 1), 1)       # psi 1x1 conv as a column
        params[f"att{i}_bp"] = jnp.zeros((1, 1), jnp.float32)
        params[f"dec{i}_w1u"] = conv3x3_w(cg, cout)          # K-chunk from upsampled gate
        params[f"dec{i}_w1s"] = conv3x3_w(cs, cout)          # K-chunk from attended skip
        params[f"dec{i}_b1"] = bias(cout)
        params[f"dec{i}_w2"] = conv3x3_w(cout, cout)
        params[f"dec{i}_b2"] = bias(cout)

    params["final_w"] = kaiming((_CHANNELS[0], OUTPUT_CHANNELS), OUTPUT_CHANNELS)  # (C0, 1)
    params["final_b"] = jnp.zeros((1, OUTPUT_CHANNELS), jnp.float32)
    return params


# ----------------------------------------------------------------------------
# Forward pass (single fused pallas_call, gridded over batch)
# ----------------------------------------------------------------------------
def attention_unet_forward(x_nchw, params):
    B, C, H, W = x_nchw.shape
    HW = H * W
    sizes = tuple((H >> l, W >> l) for l in range(DEPTH + 1))

    # NCHW -> lane-dense (B, C_pad, H*W): channels on sublanes, spatial on lanes (bf16).
    x2d = jnp.pad(x_nchw, ((0, 0), (0, _CIN_PAD - C), (0, 0), (0, 0)))
    x2d = x2d.reshape(B, _CIN_PAD, HW).astype(jnp.bfloat16)

    names = _param_names()
    arrays = [params[nm] for nm in names]

    kernel = functools.partial(_fused_unet_kernel, names=names, sizes=sizes)
    in_specs = [pl.BlockSpec((None, _CIN_PAD, HW), lambda b: (b, 0, 0))]
    in_specs += [pl.BlockSpec(a.shape, lambda b: (0, 0)) for a in arrays]

    out = pl.pallas_call(
        kernel,
        grid=(B,),
        in_specs=in_specs,
        out_specs=pl.BlockSpec((None, OUTPUT_CHANNELS, HW), lambda b: (b, 0, 0)),
        out_shape=jax.ShapeDtypeStruct((B, OUTPUT_CHANNELS, HW), jnp.float32),
        scratch_shapes=[
            pltpu.VMEM((_C_MAX, HW + 2 * W + 2), jnp.float32),   # row-padded image
            pltpu.VMEM((9 * _C_MAX, HW), jnp.float32),           # packed-K conv patches
        ],
        compiler_params=pltpu.CompilerParams(
            dimension_semantics=("parallel",)),   # v7x: one image per TensorCore
    )(x2d, *arrays)
    return out.reshape(B, OUTPUT_CHANNELS, H, W)


# ----------------------------------------------------------------------------
# Main
# ----------------------------------------------------------------------------
if __name__ == "__main__":
    params = init_params(jax.random.PRNGKey(0), input_hw=(16, 16))

    key = jax.random.PRNGKey(0)
    x = jax.random.normal(key, (2, INPUT_CHANNELS, 16, 16), jnp.float32)

    fwd = jax.jit(lambda inp: attention_unet_forward(inp, params))
    y = jax.block_until_ready(fwd(x))

    assert y.shape == (2, OUTPUT_CHANNELS, 16, 16), y.shape
    assert bool(jnp.all(jnp.isfinite(y)))
    assert bool(jnp.all((y >= 0.0) & (y <= 1.0)))   # sigmoid output range
    print("KERNEL_OK")
</pallas_src>

<mosaic_0001>
module attributes {stable_mosaic.version = 11 : i64} {
  func.func @_fused_unet_kernel(%arg0: i32, %arg1: memref<1x8x256xbf16, #tpu.memory_space<vmem>>, %arg2: memref<8x72xbf16, #tpu.memory_space<vmem>>, %arg3: memref<8x1xf32, #tpu.memory_space<vmem>>, %arg4: memref<8x72xbf16, #tpu.memory_space<vmem>>, %arg5: memref<8x1xf32, #tpu.memory_space<vmem>>, %arg6: memref<256x64xbf16, #tpu.memory_space<vmem>>, %arg7: memref<16x72xbf16, #tpu.memory_space<vmem>>, %arg8: memref<16x1xf32, #tpu.memory_space<vmem>>, %arg9: memref<16x144xbf16, #tpu.memory_space<vmem>>, %arg10: memref<16x1xf32, #tpu.memory_space<vmem>>, %arg11: memref<64x16xbf16, #tpu.memory_space<vmem>>, %arg12: memref<32x144xbf16, #tpu.memory_space<vmem>>, %arg13: memref<32x1xf32, #tpu.memory_space<vmem>>, %arg14: memref<32x288xbf16, #tpu.memory_space<vmem>>, %arg15: memref<32x1xf32, #tpu.memory_space<vmem>>, %arg16: memref<16x64xbf16, #tpu.memory_space<vmem>>, %arg17: memref<8x32xbf16, #tpu.memory_space<vmem>>, %arg18: memref<8x1xf32, #tpu.memory_space<vmem>>, %arg19: memref<8x16xbf16, #tpu.memory_space<vmem>>, %arg20: memref<8x1xf32, #tpu.memory_space<vmem>>, %arg21: memref<8x1xf32, #tpu.memory_space<vmem>>, %arg22: memref<1x1xf32, #tpu.memory_space<vmem>>, %arg23: memref<16x288xbf16, #tpu.memory_space<vmem>>, %arg24: memref<16x144xbf16, #tpu.memory_space<vmem>>, %arg25: memref<16x1xf32, #tpu.memory_space<vmem>>, %arg26: memref<16x144xbf16, #tpu.memory_space<vmem>>, %arg27: memref<16x1xf32, #tpu.memory_space<vmem>>, %arg28: memref<64x256xbf16, #tpu.memory_space<vmem>>, %arg29: memref<4x16xbf16, #tpu.memory_space<vmem>>, %arg30: memref<4x1xf32, #tpu.memory_space<vmem>>, %arg31: memref<4x8xbf16, #tpu.memory_space<vmem>>, %arg32: memref<4x1xf32, #tpu.memory_space<vmem>>, %arg33: memref<4x1xf32, #tpu.memory_space<vmem>>, %arg34: memref<1x1xf32, #tpu.memory_space<vmem>>, %arg35: memref<8x144xbf16, #tpu.memory_space<vmem>>, %arg36: memref<8x72xbf16, #tpu.memory_space<vmem>>, %arg37: memref<8x1xf32, #tpu.memory_space<vmem>>, %arg38: memref<8x72xbf16, #tpu.memory_space<vmem>>, %arg39: memref<8x1xf32, #tpu.memory_space<vmem>>, %arg40: memref<8x1xf32, #tpu.memory_space<vmem>>, %arg41: memref<1x1xf32, #tpu.memory_space<vmem>>, %arg42: memref<1x1x256xf32, #tpu.memory_space<vmem>>, %arg43: memref<32x290xf32, #tpu.memory_space<vmem>>, %arg44: memref<288x256xf32, #tpu.memory_space<vmem>>) attributes {dimension_semantics = [#tpu.dimension_semantics<parallel>], iteration_bounds = array<i64: 2>, scalar_prefetch = 0 : i64, scratch_operands = 2 : i64, tpu.core_type = #tpu.core_type<tc>, window_params = [{transform_indices = @transform_0, window_bounds = array<i64: 1, 8, 256>}, {pipeline_mode = #tpu.pipeline_mode<synchronous>, transform_indices = @transform_1, window_bounds = array<i64: 8, 72>}, {pipeline_mode = #tpu.pipeline_mode<synchronous>, transform_indices = @transform_2, window_bounds = array<i64: 8, 1>}, {pipeline_mode = #tpu.pipeline_mode<synchronous>, transform_indices = @transform_3, window_bounds = array<i64: 8, 72>}, {pipeline_mode = #tpu.pipeline_mode<synchronous>, transform_indices = @transform_4, window_bounds = array<i64: 8, 1>}, {pipeline_mode = #tpu.pipeline_mode<synchronous>, transform_indices = @transform_5, window_bounds = array<i64: 256, 64>}, {pipeline_mode = #tpu.pipeline_mode<synchronous>, transform_indices = @transform_6, window_bounds = array<i64: 16, 72>}, {pipeline_mode = #tpu.pipeline_mode<synchronous>, transform_indices = @transform_7, window_bounds = array<i64: 16, 1>}, {pipeline_mode = #tpu.pipeline_mode<synchronous>, transform_indices = @transform_8, window_bounds = array<i64: 16, 144>}, {pipeline_mode = #tpu.pipeline_mode<synchronous>, transform_indices = @transform_9, window_bounds = array<i64: 16, 1>}, {pipeline_mode = #tpu.pipeline_mode<synchronous>, transform_indices = @transform_10, window_bounds = array<i64: 64, 16>}, {pipeline_mode = #tpu.pipeline_mode<synchronous>, transform_indices = @transform_11, window_bounds = array<i64: 32, 144>}, {pipeline_mode = #tpu.pipeline_mode<synchronous>, transform_indices = @transform_12, window_bounds = array<i64: 32, 1>}, {pipeline_mode = #tpu.pipeline_mode<synchronous>, transform_indices = @transform_13, window_bounds = array<i64: 32, 288>}, {pipeline_mode = #tpu.pipeline_mode<synchronous>, transform_indices = @transform_14, window_bounds = array<i64: 32, 1>}, {pipeline_mode = #tpu.pipeline_mode<synchronous>, transform_indices = @transform_15, window_bounds = array<i64: 16, 64>}, {pipeline_mode = #tpu.pipeline_mode<synchronous>, transform_indices = @transform_16, window_bounds = array<i64: 8, 32>}, {pipeline_mode = #tpu.pipeline_mode<synchronous>, transform_indices = @transform_17, window_bounds = array<i64: 8, 1>}, {pipeline_mode = #tpu.pipeline_mode<synchronous>, transform_indices = @transform_18, window_bounds = array<i64: 8, 16>}, {pipeline_mode = #tpu.pipeline_mode<synchronous>, transform_indices = @transform_19, window_bounds = array<i64: 8, 1>}, {pipeline_mode = #tpu.pipeline_mode<synchronous>, transform_indices = @transform_20, window_bounds = array<i64: 8, 1>}, {pipeline_mode = #tpu.pipeline_mode<synchronous>, transform_indices = @transform_21, window_bounds = array<i64: 1, 1>}, {pipeline_mode = #tpu.pipeline_mode<synchronous>, transform_indices = @transform_22, window_bounds = array<i64: 16, 288>}, {pipeline_mode = #tpu.pipeline_mode<synchronous>, transform_indices = @transform_23, window_bounds = array<i64: 16, 144>}, {pipeline_mode = #tpu.pipeline_mode<synchronous>, transform_indices = @transform_24, window_bounds = array<i64: 16, 1>}, {pipeline_mode = #tpu.pipeline_mode<synchronous>, transform_indices = @transform_25, window_bounds = array<i64: 16, 144>}, {pipeline_mode = #tpu.pipeline_mode<synchronous>, transform_indices = @transform_26, window_bounds = array<i64: 16, 1>}, {pipeline_mode = #tpu.pipeline_mode<synchronous>, transform_indices = @transform_27, window_bounds = array<i64: 64, 256>}, {pipeline_mode = #tpu.pipeline_mode<synchronous>, transform_indices = @transform_28, window_bounds = array<i64: 4, 16>}, {pipeline_mode = #tpu.pipeline_mode<synchronous>, transform_indices = @transform_29, window_bounds = array<i64: 4, 1>}, {pipeline_mode = #tpu.pipeline_mode<synchronous>, transform_indices = @transform_30, window_bounds = array<i64: 4, 8>}, {pipeline_mode = #tpu.pipeline_mode<synchronous>, transform_indices = @transform_31, window_bounds = array<i64: 4, 1>}, {pipeline_mode = #tpu.pipeline_mode<synchronous>, transform_indices = @transform_32, window_bounds = array<i64: 4, 1>}, {pipeline_mode = #tpu.pipeline_mode<synchronous>, transform_indices = @transform_33, window_bounds = array<i64: 1, 1>}, {pipeline_mode = #tpu.pipeline_mode<synchronous>, transform_indices = @transform_34, window_bounds = array<i64: 8, 144>}, {pipeline_mode = #tpu.pipeline_mode<synchronous>, transform_indices = @transform_35, window_bounds = array<i64: 8, 72>}, {pipeline_mode = #tpu.pipeline_mode<synchronous>, transform_indices = @transform_36, window_bounds = array<i64: 8, 1>}, {pipeline_mode = #tpu.pipeline_mode<synchronous>, transform_indices = @transform_37, window_bounds = array<i64: 8, 72>}, {pipeline_mode = #tpu.pipeline_mode<synchronous>, transform_indices = @transform_38, window_bounds = array<i64: 8, 1>}, {pipeline_mode = #tpu.pipeline_mode<synchronous>, transform_indices = @transform_39, window_bounds = array<i64: 8, 1>}, {pipeline_mode = #tpu.pipeline_mode<synchronous>, transform_indices = @transform_40, window_bounds = array<i64: 1, 1>}, {transform_indices = @transform_41, window_bounds = array<i64: 1, 1, 256>}]} {
    %c0 = arith.constant 0 : index
    %c0_0 = arith.constant 0 : index
    %c0_1 = arith.constant 0 : index
    %0 = vector.load %arg1[%c0, %c0_0, %c0_1] : memref<1x8x256xbf16, #tpu.memory_space<vmem>>, vector<1x8x256xbf16>
    %1 = vector.shape_cast %0 : vector<1x8x256xbf16> to vector<8x256xbf16>
    %2 = arith.extf %1 : vector<8x256xbf16> to vector<8x256xf32>
    %3 = tpu.iota {dimensions = array<i32: 1>} : vector<1x256xi32>
    %c16_i32 = arith.constant 16 : i32
    %c0_i32 = arith.constant 0 : i32
    %4 = arith.cmpi eq, %c16_i32, %c0_i32 : i32
    %c1_i32 = arith.constant 1 : i32
    %5 = arith.select %4, %c1_i32, %c16_i32 : i32
    %6 = vector.broadcast %5 : i32 to vector<1x256xi32>
    %7 = arith.remsi %3, %6 : vector<1x256xi32>
    %c0_i32_2 = arith.constant 0 : i32
    %8 = vector.broadcast %c0_i32_2 : i32 to vector<1x256xi32>
    %9 = arith.cmpi ne, %7, %8 : vector<1x256xi32>
    %c0_i32_3 = arith.constant 0 : i32
    %10 = vector.broadcast %c0_i32_3 : i32 to vector<1x256xi32>
    %11 = arith.cmpi slt, %7, %10 : vector<1x256xi32>
    %c0_i32_4 = arith.constant 0 : i32
    %12 = arith.cmpi slt, %5, %c0_i32_4 : i32
    %13 = vector.broadcast %12 : i1 to vector<1x256xi1>
    %14 = vector.broadcast %13 : vector<1x256xi1> to vector<1x256xi1>
    %15 = arith.xori %11, %14 : vector<1x256xi1>
    %16 = arith.andi %15, %9 : vector<1x256xi1>
    %17 = vector.broadcast %5 : i32 to vector<1x256xi32>
    %18 = arith.addi %7, %17 : vector<1x256xi32>
    %19 = arith.select %16, %18, %7 : vector<1x256xi1>, vector<1x256xi32>
    %c0_i32_5 = arith.constant 0 : i32
    %20 = vector.broadcast %c0_i32_5 : i32 to vector<1x256xi32>
    %21 = arith.cmpi ne, %19, %20 : vector<1x256xi32>
    %c15_i32 = arith.constant 15 : i32
    %22 = vector.broadcast %c15_i32 : i32 to vector<1x256xi32>
    %23 = arith.cmpi ne, %19, %22 : vector<1x256xi32>
    %cst = arith.constant 0.000000e+00 : f32
    %24 = vector.broadcast %cst : f32 to vector<8x17xf32>
    %c0_6 = arith.constant 0 : index
    %c0_7 = arith.constant 0 : index
    %25 = vector.load %arg43[%c0_6, %c0_7] : memref<32x290xf32, #tpu.memory_space<vmem>>, vector<8x17xf32>
    tpu.vector_store %arg43[%c0_6, %c0_7], %24 {strides = array<i32>} : memref<32x290xf32, #tpu.memory_space<vmem>>, vector<8x17xf32>,
    %c0_8 = arith.constant 0 : index
    %c17 = arith.constant 17 : index
    %26 = vector.load %arg43[%c0_8, %c17] : memref<32x290xf32, #tpu.memory_space<vmem>>, vector<8x256xf32>
    tpu.vector_store %arg43[%c0_8, %c17], %2 {strides = array<i32>} : memref<32x290xf32, #tpu.memory_space<vmem>>, vector<8x256xf32>,
    %c0_9 = arith.constant 0 : index
    %c273 = arith.constant 273 : index
    %27 = vector.load %arg43[%c0_9, %c273] : memref<32x290xf32, #tpu.memory_space<vmem>>, vector<8x17xf32>
    tpu.vector_store %arg43[%c0_9, %c273], %24 {strides = array<i32>} : memref<32x290xf32, #tpu.memory_space<vmem>>, vector<8x17xf32>,
    %c0_10 = arith.constant 0 : index
    %c0_11 = arith.constant 0 : index
    %28 = vector.load %arg43[%c0_10, %c0_11] : memref<32x290xf32, #tpu.memory_space<vmem>>, vector<8x256xf32>
    %cst_12 = arith.constant 0.000000e+00 : f32
    %29 = vector.shape_cast %21 : vector<1x256xi1> to vector<1x256xi1>
    %30 = vector.broadcast %29 : vector<1x256xi1> to vector<8x256xi1>
    %31 = vector.broadcast %cst_12 : f32 to vector<8x256xf32>
    %32 = arith.select %30, %28, %31 : vector<8x256xi1>, vector<8x256xf32>
    %c0_13 = arith.constant 0 : index
    %c0_14 = arith.constant 0 : index
    %33 = vector.load %arg44[%c0_13, %c0_14] : memref<288x256xf32, #tpu.memory_space<vmem>>, vector<8x256xf32>
    tpu.vector_store %arg44[%c0_13, %c0_14], %32 {strides = array<i32>} : memref<288x256xf32, #tpu.memory_space<vmem>>, vector<8x256xf32>,
    %c0_15 = arith.constant 0 : index
    %c1 = arith.constant 1 : index
    %34 = vector.load %arg43[%c0_15, %c1] : memref<32x290xf32, #tpu.memory_space<vmem>>, vector<8x256xf32>
    %c8 = arith.constant 8 : index
    %c0_16 = arith.constant 0 : index
    %35 = vector.load %arg44[%c8, %c0_16] : memref<288x256xf32, #tpu.memory_space<vmem>>, vector<8x256xf32>
    tpu.vector_store %arg44[%c8, %c0_16], %34 {strides = array<i32>} : memref<288x256xf32, #tpu.memory_space<vmem>>, vector<8x256xf32>,
    %c0_17 = arith.constant 0 : index
    %c2 = arith.constant 2 : index
    %36 = vector.load %arg43[%c0_17, %c2] : memref<32x290xf32, #tpu.memory_space<vmem>>, vector<8x256xf32>
    %cst_18 = arith.constant 0.000000e+00 : f32
    %37 = vector.shape_cast %23 : vector<1x256xi1> to vector<1x256xi1>
    %38 = vector.broadcast %37 : vector<1x256xi1> to vector<8x256xi1>
    %39 = vector.broadcast %cst_18 : f32 to vector<8x256xf32>
    %40 = arith.select %38, %36, %39 : vector<8x256xi1>, vector<8x256xf32>
    %c16 = arith.constant 16 : index
    %c0_19 = arith.constant 0 : index
    %41 = vector.load %arg44[%c16, %c0_19] : memref<288x256xf32, #tpu.memory_space<vmem>>, vector<8x256xf32>
    tpu.vector_store %arg44[%c16, %c0_19], %40 {strides = array<i32>} : memref<288x256xf32, #tpu.memory_space<vmem>>, vector<8x256xf32>,
    %c0_20 = arith.constant 0 : index
    %c16_21 = arith.constant 16 : index
    %42 = vector.load %arg43[%c0_20, %c16_21] : memref<32x290xf32, #tpu.memory_space<vmem>>, vector<8x256xf32>
    %cst_22 = arith.constant 0.000000e+00 : f32
    %43 = vector.shape_cast %21 : vector<1x256xi1> to vector<1x256xi1>
    %44 = vector.broadcast %43 : vector<1x256xi1> to vector<8x256xi1>
    %45 = vector.broadcast %cst_22 : f32 to vector<8x256xf32>
    %46 = arith.select %44, %42, %45 : vector<8x256xi1>, vector<8x256xf32>
    %c24 = arith.constant 24 : index
    %c0_23 = arith.constant 0 : index
    %47 = vector.load %arg44[%c24, %c0_23] : memref<288x256xf32, #tpu.memory_space<vmem>>, vector<8x256xf32>
    tpu.vector_store %arg44[%c24, %c0_23], %46 {strides = array<i32>} : memref<288x256xf32, #tpu.memory_space<vmem>>, vector<8x256xf32>,
    %c0_24 = arith.constant 0 : index
    %c17_25 = arith.constant 17 : index
    %48 = vector.load %arg43[%c0_24, %c17_25] : memref<32x290xf32, #tpu.memory_space<vmem>>, vector<8x256xf32>
    %c32 = arith.constant 32 : index
    %c0_26 = arith.constant 0 : index
    %49 = vector.load %arg44[%c32, %c0_26] : memref<288x256xf32, #tpu.memory_space<vmem>>, vector<8x256xf32>
    tpu.vector_store %arg44[%c32, %c0_26], %48 {strides = array<i32>} : memref<288x256xf32, #tpu.memory_space<vmem>>, vector<8x256xf32>,
    %c0_27 = arith.constant 0 : index
    %c18 = arith.constant 18 : index
    %50 = vector.load %arg43[%c0_27, %c18] : memref<32x290xf32, #tpu.memory_space<vmem>>, vector<8x256xf32>
    %cst_28 = arith.constant 0.000000e+00 : f32
    %51 = vector.shape_cast %23 : vector<1x256xi1> to vector<1x256xi1>
    %52 = vector.broadcast %51 : vector<1x256xi1> to vector<8x256xi1>
    %53 = vector.broadcast %cst_28 : f32 to vector<8x256xf32>
    %54 = arith.select %52, %50, %53 : vector<8x256xi1>, vector<8x256xf32>
    %c40 = arith.constant 40 : index
    %c0_29 = arith.constant 0 : index
    %55 = vector.load %arg44[%c40, %c0_29] : memref<288x256xf32, #tpu.memory_space<vmem>>, vector<8x256xf32>
    tpu.vector_store %arg44[%c40, %c0_29], %54 {strides = array<i32>} : memref<288x256xf32, #tpu.memory_space<vmem>>, vector<8x256xf32>,
    %c0_30 = arith.constant 0 : index
    %c32_31 = arith.constant 32 : index
    %56 = vector.load %arg43[%c0_30, %c32_31] : memref<32x290xf32, #tpu.memory_space<vmem>>, vector<8x256xf32>
    %cst_32 = arith.constant 0.000000e+00 : f32
    %57 = vector.shape_cast %21 : vector<1x256xi1> to vector<1x256xi1>
    %58 = vector.broadcast %57 : vector<1x256xi1> to vector<8x256xi1>
    %59 = vector.broadcast %cst_32 : f32 to vector<8x256xf32>
    %60 = arith.select %58, %56, %59 : vector<8x256xi1>, vector<8x256xf32>
    %c48 = arith.constant 48 : index
    %c0_33 = arith.constant 0 : index
    %61 = vector.load %arg44[%c48, %c0_33] : memref<288x256xf32, #tpu.memory_space<vmem>>, vector<8x256xf32>
    tpu.vector_store %arg44[%c48, %c0_33], %60 {strides = array<i32>} : memref<288x256xf32, #tpu.memory_space<vmem>>, vector<8x256xf32>,
    %c0_34 = arith.constant 0 : index
    %c33 = arith.constant 33 : index
    %62 = vector.load %arg43[%c0_34, %c33] : memref<32x290xf32, #tpu.memory_space<vmem>>, vector<8x256xf32>
    %c56 = arith.constant 56 : index
    %c0_35 = arith.constant 0 : index
    %63 = vector.load %arg44[%c56, %c0_35] : memref<288x256xf32, #tpu.memory_space<vmem>>, vector<8x256xf32>
    tpu.vector_store %arg44[%c56, %c0_35], %62 {strides = array<i32>} : memref<288x256xf32, #tpu.memory_space<vmem>>, vector<8x256xf32>,
    %c0_36 = arith.constant 0 : index
    %c34 = arith.constant 34 : index
    %64 = vector.load %arg43[%c0_36, %c34] : memref<32x290xf32, #tpu.memory_space<vmem>>, vector<8x256xf32>
    %cst_37 = arith.constant 0.000000e+00 : f32
    %65 = vector.shape_cast %23 : vector<1x256xi1> to vector<1x256xi1>
    %66 = vector.broadcast %65 : vector<1x256xi1> to vector<8x256xi1>
    %67 = vector.broadcast %cst_37 : f32 to vector<8x256xf32>
    %68 = arith.select %66, %64, %67 : vector<8x256xi1>, vector<8x256xf32>
    %c64 = arith.constant 64 : index
    %c0_38 = arith.constant 0 : index
    %69 = vector.load %arg44[%c64, %c0_38] : memref<288x256xf32, #tpu.memory_space<vmem>>, vector<8x256xf32>
    tpu.vector_store %arg44[%c64, %c0_38], %68 {strides = array<i32>} : memref<288x256xf32, #tpu.memory_space<vmem>>, vector<8x256xf32>,
    %c0_39 = arith.constant 0 : index
    %c0_40 = arith.constant 0 : index
    %70 = vector.load %arg44[%c0_39, %c0_40] : memref<288x256xf32, #tpu.memory_space<vmem>>, vector<72x256xf32>
    %71 = arith.truncf %70 : vector<72x256xf32> to vector<72x256xbf16>
    %c0_41 = arith.constant 0 : index
    %c0_42 = arith.constant 0 : index
    %72 = vector.load %arg2[%c0_41, %c0_42] : memref<8x72xbf16, #tpu.memory_space<vmem>>, vector<8x72xbf16>
    %cst_43 = arith.constant dense<0.000000e+00> : vector<8x256xf32>
    %73 = tpu.matmul %72, %71, %cst_43 {dimension_numbers = #tpu.dot_dimension_numbers<[1], [0], [0], [1], [0, 0, 1, 1], [], []>} : vector<8x72xbf16>, vector<72x256xbf16>, vector<8x256xf32> -> vector<8x256xf32>
    %c0_44 = arith.constant 0 : index
    %c0_45 = arith.constant 0 : index
    %74 = vector.load %arg3[%c0_44, %c0_45] : memref<8x1xf32, #tpu.memory_space<vmem>>, vector<8x1xf32>
    %75 = vector.broadcast %74 : vector<8x1xf32> to vector<8x256xf32>
    %76 = arith.addf %73, %75 : vector<8x256xf32>
    %cst_46 = arith.constant 0.000000e+00 : f32
    %77 = vector.broadcast %cst_46 : f32 to vector<8x256xf32>
    %78 = arith.maximumf %76, %77 : vector<8x256xf32>
    %cst_47 = arith.constant 0.000000e+00 : f32
    %79 = vector.broadcast %cst_47 : f32 to vector<8x17xf32>
    %c0_48 = arith.constant 0 : index
    %c0_49 = arith.constant 0 : index
    %80 = vector.load %arg43[%c0_48, %c0_49] : memref<32x290xf32, #tpu.memory_space<vmem>>, vector<8x17xf32>
    tpu.vector_store %arg43[%c0_48, %c0_49], %79 {strides = array<i32>} : memref<32x290xf32, #tpu.memory_space<vmem>>, vector<8x17xf32>,
    %c0_50 = arith.constant 0 : index
    %c17_51 = arith.constant 17 : index
    %81 = vector.load %arg43[%c0_50, %c17_51] : memref<32x290xf32, #tpu.memory_space<vmem>>, vector<8x256xf32>
    tpu.vector_store %arg43[%c0_50, %c17_51], %78 {strides = array<i32>} : memref<32x290xf32, #tpu.memory_space<vmem>>, vector<8x256xf32>,
    %c0_52 = arith.constant 0 : index
    %c273_53 = arith.constant 273 : index
    %82 = vector.load %arg43[%c0_52, %c273_53] : memref<32x290xf32, #tpu.memory_space<vmem>>, vector<8x17xf32>
    tpu.vector_store %arg43[%c0_52, %c273_53], %79 {strides = array<i32>} : memref<32x290xf32, #tpu.memory_space<vmem>>, vector<8x17xf32>,
    %c0_54 = arith.constant 0 : index
    %c0_55 = arith.constant 0 : index
    %83 = vector.load %arg43[%c0_54, %c0_55] : memref<32x290xf32, #tpu.memory_space<vmem>>, vector<8x256xf32>
    %cst_56 = arith.constant 0.000000e+00 : f32
    %84 = vector.shape_cast %21 : vector<1x256xi1> to vector<1x256xi1>
    %85 = vector.broadcast %84 : vector<1x256xi1> to vector<8x256xi1>
    %86 = vector.broadcast %cst_56 : f32 to vector<8x256xf32>
    %87 = arith.select %85, %83, %86 : vector<8x256xi1>, vector<8x256xf32>
    %c0_57 = arith.constant 0 : index
    %c0_58 = arith.constant 0 : index
    %88 = vector.load %arg44[%c0_57, %c0_58] : memref<288x256xf32, #tpu.memory_space<vmem>>, vector<8x256xf32>
    tpu.vector_store %arg44[%c0_57, %c0_58], %87 {strides = array<i32>} : memref<288x256xf32, #tpu.memory_space<vmem>>, vector<8x256xf32>,
    %c0_59 = arith.constant 0 : index
    %c1_60 = arith.constant 1 : index
    %89 = vector.load %arg43[%c0_59, %c1_60] : memref<32x290xf32, #tpu.memory_space<vmem>>, vector<8x256xf32>
    %c8_61 = arith.constant 8 : index
    %c0_62 = arith.constant 0 : index
    %90 = vector.load %arg44[%c8_61, %c0_62] : memref<288x256xf32, #tpu.memory_space<vmem>>, vector<8x256xf32>
    tpu.vector_store %arg44[%c8_61, %c0_62], %89 {strides = array<i32>} : memref<288x256xf32, #tpu.memory_space<vmem>>, vector<8x256xf32>,
    %c0_63 = arith.constant 0 : index
    %c2_64 = arith.constant 2 : index
    %91 = vector.load %arg43[%c0_63, %c2_64] : memref<32x290xf32, #tpu.memory_space<vmem>>, vector<8x256xf32>
    %cst_65 = arith.constant 0.000000e+00 : f32
    %92 = vector.shape_cast %23 : vector<1x256xi1> to vector<1x256xi1>
    %93 = vector.broadcast %92 : vector<1x256xi1> to vector<8x256xi1>
    %94 = vector.broadcast %cst_65 : f32 to vector<8x256xf32>
    %95 = arith.select %93, %91, %94 : vector<8x256xi1>, vector<8x256xf32>
    %c16_66 = arith.constant 16 : index
    %c0_67 = arith.constant 0 : index
    %96 = vector.load %arg44[%c16_66, %c0_67] : memref<288x256xf32, #tpu.memory_space<vmem>>, vector<8x256xf32>
    tpu.vector_store %arg44[%c16_66, %c0_67], %95 {strides = array<i32>} : memref<288x256xf32, #tpu.memory_space<vmem>>, vector<8x256xf32>,
    %c0_68 = arith.constant 0 : index
    %c16_69 = arith.constant 16 : index
    %97 = vector.load %arg43[%c0_68, %c16_69] : memref<32x290xf32, #tpu.memory_space<vmem>>, vector<8x256xf32>
    %cst_70 = arith.constant 0.000000e+00 : f32
    %98 = vector.shape_cast %21 : vector<1x256xi1> to vector<1x256xi1>
    %99 = vector.broadcast %98 : vector<1x256xi1> to vector<8x256xi1>
    %100 = vector.broadcast %cst_70 : f32 to vector<8x256xf32>
    %101 = arith.select %99, %97, %100 : vector<8x256xi1>, vector<8x256xf32>
    %c24_71 = arith.constant 24 : index
    %c0_72 = arith.constant 0 : index
    %102 = vector.load %arg44[%c24_71, %c0_72] : memref<288x256xf32, #tpu.memory_space<vmem>>, vector<8x256xf32>
    tpu.vector_store %arg44[%c24_71, %c0_72], %101 {strides = array<i32>} : memref<288x256xf32, #tpu.memory_space<vmem>>, vector<8x256xf32>,
    %c0_73 = arith.constant 0 : index
    %c17_74 = arith.constant 17 : index
    %103 = vector.load %arg43[%c0_73, %c17_74] : memref<32x290xf32, #tpu.memory_space<vmem>>, vector<8x256xf32>
    %c32_75 = arith.constant 32 : index
    %c0_76 = arith.constant 0 : index
    %104 = vector.load %arg44[%c32_75, %c0_76] : memref<288x256xf32, #tpu.memory_space<vmem>>, vector<8x256xf32>
    tpu.vector_store %arg44[%c32_75, %c0_76], %103 {strides = array<i32>} : memref<288x256xf32, #tpu.memory_space<vmem>>, vector<8x256xf32>,
    %c0_77 = arith.constant 0 : index
    %c18_78 = arith.constant 18 : index
    %105 = vector.load %arg43[%c0_77, %c18_78] : memref<32x290xf32, #tpu.memory_space<vmem>>, vector<8x256xf32>
    %cst_79 = arith.constant 0.000000e+00 : f32
    %106 = vector.shape_cast %23 : vector<1x256xi1> to vector<1x256xi1>
    %107 = vector.broadcast %106 : vector<1x256xi1> to vector<8x256xi1>
    %108 = vector.broadcast %cst_79 : f32 to vector<8x256xf32>
    %109 = arith.select %107, %105, %108 : vector<8x256xi1>, vector<8x256xf32>
    %c40_80 = arith.constant 40 : index
    %c0_81 = arith.constant 0 : index
    %110 = vector.load %arg44[%c40_80, %c0_81] : memref<288x256xf32, #tpu.memory_space<vmem>>, vector<8x256xf32>
    tpu.vector_store %arg44[%c40_80, %c0_81], %109 {strides = array<i32>} : memref<288x256xf32, #tpu.memory_space<vmem>>, vector<8x256xf32>,
    %c0_82 = arith.constant 0 : index
    %c32_83 = arith.constant 32 : index
    %111 = vector.load %arg43[%c0_82, %c32_83] : memref<32x290xf32, #tpu.memory_space<vmem>>, vector<8x256xf32>
    %cst_84 = arith.constant 0.000000e+00 : f32
    %112 = vector.shape_cast %21 : vector<1x256xi1> to vector<1x256xi1>
    %113 = vector.broadcast %112 : vector<1x256xi1> to vector<8x256xi1>
    %114 = vector.broadcast %cst_84 : f32 to vector<8x256xf32>
    %115 = arith.select %113, %111, %114 : vector<8x256xi1>, vector<8x256xf32>
    %c48_85 = arith.constant 48 : index
    %c0_86 = arith.constant 0 : index
    %116 = vector.load %arg44[%c48_85, %c0_86] : memref<288x256xf32, #tpu.memory_space<vmem>>, vector<8x256xf32>
    tpu.vector_store %arg44[%c48_85, %c0_86], %115 {strides = array<i32>} : memref<288x256xf32, #tpu.memory_space<vmem>>, vector<8x256xf32>,
    %c0_87 = arith.constant 0 : index
    %c33_88 = arith.constant 33 : index
    %117 = vector.load %arg43[%c0_87, %c33_88] : memref<32x290xf32, #tpu.memory_space<vmem>>, vector<8x256xf32>
    %c56_89 = arith.constant 56 : index
    %c0_90 = arith.constant 0 : index
    %118 = vector.load %arg44[%c56_89, %c0_90] : memref<288x256xf32, #tpu.memory_space<vmem>>, vector<8x256xf32>
    tpu.vector_store %arg44[%c56_89, %c0_90], %117 {strides = array<i32>} : memref<288x256xf32, #tpu.memory_space<vmem>>, vector<8x256xf32>,
    %c0_91 = arith.constant 0 : index
    %c34_92 = arith.constant 34 : index
    %119 = vector.load %arg43[%c0_91, %c34_92] : memref<32x290xf32, #tpu.memory_space<vmem>>, vector<8x256xf32>
    %cst_93 = arith.constant 0.000000e+00 : f32
    %120 = vector.shape_cast %23 : vector<1x256xi1> to vector<1x256xi1>
    %121 = vector.broadcast %120 : vector<1x256xi1> to vector<8x256xi1>
    %122 = vector.broadcast %cst_93 : f32 to vector<8x256xf32>
    %123 = arith.select %121, %119, %122 : vector<8x256xi1>, vector<8x256xf32>
    %c64_94 = arith.constant 64 : index
    %c0_95 = arith.constant 0 : index
    %124 = vector.load %arg44[%c64_94, %c0_95] : memref<288x256xf32, #tpu.memory_space<vmem>>, vector<8x256xf32>
    tpu.vector_store %arg44[%c64_94, %c0_95], %123 {strides = array<i32>} : memref<288x256xf32, #tpu.memory_space<vmem>>, vector<8x256xf32>,
    %c0_96 = arith.constant 0 : index
    %c0_97 = arith.constant 0 : index
    %125 = vector.load %arg44[%c0_96, %c0_97] : memref<288x256xf32, #tpu.memory_space<vmem>>, vector<72x256xf32>
    %126 = arith.truncf %125 : vector<72x256xf32> to vector<72x256xbf16>
    %c0_98 = arith.constant 0 : index
    %c0_99 = arith.constant 0 : index
    %127 = vector.load %arg4[%c0_98, %c0_99] : memref<8x72xbf16, #tpu.memory_space<vmem>>, vector<8x72xbf16>
    %cst_100 = arith.constant dense<0.000000e+00> : vector<8x256xf32>
    %128 = tpu.matmul %127, %126, %cst_100 {dimension_numbers = #tpu.dot_dimension_numbers<[1], [0], [0], [1], [0, 0, 1, 1], [], []>} : vector<8x72xbf16>, vector<72x256xbf16>, vector<8x256xf32> -> vector<8x256xf32>
    %c0_101 = arith.constant 0 : index
    %c0_102 = arith.constant 0 : index
    %129 = vector.load %arg5[%c0_101, %c0_102] : memref<8x1xf32, #tpu.memory_space<vmem>>, vector<8x1xf32>
    %130 = vector.broadcast %129 : vector<8x1xf32> to vector<8x256xf32>
    %131 = arith.addf %128, %130 : vector<8x256xf32>
    %cst_103 = arith.constant 0.000000e+00 : f32
    %132 = vector.broadcast %cst_103 : f32 to vector<8x256xf32>
    %133 = arith.maximumf %131, %132 : vector<8x256xf32>
    %c0_104 = arith.constant 0 : index
    %c0_105 = arith.constant 0 : index
    %134 = vector.load %arg43[%c0_104, %c0_105] : memref<32x290xf32, #tpu.memory_space<vmem>>, vector<8x256xf32>
    tpu.vector_store %arg43[%c0_104, %c0_105], %133 {strides = array<i32>} : memref<32x290xf32, #tpu.memory_space<vmem>>, vector<8x256xf32>,
    %cst_106 = arith.constant 0.000000e+00 : f32
    %135 = vector.broadcast %cst_106 : f32 to vector<8x17xf32>
    %c0_107 = arith.constant 0 : index
    %c256 = arith.constant 256 : index
    %136 = vector.load %arg43[%c0_107, %c256] : memref<32x290xf32, #tpu.memory_space<vmem>>, vector<8x17xf32>
    tpu.vector_store %arg43[%c0_107, %c256], %135 {strides = array<i32>} : memref<32x290xf32, #tpu.memory_space<vmem>>, vector<8x17xf32>,
    %c0_108 = arith.constant 0 : index
    %c1_109 = arith.constant 1 : index
    %137 = vector.load %arg43[%c0_108, %c1_109] : memref<32x290xf32, #tpu.memory_space<vmem>>, vector<8x256xf32>
    %c0_110 = arith.constant 0 : index
    %c16_111 = arith.constant 16 : index
    %138 = vector.load %arg43[%c0_110, %c16_111] : memref<32x290xf32, #tpu.memory_space<vmem>>, vector<8x256xf32>
    %c0_112 = arith.constant 0 : index
    %c17_113 = arith.constant 17 : index
    %139 = vector.load %arg43[%c0_112, %c17_113] : memref<32x290xf32, #tpu.memory_space<vmem>>, vector<8x256xf32>
    %140 = arith.maximumf %133, %137 : vector<8x256xf32>
    %141 = arith.maximumf %138, %139 : vector<8x256xf32>
    %142 = arith.maximumf %140, %141 : vector<8x256xf32>
    %143 = arith.truncf %142 : vector<8x256xf32> to vector<8x256xbf16>
    %c0_114 = arith.constant 0 : index
    %c0_115 = arith.constant 0 : index
    %144 = vector.load %arg6[%c0_114, %c0_115] : memref<256x64xbf16, #tpu.memory_space<vmem>>, vector<256x64xbf16>
    %cst_116 = arith.constant dense<0.000000e+00> : vector<8x64xf32>
    %145 = tpu.matmul %143, %144, %cst_116 {dimension_numbers = #tpu.dot_dimension_numbers<[1], [0], [0], [1], [0, 0, 1, 1], [], []>} : vector<8x256xbf16>, vector<256x64xbf16>, vector<8x64xf32> -> vector<8x64xf32>
    %146 = tpu.iota {dimensions = array<i32: 1>} : vector<1x64xi32>
    %c8_i32 = arith.constant 8 : i32
    %c0_i32_117 = arith.constant 0 : i32
    %147 = arith.cmpi eq, %c8_i32, %c0_i32_117 : i32
    %c1_i32_118 = arith.constant 1 : i32
    %148 = arith.select %147, %c1_i32_118, %c8_i32 : i32
    %149 = vector.broadcast %148 : i32 to vector<1x64xi32>
    %150 = arith.remsi %146, %149 : vector<1x64xi32>
    %c0_i32_119 = arith.constant 0 : i32
    %151 = vector.broadcast %c0_i32_119 : i32 to vector<1x64xi32>
    %152 = arith.cmpi ne, %150, %151 : vector<1x64xi32>
    %c0_i32_120 = arith.constant 0 : i32
    %153 = vector.broadcast %c0_i32_120 : i32 to vector<1x64xi32>
    %154 = arith.cmpi slt, %150, %153 : vector<1x64xi32>
    %c0_i32_121 = arith.constant 0 : i32
    %155 = arith.cmpi slt, %148, %c0_i32_121 : i32
    %156 = vector.broadcast %155 : i1 to vector<1x64xi1>
    %157 = vector.broadcast %156 : vector<1x64xi1> to vector<1x64xi1>
    %158 = arith.xori %154, %157 : vector<1x64xi1>
    %159 = arith.andi %158, %152 : vector<1x64xi1>
    %160 = vector.broadcast %148 : i32 to vector<1x64xi32>
    %161 = arith.addi %150, %160 : vector<1x64xi32>
    %162 = arith.select %159, %161, %150 : vector<1x64xi1>, vector<1x64xi32>
    %c0_i32_122 = arith.constant 0 : i32
    %163 = vector.broadcast %c0_i32_122 : i32 to vector<1x64xi32>
    %164 = arith.cmpi ne, %162, %163 : vector<1x64xi32>
    %c7_i32 = arith.constant 7 : i32
    %165 = vector.broadcast %c7_i32 : i32 to vector<1x64xi32>
    %166 = arith.cmpi ne, %162, %165 : vector<1x64xi32>
    %cst_123 = arith.constant 0.000000e+00 : f32
    %167 = vector.broadcast %cst_123 : f32 to vector<8x9xf32>
    %c0_124 = arith.constant 0 : index
    %c0_125 = arith.constant 0 : index
    %168 = vector.load %arg43[%c0_124, %c0_125] : memref<32x290xf32, #tpu.memory_space<vmem>>, vector<8x9xf32>
    tpu.vector_store %arg43[%c0_124, %c0_125], %167 {strides = array<i32>} : memref<32x290xf32, #tpu.memory_space<vmem>>, vector<8x9xf32>,
    %c0_126 = arith.constant 0 : index
    %c9 = arith.constant 9 : index
    %169 = vector.load %arg43[%c0_126, %c9] : memref<32x290xf32, #tpu.memory_space<vmem>>, vector<8x64xf32>
    tpu.vector_store %arg43[%c0_126, %c9], %145 {strides = array<i32>} : memref<32x290xf32, #tpu.memory_space<vmem>>, vector<8x64xf32>,
    %c0_127 = arith.constant 0 : index
    %c73 = arith.constant 73 : index
    %170 = vector.load %arg43[%c0_127, %c73] : memref<32x290xf32, #tpu.memory_space<vmem>>, vector<8x9xf32>
    tpu.vector_store %arg43[%c0_127, %c73], %167 {strides = array<i32>} : memref<32x290xf32, #tpu.memory_space<vmem>>, vector<8x9xf32>,
    %c0_128 = arith.constant 0 : index
    %c0_129 = arith.constant 0 : index
    %171 = vector.load %arg43[%c0_128, %c0_129] : memref<32x290xf32, #tpu.memory_space<vmem>>, vector<8x64xf32>
    %cst_130 = arith.constant 0.000000e+00 : f32
    %172 = vector.shape_cast %164 : vector<1x64xi1> to vector<1x64xi1>
    %173 = vector.broadcast %172 : vector<1x64xi1> to vector<8x64xi1>
    %174 = vector.broadcast %cst_130 : f32 to vector<8x64xf32>
    %175 = arith.select %173, %171, %174 : vector<8x64xi1>, vector<8x64xf32>
    %c0_131 = arith.constant 0 : index
    %c0_132 = arith.constant 0 : index
    %176 = vector.load %arg44[%c0_131, %c0_132] : memref<288x256xf32, #tpu.memory_space<vmem>>, vector<8x64xf32>
    tpu.vector_store %arg44[%c0_131, %c0_132], %175 {strides = array<i32>} : memref<288x256xf32, #tpu.memory_space<vmem>>, vector<8x64xf32>,
    %c0_133 = arith.constant 0 : index
    %c1_134 = arith.constant 1 : index
    %177 = vector.load %arg43[%c0_133, %c1_134] : memref<32x290xf32, #tpu.memory_space<vmem>>, vector<8x64xf32>
    %c8_135 = arith.constant 8 : index
    %c0_136 = arith.constant 0 : index
    %178 = vector.load %arg44[%c8_135, %c0_136] : memref<288x256xf32, #tpu.memory_space<vmem>>, vector<8x64xf32>
    tpu.vector_store %arg44[%c8_135, %c0_136], %177 {strides = array<i32>} : memref<288x256xf32, #tpu.memory_space<vmem>>, vector<8x64xf32>,
    %c0_137 = arith.constant 0 : index
    %c2_138 = arith.constant 2 : index
    %179 = vector.load %arg43[%c0_137, %c2_138] : memref<32x290xf32, #tpu.memory_space<vmem>>, vector<8x64xf32>
    %cst_139 = arith.constant 0.000000e+00 : f32
    %180 = vector.shape_cast %166 : vector<1x64xi1> to vector<1x64xi1>
    %181 = vector.broadcast %180 : vector<1x64xi1> to vector<8x64xi1>
    %182 = vector.broadcast %cst_139 : f32 to vector<8x64xf32>
    %183 = arith.select %181, %179, %182 : vector<8x64xi1>, vector<8x64xf32>
    %c16_140 = arith.constant 16 : index
    %c0_141 = arith.constant 0 : index
    %184 = vector.load %arg44[%c16_140, %c0_141] : memref<288x256xf32, #tpu.memory_space<vmem>>, vector<8x64xf32>
    tpu.vector_store %arg44[%c16_140, %c0_141], %183 {strides = array<i32>} : memref<288x256xf32, #tpu.memory_space<vmem>>, vector<8x64xf32>,
    %c0_142 = arith.constant 0 : index
    %c8_143 = arith.constant 8 : index
    %185 = vector.load %arg43[%c0_142, %c8_143] : memref<32x290xf32, #tpu.memory_space<vmem>>, vector<8x64xf32>
    %cst_144 = arith.constant 0.000000e+00 : f32
    %186 = vector.shape_cast %164 : vector<1x64xi1> to vector<1x64xi1>
    %187 = vector.broadcast %186 : vector<1x64xi1> to vector<8x64xi1>
    %188 = vector.broadcast %cst_144 : f32 to vector<8x64xf32>
    %189 = arith.select %187, %185, %188 : vector<8x64xi1>, vector<8x64xf32>
    %c24_145 = arith.constant 24 : index
    %c0_146 = arith.constant 0 : index
    %190 = vector.load %arg44[%c24_145, %c0_146] : memref<288x256xf32, #tpu.memory_space<vmem>>, vector<8x64xf32>
    tpu.vector_store %arg44[%c24_145, %c0_146], %189 {strides = array<i32>} : memref<288x256xf32, #tpu.memory_space<vmem>>, vector<8x64xf32>,
    %c0_147 = arith.constant 0 : index
    %c9_148 = arith.constant 9 : index
    %191 = vector.load %arg43[%c0_147, %c9_148] : memref<32x290xf32, #tpu.memory_space<vmem>>, vector<8x64xf32>
    %c32_149 = arith.constant 32 : index
    %c0_150 = arith.constant 0 : index
    %192 = vector.load %arg44[%c32_149, %c0_150] : memref<288x256xf32, #tpu.memory_space<vmem>>, vector<8x64xf32>
    tpu.vector_store %arg44[%c32_149, %c0_150], %191 {strides = array<i32>} : memref<288x256xf32, #tpu.memory_space<vmem>>, vector<8x64xf32>,
    %c0_151 = arith.constant 0 : index
    %c10 = arith.constant 10 : index
    %193 = vector.load %arg43[%c0_151, %c10] : memref<32x290xf32, #tpu.memory_space<vmem>>, vector<8x64xf32>
    %cst_152 = arith.constant 0.000000e+00 : f32
    %194 = vector.shape_cast %166 : vector<1x64xi1> to vector<1x64xi1>
    %195 = vector.broadcast %194 : vector<1x64xi1> to vector<8x64xi1>
    %196 = vector.broadcast %cst_152 : f32 to vector<8x64xf32>
    %197 = arith.select %195, %193, %196 : vector<8x64xi1>, vector<8x64xf32>
    %c40_153 = arith.constant 40 : index
    %c0_154 = arith.constant 0 : index
    %198 = vector.load %arg44[%c40_153, %c0_154] : memref<288x256xf32, #tpu.memory_space<vmem>>, vector<8x64xf32>
    tpu.vector_store %arg44[%c40_153, %c0_154], %197 {strides = array<i32>} : memref<288x256xf32, #tpu.memory_space<vmem>>, vector<8x64xf32>,
    %c0_155 = arith.constant 0 : index
    %c16_156 = arith.constant 16 : index
    %199 = vector.load %arg43[%c0_155, %c16_156] : memref<32x290xf32, #tpu.memory_space<vmem>>, vector<8x64xf32>
    %cst_157 = arith.constant 0.000000e+00 : f32
    %200 = vector.shape_cast %164 : vector<1x64xi1> to vector<1x64xi1>
    %201 = vector.broadcast %200 : vector<1x64xi1> to vector<8x64xi1>
    %202 = vector.broadcast %cst_157 : f32 to vector<8x64xf32>
    %203 = arith.select %201, %199, %202 : vector<8x64xi1>, vector<8x64xf32>
    %c48_158 = arith.constant 48 : index
    %c0_159 = arith.constant 0 : index
    %204 = vector.load %arg44[%c48_158, %c0_159] : memref<288x256xf32, #tpu.memory_space<vmem>>, vector<8x64xf32>
    tpu.vector_store %arg44[%c48_158, %c0_159], %203 {strides = array<i32>} : memref<288x256xf32, #tpu.memory_space<vmem>>, vector<8x64xf32>,
    %c0_160 = arith.constant 0 : index
    %c17_161 = arith.constant 17 : index
    %205 = vector.load %arg43[%c0_160, %c17_161] : memref<32x290xf32, #tpu.memory_space<vmem>>, vector<8x64xf32>
    %c56_162 = arith.constant 56 : index
    %c0_163 = arith.constant 0 : index
    %206 = vector.load %arg44[%c56_162, %c0_163] : memref<288x256xf32, #tpu.memory_space<vmem>>, vector<8x64xf32>
    tpu.vector_store %arg44[%c56_162, %c0_163], %205 {strides = array<i32>} : memref<288x256xf32, #tpu.memory_space<vmem>>, vector<8x64xf32>,
    %c0_164 = arith.constant 0 : index
    %c18_165 = arith.constant 18 : index
    %207 = vector.load %arg43[%c0_164, %c18_165] : memref<32x290xf32, #tpu.memory_space<vmem>>, vector<8x64xf32>
    %cst_166 = arith.constant 0.000000e+00 : f32
    %208 = vector.shape_cast %166 : vector<1x64xi1> to vector<1x64xi1>
    %209 = vector.broadcast %208 : vector<1x64xi1> to vector<8x64xi1>
    %210 = vector.broadcast %cst_166 : f32 to vector<8x64xf32>
    %211 = arith.select %209, %207, %210 : vector<8x64xi1>, vector<8x64xf32>
    %c64_167 = arith.constant 64 : index
    %c0_168 = arith.constant 0 : index
    %212 = vector.load %arg44[%c64_167, %c0_168] : memref<288x256xf32, #tpu.memory_space<vmem>>, vector<8x64xf32>
    tpu.vector_store %arg44[%c64_167, %c0_168], %211 {strides = array<i32>} : memref<288x256xf32, #tpu.memory_space<vmem>>, vector<8x64xf32>,
    %c0_169 = arith.constant 0 : index
    %c0_170 = arith.constant 0 : index
    %213 = vector.load %arg44[%c0_169, %c0_170] : memref<288x256xf32, #tpu.memory_space<vmem>>, vector<72x64xf32>
    %214 = arith.truncf %213 : vector<72x64xf32> to vector<72x64xbf16>
    %c0_171 = arith.constant 0 : index
    %c0_172 = arith.constant 0 : index
    %215 = vector.load %arg7[%c0_171, %c0_172] : memref<16x72xbf16, #tpu.memory_space<vmem>>, vector<16x72xbf16>
    %cst_173 = arith.constant dense<0.000000e+00> : vector<16x64xf32>
    %216 = tpu.matmul %215, %214, %cst_173 {dimension_numbers = #tpu.dot_dimension_numbers<[1], [0], [0], [1], [0, 0, 1, 1], [], []>} : vector<16x72xbf16>, vector<72x64xbf16>, vector<16x64xf32> -> vector<16x64xf32>
    %c0_174 = arith.constant 0 : index
    %c0_175 = arith.constant 0 : index
    %217 = vector.load %arg8[%c0_174, %c0_175] : memref<16x1xf32, #tpu.memory_space<vmem>>, vector<16x1xf32>
    %218 = vector.broadcast %217 : vector<16x1xf32> to vector<16x64xf32>
    %219 = arith.addf %216, %218 : vector<16x64xf32>
    %cst_176 = arith.constant 0.000000e+00 : f32
    %220 = vector.broadcast %cst_176 : f32 to vector<16x64xf32>
    %221 = arith.maximumf %219, %220 : vector<16x64xf32>
    %cst_177 = arith.constant 0.000000e+00 : f32
    %222 = vector.broadcast %cst_177 : f32 to vector<16x9xf32>
    %c0_178 = arith.constant 0 : index
    %c0_179 = arith.constant 0 : index
    %223 = vector.load %arg43[%c0_178, %c0_179] : memref<32x290xf32, #tpu.memory_space<vmem>>, vector<16x9xf32>
    tpu.vector_store %arg43[%c0_178, %c0_179], %222 {strides = array<i32>} : memref<32x290xf32, #tpu.memory_space<vmem>>, vector<16x9xf32>,
    %c0_180 = arith.constant 0 : index
    %c9_181 = arith.constant 9 : index
    %224 = vector.load %arg43[%c0_180, %c9_181] : memref<32x290xf32, #tpu.memory_space<vmem>>, vector<16x64xf32>
    tpu.vector_store %arg43[%c0_180, %c9_181], %221 {strides = array<i32>} : memref<32x290xf32, #tpu.memory_space<vmem>>, vector<16x64xf32>,
    %c0_182 = arith.constant 0 : index
    %c73_183 = arith.constant 73 : index
    %225 = vector.load %arg43[%c0_182, %c73_183] : memref<32x290xf32, #tpu.memory_space<vmem>>, vector<16x9xf32>
    tpu.vector_store %arg43[%c0_182, %c73_183], %222 {strides = array<i32>} : memref<32x290xf32, #tpu.memory_space<vmem>>, vector<16x9xf32>,
    %c0_184 = arith.constant 0 : index
    %c0_185 = arith.constant 0 : index
    %226 = vector.load %arg43[%c0_184, %c0_185] : memref<32x290xf32, #tpu.memory_space<vmem>>, vector<16x64xf32>
    %cst_186 = arith.constant 0.000000e+00 : f32
    %227 = vector.shape_cast %164 : vector<1x64xi1> to vector<1x64xi1>
    %228 = vector.broadcast %227 : vector<1x64xi1> to vector<16x64xi1>
    %229 = vector.broadcast %cst_186 : f32 to vector<16x64xf32>
    %230 = arith.select %228, %226, %229 : vector<16x64xi1>, vector<16x64xf32>
    %c0_187 = arith.constant 0 : index
    %c0_188 = arith.constant 0 : index
    %231 = vector.load %arg44[%c0_187, %c0_188] : memref<288x256xf32, #tpu.memory_space<vmem>>, vector<16x64xf32>
    tpu.vector_store %arg44[%c0_187, %c0_188], %230 {strides = array<i32>} : memref<288x256xf32, #tpu.memory_space<vmem>>, vector<16x64xf32>,
    %c0_189 = arith.constant 0 : index
    %c1_190 = arith.constant 1 : index
    %232 = vector.load %arg43[%c0_189, %c1_190] : memref<32x290xf32, #tpu.memory_space<vmem>>, vector<16x64xf32>
    %c16_191 = arith.constant 16 : index
    %c0_192 = arith.constant 0 : index
    %233 = vector.load %arg44[%c16_191, %c0_192] : memref<288x256xf32, #tpu.memory_space<vmem>>, vector<16x64xf32>
    tpu.vector_store %arg44[%c16_191, %c0_192], %232 {strides = array<i32>} : memref<288x256xf32, #tpu.memory_space<vmem>>, vector<16x64xf32>,
    %c0_193 = arith.constant 0 : index
    %c2_194 = arith.constant 2 : index
    %234 = vector.load %arg43[%c0_193, %c2_194] : memref<32x290xf32, #tpu.memory_space<vmem>>, vector<16x64xf32>
    %cst_195 = arith.constant 0.000000e+00 : f32
    %235 = vector.shape_cast %166 : vector<1x64xi1> to vector<1x64xi1>
    %236 = vector.broadcast %235 : vector<1x64xi1> to vector<16x64xi1>
    %237 = vector.broadcast %cst_195 : f32 to vector<16x64xf32>
    %238 = arith.select %236, %234, %237 : vector<16x64xi1>, vector<16x64xf32>
    %c32_196 = arith.constant 32 : index
    %c0_197 = arith.constant 0 : index
    %239 = vector.load %arg44[%c32_196, %c0_197] : memref<288x256xf32, #tpu.memory_space<vmem>>, vector<16x64xf32>
    tpu.vector_store %arg44[%c32_196, %c0_197], %238 {strides = array<i32>} : memref<288x256xf32, #tpu.memory_space<vmem>>, vector<16x64xf32>,
    %c0_198 = arith.constant 0 : index
    %c8_199 = arith.constant 8 : index
    %240 = vector.load %arg43[%c0_198, %c8_199] : memref<32x290xf32, #tpu.memory_space<vmem>>, vector<16x64xf32>
    %cst_200 = arith.constant 0.000000e+00 : f32
    %241 = vector.shape_cast %164 : vector<1x64xi1> to vector<1x64xi1>
    %242 = vector.broadcast %241 : vector<1x64xi1> to vector<16x64xi1>
    %243 = vector.broadcast %cst_200 : f32 to vector<16x64xf32>
    %244 = arith.select %242, %240, %243 : vector<16x64xi1>, vector<16x64xf32>
    %c48_201 = arith.constant 48 : index
    %c0_202 = arith.constant 0 : index
    %245 = vector.load %arg44[%c48_201, %c0_202] : memref<288x256xf32, #tpu.memory_space<vmem>>, vector<16x64xf32>
    tpu.vector_store %arg44[%c48_201, %c0_202], %244 {strides = array<i32>} : memref<288x256xf32, #tpu.memory_space<vmem>>, vector<16x64xf32>,
    %c0_203 = arith.constant 0 : index
    %c9_204 = arith.constant 9 : index
    %246 = vector.load %arg43[%c0_203, %c9_204] : memref<32x290xf32, #tpu.memory_space<vmem>>, vector<16x64xf32>
    %c64_205 = arith.constant 64 : index
    %c0_206 = arith.constant 0 : index
    %247 = vector.load %arg44[%c64_205, %c0_206] : memref<288x256xf32, #tpu.memory_space<vmem>>, vector<16x64xf32>
    tpu.vector_store %arg44[%c64_205, %c0_206], %246 {strides = array<i32>} : memref<288x256xf32, #tpu.memory_space<vmem>>, vector<16x64xf32>,
    %c0_207 = arith.constant 0 : index
    %c10_208 = arith.constant 10 : index
    %248 = vector.load %arg43[%c0_207, %c10_208] : memref<32x290xf32, #tpu.memory_space<vmem>>, vector<16x64xf32>
    %cst_209 = arith.constant 0.000000e+00 : f32
    %249 = vector.shape_cast %166 : vector<1x64xi1> to vector<1x64xi1>
    %250 = vector.broadcast %249 : vector<1x64xi1> to vector<16x64xi1>
    %251 = vector.broadcast %cst_209 : f32 to vector<16x64xf32>
    %252 = arith.select %250, %248, %251 : vector<16x64xi1>, vector<16x64xf32>
    %c80 = arith.constant 80 : index
    %c0_210 = arith.constant 0 : index
    %253 = vector.load %arg44[%c80, %c0_210] : memref<288x256xf32, #tpu.memory_space<vmem>>, vector<16x64xf32>
    tpu.vector_store %arg44[%c80, %c0_210], %252 {strides = array<i32>} : memref<288x256xf32, #tpu.memory_space<vmem>>, vector<16x64xf32>,
    %c0_211 = arith.constant 0 : index
    %c16_212 = arith.constant 16 : index
    %254 = vector.load %arg43[%c0_211, %c16_212] : memref<32x290xf32, #tpu.memory_space<vmem>>, vector<16x64xf32>
    %cst_213 = arith.constant 0.000000e+00 : f32
    %255 = vector.shape_cast %164 : vector<1x64xi1> to vector<1x64xi1>
    %256 = vector.broadcast %255 : vector<1x64xi1> to vector<16x64xi1>
    %257 = vector.broadcast %cst_213 : f32 to vector<16x64xf32>
    %258 = arith.select %256, %254, %257 : vector<16x64xi1>, vector<16x64xf32>
    %c96 = arith.constant 96 : index
    %c0_214 = arith.constant 0 : index
    %259 = vector.load %arg44[%c96, %c0_214] : memref<288x256xf32, #tpu.memory_space<vmem>>, vector<16x64xf32>
    tpu.vector_store %arg44[%c96, %c0_214], %258 {strides = array<i32>} : memref<288x256xf32, #tpu.memory_space<vmem>>, vector<16x64xf32>,
    %c0_215 = arith.constant 0 : index
    %c17_216 = arith.constant 17 : index
    %260 = vector.load %arg43[%c0_215, %c17_216] : memref<32x290xf32, #tpu.memory_space<vmem>>, vector<16x64xf32>
    %c112 = arith.constant 112 : index
    %c0_217 = arith.constant 0 : index
    %261 = vector.load %arg44[%c112, %c0_217] : memref<288x256xf32, #tpu.memory_space<vmem>>, vector<16x64xf32>
    tpu.vector_store %arg44[%c112, %c0_217], %260 {strides = array<i32>} : memref<288x256xf32, #tpu.memory_space<vmem>>, vector<16x64xf32>,
    %c0_218 = arith.constant 0 : index
    %c18_219 = arith.constant 18 : index
    %262 = vector.load %arg43[%c0_218, %c18_219] : memref<32x290xf32, #tpu.memory_space<vmem>>, vector<16x64xf32>
    %cst_220 = arith.constant 0.000000e+00 : f32
    %263 = vector.shape_cast %166 : vector<1x64xi1> to vector<1x64xi1>
    %264 = vector.broadcast %263 : vector<1x64xi1> to vector<16x64xi1>
    %265 = vector.broadcast %cst_220 : f32 to vector<16x64xf32>
    %266 = arith.select %264, %262, %265 : vector<16x64xi1>, vector<16x64xf32>
    %c128 = arith.constant 128 : index
    %c0_221 = arith.constant 0 : index
    %267 = vector.load %arg44[%c128, %c0_221] : memref<288x256xf32, #tpu.memory_space<vmem>>, vector<16x64xf32>
    tpu.vector_store %arg44[%c128, %c0_221], %266 {strides = array<i32>} : memref<288x256xf32, #tpu.memory_space<vmem>>, vector<16x64xf32>,
    %c0_222 = arith.constant 0 : index
    %c0_223 = arith.constant 0 : index
    %268 = vector.load %arg44[%c0_222, %c0_223] : memref<288x256xf32, #tpu.memory_space<vmem>>, vector<144x64xf32>
    %269 = arith.truncf %268 : vector<144x64xf32> to vector<144x64xbf16>
    %c0_224 = arith.constant 0 : index
    %c0_225 = arith.constant 0 : index
    %270 = vector.load %arg9[%c0_224, %c0_225] : memref<16x144xbf16, #tpu.memory_space<vmem>>, vector<16x144xbf16>
    %cst_226 = arith.constant dense<0.000000e+00> : vector<16x64xf32>
    %271 = tpu.matmul %270, %269, %cst_226 {dimension_numbers = #tpu.dot_dimension_numbers<[1], [0], [0], [1], [0, 0, 1, 1], [], []>} : vector<16x144xbf16>, vector<144x64xbf16>, vector<16x64xf32> -> vector<16x64xf32>
    %c0_227 = arith.constant 0 : index
    %c0_228 = arith.constant 0 : index
    %272 = vector.load %arg10[%c0_227, %c0_228] : memref<16x1xf32, #tpu.memory_space<vmem>>, vector<16x1xf32>
    %273 = vector.broadcast %272 : vector<16x1xf32> to vector<16x64xf32>
    %274 = arith.addf %271, %273 : vector<16x64xf32>
    %cst_229 = arith.constant 0.000000e+00 : f32
    %275 = vector.broadcast %cst_229 : f32 to vector<16x64xf32>
    %276 = arith.maximumf %274, %275 : vector<16x64xf32>
    %c0_230 = arith.constant 0 : index
    %c0_231 = arith.constant 0 : index
    %277 = vector.load %arg43[%c0_230, %c0_231] : memref<32x290xf32, #tpu.memory_space<vmem>>, vector<16x64xf32>
    tpu.vector_store %arg43[%c0_230, %c0_231], %276 {strides = array<i32>} : memref<32x290xf32, #tpu.memory_space<vmem>>, vector<16x64xf32>,
    %cst_232 = arith.constant 0.000000e+00 : f32
    %278 = vector.broadcast %cst_232 : f32 to vector<16x9xf32>
    %c0_233 = arith.constant 0 : index
    %c64_234 = arith.constant 64 : index
    %279 = vector.load %arg43[%c0_233, %c64_234] : memref<32x290xf32, #tpu.memory_space<vmem>>, vector<16x9xf32>
    tpu.vector_store %arg43[%c0_233, %c64_234], %278 {strides = array<i32>} : memref<32x290xf32, #tpu.memory_space<vmem>>, vector<16x9xf32>,
    %c0_235 = arith.constant 0 : index
    %c1_236 = arith.constant 1 : index
    %280 = vector.load %arg43[%c0_235, %c1_236] : memref<32x290xf32, #tpu.memory_space<vmem>>, vector<16x64xf32>
    %c0_237 = arith.constant 0 : index
    %c8_238 = arith.constant 8 : index
    %281 = vector.load %arg43[%c0_237, %c8_238] : memref<32x290xf32, #tpu.memory_space<vmem>>, vector<16x64xf32>
    %c0_239 = arith.constant 0 : index
    %c9_240 = arith.constant 9 : index
    %282 = vector.load %arg43[%c0_239, %c9_240] : memref<32x290xf32, #tpu.memory_space<vmem>>, vector<16x64xf32>
    %283 = arith.maximumf %276, %280 : vector<16x64xf32>
    %284 = arith.maximumf %281, %282 : vector<16x64xf32>
    %285 = arith.maximumf %283, %284 : vector<16x64xf32>
    %286 = arith.truncf %285 : vector<16x64xf32> to vector<16x64xbf16>
    %c0_241 = arith.constant 0 : index
    %c0_242 = arith.constant 0 : index
    %287 = vector.load %arg11[%c0_241, %c0_242] : memref<64x16xbf16, #tpu.memory_space<vmem>>, vector<64x16xbf16>
    %cst_243 = arith.constant dense<0.000000e+00> : vector<16x16xf32>
    %288 = tpu.matmul %286, %287, %cst_243 {dimension_numbers = #tpu.dot_dimension_numbers<[1], [0], [0], [1], [0, 0, 1, 1], [], []>} : vector<16x64xbf16>, vector<64x16xbf16>, vector<16x16xf32> -> vector<16x16xf32>
    %289 = tpu.iota {dimensions = array<i32: 1>} : vector<1x16xi32>
    %c4_i32 = arith.constant 4 : i32
    %c0_i32_244 = arith.constant 0 : i32
    %290 = arith.cmpi eq, %c4_i32, %c0_i32_244 : i32
    %c1_i32_245 = arith.constant 1 : i32
    %291 = arith.select %290, %c1_i32_245, %c4_i32 : i32
    %292 = vector.broadcast %291 : i32 to vector<1x16xi32>
    %293 = arith.remsi %289, %292 : vector<1x16xi32>
    %c0_i32_246 = arith.constant 0 : i32
    %294 = vector.broadcast %c0_i32_246 : i32 to vector<1x16xi32>
    %295 = arith.cmpi ne, %293, %294 : vector<1x16xi32>
    %c0_i32_247 = arith.constant 0 : i32
    %296 = vector.broadcast %c0_i32_247 : i32 to vector<1x16xi32>
    %297 = arith.cmpi slt, %293, %296 : vector<1x16xi32>
    %c0_i32_248 = arith.constant 0 : i32
    %298 = arith.cmpi slt, %291, %c0_i32_248 : i32
    %299 = vector.broadcast %298 : i1 to vector<1x16xi1>
    %300 = vector.broadcast %299 : vector<1x16xi1> to vector<1x16xi1>
    %301 = arith.xori %297, %300 : vector<1x16xi1>
    %302 = arith.andi %301, %295 : vector<1x16xi1>
    %303 = vector.broadcast %291 : i32 to vector<1x16xi32>
    %304 = arith.addi %293, %303 : vector<1x16xi32>
    %305 = arith.select %302, %304, %293 : vector<1x16xi1>, vector<1x16xi32>
    %c0_i32_249 = arith.constant 0 : i32
    %306 = vector.broadcast %c0_i32_249 : i32 to vector<1x16xi32>
    %307 = arith.cmpi ne, %305, %306 : vector<1x16xi32>
    %c3_i32 = arith.constant 3 : i32
    %308 = vector.broadcast %c3_i32 : i32 to vector<1x16xi32>
    %309 = arith.cmpi ne, %305, %308 : vector<1x16xi32>
    %cst_250 = arith.constant 0.000000e+00 : f32
    %310 = vector.broadcast %cst_250 : f32 to vector<16x5xf32>
    %c0_251 = arith.constant 0 : index
    %c0_252 = arith.constant 0 : index
    %311 = vector.load %arg43[%c0_251, %c0_252] : memref<32x290xf32, #tpu.memory_space<vmem>>, vector<16x5xf32>
    tpu.vector_store %arg43[%c0_251, %c0_252], %310 {strides = array<i32>} : memref<32x290xf32, #tpu.memory_space<vmem>>, vector<16x5xf32>,
    %c0_253 = arith.constant 0 : index
    %c5 = arith.constant 5 : index
    %312 = vector.load %arg43[%c0_253, %c5] : memref<32x290xf32, #tpu.memory_space<vmem>>, vector<16x16xf32>
    tpu.vector_store %arg43[%c0_253, %c5], %288 {strides = array<i32>} : memref<32x290xf32, #tpu.memory_space<vmem>>, vector<16x16xf32>,
    %c0_254 = arith.constant 0 : index
    %c21 = arith.constant 21 : index
    %313 = vector.load %arg43[%c0_254, %c21] : memref<32x290xf32, #tpu.memory_space<vmem>>, vector<16x5xf32>
    tpu.vector_store %arg43[%c0_254, %c21], %310 {strides = array<i32>} : memref<32x290xf32, #tpu.memory_space<vmem>>, vector<16x5xf32>,
    %c0_255 = arith.constant 0 : index
    %c0_256 = arith.constant 0 : index
    %314 = vector.load %arg43[%c0_255, %c0_256] : memref<32x290xf32, #tpu.memory_space<vmem>>, vector<16x16xf32>
    %cst_257 = arith.constant 0.000000e+00 : f32
    %315 = vector.shape_cast %307 : vector<1x16xi1> to vector<1x16xi1>
    %316 = vector.broadcast %315 : vector<1x16xi1> to vector<16x16xi1>
    %317 = vector.broadcast %cst_257 : f32 to vector<16x16xf32>
    %318 = arith.select %316, %314, %317 : vector<16x16xi1>, vector<16x16xf32>
    %c0_258 = arith.constant 0 : index
    %c0_259 = arith.constant 0 : index
    %319 = vector.load %arg44[%c0_258, %c0_259] : memref<288x256xf32, #tpu.memory_space<vmem>>, vector<16x16xf32>
    tpu.vector_store %arg44[%c0_258, %c0_259], %318 {strides = array<i32>} : memref<288x256xf32, #tpu.memory_space<vmem>>, vector<16x16xf32>,
    %c0_260 = arith.constant 0 : index
    %c1_261 = arith.constant 1 : index
    %320 = vector.load %arg43[%c0_260, %c1_261] : memref<32x290xf32, #tpu.memory_space<vmem>>, vector<16x16xf32>
    %c16_262 = arith.constant 16 : index
    %c0_263 = arith.constant 0 : index
    %321 = vector.load %arg44[%c16_262, %c0_263] : memref<288x256xf32, #tpu.memory_space<vmem>>, vector<16x16xf32>
    tpu.vector_store %arg44[%c16_262, %c0_263], %320 {strides = array<i32>} : memref<288x256xf32, #tpu.memory_space<vmem>>, vector<16x16xf32>,
    %c0_264 = arith.constant 0 : index
    %c2_265 = arith.constant 2 : index
    %322 = vector.load %arg43[%c0_264, %c2_265] : memref<32x290xf32, #tpu.memory_space<vmem>>, vector<16x16xf32>
    %cst_266 = arith.constant 0.000000e+00 : f32
    %323 = vector.shape_cast %309 : vector<1x16xi1> to vector<1x16xi1>
    %324 = vector.broadcast %323 : vector<1x16xi1> to vector<16x16xi1>
    %325 = vector.broadcast %cst_266 : f32 to vector<16x16xf32>
    %326 = arith.select %324, %322, %325 : vector<16x16xi1>, vector<16x16xf32>
    %c32_267 = arith.constant 32 : index
    %c0_268 = arith.constant 0 : index
    %327 = vector.load %arg44[%c32_267, %c0_268] : memref<288x256xf32, #tpu.memory_space<vmem>>, vector<16x16xf32>
    tpu.vector_store %arg44[%c32_267, %c0_268], %326 {strides = array<i32>} : memref<288x256xf32, #tpu.memory_space<vmem>>, vector<16x16xf32>,
    %c0_269 = arith.constant 0 : index
    %c4 = arith.constant 4 : index
    %328 = vector.load %arg43[%c0_269, %c4] : memref<32x290xf32, #tpu.memory_space<vmem>>, vector<16x16xf32>
    %cst_270 = arith.constant 0.000000e+00 : f32
    %329 = vector.shape_cast %307 : vector<1x16xi1> to vector<1x16xi1>
    %330 = vector.broadcast %329 : vector<1x16xi1> to vector<16x16xi1>
    %331 = vector.broadcast %cst_270 : f32 to vector<16x16xf32>
    %332 = arith.select %330, %328, %331 : vector<16x16xi1>, vector<16x16xf32>
    %c48_271 = arith.constant 48 : index
    %c0_272 = arith.constant 0 : index
    %333 = vector.load %arg44[%c48_271, %c0_272] : memref<288x256xf32, #tpu.memory_space<vmem>>, vector<16x16xf32>
    tpu.vector_store %arg44[%c48_271, %c0_272], %332 {strides = array<i32>} : memref<288x256xf32, #tpu.memory_space<vmem>>, vector<16x16xf32>,
    %c0_273 = arith.constant 0 : index
    %c5_274 = arith.constant 5 : index
    %334 = vector.load %arg43[%c0_273, %c5_274] : memref<32x290xf32, #tpu.memory_space<vmem>>, vector<16x16xf32>
    %c64_275 = arith.constant 64 : index
    %c0_276 = arith.constant 0 : index
    %335 = vector.load %arg44[%c64_275, %c0_276] : memref<288x256xf32, #tpu.memory_space<vmem>>, vector<16x16xf32>
    tpu.vector_store %arg44[%c64_275, %c0_276], %334 {strides = array<i32>} : memref<288x256xf32, #tpu.memory_space<vmem>>, vector<16x16xf32>,
    %c0_277 = arith.constant 0 : index
    %c6 = arith.constant 6 : index
    %336 = vector.load %arg43[%c0_277, %c6] : memref<32x290xf32, #tpu.memory_space<vmem>>, vector<16x16xf32>
    %cst_278 = arith.constant 0.000000e+00 : f32
    %337 = vector.shape_cast %309 : vector<1x16xi1> to vector<1x16xi1>
    %338 = vector.broadcast %337 : vector<1x16xi1> to vector<16x16xi1>
    %339 = vector.broadcast %cst_278 : f32 to vector<16x16xf32>
    %340 = arith.select %338, %336, %339 : vector<16x16xi1>, vector<16x16xf32>
    %c80_279 = arith.constant 80 : index
    %c0_280 = arith.constant 0 : index
    %341 = vector.load %arg44[%c80_279, %c0_280] : memref<288x256xf32, #tpu.memory_space<vmem>>, vector<16x16xf32>
    tpu.vector_store %arg44[%c80_279, %c0_280], %340 {strides = array<i32>} : memref<288x256xf32, #tpu.memory_space<vmem>>, vector<16x16xf32>,
    %c0_281 = arith.constant 0 : index
    %c8_282 = arith.constant 8 : index
    %342 = vector.load %arg43[%c0_281, %c8_282] : memref<32x290xf32, #tpu.memory_space<vmem>>, vector<16x16xf32>
    %cst_283 = arith.constant 0.000000e+00 : f32
    %343 = vector.shape_cast %307 : vector<1x16xi1> to vector<1x16xi1>
    %344 = vector.broadcast %343 : vector<1x16xi1> to vector<16x16xi1>
    %345 = vector.broadcast %cst_283 : f32 to vector<16x16xf32>
    %346 = arith.select %344, %342, %345 : vector<16x16xi1>, vector<16x16xf32>
    %c96_284 = arith.constant 96 : index
    %c0_285 = arith.constant 0 : index
    %347 = vector.load %arg44[%c96_284, %c0_285] : memref<288x256xf32, #tpu.memory_space<vmem>>, vector<16x16xf32>
    tpu.vector_store %arg44[%c96_284, %c0_285], %346 {strides = array<i32>} : memref<288x256xf32, #tpu.memory_space<vmem>>, vector<16x16xf32>,
    %c0_286 = arith.constant 0 : index
    %c9_287 = arith.constant 9 : index
    %348 = vector.load %arg43[%c0_286, %c9_287] : memref<32x290xf32, #tpu.memory_space<vmem>>, vector<16x16xf32>
    %c112_288 = arith.constant 112 : index
    %c0_289 = arith.constant 0 : index
    %349 = vector.load %arg44[%c112_288, %c0_289] : memref<288x256xf32, #tpu.memory_space<vmem>>, vector<16x16xf32>
    tpu.vector_store %arg44[%c112_288, %c0_289], %348 {strides = array<i32>} : memref<288x256xf32, #tpu.memory_space<vmem>>, vector<16x16xf32>,
    %c0_290 = arith.constant 0 : index
    %c10_291 = arith.constant 10 : index
    %350 = vector.load %arg43[%c0_290, %c10_291] : memref<32x290xf32, #tpu.memory_space<vmem>>, vector<16x16xf32>
    %cst_292 = arith.constant 0.000000e+00 : f32
    %351 = vector.shape_cast %309 : vector<1x16xi1> to vector<1x16xi1>
    %352 = vector.broadcast %351 : vector<1x16xi1> to vector<16x16xi1>
    %353 = vector.broadcast %cst_292 : f32 to vector<16x16xf32>
    %354 = arith.select %352, %350, %353 : vector<16x16xi1>, vector<16x16xf32>
    %c128_293 = arith.constant 128 : index
    %c0_294 = arith.constant 0 : index
    %355 = vector.load %arg44[%c128_293, %c0_294] : memref<288x256xf32, #tpu.memory_space<vmem>>, vector<16x16xf32>
    tpu.vector_store %arg44[%c128_293, %c0_294], %354 {strides = array<i32>} : memref<288x256xf32, #tpu.memory_space<vmem>>, vector<16x16xf32>,
    %c0_295 = arith.constant 0 : index
    %c0_296 = arith.constant 0 : index
    %356 = vector.load %arg44[%c0_295, %c0_296] : memref<288x256xf32, #tpu.memory_space<vmem>>, vector<144x16xf32>
    %357 = arith.truncf %356 : vector<144x16xf32> to vector<144x16xbf16>
    %c0_297 = arith.constant 0 : index
    %c0_298 = arith.constant 0 : index
    %358 = vector.load %arg12[%c0_297, %c0_298] : memref<32x144xbf16, #tpu.memory_space<vmem>>, vector<32x144xbf16>
    %cst_299 = arith.constant dense<0.000000e+00> : vector<32x16xf32>
    %359 = tpu.matmul %358, %357, %cst_299 {dimension_numbers = #tpu.dot_dimension_numbers<[1], [0], [0], [1], [0, 0, 1, 1], [], []>} : vector<32x144xbf16>, vector<144x16xbf16>, vector<32x16xf32> -> vector<32x16xf32>
    %c0_300 = arith.constant 0 : index
    %c0_301 = arith.constant 0 : index
    %360 = vector.load %arg13[%c0_300, %c0_301] : memref<32x1xf32, #tpu.memory_space<vmem>>, vector<32x1xf32>
    %361 = vector.broadcast %360 : vector<32x1xf32> to vector<32x16xf32>
    %362 = arith.addf %359, %361 : vector<32x16xf32>
    %cst_302 = arith.constant 0.000000e+00 : f32
    %363 = vector.broadcast %cst_302 : f32 to vector<32x16xf32>
    %364 = arith.maximumf %362, %363 : vector<32x16xf32>
    %cst_303 = arith.constant 0.000000e+00 : f32
    %365 = vector.broadcast %cst_303 : f32 to vector<32x5xf32>
    %c0_304 = arith.constant 0 : index
    %c0_305 = arith.constant 0 : index
    %366 = vector.load %arg43[%c0_304, %c0_305] : memref<32x290xf32, #tpu.memory_space<vmem>>, vector<32x5xf32>
    tpu.vector_store %arg43[%c0_304, %c0_305], %365 {strides = array<i32>} : memref<32x290xf32, #tpu.memory_space<vmem>>, vector<32x5xf32>,
    %c0_306 = arith.constant 0 : index
    %c5_307 = arith.constant 5 : index
    %367 = vector.load %arg43[%c0_306, %c5_307] : memref<32x290xf32, #tpu.memory_space<vmem>>, vector<32x16xf32>
    tpu.vector_store %arg43[%c0_306, %c5_307], %364 {strides = array<i32>} : memref<32x290xf32, #tpu.memory_space<vmem>>, vector<32x16xf32>,
    %c0_308 = arith.constant 0 : index
    %c21_309 = arith.constant 21 : index
    %368 = vector.load %arg43[%c0_308, %c21_309] : memref<32x290xf32, #tpu.memory_space<vmem>>, vector<32x5xf32>
    tpu.vector_store %arg43[%c0_308, %c21_309], %365 {strides = array<i32>} : memref<32x290xf32, #tpu.memory_space<vmem>>, vector<32x5xf32>,
    %c0_310 = arith.constant 0 : index
    %c0_311 = arith.constant 0 : index
    %369 = vector.load %arg43[%c0_310, %c0_311] : memref<32x290xf32, #tpu.memory_space<vmem>>, vector<32x16xf32>
    %cst_312 = arith.constant 0.000000e+00 : f32
    %370 = vector.shape_cast %307 : vector<1x16xi1> to vector<1x16xi1>
    %371 = vector.broadcast %370 : vector<1x16xi1> to vector<32x16xi1>
    %372 = vector.broadcast %cst_312 : f32 to vector<32x16xf32>
    %373 = arith.select %371, %369, %372 : vector<32x16xi1>, vector<32x16xf32>
    %c0_313 = arith.constant 0 : index
    %c0_314 = arith.constant 0 : index
    %374 = vector.load %arg44[%c0_313, %c0_314] : memref<288x256xf32, #tpu.memory_space<vmem>>, vector<32x16xf32>
    tpu.vector_store %arg44[%c0_313, %c0_314], %373 {strides = array<i32>} : memref<288x256xf32, #tpu.memory_space<vmem>>, vector<32x16xf32>,
    %c0_315 = arith.constant 0 : index
    %c1_316 = arith.constant 1 : index
    %375 = vector.load %arg43[%c0_315, %c1_316] : memref<32x290xf32, #tpu.memory_space<vmem>>, vector<32x16xf32>
    %c32_317 = arith.constant 32 : index
    %c0_318 = arith.constant 0 : index
    %376 = vector.load %arg44[%c32_317, %c0_318] : memref<288x256xf32, #tpu.memory_space<vmem>>, vector<32x16xf32>
    tpu.vector_store %arg44[%c32_317, %c0_318], %375 {strides = array<i32>} : memref<288x256xf32, #tpu.memory_space<vmem>>, vector<32x16xf32>,
    %c0_319 = arith.constant 0 : index
    %c2_320 = arith.constant 2 : index
    %377 = vector.load %arg43[%c0_319, %c2_320] : memref<32x290xf32, #tpu.memory_space<vmem>>, vector<32x16xf32>
    %cst_321 = arith.constant 0.000000e+00 : f32
    %378 = vector.shape_cast %309 : vector<1x16xi1> to vector<1x16xi1>
    %379 = vector.broadcast %378 : vector<1x16xi1> to vector<32x16xi1>
    %380 = vector.broadcast %cst_321 : f32 to vector<32x16xf32>
    %381 = arith.select %379, %377, %380 : vector<32x16xi1>, vector<32x16xf32>
    %c64_322 = arith.constant 64 : index
    %c0_323 = arith.constant 0 : index
    %382 = vector.load %arg44[%c64_322, %c0_323] : memref<288x256xf32, #tpu.memory_space<vmem>>, vector<32x16xf32>
    tpu.vector_store %arg44[%c64_322, %c0_323], %381 {strides = array<i32>} : memref<288x256xf32, #tpu.memory_space<vmem>>, vector<32x16xf32>,
    %c0_324 = arith.constant 0 : index
    %c4_325 = arith.constant 4 : index
    %383 = vector.load %arg43[%c0_324, %c4_325] : memref<32x290xf32, #tpu.memory_space<vmem>>, vector<32x16xf32>
    %cst_326 = arith.constant 0.000000e+00 : f32
    %384 = vector.shape_cast %307 : vector<1x16xi1> to vector<1x16xi1>
    %385 = vector.broadcast %384 : vector<1x16xi1> to vector<32x16xi1>
    %386 = vector.broadcast %cst_326 : f32 to vector<32x16xf32>
    %387 = arith.select %385, %383, %386 : vector<32x16xi1>, vector<32x16xf32>
    %c96_327 = arith.constant 96 : index
    %c0_328 = arith.constant 0 : index
    %388 = vector.load %arg44[%c96_327, %c0_328] : memref<288x256xf32, #tpu.memory_space<vmem>>, vector<32x16xf32>
    tpu.vector_store %arg44[%c96_327, %c0_328], %387 {strides = array<i32>} : memref<288x256xf32, #tpu.memory_space<vmem>>, vector<32x16xf32>,
    %c0_329 = arith.constant 0 : index
    %c5_330 = arith.constant 5 : index
    %389 = vector.load %arg43[%c0_329, %c5_330] : memref<32x290xf32, #tpu.memory_space<vmem>>, vector<32x16xf32>
    %c128_331 = arith.constant 128 : index
    %c0_332 = arith.constant 0 : index
    %390 = vector.load %arg44[%c128_331, %c0_332] : memref<288x256xf32, #tpu.memory_space<vmem>>, vector<32x16xf32>
    tpu.vector_store %arg44[%c128_331, %c0_332], %389 {strides = array<i32>} : memref<288x256xf32, #tpu.memory_space<vmem>>, vector<32x16xf32>,
    %c0_333 = arith.constant 0 : index
    %c6_334 = arith.constant 6 : index
    %391 = vector.load %arg43[%c0_333, %c6_334] : memref<32x290xf32, #tpu.memory_space<vmem>>, vector<32x16xf32>
    %cst_335 = arith.constant 0.000000e+00 : f32
    %392 = vector.shape_cast %309 : vector<1x16xi1> to vector<1x16xi1>
    %393 = vector.broadcast %392 : vector<1x16xi1> to vector<32x16xi1>
    %394 = vector.broadcast %cst_335 : f32 to vector<32x16xf32>
    %395 = arith.select %393, %391, %394 : vector<32x16xi1>, vector<32x16xf32>
    %c160 = arith.constant 160 : index
    %c0_336 = arith.constant 0 : index
    %396 = vector.load %arg44[%c160, %c0_336] : memref<288x256xf32, #tpu.memory_space<vmem>>, vector<32x16xf32>
    tpu.vector_store %arg44[%c160, %c0_336], %395 {strides = array<i32>} : memref<288x256xf32, #tpu.memory_space<vmem>>, vector<32x16xf32>,
    %c0_337 = arith.constant 0 : index
    %c8_338 = arith.constant 8 : index
    %397 = vector.load %arg43[%c0_337, %c8_338] : memref<32x290xf32, #tpu.memory_space<vmem>>, vector<32x16xf32>
    %cst_339 = arith.constant 0.000000e+00 : f32
    %398 = vector.shape_cast %307 : vector<1x16xi1> to vector<1x16xi1>
    %399 = vector.broadcast %398 : vector<1x16xi1> to vector<32x16xi1>
    %400 = vector.broadcast %cst_339 : f32 to vector<32x16xf32>
    %401 = arith.select %399, %397, %400 : vector<32x16xi1>, vector<32x16xf32>
    %c192 = arith.constant 192 : index
    %c0_340 = arith.constant 0 : index
    %402 = vector.load %arg44[%c192, %c0_340] : memref<288x256xf32, #tpu.memory_space<vmem>>, vector<32x16xf32>
    tpu.vector_store %arg44[%c192, %c0_340], %401 {strides = array<i32>} : memref<288x256xf32, #tpu.memory_space<vmem>>, vector<32x16xf32>,
    %c0_341 = arith.constant 0 : index
    %c9_342 = arith.constant 9 : index
    %403 = vector.load %arg43[%c0_341, %c9_342] : memref<32x290xf32, #tpu.memory_space<vmem>>, vector<32x16xf32>
    %c224 = arith.constant 224 : index
    %c0_343 = arith.constant 0 : index
    %404 = vector.load %arg44[%c224, %c0_343] : memref<288x256xf32, #tpu.memory_space<vmem>>, vector<32x16xf32>
    tpu.vector_store %arg44[%c224, %c0_343], %403 {strides = array<i32>} : memref<288x256xf32, #tpu.memory_space<vmem>>, vector<32x16xf32>,
    %c0_344 = arith.constant 0 : index
    %c10_345 = arith.constant 10 : index
    %405 = vector.load %arg43[%c0_344, %c10_345] : memref<32x290xf32, #tpu.memory_space<vmem>>, vector<32x16xf32>
    %cst_346 = arith.constant 0.000000e+00 : f32
    %406 = vector.shape_cast %309 : vector<1x16xi1> to vector<1x16xi1>
    %407 = vector.broadcast %406 : vector<1x16xi1> to vector<32x16xi1>
    %408 = vector.broadcast %cst_346 : f32 to vector<32x16xf32>
    %409 = arith.select %407, %405, %408 : vector<32x16xi1>, vector<32x16xf32>
    %c256_347 = arith.constant 256 : index
    %c0_348 = arith.constant 0 : index
    %410 = vector.load %arg44[%c256_347, %c0_348] : memref<288x256xf32, #tpu.memory_space<vmem>>, vector<32x16xf32>
    tpu.vector_store %arg44[%c256_347, %c0_348], %409 {strides = array<i32>} : memref<288x256xf32, #tpu.memory_space<vmem>>, vector<32x16xf32>,
    %c0_349 = arith.constant 0 : index
    %c0_350 = arith.constant 0 : index
    %411 = vector.load %arg44[%c0_349, %c0_350] : memref<288x256xf32, #tpu.memory_space<vmem>>, vector<288x16xf32>
    %412 = arith.truncf %411 : vector<288x16xf32> to vector<288x16xbf16>
    %c0_351 = arith.constant 0 : index
    %c0_352 = arith.constant 0 : index
    %413 = vector.load %arg14[%c0_351, %c0_352] : memref<32x288xbf16, #tpu.memory_space<vmem>>, vector<32x288xbf16>
    %cst_353 = arith.constant dense<0.000000e+00> : vector<32x16xf32>
    %414 = tpu.matmul %413, %412, %cst_353 {dimension_numbers = #tpu.dot_dimension_numbers<[1], [0], [0], [1], [0, 0, 1, 1], [], []>} : vector<32x288xbf16>, vector<288x16xbf16>, vector<32x16xf32> -> vector<32x16xf32>
    %c0_354 = arith.constant 0 : index
    %c0_355 = arith.constant 0 : index
    %415 = vector.load %arg15[%c0_354, %c0_355] : memref<32x1xf32, #tpu.memory_space<vmem>>, vector<32x1xf32>
    %416 = vector.broadcast %415 : vector<32x1xf32> to vector<32x16xf32>
    %417 = arith.addf %414, %416 : vector<32x16xf32>
    %cst_356 = arith.constant 0.000000e+00 : f32
    %418 = vector.broadcast %cst_356 : f32 to vector<32x16xf32>
    %419 = arith.maximumf %417, %418 : vector<32x16xf32>
    %420 = arith.truncf %419 : vector<32x16xf32> to vector<32x16xbf16>
    %c0_357 = arith.constant 0 : index
    %c0_358 = arith.constant 0 : index
    %421 = vector.load %arg16[%c0_357, %c0_358] : memref<16x64xbf16, #tpu.memory_space<vmem>>, vector<16x64xbf16>
    %cst_359 = arith.constant dense<0.000000e+00> : vector<32x64xf32>
    %422 = tpu.matmul %420, %421, %cst_359 {dimension_numbers = #tpu.dot_dimension_numbers<[1], [0], [0], [1], [0, 0, 1, 1], [], []>} : vector<32x16xbf16>, vector<16x64xbf16>, vector<32x64xf32> -> vector<32x64xf32>
    %c0_360 = arith.constant 0 : index
    %c0_361 = arith.constant 0 : index
    %423 = vector.load %arg17[%c0_360, %c0_361] : memref<8x32xbf16, #tpu.memory_space<vmem>>, vector<8x32xbf16>
    %424 = arith.truncf %422 : vector<32x64xf32> to vector<32x64xbf16>
    %cst_362 = arith.constant dense<0.000000e+00> : vector<8x64xf32>
    %425 = tpu.matmul %423, %424, %cst_362 {dimension_numbers = #tpu.dot_dimension_numbers<[1], [0], [0], [1], [0, 0, 1, 1], [], []>} : vector<8x32xbf16>, vector<32x64xbf16>, vector<8x64xf32> -> vector<8x64xf32>
    %c0_363 = arith.constant 0 : index
    %c0_364 = arith.constant 0 : index
    %426 = vector.load %arg18[%c0_363, %c0_364] : memref<8x1xf32, #tpu.memory_space<vmem>>, vector<8x1xf32>
    %427 = vector.broadcast %426 : vector<8x1xf32> to vector<8x64xf32>
    %428 = arith.addf %425, %427 : vector<8x64xf32>
    %c0_365 = arith.constant 0 : index
    %c0_366 = arith.constant 0 : index
    %429 = vector.load %arg19[%c0_365, %c0_366] : memref<8x16xbf16, #tpu.memory_space<vmem>>, vector<8x16xbf16>
    %430 = arith.truncf %276 : vector<16x64xf32> to vector<16x64xbf16>
    %cst_367 = arith.constant dense<0.000000e+00> : vector<8x64xf32>
    %431 = tpu.matmul %429, %430, %cst_367 {dimension_numbers = #tpu.dot_dimension_numbers<[1], [0], [0], [1], [0, 0, 1, 1], [], []>} : vector<8x16xbf16>, vector<16x64xbf16>, vector<8x64xf32> -> vector<8x64xf32>
    %c0_368 = arith.constant 0 : index
    %c0_369 = arith.constant 0 : index
    %432 = vector.load %arg20[%c0_368, %c0_369] : memref<8x1xf32, #tpu.memory_space<vmem>>, vector<8x1xf32>
    %433 = vector.broadcast %432 : vector<8x1xf32> to vector<8x64xf32>
    %434 = arith.addf %431, %433 : vector<8x64xf32>
    %435 = arith.addf %428, %434 : vector<8x64xf32>
    %cst_370 = arith.constant 0.000000e+00 : f32
    %436 = vector.broadcast %cst_370 : f32 to vector<8x64xf32>
    %437 = arith.maximumf %435, %436 : vector<8x64xf32>
    %c0_371 = arith.constant 0 : index
    %c0_372 = arith.constant 0 : index
    %438 = vector.load %arg21[%c0_371, %c0_372] : memref<8x1xf32, #tpu.memory_space<vmem>>, vector<8x1xf32>
    %439 = vector.broadcast %438 : vector<8x1xf32> to vector<8x64xf32>
    %440 = arith.mulf %437, %439 : vector<8x64xf32>
    %cst_373 = arith.constant dense<0.000000e+00> : vector<64xf32>
    %441 = vector.multi_reduction <add>, %440, %cst_373 [0] : vector<8x64xf32> to vector<64xf32>
    %442 = vector.shape_cast %441 : vector<64xf32> to vector<1x64xf32>
    %c0_374 = arith.constant 0 : index
    %c0_375 = arith.constant 0 : index
    %443 = vector.load %arg22[%c0_374, %c0_375] : memref<1x1xf32, #tpu.memory_space<vmem>>, vector<1x1xf32>
    %444 = vector.broadcast %443 : vector<1x1xf32> to vector<1x64xf32>
    %445 = arith.addf %442, %444 : vector<1x64xf32>
    %cst_376 = arith.constant 0.000000e+00 : f32
    %446 = vector.broadcast %cst_376 : f32 to vector<1x64xf32>
    %447 = arith.subf %446, %445 : vector<1x64xf32>
    %448 = math.exp %447 : vector<1x64xf32>
    %cst_377 = arith.constant 1.000000e+00 : f32
    %449 = vector.broadcast %cst_377 : f32 to vector<1x64xf32>
    %450 = arith.addf %449, %448 : vector<1x64xf32>
    %cst_378 = arith.constant 1.000000e+00 : f32
    %451 = vector.broadcast %cst_378 : f32 to vector<1x64xf32>
    %452 = arith.divf %451, %450 : vector<1x64xf32>
    %453 = vector.broadcast %452 : vector<1x64xf32> to vector<16x64xf32>
    %454 = arith.mulf %276, %453 : vector<16x64xf32>
    %cst_379 = arith.constant 0.000000e+00 : f32
    %455 = vector.broadcast %cst_379 : f32 to vector<32x9xf32>
    %c0_380 = arith.constant 0 : index
    %c0_381 = arith.constant 0 : index
    %456 = vector.load %arg43[%c0_380, %c0_381] : memref<32x290xf32, #tpu.memory_space<vmem>>, vector<32x9xf32>
    tpu.vector_store %arg43[%c0_380, %c0_381], %455 {strides = array<i32>} : memref<32x290xf32, #tpu.memory_space<vmem>>, vector<32x9xf32>,
    %c0_382 = arith.constant 0 : index
    %c9_383 = arith.constant 9 : index
    %457 = vector.load %arg43[%c0_382, %c9_383] : memref<32x290xf32, #tpu.memory_space<vmem>>, vector<32x64xf32>
    tpu.vector_store %arg43[%c0_382, %c9_383], %422 {strides = array<i32>} : memref<32x290xf32, #tpu.memory_space<vmem>>, vector<32x64xf32>,
    %c0_384 = arith.constant 0 : index
    %c73_385 = arith.constant 73 : index
    %458 = vector.load %arg43[%c0_384, %c73_385] : memref<32x290xf32, #tpu.memory_space<vmem>>, vector<32x9xf32>
    tpu.vector_store %arg43[%c0_384, %c73_385], %455 {strides = array<i32>} : memref<32x290xf32, #tpu.memory_space<vmem>>, vector<32x9xf32>,
    %c0_386 = arith.constant 0 : index
    %c0_387 = arith.constant 0 : index
    %459 = vector.load %arg43[%c0_386, %c0_387] : memref<32x290xf32, #tpu.memory_space<vmem>>, vector<32x64xf32>
    %cst_388 = arith.constant 0.000000e+00 : f32
    %460 = vector.shape_cast %164 : vector<1x64xi1> to vector<1x64xi1>
    %461 = vector.broadcast %460 : vector<1x64xi1> to vector<32x64xi1>
    %462 = vector.broadcast %cst_388 : f32 to vector<32x64xf32>
    %463 = arith.select %461, %459, %462 : vector<32x64xi1>, vector<32x64xf32>
    %c0_389 = arith.constant 0 : index
    %c0_390 = arith.constant 0 : index
    %464 = vector.load %arg44[%c0_389, %c0_390] : memref<288x256xf32, #tpu.memory_space<vmem>>, vector<32x64xf32>
    tpu.vector_store %arg44[%c0_389, %c0_390], %463 {strides = array<i32>} : memref<288x256xf32, #tpu.memory_space<vmem>>, vector<32x64xf32>,
    %c0_391 = arith.constant 0 : index
    %c1_392 = arith.constant 1 : index
    %465 = vector.load %arg43[%c0_391, %c1_392] : memref<32x290xf32, #tpu.memory_space<vmem>>, vector<32x64xf32>
    %c32_393 = arith.constant 32 : index
    %c0_394 = arith.constant 0 : index
    %466 = vector.load %arg44[%c32_393, %c0_394] : memref<288x256xf32, #tpu.memory_space<vmem>>, vector<32x64xf32>
    tpu.vector_store %arg44[%c32_393, %c0_394], %465 {strides = array<i32>} : memref<288x256xf32, #tpu.memory_space<vmem>>, vector<32x64xf32>,
    %c0_395 = arith.constant 0 : index
    %c2_396 = arith.constant 2 : index
    %467 = vector.load %arg43[%c0_395, %c2_396] : memref<32x290xf32, #tpu.memory_space<vmem>>, vector<32x64xf32>
    %cst_397 = arith.constant 0.000000e+00 : f32
    %468 = vector.shape_cast %166 : vector<1x64xi1> to vector<1x64xi1>
    %469 = vector.broadcast %468 : vector<1x64xi1> to vector<32x64xi1>
    %470 = vector.broadcast %cst_397 : f32 to vector<32x64xf32>
    %471 = arith.select %469, %467, %470 : vector<32x64xi1>, vector<32x64xf32>
    %c64_398 = arith.constant 64 : index
    %c0_399 = arith.constant 0 : index
    %472 = vector.load %arg44[%c64_398, %c0_399] : memref<288x256xf32, #tpu.memory_space<vmem>>, vector<32x64xf32>
    tpu.vector_store %arg44[%c64_398, %c0_399], %471 {strides = array<i32>} : memref<288x256xf32, #tpu.memory_space<vmem>>, vector<32x64xf32>,
    %c0_400 = arith.constant 0 : index
    %c8_401 = arith.constant 8 : index
    %473 = vector.load %arg43[%c0_400, %c8_401] : memref<32x290xf32, #tpu.memory_space<vmem>>, vector<32x64xf32>
    %cst_402 = arith.constant 0.000000e+00 : f32
    %474 = vector.shape_cast %164 : vector<1x64xi1> to vector<1x64xi1>
    %475 = vector.broadcast %474 : vector<1x64xi1> to vector<32x64xi1>
    %476 = vector.broadcast %cst_402 : f32 to vector<32x64xf32>
    %477 = arith.select %475, %473, %476 : vector<32x64xi1>, vector<32x64xf32>
    %c96_403 = arith.constant 96 : index
    %c0_404 = arith.constant 0 : index
    %478 = vector.load %arg44[%c96_403, %c0_404] : memref<288x256xf32, #tpu.memory_space<vmem>>, vector<32x64xf32>
    tpu.vector_store %arg44[%c96_403, %c0_404], %477 {strides = array<i32>} : memref<288x256xf32, #tpu.memory_space<vmem>>, vector<32x64xf32>,
    %c0_405 = arith.constant 0 : index
    %c9_406 = arith.constant 9 : index
    %479 = vector.load %arg43[%c0_405, %c9_406] : memref<32x290xf32, #tpu.memory_space<vmem>>, vector<32x64xf32>
    %c128_407 = arith.constant 128 : index
    %c0_408 = arith.constant 0 : index
    %480 = vector.load %arg44[%c128_407, %c0_408] : memref<288x256xf32, #tpu.memory_space<vmem>>, vector<32x64xf32>
    tpu.vector_store %arg44[%c128_407, %c0_408], %479 {strides = array<i32>} : memref<288x256xf32, #tpu.memory_space<vmem>>, vector<32x64xf32>,
    %c0_409 = arith.constant 0 : index
    %c10_410 = arith.constant 10 : index
    %481 = vector.load %arg43[%c0_409, %c10_410] : memref<32x290xf32, #tpu.memory_space<vmem>>, vector<32x64xf32>
    %cst_411 = arith.constant 0.000000e+00 : f32
    %482 = vector.shape_cast %166 : vector<1x64xi1> to vector<1x64xi1>
    %483 = vector.broadcast %482 : vector<1x64xi1> to vector<32x64xi1>
    %484 = vector.broadcast %cst_411 : f32 to vector<32x64xf32>
    %485 = arith.select %483, %481, %484 : vector<32x64xi1>, vector<32x64xf32>
    %c160_412 = arith.constant 160 : index
    %c0_413 = arith.constant 0 : index
    %486 = vector.load %arg44[%c160_412, %c0_413] : memref<288x256xf32, #tpu.memory_space<vmem>>, vector<32x64xf32>
    tpu.vector_store %arg44[%c160_412, %c0_413], %485 {strides = array<i32>} : memref<288x256xf32, #tpu.memory_space<vmem>>, vector<32x64xf32>,
    %c0_414 = arith.constant 0 : index
    %c16_415 = arith.constant 16 : index
    %487 = vector.load %arg43[%c0_414, %c16_415] : memref<32x290xf32, #tpu.memory_space<vmem>>, vector<32x64xf32>
    %cst_416 = arith.constant 0.000000e+00 : f32
    %488 = vector.shape_cast %164 : vector<1x64xi1> to vector<1x64xi1>
    %489 = vector.broadcast %488 : vector<1x64xi1> to vector<32x64xi1>
    %490 = vector.broadcast %cst_416 : f32 to vector<32x64xf32>
    %491 = arith.select %489, %487, %490 : vector<32x64xi1>, vector<32x64xf32>
    %c192_417 = arith.constant 192 : index
    %c0_418 = arith.constant 0 : index
    %492 = vector.load %arg44[%c192_417, %c0_418] : memref<288x256xf32, #tpu.memory_space<vmem>>, vector<32x64xf32>
    tpu.vector_store %arg44[%c192_417, %c0_418], %491 {strides = array<i32>} : memref<288x256xf32, #tpu.memory_space<vmem>>, vector<32x64xf32>,
    %c0_419 = arith.constant 0 : index
    %c17_420 = arith.constant 17 : index
    %493 = vector.load %arg43[%c0_419, %c17_420] : memref<32x290xf32, #tpu.memory_space<vmem>>, vector<32x64xf32>
    %c224_421 = arith.constant 224 : index
    %c0_422 = arith.constant 0 : index
    %494 = vector.load %arg44[%c224_421, %c0_422] : memref<288x256xf32, #tpu.memory_space<vmem>>, vector<32x64xf32>
    tpu.vector_store %arg44[%c224_421, %c0_422], %493 {strides = array<i32>} : memref<288x256xf32, #tpu.memory_space<vmem>>, vector<32x64xf32>,
    %c0_423 = arith.constant 0 : index
    %c18_424 = arith.constant 18 : index
    %495 = vector.load %arg43[%c0_423, %c18_424] : memref<32x290xf32, #tpu.memory_space<vmem>>, vector<32x64xf32>
    %cst_425 = arith.constant 0.000000e+00 : f32
    %496 = vector.shape_cast %166 : vector<1x64xi1> to vector<1x64xi1>
    %497 = vector.broadcast %496 : vector<1x64xi1> to vector<32x64xi1>
    %498 = vector.broadcast %cst_425 : f32 to vector<32x64xf32>
    %499 = arith.select %497, %495, %498 : vector<32x64xi1>, vector<32x64xf32>
    %c256_426 = arith.constant 256 : index
    %c0_427 = arith.constant 0 : index
    %500 = vector.load %arg44[%c256_426, %c0_427] : memref<288x256xf32, #tpu.memory_space<vmem>>, vector<32x64xf32>
    tpu.vector_store %arg44[%c256_426, %c0_427], %499 {strides = array<i32>} : memref<288x256xf32, #tpu.memory_space<vmem>>, vector<32x64xf32>,
    %c0_428 = arith.constant 0 : index
    %c0_429 = arith.constant 0 : index
    %501 = vector.load %arg44[%c0_428, %c0_429] : memref<288x256xf32, #tpu.memory_space<vmem>>, vector<288x64xf32>
    %502 = arith.truncf %501 : vector<288x64xf32> to vector<288x64xbf16>
    %c0_430 = arith.constant 0 : index
    %c0_431 = arith.constant 0 : index
    %503 = vector.load %arg23[%c0_430, %c0_431] : memref<16x288xbf16, #tpu.memory_space<vmem>>, vector<16x288xbf16>
    %cst_432 = arith.constant dense<0.000000e+00> : vector<16x64xf32>
    %504 = tpu.matmul %503, %502, %cst_432 {dimension_numbers = #tpu.dot_dimension_numbers<[1], [0], [0], [1], [0, 0, 1, 1], [], []>} : vector<16x288xbf16>, vector<288x64xbf16>, vector<16x64xf32> -> vector<16x64xf32>
    %cst_433 = arith.constant 0.000000e+00 : f32
    %505 = vector.broadcast %cst_433 : f32 to vector<16x9xf32>
    %c0_434 = arith.constant 0 : index
    %c0_435 = arith.constant 0 : index
    %506 = vector.load %arg43[%c0_434, %c0_435] : memref<32x290xf32, #tpu.memory_space<vmem>>, vector<16x9xf32>
    tpu.vector_store %arg43[%c0_434, %c0_435], %505 {strides = array<i32>} : memref<32x290xf32, #tpu.memory_space<vmem>>, vector<16x9xf32>,
    %c0_436 = arith.constant 0 : index
    %c9_437 = arith.constant 9 : index
    %507 = vector.load %arg43[%c0_436, %c9_437] : memref<32x290xf32, #tpu.memory_space<vmem>>, vector<16x64xf32>
    tpu.vector_store %arg43[%c0_436, %c9_437], %454 {strides = array<i32>} : memref<32x290xf32, #tpu.memory_space<vmem>>, vector<16x64xf32>,
    %c0_438 = arith.constant 0 : index
    %c73_439 = arith.constant 73 : index
    %508 = vector.load %arg43[%c0_438, %c73_439] : memref<32x290xf32, #tpu.memory_space<vmem>>, vector<16x9xf32>
    tpu.vector_store %arg43[%c0_438, %c73_439], %505 {strides = array<i32>} : memref<32x290xf32, #tpu.memory_space<vmem>>, vector<16x9xf32>,
    %c0_440 = arith.constant 0 : index
    %c0_441 = arith.constant 0 : index
    %509 = vector.load %arg43[%c0_440, %c0_441] : memref<32x290xf32, #tpu.memory_space<vmem>>, vector<16x64xf32>
    %cst_442 = arith.constant 0.000000e+00 : f32
    %510 = vector.shape_cast %164 : vector<1x64xi1> to vector<1x64xi1>
    %511 = vector.broadcast %510 : vector<1x64xi1> to vector<16x64xi1>
    %512 = vector.broadcast %cst_442 : f32 to vector<16x64xf32>
    %513 = arith.select %511, %509, %512 : vector<16x64xi1>, vector<16x64xf32>
    %c0_443 = arith.constant 0 : index
    %c0_444 = arith.constant 0 : index
    %514 = vector.load %arg44[%c0_443, %c0_444] : memref<288x256xf32, #tpu.memory_space<vmem>>, vector<16x64xf32>
    tpu.vector_store %arg44[%c0_443, %c0_444], %513 {strides = array<i32>} : memref<288x256xf32, #tpu.memory_space<vmem>>, vector<16x64xf32>,
    %c0_445 = arith.constant 0 : index
    %c1_446 = arith.constant 1 : index
    %515 = vector.load %arg43[%c0_445, %c1_446] : memref<32x290xf32, #tpu.memory_space<vmem>>, vector<16x64xf32>
    %c16_447 = arith.constant 16 : index
    %c0_448 = arith.constant 0 : index
    %516 = vector.load %arg44[%c16_447, %c0_448] : memref<288x256xf32, #tpu.memory_space<vmem>>, vector<16x64xf32>
    tpu.vector_store %arg44[%c16_447, %c0_448], %515 {strides = array<i32>} : memref<288x256xf32, #tpu.memory_space<vmem>>, vector<16x64xf32>,
    %c0_449 = arith.constant 0 : index
    %c2_450 = arith.constant 2 : index
    %517 = vector.load %arg43[%c0_449, %c2_450] : memref<32x290xf32, #tpu.memory_space<vmem>>, vector<16x64xf32>
    %cst_451 = arith.constant 0.000000e+00 : f32
    %518 = vector.shape_cast %166 : vector<1x64xi1> to vector<1x64xi1>
    %519 = vector.broadcast %518 : vector<1x64xi1> to vector<16x64xi1>
    %520 = vector.broadcast %cst_451 : f32 to vector<16x64xf32>
    %521 = arith.select %519, %517, %520 : vector<16x64xi1>, vector<16x64xf32>
    %c32_452 = arith.constant 32 : index
    %c0_453 = arith.constant 0 : index
    %522 = vector.load %arg44[%c32_452, %c0_453] : memref<288x256xf32, #tpu.memory_space<vmem>>, vector<16x64xf32>
    tpu.vector_store %arg44[%c32_452, %c0_453], %521 {strides = array<i32>} : memref<288x256xf32, #tpu.memory_space<vmem>>, vector<16x64xf32>,
    %c0_454 = arith.constant 0 : index
    %c8_455 = arith.constant 8 : index
    %523 = vector.load %arg43[%c0_454, %c8_455] : memref<32x290xf32, #tpu.memory_space<vmem>>, vector<16x64xf32>
    %cst_456 = arith.constant 0.000000e+00 : f32
    %524 = vector.shape_cast %164 : vector<1x64xi1> to vector<1x64xi1>
    %525 = vector.broadcast %524 : vector<1x64xi1> to vector<16x64xi1>
    %526 = vector.broadcast %cst_456 : f32 to vector<16x64xf32>
    %527 = arith.select %525, %523, %526 : vector<16x64xi1>, vector<16x64xf32>
    %c48_457 = arith.constant 48 : index
    %c0_458 = arith.constant 0 : index
    %528 = vector.load %arg44[%c48_457, %c0_458] : memref<288x256xf32, #tpu.memory_space<vmem>>, vector<16x64xf32>
    tpu.vector_store %arg44[%c48_457, %c0_458], %527 {strides = array<i32>} : memref<288x256xf32, #tpu.memory_space<vmem>>, vector<16x64xf32>,
    %c0_459 = arith.constant 0 : index
    %c9_460 = arith.constant 9 : index
    %529 = vector.load %arg43[%c0_459, %c9_460] : memref<32x290xf32, #tpu.memory_space<vmem>>, vector<16x64xf32>
    %c64_461 = arith.constant 64 : index
    %c0_462 = arith.constant 0 : index
    %530 = vector.load %arg44[%c64_461, %c0_462] : memref<288x256xf32, #tpu.memory_space<vmem>>, vector<16x64xf32>
    tpu.vector_store %arg44[%c64_461, %c0_462], %529 {strides = array<i32>} : memref<288x256xf32, #tpu.memory_space<vmem>>, vector<16x64xf32>,
    %c0_463 = arith.constant 0 : index
    %c10_464 = arith.constant 10 : index
    %531 = vector.load %arg43[%c0_463, %c10_464] : memref<32x290xf32, #tpu.memory_space<vmem>>, vector<16x64xf32>
    %cst_465 = arith.constant 0.000000e+00 : f32
    %532 = vector.shape_cast %166 : vector<1x64xi1> to vector<1x64xi1>
    %533 = vector.broadcast %532 : vector<1x64xi1> to vector<16x64xi1>
    %534 = vector.broadcast %cst_465 : f32 to vector<16x64xf32>
    %535 = arith.select %533, %531, %534 : vector<16x64xi1>, vector<16x64xf32>
    %c80_466 = arith.constant 80 : index
    %c0_467 = arith.constant 0 : index
    %536 = vector.load %arg44[%c80_466, %c0_467] : memref<288x256xf32, #tpu.memory_space<vmem>>, vector<16x64xf32>
    tpu.vector_store %arg44[%c80_466, %c0_467], %535 {strides = array<i32>} : memref<288x256xf32, #tpu.memory_space<vmem>>, vector<16x64xf32>,
    %c0_468 = arith.constant 0 : index
    %c16_469 = arith.constant 16 : index
    %537 = vector.load %arg43[%c0_468, %c16_469] : memref<32x290xf32, #tpu.memory_space<vmem>>, vector<16x64xf32>
    %cst_470 = arith.constant 0.000000e+00 : f32
    %538 = vector.shape_cast %164 : vector<1x64xi1> to vector<1x64xi1>
    %539 = vector.broadcast %538 : vector<1x64xi1> to vector<16x64xi1>
    %540 = vector.broadcast %cst_470 : f32 to vector<16x64xf32>
    %541 = arith.select %539, %537, %540 : vector<16x64xi1>, vector<16x64xf32>
    %c96_471 = arith.constant 96 : index
    %c0_472 = arith.constant 0 : index
    %542 = vector.load %arg44[%c96_471, %c0_472] : memref<288x256xf32, #tpu.memory_space<vmem>>, vector<16x64xf32>
    tpu.vector_store %arg44[%c96_471, %c0_472], %541 {strides = array<i32>} : memref<288x256xf32, #tpu.memory_space<vmem>>, vector<16x64xf32>,
    %c0_473 = arith.constant 0 : index
    %c17_474 = arith.constant 17 : index
    %543 = vector.load %arg43[%c0_473, %c17_474] : memref<32x290xf32, #tpu.memory_space<vmem>>, vector<16x64xf32>
    %c112_475 = arith.constant 112 : index
    %c0_476 = arith.constant 0 : index
    %544 = vector.load %arg44[%c112_475, %c0_476] : memref<288x256xf32, #tpu.memory_space<vmem>>, vector<16x64xf32>
    tpu.vector_store %arg44[%c112_475, %c0_476], %543 {strides = array<i32>} : memref<288x256xf32, #tpu.memory_space<vmem>>, vector<16x64xf32>,
    %c0_477 = arith.constant 0 : index
    %c18_478 = arith.constant 18 : index
    %545 = vector.load %arg43[%c0_477, %c18_478] : memref<32x290xf32, #tpu.memory_space<vmem>>, vector<16x64xf32>
    %cst_479 = arith.constant 0.000000e+00 : f32
    %546 = vector.shape_cast %166 : vector<1x64xi1> to vector<1x64xi1>
    %547 = vector.broadcast %546 : vector<1x64xi1> to vector<16x64xi1>
    %548 = vector.broadcast %cst_479 : f32 to vector<16x64xf32>
    %549 = arith.select %547, %545, %548 : vector<16x64xi1>, vector<16x64xf32>
    %c128_480 = arith.constant 128 : index
    %c0_481 = arith.constant 0 : index
    %550 = vector.load %arg44[%c128_480, %c0_481] : memref<288x256xf32, #tpu.memory_space<vmem>>, vector<16x64xf32>
    tpu.vector_store %arg44[%c128_480, %c0_481], %549 {strides = array<i32>} : memref<288x256xf32, #tpu.memory_space<vmem>>, vector<16x64xf32>,
    %c0_482 = arith.constant 0 : index
    %c0_483 = arith.constant 0 : index
    %551 = vector.load %arg44[%c0_482, %c0_483] : memref<288x256xf32, #tpu.memory_space<vmem>>, vector<144x64xf32>
    %552 = arith.truncf %551 : vector<144x64xf32> to vector<144x64xbf16>
    %c0_484 = arith.constant 0 : index
    %c0_485 = arith.constant 0 : index
    %553 = vector.load %arg24[%c0_484, %c0_485] : memref<16x144xbf16, #tpu.memory_space<vmem>>, vector<16x144xbf16>
    %cst_486 = arith.constant dense<0.000000e+00> : vector<16x64xf32>
    %554 = tpu.matmul %553, %552, %cst_486 {dimension_numbers = #tpu.dot_dimension_numbers<[1], [0], [0], [1], [0, 0, 1, 1], [], []>} : vector<16x144xbf16>, vector<144x64xbf16>, vector<16x64xf32> -> vector<16x64xf32>
    %555 = arith.addf %504, %554 : vector<16x64xf32>
    %c0_487 = arith.constant 0 : index
    %c0_488 = arith.constant 0 : index
    %556 = vector.load %arg25[%c0_487, %c0_488] : memref<16x1xf32, #tpu.memory_space<vmem>>, vector<16x1xf32>
    %557 = vector.broadcast %556 : vector<16x1xf32> to vector<16x64xf32>
    %558 = arith.addf %555, %557 : vector<16x64xf32>
    %cst_489 = arith.constant 0.000000e+00 : f32
    %559 = vector.broadcast %cst_489 : f32 to vector<16x64xf32>
    %560 = arith.maximumf %558, %559 : vector<16x64xf32>
    %cst_490 = arith.constant 0.000000e+00 : f32
    %561 = vector.broadcast %cst_490 : f32 to vector<16x9xf32>
    %c0_491 = arith.constant 0 : index
    %c0_492 = arith.constant 0 : index
    %562 = vector.load %arg43[%c0_491, %c0_492] : memref<32x290xf32, #tpu.memory_space<vmem>>, vector<16x9xf32>
    tpu.vector_store %arg43[%c0_491, %c0_492], %561 {strides = array<i32>} : memref<32x290xf32, #tpu.memory_space<vmem>>, vector<16x9xf32>,
    %c0_493 = arith.constant 0 : index
    %c9_494 = arith.constant 9 : index
    %563 = vector.load %arg43[%c0_493, %c9_494] : memref<32x290xf32, #tpu.memory_space<vmem>>, vector<16x64xf32>
    tpu.vector_store %arg43[%c0_493, %c9_494], %560 {strides = array<i32>} : memref<32x290xf32, #tpu.memory_space<vmem>>, vector<16x64xf32>,
    %c0_495 = arith.constant 0 : index
    %c73_496 = arith.constant 73 : index
    %564 = vector.load %arg43[%c0_495, %c73_496] : memref<32x290xf32, #tpu.memory_space<vmem>>, vector<16x9xf32>
    tpu.vector_store %arg43[%c0_495, %c73_496], %561 {strides = array<i32>} : memref<32x290xf32, #tpu.memory_space<vmem>>, vector<16x9xf32>,
    %c0_497 = arith.constant 0 : index
    %c0_498 = arith.constant 0 : index
    %565 = vector.load %arg43[%c0_497, %c0_498] : memref<32x290xf32, #tpu.memory_space<vmem>>, vector<16x64xf32>
    %cst_499 = arith.constant 0.000000e+00 : f32
    %566 = vector.shape_cast %164 : vector<1x64xi1> to vector<1x64xi1>
    %567 = vector.broadcast %566 : vector<1x64xi1> to vector<16x64xi1>
    %568 = vector.broadcast %cst_499 : f32 to vector<16x64xf32>
    %569 = arith.select %567, %565, %568 : vector<16x64xi1>, vector<16x64xf32>
    %c0_500 = arith.constant 0 : index
    %c0_501 = arith.constant 0 : index
    %570 = vector.load %arg44[%c0_500, %c0_501] : memref<288x256xf32, #tpu.memory_space<vmem>>, vector<16x64xf32>
    tpu.vector_store %arg44[%c0_500, %c0_501], %569 {strides = array<i32>} : memref<288x256xf32, #tpu.memory_space<vmem>>, vector<16x64xf32>,
    %c0_502 = arith.constant 0 : index
    %c1_503 = arith.constant 1 : index
    %571 = vector.load %arg43[%c0_502, %c1_503] : memref<32x290xf32, #tpu.memory_space<vmem>>, vector<16x64xf32>
    %c16_504 = arith.constant 16 : index
    %c0_505 = arith.constant 0 : index
    %572 = vector.load %arg44[%c16_504, %c0_505] : memref<288x256xf32, #tpu.memory_space<vmem>>, vector<16x64xf32>
    tpu.vector_store %arg44[%c16_504, %c0_505], %571 {strides = array<i32>} : memref<288x256xf32, #tpu.memory_space<vmem>>, vector<16x64xf32>,
    %c0_506 = arith.constant 0 : index
    %c2_507 = arith.constant 2 : index
    %573 = vector.load %arg43[%c0_506, %c2_507] : memref<32x290xf32, #tpu.memory_space<vmem>>, vector<16x64xf32>
    %cst_508 = arith.constant 0.000000e+00 : f32
    %574 = vector.shape_cast %166 : vector<1x64xi1> to vector<1x64xi1>
    %575 = vector.broadcast %574 : vector<1x64xi1> to vector<16x64xi1>
    %576 = vector.broadcast %cst_508 : f32 to vector<16x64xf32>
    %577 = arith.select %575, %573, %576 : vector<16x64xi1>, vector<16x64xf32>
    %c32_509 = arith.constant 32 : index
    %c0_510 = arith.constant 0 : index
    %578 = vector.load %arg44[%c32_509, %c0_510] : memref<288x256xf32, #tpu.memory_space<vmem>>, vector<16x64xf32>
    tpu.vector_store %arg44[%c32_509, %c0_510], %577 {strides = array<i32>} : memref<288x256xf32, #tpu.memory_space<vmem>>, vector<16x64xf32>,
    %c0_511 = arith.constant 0 : index
    %c8_512 = arith.constant 8 : index
    %579 = vector.load %arg43[%c0_511, %c8_512] : memref<32x290xf32, #tpu.memory_space<vmem>>, vector<16x64xf32>
    %cst_513 = arith.constant 0.000000e+00 : f32
    %580 = vector.shape_cast %164 : vector<1x64xi1> to vector<1x64xi1>
    %581 = vector.broadcast %580 : vector<1x64xi1> to vector<16x64xi1>
    %582 = vector.broadcast %cst_513 : f32 to vector<16x64xf32>
    %583 = arith.select %581, %579, %582 : vector<16x64xi1>, vector<16x64xf32>
    %c48_514 = arith.constant 48 : index
    %c0_515 = arith.constant 0 : index
    %584 = vector.load %arg44[%c48_514, %c0_515] : memref<288x256xf32, #tpu.memory_space<vmem>>, vector<16x64xf32>
    tpu.vector_store %arg44[%c48_514, %c0_515], %583 {strides = array<i32>} : memref<288x256xf32, #tpu.memory_space<vmem>>, vector<16x64xf32>,
    %c0_516 = arith.constant 0 : index
    %c9_517 = arith.constant 9 : index
    %585 = vector.load %arg43[%c0_516, %c9_517] : memref<32x290xf32, #tpu.memory_space<vmem>>, vector<16x64xf32>
    %c64_518 = arith.constant 64 : index
    %c0_519 = arith.constant 0 : index
    %586 = vector.load %arg44[%c64_518, %c0_519] : memref<288x256xf32, #tpu.memory_space<vmem>>, vector<16x64xf32>
    tpu.vector_store %arg44[%c64_518, %c0_519], %585 {strides = array<i32>} : memref<288x256xf32, #tpu.memory_space<vmem>>, vector<16x64xf32>,
    %c0_520 = arith.constant 0 : index
    %c10_521 = arith.constant 10 : index
    %587 = vector.load %arg43[%c0_520, %c10_521] : memref<32x290xf32, #tpu.memory_space<vmem>>, vector<16x64xf32>
    %cst_522 = arith.constant 0.000000e+00 : f32
    %588 = vector.shape_cast %166 : vector<1x64xi1> to vector<1x64xi1>
    %589 = vector.broadcast %588 : vector<1x64xi1> to vector<16x64xi1>
    %590 = vector.broadcast %cst_522 : f32 to vector<16x64xf32>
    %591 = arith.select %589, %587, %590 : vector<16x64xi1>, vector<16x64xf32>
    %c80_523 = arith.constant 80 : index
    %c0_524 = arith.constant 0 : index
    %592 = vector.load %arg44[%c80_523, %c0_524] : memref<288x256xf32, #tpu.memory_space<vmem>>, vector<16x64xf32>
    tpu.vector_store %arg44[%c80_523, %c0_524], %591 {strides = array<i32>} : memref<288x256xf32, #tpu.memory_space<vmem>>, vector<16x64xf32>,
    %c0_525 = arith.constant 0 : index
    %c16_526 = arith.constant 16 : index
    %593 = vector.load %arg43[%c0_525, %c16_526] : memref<32x290xf32, #tpu.memory_space<vmem>>, vector<16x64xf32>
    %cst_527 = arith.constant 0.000000e+00 : f32
    %594 = vector.shape_cast %164 : vector<1x64xi1> to vector<1x64xi1>
    %595 = vector.broadcast %594 : vector<1x64xi1> to vector<16x64xi1>
    %596 = vector.broadcast %cst_527 : f32 to vector<16x64xf32>
    %597 = arith.select %595, %593, %596 : vector<16x64xi1>, vector<16x64xf32>
    %c96_528 = arith.constant 96 : index
    %c0_529 = arith.constant 0 : index
    %598 = vector.load %arg44[%c96_528, %c0_529] : memref<288x256xf32, #tpu.memory_space<vmem>>, vector<16x64xf32>
    tpu.vector_store %arg44[%c96_528, %c0_529], %597 {strides = array<i32>} : memref<288x256xf32, #tpu.memory_space<vmem>>, vector<16x64xf32>,
    %c0_530 = arith.constant 0 : index
    %c17_531 = arith.constant 17 : index
    %599 = vector.load %arg43[%c0_530, %c17_531] : memref<32x290xf32, #tpu.memory_space<vmem>>, vector<16x64xf32>
    %c112_532 = arith.constant 112 : index
    %c0_533 = arith.constant 0 : index
    %600 = vector.load %arg44[%c112_532, %c0_533] : memref<288x256xf32, #tpu.memory_space<vmem>>, vector<16x64xf32>
    tpu.vector_store %arg44[%c112_532, %c0_533], %599 {strides = array<i32>} : memref<288x256xf32, #tpu.memory_space<vmem>>, vector<16x64xf32>,
    %c0_534 = arith.constant 0 : index
    %c18_535 = arith.constant 18 : index
    %601 = vector.load %arg43[%c0_534, %c18_535] : memref<32x290xf32, #tpu.memory_space<vmem>>, vector<16x64xf32>
    %cst_536 = arith.constant 0.000000e+00 : f32
    %602 = vector.shape_cast %166 : vector<1x64xi1> to vector<1x64xi1>
    %603 = vector.broadcast %602 : vector<1x64xi1> to vector<16x64xi1>
    %604 = vector.broadcast %cst_536 : f32 to vector<16x64xf32>
    %605 = arith.select %603, %601, %604 : vector<16x64xi1>, vector<16x64xf32>
    %c128_537 = arith.constant 128 : index
    %c0_538 = arith.constant 0 : index
    %606 = vector.load %arg44[%c128_537, %c0_538] : memref<288x256xf32, #tpu.memory_space<vmem>>, vector<16x64xf32>
    tpu.vector_store %arg44[%c128_537, %c0_538], %605 {strides = array<i32>} : memref<288x256xf32, #tpu.memory_space<vmem>>, vector<16x64xf32>,
    %c0_539 = arith.constant 0 : index
    %c0_540 = arith.constant 0 : index
    %607 = vector.load %arg44[%c0_539, %c0_540] : memref<288x256xf32, #tpu.memory_space<vmem>>, vector<144x64xf32>
    %608 = arith.truncf %607 : vector<144x64xf32> to vector<144x64xbf16>
    %c0_541 = arith.constant 0 : index
    %c0_542 = arith.constant 0 : index
    %609 = vector.load %arg26[%c0_541, %c0_542] : memref<16x144xbf16, #tpu.memory_space<vmem>>, vector<16x144xbf16>
    %cst_543 = arith.constant dense<0.000000e+00> : vector<16x64xf32>
    %610 = tpu.matmul %609, %608, %cst_543 {dimension_numbers = #tpu.dot_dimension_numbers<[1], [0], [0], [1], [0, 0, 1, 1], [], []>} : vector<16x144xbf16>, vector<144x64xbf16>, vector<16x64xf32> -> vector<16x64xf32>
    %c0_544 = arith.constant 0 : index
    %c0_545 = arith.constant 0 : index
    %611 = vector.load %arg27[%c0_544, %c0_545] : memref<16x1xf32, #tpu.memory_space<vmem>>, vector<16x1xf32>
    %612 = vector.broadcast %611 : vector<16x1xf32> to vector<16x64xf32>
    %613 = arith.addf %610, %612 : vector<16x64xf32>
    %cst_546 = arith.constant 0.000000e+00 : f32
    %614 = vector.broadcast %cst_546 : f32 to vector<16x64xf32>
    %615 = arith.maximumf %613, %614 : vector<16x64xf32>
    %616 = arith.truncf %615 : vector<16x64xf32> to vector<16x64xbf16>
    %c0_547 = arith.constant 0 : index
    %c0_548 = arith.constant 0 : index
    %617 = vector.load %arg28[%c0_547, %c0_548] : memref<64x256xbf16, #tpu.memory_space<vmem>>, vector<64x256xbf16>
    %cst_549 = arith.constant dense<0.000000e+00> : vector<16x256xf32>
    %618 = tpu.matmul %616, %617, %cst_549 {dimension_numbers = #tpu.dot_dimension_numbers<[1], [0], [0], [1], [0, 0, 1, 1], [], []>} : vector<16x64xbf16>, vector<64x256xbf16>, vector<16x256xf32> -> vector<16x256xf32>
    %c0_550 = arith.constant 0 : index
    %c0_551 = arith.constant 0 : index
    %619 = vector.load %arg29[%c0_550, %c0_551] : memref<4x16xbf16, #tpu.memory_space<vmem>>, vector<4x16xbf16>
    %620 = arith.truncf %618 : vector<16x256xf32> to vector<16x256xbf16>
    %cst_552 = arith.constant dense<0.000000e+00> : vector<4x256xf32>
    %621 = tpu.matmul %619, %620, %cst_552 {dimension_numbers = #tpu.dot_dimension_numbers<[1], [0], [0], [1], [0, 0, 1, 1], [], []>} : vector<4x16xbf16>, vector<16x256xbf16>, vector<4x256xf32> -> vector<4x256xf32>
    %c0_553 = arith.constant 0 : index
    %c0_554 = arith.constant 0 : index
    %622 = vector.load %arg30[%c0_553, %c0_554] : memref<4x1xf32, #tpu.memory_space<vmem>>, vector<4x1xf32>
    %623 = vector.broadcast %622 : vector<4x1xf32> to vector<4x256xf32>
    %624 = arith.addf %621, %623 : vector<4x256xf32>
    %c0_555 = arith.constant 0 : index
    %c0_556 = arith.constant 0 : index
    %625 = vector.load %arg31[%c0_555, %c0_556] : memref<4x8xbf16, #tpu.memory_space<vmem>>, vector<4x8xbf16>
    %626 = arith.truncf %133 : vector<8x256xf32> to vector<8x256xbf16>
    %cst_557 = arith.constant dense<0.000000e+00> : vector<4x256xf32>
    %627 = tpu.matmul %625, %626, %cst_557 {dimension_numbers = #tpu.dot_dimension_numbers<[1], [0], [0], [1], [0, 0, 1, 1], [], []>} : vector<4x8xbf16>, vector<8x256xbf16>, vector<4x256xf32> -> vector<4x256xf32>
    %c0_558 = arith.constant 0 : index
    %c0_559 = arith.constant 0 : index
    %628 = vector.load %arg32[%c0_558, %c0_559] : memref<4x1xf32, #tpu.memory_space<vmem>>, vector<4x1xf32>
    %629 = vector.broadcast %628 : vector<4x1xf32> to vector<4x256xf32>
    %630 = arith.addf %627, %629 : vector<4x256xf32>
    %631 = arith.addf %624, %630 : vector<4x256xf32>
    %cst_560 = arith.constant 0.000000e+00 : f32
    %632 = vector.broadcast %cst_560 : f32 to vector<4x256xf32>
    %633 = arith.maximumf %631, %632 : vector<4x256xf32>
    %c0_561 = arith.constant 0 : index
    %c0_562 = arith.constant 0 : index
    %634 = vector.load %arg33[%c0_561, %c0_562] : memref<4x1xf32, #tpu.memory_space<vmem>>, vector<4x1xf32>
    %635 = vector.broadcast %634 : vector<4x1xf32> to vector<4x256xf32>
    %636 = arith.mulf %633, %635 : vector<4x256xf32>
    %cst_563 = arith.constant dense<0.000000e+00> : vector<256xf32>
    %637 = vector.multi_reduction <add>, %636, %cst_563 [0] : vector<4x256xf32> to vector<256xf32>
    %638 = vector.shape_cast %637 : vector<256xf32> to vector<1x256xf32>
    %c0_564 = arith.constant 0 : index
    %c0_565 = arith.constant 0 : index
    %639 = vector.load %arg34[%c0_564, %c0_565] : memref<1x1xf32, #tpu.memory_space<vmem>>, vector<1x1xf32>
    %640 = vector.broadcast %639 : vector<1x1xf32> to vector<1x256xf32>
    %641 = arith.addf %638, %640 : vector<1x256xf32>
    %cst_566 = arith.constant 0.000000e+00 : f32
    %642 = vector.broadcast %cst_566 : f32 to vector<1x256xf32>
    %643 = arith.subf %642, %641 : vector<1x256xf32>
    %644 = math.exp %643 : vector<1x256xf32>
    %cst_567 = arith.constant 1.000000e+00 : f32
    %645 = vector.broadcast %cst_567 : f32 to vector<1x256xf32>
    %646 = arith.addf %645, %644 : vector<1x256xf32>
    %cst_568 = arith.constant 1.000000e+00 : f32
    %647 = vector.broadcast %cst_568 : f32 to vector<1x256xf32>
    %648 = arith.divf %647, %646 : vector<1x256xf32>
    %649 = vector.broadcast %648 : vector<1x256xf32> to vector<8x256xf32>
    %650 = arith.mulf %133, %649 : vector<8x256xf32>
    %cst_569 = arith.constant 0.000000e+00 : f32
    %651 = vector.broadcast %cst_569 : f32 to vector<16x17xf32>
    %c0_570 = arith.constant 0 : index
    %c0_571 = arith.constant 0 : index
    %652 = vector.load %arg43[%c0_570, %c0_571] : memref<32x290xf32, #tpu.memory_space<vmem>>, vector<16x17xf32>
    tpu.vector_store %arg43[%c0_570, %c0_571], %651 {strides = array<i32>} : memref<32x290xf32, #tpu.memory_space<vmem>>, vector<16x17xf32>,
    %c0_572 = arith.constant 0 : index
    %c17_573 = arith.constant 17 : index
    %653 = vector.load %arg43[%c0_572, %c17_573] : memref<32x290xf32, #tpu.memory_space<vmem>>, vector<16x256xf32>
    tpu.vector_store %arg43[%c0_572, %c17_573], %618 {strides = array<i32>} : memref<32x290xf32, #tpu.memory_space<vmem>>, vector<16x256xf32>,
    %c0_574 = arith.constant 0 : index
    %c273_575 = arith.constant 273 : index
    %654 = vector.load %arg43[%c0_574, %c273_575] : memref<32x290xf32, #tpu.memory_space<vmem>>, vector<16x17xf32>
    tpu.vector_store %arg43[%c0_574, %c273_575], %651 {strides = array<i32>} : memref<32x290xf32, #tpu.memory_space<vmem>>, vector<16x17xf32>,
    %c0_576 = arith.constant 0 : index
    %c0_577 = arith.constant 0 : index
    %655 = vector.load %arg43[%c0_576, %c0_577] : memref<32x290xf32, #tpu.memory_space<vmem>>, vector<16x256xf32>
    %cst_578 = arith.constant 0.000000e+00 : f32
    %656 = vector.shape_cast %21 : vector<1x256xi1> to vector<1x256xi1>
    %657 = vector.broadcast %656 : vector<1x256xi1> to vector<16x256xi1>
    %658 = vector.broadcast %cst_578 : f32 to vector<16x256xf32>
    %659 = arith.select %657, %655, %658 : vector<16x256xi1>, vector<16x256xf32>
    %c0_579 = arith.constant 0 : index
    %c0_580 = arith.constant 0 : index
    %660 = vector.load %arg44[%c0_579, %c0_580] : memref<288x256xf32, #tpu.memory_space<vmem>>, vector<16x256xf32>
    tpu.vector_store %arg44[%c0_579, %c0_580], %659 {strides = array<i32>} : memref<288x256xf32, #tpu.memory_space<vmem>>, vector<16x256xf32>,
    %c0_581 = arith.constant 0 : index
    %c1_582 = arith.constant 1 : index
    %661 = vector.load %arg43[%c0_581, %c1_582] : memref<32x290xf32, #tpu.memory_space<vmem>>, vector<16x256xf32>
    %c16_583 = arith.constant 16 : index
    %c0_584 = arith.constant 0 : index
    %662 = vector.load %arg44[%c16_583, %c0_584] : memref<288x256xf32, #tpu.memory_space<vmem>>, vector<16x256xf32>
    tpu.vector_store %arg44[%c16_583, %c0_584], %661 {strides = array<i32>} : memref<288x256xf32, #tpu.memory_space<vmem>>, vector<16x256xf32>,
    %c0_585 = arith.constant 0 : index
    %c2_586 = arith.constant 2 : index
    %663 = vector.load %arg43[%c0_585, %c2_586] : memref<32x290xf32, #tpu.memory_space<vmem>>, vector<16x256xf32>
    %cst_587 = arith.constant 0.000000e+00 : f32
    %664 = vector.shape_cast %23 : vector<1x256xi1> to vector<1x256xi1>
    %665 = vector.broadcast %664 : vector<1x256xi1> to vector<16x256xi1>
    %666 = vector.broadcast %cst_587 : f32 to vector<16x256xf32>
    %667 = arith.select %665, %663, %666 : vector<16x256xi1>, vector<16x256xf32>
    %c32_588 = arith.constant 32 : index
    %c0_589 = arith.constant 0 : index
    %668 = vector.load %arg44[%c32_588, %c0_589] : memref<288x256xf32, #tpu.memory_space<vmem>>, vector<16x256xf32>
    tpu.vector_store %arg44[%c32_588, %c0_589], %667 {strides = array<i32>} : memref<288x256xf32, #tpu.memory_space<vmem>>, vector<16x256xf32>,
    %c0_590 = arith.constant 0 : index
    %c16_591 = arith.constant 16 : index
    %669 = vector.load %arg43[%c0_590, %c16_591] : memref<32x290xf32, #tpu.memory_space<vmem>>, vector<16x256xf32>
    %cst_592 = arith.constant 0.000000e+00 : f32
    %670 = vector.shape_cast %21 : vector<1x256xi1> to vector<1x256xi1>
    %671 = vector.broadcast %670 : vector<1x256xi1> to vector<16x256xi1>
    %672 = vector.broadcast %cst_592 : f32 to vector<16x256xf32>
    %673 = arith.select %671, %669, %672 : vector<16x256xi1>, vector<16x256xf32>
    %c48_593 = arith.constant 48 : index
    %c0_594 = arith.constant 0 : index
    %674 = vector.load %arg44[%c48_593, %c0_594] : memref<288x256xf32, #tpu.memory_space<vmem>>, vector<16x256xf32>
    tpu.vector_store %arg44[%c48_593, %c0_594], %673 {strides = array<i32>} : memref<288x256xf32, #tpu.memory_space<vmem>>, vector<16x256xf32>,
    %c0_595 = arith.constant 0 : index
    %c17_596 = arith.constant 17 : index
    %675 = vector.load %arg43[%c0_595, %c17_596] : memref<32x290xf32, #tpu.memory_space<vmem>>, vector<16x256xf32>
    %c64_597 = arith.constant 64 : index
    %c0_598 = arith.constant 0 : index
    %676 = vector.load %arg44[%c64_597, %c0_598] : memref<288x256xf32, #tpu.memory_space<vmem>>, vector<16x256xf32>
    tpu.vector_store %arg44[%c64_597, %c0_598], %675 {strides = array<i32>} : memref<288x256xf32, #tpu.memory_space<vmem>>, vector<16x256xf32>,
    %c0_599 = arith.constant 0 : index
    %c18_600 = arith.constant 18 : index
    %677 = vector.load %arg43[%c0_599, %c18_600] : memref<32x290xf32, #tpu.memory_space<vmem>>, vector<16x256xf32>
    %cst_601 = arith.constant 0.000000e+00 : f32
    %678 = vector.shape_cast %23 : vector<1x256xi1> to vector<1x256xi1>
    %679 = vector.broadcast %678 : vector<1x256xi1> to vector<16x256xi1>
    %680 = vector.broadcast %cst_601 : f32 to vector<16x256xf32>
    %681 = arith.select %679, %677, %680 : vector<16x256xi1>, vector<16x256xf32>
    %c80_602 = arith.constant 80 : index
    %c0_603 = arith.constant 0 : index
    %682 = vector.load %arg44[%c80_602, %c0_603] : memref<288x256xf32, #tpu.memory_space<vmem>>, vector<16x256xf32>
    tpu.vector_store %arg44[%c80_602, %c0_603], %681 {strides = array<i32>} : memref<288x256xf32, #tpu.memory_space<vmem>>, vector<16x256xf32>,
    %c0_604 = arith.constant 0 : index
    %c32_605 = arith.constant 32 : index
    %683 = vector.load %arg43[%c0_604, %c32_605] : memref<32x290xf32, #tpu.memory_space<vmem>>, vector<16x256xf32>
    %cst_606 = arith.constant 0.000000e+00 : f32
    %684 = vector.shape_cast %21 : vector<1x256xi1> to vector<1x256xi1>
    %685 = vector.broadcast %684 : vector<1x256xi1> to vector<16x256xi1>
    %686 = vector.broadcast %cst_606 : f32 to vector<16x256xf32>
    %687 = arith.select %685, %683, %686 : vector<16x256xi1>, vector<16x256xf32>
    %c96_607 = arith.constant 96 : index
    %c0_608 = arith.constant 0 : index
    %688 = vector.load %arg44[%c96_607, %c0_608] : memref<288x256xf32, #tpu.memory_space<vmem>>, vector<16x256xf32>
    tpu.vector_store %arg44[%c96_607, %c0_608], %687 {strides = array<i32>} : memref<288x256xf32, #tpu.memory_space<vmem>>, vector<16x256xf32>,
    %c0_609 = arith.constant 0 : index
    %c33_610 = arith.constant 33 : index
    %689 = vector.load %arg43[%c0_609, %c33_610] : memref<32x290xf32, #tpu.memory_space<vmem>>, vector<16x256xf32>
    %c112_611 = arith.constant 112 : index
    %c0_612 = arith.constant 0 : index
    %690 = vector.load %arg44[%c112_611, %c0_612] : memref<288x256xf32, #tpu.memory_space<vmem>>, vector<16x256xf32>
    tpu.vector_store %arg44[%c112_611, %c0_612], %689 {strides = array<i32>} : memref<288x256xf32, #tpu.memory_space<vmem>>, vector<16x256xf32>,
    %c0_613 = arith.constant 0 : index
    %c34_614 = arith.constant 34 : index
    %691 = vector.load %arg43[%c0_613, %c34_614] : memref<32x290xf32, #tpu.memory_space<vmem>>, vector<16x256xf32>
    %cst_615 = arith.constant 0.000000e+00 : f32
    %692 = vector.shape_cast %23 : vector<1x256xi1> to vector<1x256xi1>
    %693 = vector.broadcast %692 : vector<1x256xi1> to vector<16x256xi1>
    %694 = vector.broadcast %cst_615 : f32 to vector<16x256xf32>
    %695 = arith.select %693, %691, %694 : vector<16x256xi1>, vector<16x256xf32>
    %c128_616 = arith.constant 128 : index
    %c0_617 = arith.constant 0 : index
    %696 = vector.load %arg44[%c128_616, %c0_617] : memref<288x256xf32, #tpu.memory_space<vmem>>, vector<16x256xf32>
    tpu.vector_store %arg44[%c128_616, %c0_617], %695 {strides = array<i32>} : memref<288x256xf32, #tpu.memory_space<vmem>>, vector<16x256xf32>,
    %c0_618 = arith.constant 0 : index
    %c0_619 = arith.constant 0 : index
    %697 = vector.load %arg44[%c0_618, %c0_619] : memref<288x256xf32, #tpu.memory_space<vmem>>, vector<144x256xf32>
    %698 = arith.truncf %697 : vector<144x256xf32> to vector<144x256xbf16>
    %c0_620 = arith.constant 0 : index
    %c0_621 = arith.constant 0 : index
    %699 = vector.load %arg35[%c0_620, %c0_621] : memref<8x144xbf16, #tpu.memory_space<vmem>>, vector<8x144xbf16>
    %cst_622 = arith.constant dense<0.000000e+00> : vector<8x256xf32>
    %700 = tpu.matmul %699, %698, %cst_622 {dimension_numbers = #tpu.dot_dimension_numbers<[1], [0], [0], [1], [0, 0, 1, 1], [], []>} : vector<8x144xbf16>, vector<144x256xbf16>, vector<8x256xf32> -> vector<8x256xf32>
    %cst_623 = arith.constant 0.000000e+00 : f32
    %701 = vector.broadcast %cst_623 : f32 to vector<8x17xf32>
    %c0_624 = arith.constant 0 : index
    %c0_625 = arith.constant 0 : index
    %702 = vector.load %arg43[%c0_624, %c0_625] : memref<32x290xf32, #tpu.memory_space<vmem>>, vector<8x17xf32>
    tpu.vector_store %arg43[%c0_624, %c0_625], %701 {strides = array<i32>} : memref<32x290xf32, #tpu.memory_space<vmem>>, vector<8x17xf32>,
    %c0_626 = arith.constant 0 : index
    %c17_627 = arith.constant 17 : index
    %703 = vector.load %arg43[%c0_626, %c17_627] : memref<32x290xf32, #tpu.memory_space<vmem>>, vector<8x256xf32>
    tpu.vector_store %arg43[%c0_626, %c17_627], %650 {strides = array<i32>} : memref<32x290xf32, #tpu.memory_space<vmem>>, vector<8x256xf32>,
    %c0_628 = arith.constant 0 : index
    %c273_629 = arith.constant 273 : index
    %704 = vector.load %arg43[%c0_628, %c273_629] : memref<32x290xf32, #tpu.memory_space<vmem>>, vector<8x17xf32>
    tpu.vector_store %arg43[%c0_628, %c273_629], %701 {strides = array<i32>} : memref<32x290xf32, #tpu.memory_space<vmem>>, vector<8x17xf32>,
    %c0_630 = arith.constant 0 : index
    %c0_631 = arith.constant 0 : index
    %705 = vector.load %arg43[%c0_630, %c0_631] : memref<32x290xf32, #tpu.memory_space<vmem>>, vector<8x256xf32>
    %cst_632 = arith.constant 0.000000e+00 : f32
    %706 = vector.shape_cast %21 : vector<1x256xi1> to vector<1x256xi1>
    %707 = vector.broadcast %706 : vector<1x256xi1> to vector<8x256xi1>
    %708 = vector.broadcast %cst_632 : f32 to vector<8x256xf32>
    %709 = arith.select %707, %705, %708 : vector<8x256xi1>, vector<8x256xf32>
    %c0_633 = arith.constant 0 : index
    %c0_634 = arith.constant 0 : index
    %710 = vector.load %arg44[%c0_633, %c0_634] : memref<288x256xf32, #tpu.memory_space<vmem>>, vector<8x256xf32>
    tpu.vector_store %arg44[%c0_633, %c0_634], %709 {strides = array<i32>} : memref<288x256xf32, #tpu.memory_space<vmem>>, vector<8x256xf32>,
    %c0_635 = arith.constant 0 : index
    %c1_636 = arith.constant 1 : index
    %711 = vector.load %arg43[%c0_635, %c1_636] : memref<32x290xf32, #tpu.memory_space<vmem>>, vector<8x256xf32>
    %c8_637 = arith.constant 8 : index
    %c0_638 = arith.constant 0 : index
    %712 = vector.load %arg44[%c8_637, %c0_638] : memref<288x256xf32, #tpu.memory_space<vmem>>, vector<8x256xf32>
    tpu.vector_store %arg44[%c8_637, %c0_638], %711 {strides = array<i32>} : memref<288x256xf32, #tpu.memory_space<vmem>>, vector<8x256xf32>,
    %c0_639 = arith.constant 0 : index
    %c2_640 = arith.constant 2 : index
    %713 = vector.load %arg43[%c0_639, %c2_640] : memref<32x290xf32, #tpu.memory_space<vmem>>, vector<8x256xf32>
    %cst_641 = arith.constant 0.000000e+00 : f32
    %714 = vector.shape_cast %23 : vector<1x256xi1> to vector<1x256xi1>
    %715 = vector.broadcast %714 : vector<1x256xi1> to vector<8x256xi1>
    %716 = vector.broadcast %cst_641 : f32 to vector<8x256xf32>
    %717 = arith.select %715, %713, %716 : vector<8x256xi1>, vector<8x256xf32>
    %c16_642 = arith.constant 16 : index
    %c0_643 = arith.constant 0 : index
    %718 = vector.load %arg44[%c16_642, %c0_643] : memref<288x256xf32, #tpu.memory_space<vmem>>, vector<8x256xf32>
    tpu.vector_store %arg44[%c16_642, %c0_643], %717 {strides = array<i32>} : memref<288x256xf32, #tpu.memory_space<vmem>>, vector<8x256xf32>,
    %c0_644 = arith.constant 0 : index
    %c16_645 = arith.constant 16 : index
    %719 = vector.load %arg43[%c0_644, %c16_645] : memref<32x290xf32, #tpu.memory_space<vmem>>, vector<8x256xf32>
    %cst_646 = arith.constant 0.000000e+00 : f32
    %720 = vector.shape_cast %21 : vector<1x256xi1> to vector<1x256xi1>
    %721 = vector.broadcast %720 : vector<1x256xi1> to vector<8x256xi1>
    %722 = vector.broadcast %cst_646 : f32 to vector<8x256xf32>
    %723 = arith.select %721, %719, %722 : vector<8x256xi1>, vector<8x256xf32>
    %c24_647 = arith.constant 24 : index
    %c0_648 = arith.constant 0 : index
    %724 = vector.load %arg44[%c24_647, %c0_648] : memref<288x256xf32, #tpu.memory_space<vmem>>, vector<8x256xf32>
    tpu.vector_store %arg44[%c24_647, %c0_648], %723 {strides = array<i32>} : memref<288x256xf32, #tpu.memory_space<vmem>>, vector<8x256xf32>,
    %c0_649 = arith.constant 0 : index
    %c17_650 = arith.constant 17 : index
    %725 = vector.load %arg43[%c0_649, %c17_650] : memref<32x290xf32, #tpu.memory_space<vmem>>, vector<8x256xf32>
    %c32_651 = arith.constant 32 : index
    %c0_652 = arith.constant 0 : index
    %726 = vector.load %arg44[%c32_651, %c0_652] : memref<288x256xf32, #tpu.memory_space<vmem>>, vector<8x256xf32>
    tpu.vector_store %arg44[%c32_651, %c0_652], %725 {strides = array<i32>} : memref<288x256xf32, #tpu.memory_space<vmem>>, vector<8x256xf32>,
    %c0_653 = arith.constant 0 : index
    %c18_654 = arith.constant 18 : index
    %727 = vector.load %arg43[%c0_653, %c18_654] : memref<32x290xf32, #tpu.memory_space<vmem>>, vector<8x256xf32>
    %cst_655 = arith.constant 0.000000e+00 : f32
    %728 = vector.shape_cast %23 : vector<1x256xi1> to vector<1x256xi1>
    %729 = vector.broadcast %728 : vector<1x256xi1> to vector<8x256xi1>
    %730 = vector.broadcast %cst_655 : f32 to vector<8x256xf32>
    %731 = arith.select %729, %727, %730 : vector<8x256xi1>, vector<8x256xf32>
    %c40_656 = arith.constant 40 : index
    %c0_657 = arith.constant 0 : index
    %732 = vector.load %arg44[%c40_656, %c0_657] : memref<288x256xf32, #tpu.memory_space<vmem>>, vector<8x256xf32>
    tpu.vector_store %arg44[%c40_656, %c0_657], %731 {strides = array<i32>} : memref<288x256xf32, #tpu.memory_space<vmem>>, vector<8x256xf32>,
    %c0_658 = arith.constant 0 : index
    %c32_659 = arith.constant 32 : index
    %733 = vector.load %arg43[%c0_658, %c32_659] : memref<32x290xf32, #tpu.memory_space<vmem>>, vector<8x256xf32>
    %cst_660 = arith.constant 0.000000e+00 : f32
    %734 = vector.shape_cast %21 : vector<1x256xi1> to vector<1x256xi1>
    %735 = vector.broadcast %734 : vector<1x256xi1> to vector<8x256xi1>
    %736 = vector.broadcast %cst_660 : f32 to vector<8x256xf32>
    %737 = arith.select %735, %733, %736 : vector<8x256xi1>, vector<8x256xf32>
    %c48_661 = arith.constant 48 : index
    %c0_662 = arith.constant 0 : index
    %738 = vector.load %arg44[%c48_661, %c0_662] : memref<288x256xf32, #tpu.memory_space<vmem>>, vector<8x256xf32>
    tpu.vector_store %arg44[%c48_661, %c0_662], %737 {strides = array<i32>} : memref<288x256xf32, #tpu.memory_space<vmem>>, vector<8x256xf32>,
    %c0_663 = arith.constant 0 : index
    %c33_664 = arith.constant 33 : index
    %739 = vector.load %arg43[%c0_663, %c33_664] : memref<32x290xf32, #tpu.memory_space<vmem>>, vector<8x256xf32>
    %c56_665 = arith.constant 56 : index
    %c0_666 = arith.constant 0 : index
    %740 = vector.load %arg44[%c56_665, %c0_666] : memref<288x256xf32, #tpu.memory_space<vmem>>, vector<8x256xf32>
    tpu.vector_store %arg44[%c56_665, %c0_666], %739 {strides = array<i32>} : memref<288x256xf32, #tpu.memory_space<vmem>>, vector<8x256xf32>,
    %c0_667 = arith.constant 0 : index
    %c34_668 = arith.constant 34 : index
    %741 = vector.load %arg43[%c0_667, %c34_668] : memref<32x290xf32, #tpu.memory_space<vmem>>, vector<8x256xf32>
    %cst_669 = arith.constant 0.000000e+00 : f32
    %742 = vector.shape_cast %23 : vector<1x256xi1> to vector<1x256xi1>
    %743 = vector.broadcast %742 : vector<1x256xi1> to vector<8x256xi1>
    %744 = vector.broadcast %cst_669 : f32 to vector<8x256xf32>
    %745 = arith.select %743, %741, %744 : vector<8x256xi1>, vector<8x256xf32>
    %c64_670 = arith.constant 64 : index
    %c0_671 = arith.constant 0 : index
    %746 = vector.load %arg44[%c64_670, %c0_671] : memref<288x256xf32, #tpu.memory_space<vmem>>, vector<8x256xf32>
    tpu.vector_store %arg44[%c64_670, %c0_671], %745 {strides = array<i32>} : memref<288x256xf32, #tpu.memory_space<vmem>>, vector<8x256xf32>,
    %c0_672 = arith.constant 0 : index
    %c0_673 = arith.constant 0 : index
    %747 = vector.load %arg44[%c0_672, %c0_673] : memref<288x256xf32, #tpu.memory_space<vmem>>, vector<72x256xf32>
    %748 = arith.truncf %747 : vector<72x256xf32> to vector<72x256xbf16>
    %c0_674 = arith.constant 0 : index
    %c0_675 = arith.constant 0 : index
    %749 = vector.load %arg36[%c0_674, %c0_675] : memref<8x72xbf16, #tpu.memory_space<vmem>>, vector<8x72xbf16>
    %cst_676 = arith.constant dense<0.000000e+00> : vector<8x256xf32>
    %750 = tpu.matmul %749, %748, %cst_676 {dimension_numbers = #tpu.dot_dimension_numbers<[1], [0], [0], [1], [0, 0, 1, 1], [], []>} : vector<8x72xbf16>, vector<72x256xbf16>, vector<8x256xf32> -> vector<8x256xf32>
    %751 = arith.addf %700, %750 : vector<8x256xf32>
    %c0_677 = arith.constant 0 : index
    %c0_678 = arith.constant 0 : index
    %752 = vector.load %arg37[%c0_677, %c0_678] : memref<8x1xf32, #tpu.memory_space<vmem>>, vector<8x1xf32>
    %753 = vector.broadcast %752 : vector<8x1xf32> to vector<8x256xf32>
    %754 = arith.addf %751, %753 : vector<8x256xf32>
    %cst_679 = arith.constant 0.000000e+00 : f32
    %755 = vector.broadcast %cst_679 : f32 to vector<8x256xf32>
    %756 = arith.maximumf %754, %755 : vector<8x256xf32>
    %cst_680 = arith.constant 0.000000e+00 : f32
    %757 = vector.broadcast %cst_680 : f32 to vector<8x17xf32>
    %c0_681 = arith.constant 0 : index
    %c0_682 = arith.constant 0 : index
    %758 = vector.load %arg43[%c0_681, %c0_682] : memref<32x290xf32, #tpu.memory_space<vmem>>, vector<8x17xf32>
    tpu.vector_store %arg43[%c0_681, %c0_682], %757 {strides = array<i32>} : memref<32x290xf32, #tpu.memory_space<vmem>>, vector<8x17xf32>,
    %c0_683 = arith.constant 0 : index
    %c17_684 = arith.constant 17 : index
    %759 = vector.load %arg43[%c0_683, %c17_684] : memref<32x290xf32, #tpu.memory_space<vmem>>, vector<8x256xf32>
    tpu.vector_store %arg43[%c0_683, %c17_684], %756 {strides = array<i32>} : memref<32x290xf32, #tpu.memory_space<vmem>>, vector<8x256xf32>,
    %c0_685 = arith.constant 0 : index
    %c273_686 = arith.constant 273 : index
    %760 = vector.load %arg43[%c0_685, %c273_686] : memref<32x290xf32, #tpu.memory_space<vmem>>, vector<8x17xf32>
    tpu.vector_store %arg43[%c0_685, %c273_686], %757 {strides = array<i32>} : memref<32x290xf32, #tpu.memory_space<vmem>>, vector<8x17xf32>,
    %c0_687 = arith.constant 0 : index
    %c0_688 = arith.constant 0 : index
    %761 = vector.load %arg43[%c0_687, %c0_688] : memref<32x290xf32, #tpu.memory_space<vmem>>, vector<8x256xf32>
    %cst_689 = arith.constant 0.000000e+00 : f32
    %762 = vector.shape_cast %21 : vector<1x256xi1> to vector<1x256xi1>
    %763 = vector.broadcast %762 : vector<1x256xi1> to vector<8x256xi1>
    %764 = vector.broadcast %cst_689 : f32 to vector<8x256xf32>
    %765 = arith.select %763, %761, %764 : vector<8x256xi1>, vector<8x256xf32>
    %c0_690 = arith.constant 0 : index
    %c0_691 = arith.constant 0 : index
    %766 = vector.load %arg44[%c0_690, %c0_691] : memref<288x256xf32, #tpu.memory_space<vmem>>, vector<8x256xf32>
    tpu.vector_store %arg44[%c0_690, %c0_691], %765 {strides = array<i32>} : memref<288x256xf32, #tpu.memory_space<vmem>>, vector<8x256xf32>,
    %c0_692 = arith.constant 0 : index
    %c1_693 = arith.constant 1 : index
    %767 = vector.load %arg43[%c0_692, %c1_693] : memref<32x290xf32, #tpu.memory_space<vmem>>, vector<8x256xf32>
    %c8_694 = arith.constant 8 : index
    %c0_695 = arith.constant 0 : index
    %768 = vector.load %arg44[%c8_694, %c0_695] : memref<288x256xf32, #tpu.memory_space<vmem>>, vector<8x256xf32>
    tpu.vector_store %arg44[%c8_694, %c0_695], %767 {strides = array<i32>} : memref<288x256xf32, #tpu.memory_space<vmem>>, vector<8x256xf32>,
    %c0_696 = arith.constant 0 : index
    %c2_697 = arith.constant 2 : index
    %769 = vector.load %arg43[%c0_696, %c2_697] : memref<32x290xf32, #tpu.memory_space<vmem>>, vector<8x256xf32>
    %cst_698 = arith.constant 0.000000e+00 : f32
    %770 = vector.shape_cast %23 : vector<1x256xi1> to vector<1x256xi1>
    %771 = vector.broadcast %770 : vector<1x256xi1> to vector<8x256xi1>
    %772 = vector.broadcast %cst_698 : f32 to vector<8x256xf32>
    %773 = arith.select %771, %769, %772 : vector<8x256xi1>, vector<8x256xf32>
    %c16_699 = arith.constant 16 : index
    %c0_700 = arith.constant 0 : index
    %774 = vector.load %arg44[%c16_699, %c0_700] : memref<288x256xf32, #tpu.memory_space<vmem>>, vector<8x256xf32>
    tpu.vector_store %arg44[%c16_699, %c0_700], %773 {strides = array<i32>} : memref<288x256xf32, #tpu.memory_space<vmem>>, vector<8x256xf32>,
    %c0_701 = arith.constant 0 : index
    %c16_702 = arith.constant 16 : index
    %775 = vector.load %arg43[%c0_701, %c16_702] : memref<32x290xf32, #tpu.memory_space<vmem>>, vector<8x256xf32>
    %cst_703 = arith.constant 0.000000e+00 : f32
    %776 = vector.shape_cast %21 : vector<1x256xi1> to vector<1x256xi1>
    %777 = vector.broadcast %776 : vector<1x256xi1> to vector<8x256xi1>
    %778 = vector.broadcast %cst_703 : f32 to vector<8x256xf32>
    %779 = arith.select %777, %775, %778 : vector<8x256xi1>, vector<8x256xf32>
    %c24_704 = arith.constant 24 : index
    %c0_705 = arith.constant 0 : index
    %780 = vector.load %arg44[%c24_704, %c0_705] : memref<288x256xf32, #tpu.memory_space<vmem>>, vector<8x256xf32>
    tpu.vector_store %arg44[%c24_704, %c0_705], %779 {strides = array<i32>} : memref<288x256xf32, #tpu.memory_space<vmem>>, vector<8x256xf32>,
    %c0_706 = arith.constant 0 : index
    %c17_707 = arith.constant 17 : index
    %781 = vector.load %arg43[%c0_706, %c17_707] : memref<32x290xf32, #tpu.memory_space<vmem>>, vector<8x256xf32>
    %c32_708 = arith.constant 32 : index
    %c0_709 = arith.constant 0 : index
    %782 = vector.load %arg44[%c32_708, %c0_709] : memref<288x256xf32, #tpu.memory_space<vmem>>, vector<8x256xf32>
    tpu.vector_store %arg44[%c32_708, %c0_709], %781 {strides = array<i32>} : memref<288x256xf32, #tpu.memory_space<vmem>>, vector<8x256xf32>,
    %c0_710 = arith.constant 0 : index
    %c18_711 = arith.constant 18 : index
    %783 = vector.load %arg43[%c0_710, %c18_711] : memref<32x290xf32, #tpu.memory_space<vmem>>, vector<8x256xf32>
    %cst_712 = arith.constant 0.000000e+00 : f32
    %784 = vector.shape_cast %23 : vector<1x256xi1> to vector<1x256xi1>
    %785 = vector.broadcast %784 : vector<1x256xi1> to vector<8x256xi1>
    %786 = vector.broadcast %cst_712 : f32 to vector<8x256xf32>
    %787 = arith.select %785, %783, %786 : vector<8x256xi1>, vector<8x256xf32>
    %c40_713 = arith.constant 40 : index
    %c0_714 = arith.constant 0 : index
    %788 = vector.load %arg44[%c40_713, %c0_714] : memref<288x256xf32, #tpu.memory_space<vmem>>, vector<8x256xf32>
    tpu.vector_store %arg44[%c40_713, %c0_714], %787 {strides = array<i32>} : memref<288x256xf32, #tpu.memory_space<vmem>>, vector<8x256xf32>,
    %c0_715 = arith.constant 0 : index
    %c32_716 = arith.constant 32 : index
    %789 = vector.load %arg43[%c0_715, %c32_716] : memref<32x290xf32, #tpu.memory_space<vmem>>, vector<8x256xf32>
    %cst_717 = arith.constant 0.000000e+00 : f32
    %790 = vector.shape_cast %21 : vector<1x256xi1> to vector<1x256xi1>
    %791 = vector.broadcast %790 : vector<1x256xi1> to vector<8x256xi1>
    %792 = vector.broadcast %cst_717 : f32 to vector<8x256xf32>
    %793 = arith.select %791, %789, %792 : vector<8x256xi1>, vector<8x256xf32>
    %c48_718 = arith.constant 48 : index
    %c0_719 = arith.constant 0 : index
    %794 = vector.load %arg44[%c48_718, %c0_719] : memref<288x256xf32, #tpu.memory_space<vmem>>, vector<8x256xf32>
    tpu.vector_store %arg44[%c48_718, %c0_719], %793 {strides = array<i32>} : memref<288x256xf32, #tpu.memory_space<vmem>>, vector<8x256xf32>,
    %c0_720 = arith.constant 0 : index
    %c33_721 = arith.constant 33 : index
    %795 = vector.load %arg43[%c0_720, %c33_721] : memref<32x290xf32, #tpu.memory_space<vmem>>, vector<8x256xf32>
    %c56_722 = arith.constant 56 : index
    %c0_723 = arith.constant 0 : index
    %796 = vector.load %arg44[%c56_722, %c0_723] : memref<288x256xf32, #tpu.memory_space<vmem>>, vector<8x256xf32>
    tpu.vector_store %arg44[%c56_722, %c0_723], %795 {strides = array<i32>} : memref<288x256xf32, #tpu.memory_space<vmem>>, vector<8x256xf32>,
    %c0_724 = arith.constant 0 : index
    %c34_725 = arith.constant 34 : index
    %797 = vector.load %arg43[%c0_724, %c34_725] : memref<32x290xf32, #tpu.memory_space<vmem>>, vector<8x256xf32>
    %cst_726 = arith.constant 0.000000e+00 : f32
    %798 = vector.shape_cast %23 : vector<1x256xi1> to vector<1x256xi1>
    %799 = vector.broadcast %798 : vector<1x256xi1> to vector<8x256xi1>
    %800 = vector.broadcast %cst_726 : f32 to vector<8x256xf32>
    %801 = arith.select %799, %797, %800 : vector<8x256xi1>, vector<8x256xf32>
    %c64_727 = arith.constant 64 : index
    %c0_728 = arith.constant 0 : index
    %802 = vector.load %arg44[%c64_727, %c0_728] : memref<288x256xf32, #tpu.memory_space<vmem>>, vector<8x256xf32>
    tpu.vector_store %arg44[%c64_727, %c0_728], %801 {strides = array<i32>} : memref<288x256xf32, #tpu.memory_space<vmem>>, vector<8x256xf32>,
    %c0_729 = arith.constant 0 : index
    %c0_730 = arith.constant 0 : index
    %803 = vector.load %arg44[%c0_729, %c0_730] : memref<288x256xf32, #tpu.memory_space<vmem>>, vector<72x256xf32>
    %804 = arith.truncf %803 : vector<72x256xf32> to vector<72x256xbf16>
    %c0_731 = arith.constant 0 : index
    %c0_732 = arith.constant 0 : index
    %805 = vector.load %arg38[%c0_731, %c0_732] : memref<8x72xbf16, #tpu.memory_space<vmem>>, vector<8x72xbf16>
    %cst_733 = arith.constant dense<0.000000e+00> : vector<8x256xf32>
    %806 = tpu.matmul %805, %804, %cst_733 {dimension_numbers = #tpu.dot_dimension_numbers<[1], [0], [0], [1], [0, 0, 1, 1], [], []>} : vector<8x72xbf16>, vector<72x256xbf16>, vector<8x256xf32> -> vector<8x256xf32>
    %c0_734 = arith.constant 0 : index
    %c0_735 = arith.constant 0 : index
    %807 = vector.load %arg39[%c0_734, %c0_735] : memref<8x1xf32, #tpu.memory_space<vmem>>, vector<8x1xf32>
    %808 = vector.broadcast %807 : vector<8x1xf32> to vector<8x256xf32>
    %809 = arith.addf %806, %808 : vector<8x256xf32>
    %cst_736 = arith.constant 0.000000e+00 : f32
    %810 = vector.broadcast %cst_736 : f32 to vector<8x256xf32>
    %811 = arith.maximumf %809, %810 : vector<8x256xf32>
    %c0_737 = arith.constant 0 : index
    %c0_738 = arith.constant 0 : index
    %812 = vector.load %arg40[%c0_737, %c0_738] : memref<8x1xf32, #tpu.memory_space<vmem>>, vector<8x1xf32>
    %813 = vector.broadcast %812 : vector<8x1xf32> to vector<8x256xf32>
    %814 = arith.mulf %811, %813 : vector<8x256xf32>
    %cst_739 = arith.constant dense<0.000000e+00> : vector<256xf32>
    %815 = vector.multi_reduction <add>, %814, %cst_739 [0] : vector<8x256xf32> to vector<256xf32>
    %816 = vector.shape_cast %815 : vector<256xf32> to vector<1x256xf32>
    %c0_740 = arith.constant 0 : index
    %c0_741 = arith.constant 0 : index
    %817 = vector.load %arg41[%c0_740, %c0_741] : memref<1x1xf32, #tpu.memory_space<vmem>>, vector<1x1xf32>
    %818 = vector.broadcast %817 : vector<1x1xf32> to vector<1x256xf32>
    %819 = arith.addf %816, %818 : vector<1x256xf32>
    %cst_742 = arith.constant 0.000000e+00 : f32
    %820 = vector.broadcast %cst_742 : f32 to vector<1x256xf32>
    %821 = arith.subf %820, %819 : vector<1x256xf32>
    %822 = math.exp %821 : vector<1x256xf32>
    %cst_743 = arith.constant 1.000000e+00 : f32
    %823 = vector.broadcast %cst_743 : f32 to vector<1x256xf32>
    %824 = arith.addf %823, %822 : vector<1x256xf32>
    %cst_744 = arith.constant 1.000000e+00 : f32
    %825 = vector.broadcast %cst_744 : f32 to vector<1x256xf32>
    %826 = arith.divf %825, %824 : vector<1x256xf32>
    %c0_745 = arith.constant 0 : index
    %c0_746 = arith.constant 0 : index
    %c0_747 = arith.constant 0 : index
    %827 = vector.load %arg42[%c0_745, %c0_746, %c0_747] : memref<1x1x256xf32, #tpu.memory_space<vmem>>, vector<1x1x256xf32>
    %828 = vector.shape_cast %827 : vector<1x1x256xf32> to vector<1x256xf32>
    %829 = vector.shape_cast %826 : vector<1x256xf32> to vector<1x1x256xf32>
    tpu.vector_store %arg42[%c0_745, %c0_746, %c0_747], %829 {strides = array<i32>} : memref<1x1x256xf32, #tpu.memory_space<vmem>>, vector<1x1x256xf32>,
    return
  }
  func.func @transform_0(%arg0: i32) -> (i32, i32, i32) {
    %c0_i32 = arith.constant 0 : i32
    %c0_i32_0 = arith.constant 0 : i32
    %c0_i32_1 = arith.constant 0 : i32
    return %arg0, %c0_i32, %c0_i32_0 : i32, i32, i32
  }
  func.func @transform_1(%arg0: i32) -> (i32, i32) {
    %c0_i32 = arith.constant 0 : i32
    %c0_i32_0 = arith.constant 0 : i32
    %c0_i32_1 = arith.constant 0 : i32
    return %c0_i32, %c0_i32_0 : i32, i32
  }
  func.func @transform_2(%arg0: i32) -> (i32, i32) {
    %c0_i32 = arith.constant 0 : i32
    %c0_i32_0 = arith.constant 0 : i32
    %c0_i32_1 = arith.constant 0 : i32
    return %c0_i32, %c0_i32_0 : i32, i32
  }
  func.func @transform_3(%arg0: i32) -> (i32, i32) {
    %c0_i32 = arith.constant 0 : i32
    %c0_i32_0 = arith.constant 0 : i32
    %c0_i32_1 = arith.constant 0 : i32
    return %c0_i32, %c0_i32_0 : i32, i32
  }
  func.func @transform_4(%arg0: i32) -> (i32, i32) {
    %c0_i32 = arith.constant 0 : i32
    %c0_i32_0 = arith.constant 0 : i32
    %c0_i32_1 = arith.constant 0 : i32
    return %c0_i32, %c0_i32_0 : i32, i32
  }
  func.func @transform_5(%arg0: i32) -> (i32, i32) {
    %c0_i32 = arith.constant 0 : i32
    %c0_i32_0 = arith.constant 0 : i32
    %c0_i32_1 = arith.constant 0 : i32
    return %c0_i32, %c0_i32_0 : i32, i32
  }
  func.func @transform_6(%arg0: i32) -> (i32, i32) {
    %c0_i32 = arith.constant 0 : i32
    %c0_i32_0 = arith.constant 0 : i32
    %c0_i32_1 = arith.constant 0 : i32
    return %c0_i32, %c0_i32_0 : i32, i32
  }
  func.func @transform_7(%arg0: i32) -> (i32, i32) {
    %c0_i32 = arith.constant 0 : i32
    %c0_i32_0 = arith.constant 0 : i32
    %c0_i32_1 = arith.constant 0 : i32
    return %c0_i32, %c0_i32_0 : i32, i32
  }
  func.func @transform_8(%arg0: i32) -> (i32, i32) {
    %c0_i32 = arith.constant 0 : i32
    %c0_i32_0 = arith.constant 0 : i32
    %c0_i32_1 = arith.constant 0 : i32
    return %c0_i32, %c0_i32_0 : i32, i32
  }
  func.func @transform_9(%arg0: i32) -> (i32, i32) {
    %c0_i32 = arith.constant 0 : i32
    %c0_i32_0 = arith.constant 0 : i32
    %c0_i32_1 = arith.constant 0 : i32
    return %c0_i32, %c0_i32_0 : i32, i32
  }
  func.func @transform_10(%arg0: i32) -> (i32, i32) {
    %c0_i32 = arith.constant 0 : i32
    %c0_i32_0 = arith.constant 0 : i32
    %c0_i32_1 = arith.constant 0 : i32
    return %c0_i32, %c0_i32_0 : i32, i32
  }
  func.func @transform_11(%arg0: i32) -> (i32, i32) {
    %c0_i32 = arith.constant 0 : i32
    %c0_i32_0 = arith.constant 0 : i32
    %c0_i32_1 = arith.constant 0 : i32
    return %c0_i32, %c0_i32_0 : i32, i32
  }
  func.func @transform_12(%arg0: i32) -> (i32, i32) {
    %c0_i32 = arith.constant 0 : i32
    %c0_i32_0 = arith.constant 0 : i32
    %c0_i32_1 = arith.constant 0 : i32
    return %c0_i32, %c0_i32_0 : i32, i32
  }
  func.func @transform_13(%arg0: i32) -> (i32, i32) {
    %c0_i32 = arith.constant 0 : i32
    %c0_i32_0 = arith.constant 0 : i32
    %c0_i32_1 = arith.constant 0 : i32
    return %c0_i32, %c0_i32_0 : i32, i32
  }
  func.func @transform_14(%arg0: i32) -> (i32, i32) {
    %c0_i32 = arith.constant 0 : i32
    %c0_i32_0 = arith.constant 0 : i32
    %c0_i32_1 = arith.constant 0 : i32
    return %c0_i32, %c0_i32_0 : i32, i32
  }
  func.func @transform_15(%arg0: i32) -> (i32, i32) {
    %c0_i32 = arith.constant 0 : i32
    %c0_i32_0 = arith.constant 0 : i32
    %c0_i32_1 = arith.constant 0 : i32
    return %c0_i32, %c0_i32_0 : i32, i32
  }
  func.func @transform_16(%arg0: i32) -> (i32, i32) {
    %c0_i32 = arith.constant 0 : i32
    %c0_i32_0 = arith.constant 0 : i32
    %c0_i32_1 = arith.constant 0 : i32
    return %c0_i32, %c0_i32_0 : i32, i32
  }
  func.func @transform_17(%arg0: i32) -> (i32, i32) {
    %c0_i32 = arith.constant 0 : i32
    %c0_i32_0 = arith.constant 0 : i32
    %c0_i32_1 = arith.constant 0 : i32
    return %c0_i32, %c0_i32_0 : i32, i32
  }
  func.func @transform_18(%arg0: i32) -> (i32, i32) {
    %c0_i32 = arith.constant 0 : i32
    %c0_i32_0 = arith.constant 0 : i32
    %c0_i32_1 = arith.constant 0 : i32
    return %c0_i32, %c0_i32_0 : i32, i32
  }
  func.func @transform_19(%arg0: i32) -> (i32, i32) {
    %c0_i32 = arith.constant 0 : i32
    %c0_i32_0 = arith.constant 0 : i32
    %c0_i32_1 = arith.constant 0 : i32
    return %c0_i32, %c0_i32_0 : i32, i32
  }
  func.func @transform_20(%arg0: i32) -> (i32, i32) {
    %c0_i32 = arith.constant 0 : i32
    %c0_i32_0 = arith.constant 0 : i32
    %c0_i32_1 = arith.constant 0 : i32
    return %c0_i32, %c0_i32_0 : i32, i32
  }
  func.func @transform_21(%arg0: i32) -> (i32, i32) {
    %c0_i32 = arith.constant 0 : i32
    %c0_i32_0 = arith.constant 0 : i32
    %c0_i32_1 = arith.constant 0 : i32
    return %c0_i32, %c0_i32_0 : i32, i32
  }
  func.func @transform_22(%arg0: i32) -> (i32, i32) {
    %c0_i32 = arith.constant 0 : i32
    %c0_i32_0 = arith.constant 0 : i32
    %c0_i32_1 = arith.constant 0 : i32
    return %c0_i32, %c0_i32_0 : i32, i32
  }
  func.func @transform_23(%arg0: i32) -> (i32, i32) {
    %c0_i32 = arith.constant 0 : i32
    %c0_i32_0 = arith.constant 0 : i32
    %c0_i32_1 = arith.constant 0 : i32
    return %c0_i32, %c0_i32_0 : i32, i32
  }
  func.func @transform_24(%arg0: i32) -> (i32, i32) {
    %c0_i32 = arith.constant 0 : i32
    %c0_i32_0 = arith.constant 0 : i32
    %c0_i32_1 = arith.constant 0 : i32
    return %c0_i32, %c0_i32_0 : i32, i32
  }
  func.func @transform_25(%arg0: i32) -> (i32, i32) {
    %c0_i32 = arith.constant 0 : i32
    %c0_i32_0 = arith.constant 0 : i32
    %c0_i32_1 = arith.constant 0 : i32
    return %c0_i32, %c0_i32_0 : i32, i32
  }
  func.func @transform_26(%arg0: i32) -> (i32, i32) {
    %c0_i32 = arith.constant 0 : i32
    %c0_i32_0 = arith.constant 0 : i32
    %c0_i32_1 = arith.constant 0 : i32
    return %c0_i32, %c0_i32_0 : i32, i32
  }
  func.func @transform_27(%arg0: i32) -> (i32, i32) {
    %c0_i32 = arith.constant 0 : i32
    %c0_i32_0 = arith.constant 0 : i32
    %c0_i32_1 = arith.constant 0 : i32
    return %c0_i32, %c0_i32_0 : i32, i32
  }
  func.func @transform_28(%arg0: i32) -> (i32, i32) {
    %c0_i32 = arith.constant 0 : i32
    %c0_i32_0 = arith.constant 0 : i32
    %c0_i32_1 = arith.constant 0 : i32
    return %c0_i32, %c0_i32_0 : i32, i32
  }
  func.func @transform_29(%arg0: i32) -> (i32, i32) {
    %c0_i32 = arith.constant 0 : i32
    %c0_i32_0 = arith.constant 0 : i32
    %c0_i32_1 = arith.constant 0 : i32
    return %c0_i32, %c0_i32_0 : i32, i32
  }
  func.func @transform_30(%arg0: i32) -> (i32, i32) {
    %c0_i32 = arith.constant 0 : i32
    %c0_i32_0 = arith.constant 0 : i32
    %c0_i32_1 = arith.constant 0 : i32
    return %c0_i32, %c0_i32_0 : i32, i32
  }
  func.func @transform_31(%arg0: i32) -> (i32, i32) {
    %c0_i32 = arith.constant 0 : i32
    %c0_i32_0 = arith.constant 0 : i32
    %c0_i32_1 = arith.constant 0 : i32
    return %c0_i32, %c0_i32_0 : i32, i32
  }
  func.func @transform_32(%arg0: i32) -> (i32, i32) {
    %c0_i32 = arith.constant 0 : i32
    %c0_i32_0 = arith.constant 0 : i32
    %c0_i32_1 = arith.constant 0 : i32
    return %c0_i32, %c0_i32_0 : i32, i32
  }
  func.func @transform_33(%arg0: i32) -> (i32, i32) {
    %c0_i32 = arith.constant 0 : i32
    %c0_i32_0 = arith.constant 0 : i32
    %c0_i32_1 = arith.constant 0 : i32
    return %c0_i32, %c0_i32_0 : i32, i32
  }
  func.func @transform_34(%arg0: i32) -> (i32, i32) {
    %c0_i32 = arith.constant 0 : i32
    %c0_i32_0 = arith.constant 0 : i32
    %c0_i32_1 = arith.constant 0 : i32
    return %c0_i32, %c0_i32_0 : i32, i32
  }
  func.func @transform_35(%arg0: i32) -> (i32, i32) {
    %c0_i32 = arith.constant 0 : i32
    %c0_i32_0 = arith.constant 0 : i32
    %c0_i32_1 = arith.constant 0 : i32
    return %c0_i32, %c0_i32_0 : i32, i32
  }
  func.func @transform_36(%arg0: i32) -> (i32, i32) {
    %c0_i32 = arith.constant 0 : i32
    %c0_i32_0 = arith.constant 0 : i32
    %c0_i32_1 = arith.constant 0 : i32
    return %c0_i32, %c0_i32_0 : i32, i32
  }
  func.func @transform_37(%arg0: i32) -> (i32, i32) {
    %c0_i32 = arith.constant 0 : i32
    %c0_i32_0 = arith.constant 0 : i32
    %c0_i32_1 = arith.constant 0 : i32
    return %c0_i32, %c0_i32_0 : i32, i32
  }
  func.func @transform_38(%arg0: i32) -> (i32, i32) {
    %c0_i32 = arith.constant 0 : i32
    %c0_i32_0 = arith.constant 0 : i32
    %c0_i32_1 = arith.constant 0 : i32
    return %c0_i32, %c0_i32_0 : i32, i32
  }
  func.func @transform_39(%arg0: i32) -> (i32, i32) {
    %c0_i32 = arith.constant 0 : i32
    %c0_i32_0 = arith.constant 0 : i32
    %c0_i32_1 = arith.constant 0 : i32
    return %c0_i32, %c0_i32_0 : i32, i32
  }
  func.func @transform_40(%arg0: i32) -> (i32, i32) {
    %c0_i32 = arith.constant 0 : i32
    %c0_i32_0 = arith.constant 0 : i32
    %c0_i32_1 = arith.constant 0 : i32
    return %c0_i32, %c0_i32_0 : i32, i32
  }
  func.func @transform_41(%arg0: i32) -> (i32, i32, i32) {
    %c0_i32 = arith.constant 0 : i32
    %c0_i32_0 = arith.constant 0 : i32
    %c0_i32_1 = arith.constant 0 : i32
    return %arg0, %c0_i32, %c0_i32_0 : i32, i32, i32
  }
}

</mosaic_0001>

<llo_original>
// kernel: _lambda_.1
$region0: #{_lambda_.1}
  #allocation0 [shape = 'u32[]', space=smem, size = 0x4, offset = 0x4, fixed_abs, tag = 'smem constant byte address 0x4 - core index']
  #allocation1 [shape = 'u32[144,128]{1,0:T(1,128)}', space=vmem, size = 0x12000, scoped, tag = 'internal scratch']
  #allocation2 [shape = 'f32[32,290]{1,0:T(8,128)}', space=vmem, size = 0xc000, scoped, tag = 'scratch operand']
  #allocation3 [shape = 'f32[288,256]{1,0:T(8,128)}', space=vmem, size = 0x48000, scoped, tag = 'scratch operand']
  #allocation4 [shape = 'f32[1,1]{1,0:T(1,128)S(1)}', space=vmem, size = 0x200, scoped, tag = 'scoped memory for _lambda_.1']
  #allocation5 [shape = 'f32[1,1]{1,0:T(1,128)S(1)}', space=vmem, size = 0x200, scoped, tag = 'scoped memory for _lambda_.1']
  #allocation6 [shape = 'f32[1,1]{1,0:T(1,128)S(1)}', space=vmem, size = 0x200, scoped, tag = 'scoped memory for _lambda_.1']
  %s0 = inlined_call_operand.smem [shape: u32[42], index: -1, kind: input, shape index: {}]
  %s1 = sld [smem:[%s0]]
  %s2 = scalar_lea.smem %s0, 1
  %s3 = sld [smem:[%s2]]
  %s4 = scalar_lea.smem %s0, 2
  %s5 = sld [smem:[%s4]]
  %s6 = scalar_lea.smem %s0, 3
  %s7 = sld [smem:[%s6]]
  %s8 = scalar_lea.smem %s0, 4
  %s9 = sld [smem:[%s8]]
  %s10 = scalar_lea.smem %s0, 5
  %s11 = sld [smem:[%s10]]
  %s12 = scalar_lea.smem %s0, 6
  %s13 = sld [smem:[%s12]]
  %s14 = scalar_lea.smem %s0, 7
  %s15 = sld [smem:[%s14]]
  %s16 = scalar_lea.smem %s0, 8
  %s17 = sld [smem:[%s16]]
  %s18 = scalar_lea.smem %s0, 9
  %s19 = sld [smem:[%s18]]
  %s20 = scalar_lea.smem %s0, 10
  %s21 = sld [smem:[%s20]]
  %s22 = scalar_lea.smem %s0, 11
  %s23 = sld [smem:[%s22]]
  %s24 = scalar_lea.smem %s0, 12
  %s25 = sld [smem:[%s24]]
  %s26 = scalar_lea.smem %s0, 13
  %s27 = sld [smem:[%s26]]
  %s28 = scalar_lea.smem %s0, 14
  %s29 = sld [smem:[%s28]]
  %s30 = scalar_lea.smem %s0, 15
  %s31 = sld [smem:[%s30]]
  %s32 = scalar_lea.smem %s0, 16
  %s33 = sld [smem:[%s32]]
  %s34 = scalar_lea.smem %s0, 17
  %s35 = sld [smem:[%s34]]
  %s36 = scalar_lea.smem %s0, 18
  %s37 = sld [smem:[%s36]]
  %s38 = scalar_lea.smem %s0, 19
  %s39 = sld [smem:[%s38]]
  %s40 = scalar_lea.smem %s0, 20
  %s41 = sld [smem:[%s40]]
  %s42 = scalar_lea.smem %s0, 21
  %s43 = sld [smem:[%s42]]
  %s44 = scalar_lea.smem %s0, 22
  %s45 = sld [smem:[%s44]]
  %s46 = scalar_lea.smem %s0, 23
  %s47 = sld [smem:[%s46]]
  %s48 = scalar_lea.smem %s0, 24
  %s49 = sld [smem:[%s48]]
  %s50 = scalar_lea.smem %s0, 25
  %s51 = sld [smem:[%s50]]
  %s52 = scalar_lea.smem %s0, 26
  %s53 = sld [smem:[%s52]]
  %s54 = scalar_lea.smem %s0, 27
  %s55 = sld [smem:[%s54]]
  %s56 = scalar_lea.smem %s0, 28
  %s57 = sld [smem:[%s56]]
  %s58 = scalar_lea.smem %s0, 29
  %s59 = sld [smem:[%s58]]
  %s60 = scalar_lea.smem %s0, 30
  %s61 = sld [smem:[%s60]]
  %s62 = scalar_lea.smem %s0, 31
  %s63 = sld [smem:[%s62]]
  %s64 = scalar_lea.smem %s0, 32
  %s65 = sld [smem:[%s64]]
  %s66 = scalar_lea.smem %s0, 33
  %s67 = sld [smem:[%s66]]
  %s68 = scalar_lea.smem %s0, 34
  %s69 = sld [smem:[%s68]]
  %s70 = scalar_lea.smem %s0, 35
  %s71 = sld [smem:[%s70]]
  %s72 = scalar_lea.smem %s0, 36
  %s73 = sld [smem:[%s72]]
  %s74 = scalar_lea.smem %s0, 37
  %s75 = sld [smem:[%s74]]
  %s76 = scalar_lea.smem %s0, 38
  %s77 = sld [smem:[%s76]]
  %s78 = scalar_lea.smem %s0, 39
  %s79 = sld [smem:[%s78]]
  %s80 = scalar_lea.smem %s0, 40
  %s81 = sld [smem:[%s80]]
  %s82 = scalar_lea.smem %s0, 41
  %s83 = sld [smem:[%s82]]
  %s84 = sld [smem:[#allocation0]]
  $region197: #{_lambda_.1} parent=0
    _
  %s86 = ssub.s32 1, %s84
  %s87 = scalar_select 0, %s86, %s84
  %v88 = vstv %s43
  %89 = vst [vmem:[#allocation4] sm:$0x1] %v88
  %v90 = vstv %s67
  %91 = vst [vmem:[#allocation5] sm:$0x1] %v90
  %v92 = vstv %s81
  %93 = vst [vmem:[#allocation6] sm:$0x1] %v92
  loop: start=0, step=1, limit=4
  $region2: #{_lambda_.1} parent=0 // loop_pre_header
    _
  $region3: #{_lambda_.1} parent=0 // loop_header
    %s95 = sphi 0, %s99
    %p96 = scmp.ge.s32.totalorder %s95, 4
    %s105 = sphi 0, %s107
    %s108 = sphi 0, %s105
    %s109 = sphi 0, %s108
    %s125 = sphi 0, %s109
    %s129 = sphi 0, %s129
    %s131 = sphi 0, %s129
    %s132 = sphi 0, %s131
    %s146 = sphi 0, %s132
    %s150 = sphi 0, %s150
    %s152 = sphi 0, %s150
    %s153 = sphi 0, %s152
    %s167 = sphi 0, %s153
    %s171 = sphi 0, %s171
    %s173 = sphi 0, %s171
    %s174 = sphi 0, %s173
    %s188 = sphi 0, %s174
    %s192 = sphi 0, %s192
    %s194 = sphi 0, %s192
    %s195 = sphi 0, %s194
    %s209 = sphi 0, %s195
    %s213 = sphi 0, %s213
    %s215 = sphi 0, %s213
    %s216 = sphi 0, %s215
    %s230 = sphi 0, %s216
    %s234 = sphi 0, %s234
    %s236 = sphi 0, %s234
    %s237 = sphi 0, %s236
    %s251 = sphi 0, %s237
    %s255 = sphi 0, %s255
    %s257 = sphi 0, %s255
    %s258 = sphi 0, %s257
    %s272 = sphi 0, %s258
    %s276 = sphi 0, %s276
    %s278 = sphi 0, %s276
    %s279 = sphi 0, %s278
    %s293 = sphi 0, %s279
    %s297 = sphi 0, %s297
    %s299 = sphi 0, %s297
    %s300 = sphi 0, %s299
    %s314 = sphi 0, %s300
    %s318 = sphi 0, %s318
    %s320 = sphi 0, %s318
    %s321 = sphi 0, %s320
    %s335 = sphi 0, %s321
    %s339 = sphi 0, %s339
    %s341 = sphi 0, %s339
    %s342 = sphi 0, %s341
    %s356 = sphi 0, %s342
    %s360 = sphi 0, %s360
    %s362 = sphi 0, %s360
    %s363 = sphi 0, %s362
    %s377 = sphi 0, %s363
    %s381 = sphi 0, %s381
    %s383 = sphi 0, %s381
    %s384 = sphi 0, %s383
    %s398 = sphi 0, %s384
    %s402 = sphi 0, %s402
    %s404 = sphi 0, %s402
    %s405 = sphi 0, %s404
    %s419 = sphi 0, %s405
    %s423 = sphi 0, %s423
    %s425 = sphi 0, %s423
    %s426 = sphi 0, %s425
    %s440 = sphi 0, %s426
    %s444 = sphi 0, %s444
    %s446 = sphi 0, %s444
    %s447 = sphi 0, %s446
    %s461 = sphi 0, %s447
    %s465 = sphi 0, %s465
    %s467 = sphi 0, %s465
    %s468 = sphi 0, %s467
    %s482 = sphi 0, %s468
    %s486 = sphi 0, %s486
    %s488 = sphi 0, %s486
    %s489 = sphi 0, %s488
    %s503 = sphi 0, %s489
    %s507 = sphi 0, %s507
    %s509 = sphi 0, %s507
    %s510 = sphi 0, %s509
    %s524 = sphi 0, %s510
    %s528 = sphi 0, %s528
    %s530 = sphi 0, %s528
    %s531 = sphi 0, %s530
    %s545 = sphi 0, %s531
    %s549 = sphi 0, %s549
    %s551 = sphi 0, %s549
    %s552 = sphi 0, %s551
    %s566 = sphi 0, %s552
    %s570 = sphi 0, %s570
    %s572 = sphi 0, %s570
    %s573 = sphi 0, %s572
    %s587 = sphi 0, %s573
    %s591 = sphi 0, %s591
    %s593 = sphi 0, %s591
    %s594 = sphi 0, %s593
    %s608 = sphi 0, %s594
    %s612 = sphi 0, %s612
    %s614 = sphi 0, %s612
    %s615 = sphi 0, %s614
    %s629 = sphi 0, %s615
    %s633 = sphi 0, %s633
    %s635 = sphi 0, %s633
    %s636 = sphi 0, %s635
    %s650 = sphi 0, %s636
    %s654 = sphi 0, %s654
    %s656 = sphi 0, %s654
    %s657 = sphi 0, %s656
    %s671 = sphi 0, %s657
    %s675 = sphi 0, %s675
    %s677 = sphi 0, %s675
    %s678 = sphi 0, %s677
    %s692 = sphi 0, %s678
    %s696 = sphi 0, %s696
    %s698 = sphi 0, %s696
    %s699 = sphi 0, %s698
    %s713 = sphi 0, %s699
    %s717 = sphi 0, %s717
    %s719 = sphi 0, %s717
    %s720 = sphi 0, %s719
    %s734 = sphi 0, %s720
    %s738 = sphi 0, %s738
    %s740 = sphi 0, %s738
    %s741 = sphi 0, %s740
    %s755 = sphi 0, %s741
    %s759 = sphi 0, %s759
    %s761 = sphi 0, %s759
    %s762 = sphi 0, %s761
    %s776 = sphi 0, %s762
    %s780 = sphi 0, %s780
    %s782 = sphi 0, %s780
    %s783 = sphi 0, %s782
    %s797 = sphi 0, %s783
    %s801 = sphi 0, %s801
    %s803 = sphi 0, %s801
    %s804 = sphi 0, %s803
    %s818 = sphi 0, %s804
    %s822 = sphi 0, %s822
    %s824 = sphi 0, %s822
    %s825 = sphi 0, %s824
    %s839 = sphi 0, %s825
    %s843 = sphi 0, %s843
    %s845 = sphi 0, %s843
    %s846 = sphi 0, %s845
    %s860 = sphi 0, %s846
    %s864 = sphi 0, %s864
    %s866 = sphi 0, %s864
    %s867 = sphi 0, %s866
    %s881 = sphi 0, %s867
    %s885 = sphi 0, %s885
    %s887 = sphi 0, %s885
    %s888 = sphi 0, %s887
    %s902 = sphi 0, %s888
    %s906 = sphi 0, %s906
    %s908 = sphi 0, %s906
    %s909 = sphi 0, %s908
    %s923 = sphi 0, %s909
    %s927 = sphi 0, %s927
    %s929 = sphi 0, %s927
    %s930 = sphi 0, %s929
    %s944 = sphi 0, %s930
    %s948 = sphi 0, %s948
    %s950 = sphi 0, %s948
    %s951 = sphi 0, %s950
    %s965 = sphi 0, %s951
    %s971 = sphi 0, %s973
    %s974 = sphi 0, %s971
    %s975 = sphi 0, %s974
    %s991 = sphi 0, %s975
  $region4: #{_lambda_.1} parent=0 // loop_header_branch
    %98 = sbr.rel (%p96) target = $region8
  $region5: #{_lambda_.1} parent=0 // loop_body
    %s100 = ssub.s32 %s95, 1
    %s101 = ssub.s32 %s95, 2
    %s102 = sadd.s32 %s95, 1
    %s103 = ssub.s32 %s95, %s102
    %p104 = scmp.eq.s32.totalorder %s103, 0
    %s106 = sadd.s32 %s105, 1
    %s107 = scalar_select %p104, %s105, %s106
    %p110 = pneg %p104
    %p111 = scmp.eq.s32.totalorder %s95, 1
    %p112 = por %p110, %p111
    %p113 = scmp.ne.s32.totalorder %s105, %s108
    %p114 = scmp.eq.s32.totalorder %s95, 0
    %p115 = por %p113, %p114
    %p116 = scmp.ne.s32.totalorder %s105, %s108
    %p117 = scmp.eq.s32.totalorder %s100, 1
    %p118 = por %p116, %p117
    %p119 = scmp.ne.s32.totalorder %s108, %s109
    %p120 = scmp.eq.s32.totalorder %s100, 0
    %p121 = por %p119, %p120
    %p122 = scmp.ne.s32.totalorder %s108, %s109
    %p123 = scmp.eq.s32.totalorder %s101, 1
    %p124 = por %p122, %p123
    %p126 = scmp.ne.s32.totalorder %s109, %s125
    %p127 = scmp.eq.s32.totalorder %s101, 0
    %p128 = por %p126, %p127
    %s130 = sadd.s32 %s129, 1
    %p133 = scmp.eq.s32.totalorder %s95, 1
    %p134 = scmp.ne.s32.totalorder %s129, %s131
    %p135 = scmp.eq.s32.totalorder %s95, 0
    %p136 = por %p134, %p135
    %p137 = scmp.ne.s32.totalorder %s129, %s131
    %p138 = scmp.eq.s32.totalorder %s100, 1
    %p139 = por %p137, %p138
    %p140 = scmp.ne.s32.totalorder %s131, %s132
    %p141 = scmp.eq.s32.totalorder %s100, 0
    %p142 = por %p140, %p141
    %p143 = scmp.ne.s32.totalorder %s131, %s132
    %p144 = scmp.eq.s32.totalorder %s101, 1
    %p145 = por %p143, %p144
    %p147 = scmp.ne.s32.totalorder %s132, %s146
    %p148 = scmp.eq.s32.totalorder %s101, 0
    %p149 = por %p147, %p148
    %s151 = sadd.s32 %s150, 1
    %p154 = scmp.eq.s32.totalorder %s95, 1
    %p155 = scmp.ne.s32.totalorder %s150, %s152
    %p156 = scmp.eq.s32.totalorder %s95, 0
    %p157 = por %p155, %p156
    %p158 = scmp.ne.s32.totalorder %s150, %s152
    %p159 = scmp.eq.s32.totalorder %s100, 1
    %p160 = por %p158, %p159
    %p161 = scmp.ne.s32.totalorder %s152, %s153
    %p162 = scmp.eq.s32.totalorder %s100, 0
    %p163 = por %p161, %p162
    %p164 = scmp.ne.s32.totalorder %s152, %s153
    %p165 = scmp.eq.s32.totalorder %s101, 1
    %p166 = por %p164, %p165
    %p168 = scmp.ne.s32.totalorder %s153, %s167
    %p169 = scmp.eq.s32.totalorder %s101, 0
    %p170 = por %p168, %p169
    %s172 = sadd.s32 %s171, 1
    %p175 = scmp.eq.s32.totalorder %s95, 1
    %p176 = scmp.ne.s32.totalorder %s171, %s173
    %p177 = scmp.eq.s32.totalorder %s95, 0
    %p178 = por %p176, %p177
    %p179 = scmp.ne.s32.totalorder %s171, %s173
    %p180 = scmp.eq.s32.totalorder %s100, 1
    %p181 = por %p179, %p180
    %p182 = scmp.ne.s32.totalorder %s173, %s174
    %p183 = scmp.eq.s32.totalorder %s100, 0
    %p184 = por %p182, %p183
    %p185 = scmp.ne.s32.totalorder %s173, %s174
    %p186 = scmp.eq.s32.totalorder %s101, 1
    %p187 = por %p185, %p186
    %p189 = scmp.ne.s32.totalorder %s174, %s188
    %p190 = scmp.eq.s32.totalorder %s101, 0
    %p191 = por %p189, %p190
    %s193 = sadd.s32 %s192, 1
    %p196 = scmp.eq.s32.totalorder %s95, 1
    %p197 = scmp.ne.s32.totalorder %s192, %s194
    %p198 = scmp.eq.s32.totalorder %s95, 0
    %p199 = por %p197, %p198
    %p200 = scmp.ne.s32.totalorder %s192, %s194
    %p201 = scmp.eq.s32.totalorder %s100, 1
    %p202 = por %p200, %p201
    %p203 = scmp.ne.s32.totalorder %s194, %s195
    %p204 = scmp.eq.s32.totalorder %s100, 0
    %p205 = por %p203, %p204
    %p206 = scmp.ne.s32.totalorder %s194, %s195
    %p207 = scmp.eq.s32.totalorder %s101, 1
    %p208 = por %p206, %p207
    %p210 = scmp.ne.s32.totalorder %s195, %s209
    %p211 = scmp.eq.s32.totalorder %s101, 0
    %p212 = por %p210, %p211
    %s214 = sadd.s32 %s213, 1
    %p217 = scmp.eq.s32.totalorder %s95, 1
    %p218 = scmp.ne.s32.totalorder %s213, %s215
    %p219 = scmp.eq.s32.totalorder %s95, 0
    %p220 = por %p218, %p219
    %p221 = scmp.ne.s32.totalorder %s213, %s215
    %p222 = scmp.eq.s32.totalorder %s100, 1
    %p223 = por %p221, %p222
    %p224 = scmp.ne.s32.totalorder %s215, %s216
    %p225 = scmp.eq.s32.totalorder %s100, 0
    %p226 = por %p224, %p225
    %p227 = scmp.ne.s32.totalorder %s215, %s216
    %p228 = scmp.eq.s32.totalorder %s101, 1
    %p229 = por %p227, %p228
    %p231 = scmp.ne.s32.totalorder %s216, %s230
    %p232 = scmp.eq.s32.totalorder %s101, 0
    %p233 = por %p231, %p232
    %s235 = sadd.s32 %s234, 1
    %p238 = scmp.eq.s32.totalorder %s95, 1
    %p239 = scmp.ne.s32.totalorder %s234, %s236
    %p240 = scmp.eq.s32.totalorder %s95, 0
    %p241 = por %p239, %p240
    %p242 = scmp.ne.s32.totalorder %s234, %s236
    %p243 = scmp.eq.s32.totalorder %s100, 1
    %p244 = por %p242, %p243
    %p245 = scmp.ne.s32.totalorder %s236, %s237
    %p246 = scmp.eq.s32.totalorder %s100, 0
    %p247 = por %p245, %p246
    %p248 = scmp.ne.s32.totalorder %s236, %s237
    %p249 = scmp.eq.s32.totalorder %s101, 1
    %p250 = por %p248, %p249
    %p252 = scmp.ne.s32.totalorder %s237, %s251
    %p253 = scmp.eq.s32.totalorder %s101, 0
    %p254 = por %p252, %p253
    %s256 = sadd.s32 %s255, 1
    %p259 = scmp.eq.s32.totalorder %s95, 1
    %p260 = scmp.ne.s32.totalorder %s255, %s257
    %p261 = scmp.eq.s32.totalorder %s95, 0
    %p262 = por %p260, %p261
    %p263 = scmp.ne.s32.totalorder %s255, %s257
    %p264 = scmp.eq.s32.totalorder %s100, 1
    %p265 = por %p263, %p264
    %p266 = scmp.ne.s32.totalorder %s257, %s258
    %p267 = scmp.eq.s32.totalorder %s100, 0
    %p268 = por %p266, %p267
    %p269 = scmp.ne.s32.totalorder %s257, %s258
    %p270 = scmp.eq.s32.totalorder %s101, 1
    %p271 = por %p269, %p270
    %p273 = scmp.ne.s32.totalorder %s258, %s272
    %p274 = scmp.eq.s32.totalorder %s101, 0
    %p275 = por %p273, %p274
    %s277 = sadd.s32 %s276, 1
    %p280 = scmp.eq.s32.totalorder %s95, 1
    %p281 = scmp.ne.s32.totalorder %s276, %s278
    %p282 = scmp.eq.s32.totalorder %s95, 0
    %p283 = por %p281, %p282
    %p284 = scmp.ne.s32.totalorder %s276, %s278
    %p285 = scmp.eq.s32.totalorder %s100, 1
    %p286 = por %p284, %p285
    %p287 = scmp.ne.s32.totalorder %s278, %s279
    %p288 = scmp.eq.s32.totalorder %s100, 0
    %p289 = por %p287, %p288
    %p290 = scmp.ne.s32.totalorder %s278, %s279
    %p291 = scmp.eq.s32.totalorder %s101, 1
    %p292 = por %p290, %p291
    %p294 = scmp.ne.s32.totalorder %s279, %s293
    %p295 = scmp.eq.s32.totalorder %s101, 0
    %p296 = por %p294, %p295
    %s298 = sadd.s32 %s297, 1
    %p301 = scmp.eq.s32.totalorder %s95, 1
    %p302 = scmp.ne.s32.totalorder %s297, %s299
    %p303 = scmp.eq.s32.totalorder %s95, 0
    %p304 = por %p302, %p303
    %p305 = scmp.ne.s32.totalorder %s297, %s299
    %p306 = scmp.eq.s32.totalorder %s100, 1
    %p307 = por %p305, %p306
    %p308 = scmp.ne.s32.totalorder %s299, %s300
    %p309 = scmp.eq.s32.totalorder %s100, 0
    %p310 = por %p308, %p309
    %p311 = scmp.ne.s32.totalorder %s299, %s300
    %p312 = scmp.eq.s32.totalorder %s101, 1
    %p313 = por %p311, %p312
    %p315 = scmp.ne.s32.totalorder %s300, %s314
    %p316 = scmp.eq.s32.totalorder %s101, 0
    %p317 = por %p315, %p316
    %s319 = sadd.s32 %s318, 1
    %p322 = scmp.eq.s32.totalorder %s95, 1
    %p323 = scmp.ne.s32.totalorder %s318, %s320
    %p324 = scmp.eq.s32.totalorder %s95, 0
    %p325 = por %p323, %p324
    %p326 = scmp.ne.s32.totalorder %s318, %s320
    %p327 = scmp.eq.s32.totalorder %s100, 1
    %p328 = por %p326, %p327
    %p329 = scmp.ne.s32.totalorder %s320, %s321
    %p330 = scmp.eq.s32.totalorder %s100, 0
    %p331 = por %p329, %p330
    %p332 = scmp.ne.s32.totalorder %s320, %s321
    %p333 = scmp.eq.s32.totalorder %s101, 1
    %p334 = por %p332, %p333
    %p336 = scmp.ne.s32.totalorder %s321, %s335
    %p337 = scmp.eq.s32.totalorder %s101, 0
    %p338 = por %p336, %p337
    %s340 = sadd.s32 %s339, 1
    %p343 = scmp.eq.s32.totalorder %s95, 1
    %p344 = scmp.ne.s32.totalorder %s339, %s341
    %p345 = scmp.eq.s32.totalorder %s95, 0
    %p346 = por %p344, %p345
    %p347 = scmp.ne.s32.totalorder %s339, %s341
    %p348 = scmp.eq.s32.totalorder %s100, 1
    %p349 = por %p347, %p348
    %p350 = scmp.ne.s32.totalorder %s341, %s342
    %p351 = scmp.eq.s32.totalorder %s100, 0
    %p352 = por %p350, %p351
    %p353 = scmp.ne.s32.totalorder %s341, %s342
    %p354 = scmp.eq.s32.totalorder %s101, 1
    %p355 = por %p353, %p354
    %p357 = scmp.ne.s32.totalorder %s342, %s356
    %p358 = scmp.eq.s32.totalorder %s101, 0
    %p359 = por %p357, %p358
    %s361 = sadd.s32 %s360, 1
    %p364 = scmp.eq.s32.totalorder %s95, 1
    %p365 = scmp.ne.s32.totalorder %s360, %s362
    %p366 = scmp.eq.s32.totalorder %s95, 0
    %p367 = por %p365, %p366
    %p368 = scmp.ne.s32.totalorder %s360, %s362
    %p369 = scmp.eq.s32.totalorder %s100, 1
    %p370 = por %p368, %p369
    %p371 = scmp.ne.s32.totalorder %s362, %s363
    %p372 = scmp.eq.s32.totalorder %s100, 0
    %p373 = por %p371, %p372
    %p374 = scmp.ne.s32.totalorder %s362, %s363
    %p375 = scmp.eq.s32.totalorder %s101, 1
    %p376 = por %p374, %p375
    %p378 = scmp.ne.s32.totalorder %s363, %s377
    %p379 = scmp.eq.s32.totalorder %s101, 0
    %p380 = por %p378, %p379
    %s382 = sadd.s32 %s381, 1
    %p385 = scmp.eq.s32.totalorder %s95, 1
    %p386 = scmp.ne.s32.totalorder %s381, %s383
    %p387 = scmp.eq.s32.totalorder %s95, 0
    %p388 = por %p386, %p387
    %p389 = scmp.ne.s32.totalorder %s381, %s383
    %p390 = scmp.eq.s32.totalorder %s100, 1
    %p391 = por %p389, %p390
    %p392 = scmp.ne.s32.totalorder %s383, %s384
    %p393 = scmp.eq.s32.totalorder %s100, 0
    %p394 = por %p392, %p393
    %p395 = scmp.ne.s32.totalorder %s383, %s384
    %p396 = scmp.eq.s32.totalorder %s101, 1
    %p397 = por %p395, %p396
    %p399 = scmp.ne.s32.totalorder %s384, %s398
    %p400 = scmp.eq.s32.totalorder %s101, 0
    %p401 = por %p399, %p400
    %s403 = sadd.s32 %s402, 1
    %p406 = scmp.eq.s32.totalorder %s95, 1
    %p407 = scmp.ne.s32.totalorder %s402, %s404
    %p408 = scmp.eq.s32.totalorder %s95, 0
    %p409 = por %p407, %p408
    %p410 = scmp.ne.s32.totalorder %s402, %s404
    %p411 = scmp.eq.s32.totalorder %s100, 1
    %p412 = por %p410, %p411
    %p413 = scmp.ne.s32.totalorder %s404, %s405
    %p414 = scmp.eq.s32.totalorder %s100, 0
    %p415 = por %p413, %p414
    %p416 = scmp.ne.s32.totalorder %s404, %s405
    %p417 = scmp.eq.s32.totalorder %s101, 1
    %p418 = por %p416, %p417
    %p420 = scmp.ne.s32.totalorder %s405, %s419
    %p421 = scmp.eq.s32.totalorder %s101, 0
    %p422 = por %p420, %p421
    %s424 = sadd.s32 %s423, 1
    %p427 = scmp.eq.s32.totalorder %s95, 1
    %p428 = scmp.ne.s32.totalorder %s423, %s425
    %p429 = scmp.eq.s32.totalorder %s95, 0
    %p430 = por %p428, %p429
    %p431 = scmp.ne.s32.totalorder %s423, %s425
    %p432 = scmp.eq.s32.totalorder %s100, 1
    %p433 = por %p431, %p432
    %p434 = scmp.ne.s32.totalorder %s425, %s426
    %p435 = scmp.eq.s32.totalorder %s100, 0
    %p436 = por %p434, %p435
    %p437 = scmp.ne.s32.totalorder %s425, %s426
    %p438 = scmp.eq.s32.totalorder %s101, 1
    %p439 = por %p437, %p438
    %p441 = scmp.ne.s32.totalorder %s426, %s440
    %p442 = scmp.eq.s32.totalorder %s101, 0
    %p443 = por %p441, %p442
    %s445 = sadd.s32 %s444, 1
    %p448 = scmp.eq.s32.totalorder %s95, 1
    %p449 = scmp.ne.s32.totalorder %s444, %s446
    %p450 = scmp.eq.s32.totalorder %s95, 0
    %p451 = por %p449, %p450
    %p452 = scmp.ne.s32.totalorder %s444, %s446
    %p453 = scmp.eq.s32.totalorder %s100, 1
    %p454 = por %p452, %p453
    %p455 = scmp.ne.s32.totalorder %s446, %s447
    %p456 = scmp.eq.s32.totalorder %s100, 0
    %p457 = por %p455, %p456
    %p458 = scmp.ne.s32.totalorder %s446, %s447
    %p459 = scmp.eq.s32.totalorder %s101, 1
    %p460 = por %p458, %p459
    %p462 = scmp.ne.s32.totalorder %s447, %s461
    %p463 = scmp.eq.s32.totalorder %s101, 0
    %p464 = por %p462, %p463
    %s466 = sadd.s32 %s465, 1
    %p469 = scmp.eq.s32.totalorder %s95, 1
    %p470 = scmp.ne.s32.totalorder %s465, %s467
    %p471 = scmp.eq.s32.totalorder %s95, 0
    %p472 = por %p470, %p471
    %p473 = scmp.ne.s32.totalorder %s465, %s467
    %p474 = scmp.eq.s32.totalorder %s100, 1
    %p475 = por %p473, %p474
    %p476 = scmp.ne.s32.totalorder %s467, %s468
    %p477 = scmp.eq.s32.totalorder %s100, 0
    %p478 = por %p476, %p477
    %p479 = scmp.ne.s32.totalorder %s467, %s468
    %p480 = scmp.eq.s32.totalorder %s101, 1
    %p481 = por %p479, %p480
    %p483 = scmp.ne.s32.totalorder %s468, %s482
    %p484 = scmp.eq.s32.totalorder %s101, 0
    %p485 = por %p483, %p484
    %s487 = sadd.s32 %s486, 1
    %p490 = scmp.eq.s32.totalorder %s95, 1
    %p491 = scmp.ne.s32.totalorder %s486, %s488
    %p492 = scmp.eq.s32.totalorder %s95, 0
    %p493 = por %p491, %p492
    %p494 = scmp.ne.s32.totalorder %s486, %s488
    %p495 = scmp.eq.s32.totalorder %s100, 1
    %p496 = por %p494, %p495
    %p497 = scmp.ne.s32.totalorder %s488, %s489
    %p498 = scmp.eq.s32.totalorder %s100, 0
    %p499 = por %p497, %p498
    %p500 = scmp.ne.s32.totalorder %s488, %s489
    %p501 = scmp.eq.s32.totalorder %s101, 1
    %p502 = por %p500, %p501
    %p504 = scmp.ne.s32.totalorder %s489, %s503
    %p505 = scmp.eq.s32.totalorder %s101, 0
    %p506 = por %p504, %p505
    %s508 = sadd.s32 %s507, 1
    %p511 = scmp.eq.s32.totalorder %s95, 1
    %p512 = scmp.ne.s32.totalorder %s507, %s509
    %p513 = scmp.eq.s32.totalorder %s95, 0
    %p514 = por %p512, %p513
    %p515 = scmp.ne.s32.totalorder %s507, %s509
    %p516 = scmp.eq.s32.totalorder %s100, 1
    %p517 = por %p515, %p516
    %p518 = scmp.ne.s32.totalorder %s509, %s510
    %p519 = scmp.eq.s32.totalorder %s100, 0
    %p520 = por %p518, %p519
    %p521 = scmp.ne.s32.totalorder %s509, %s510
    %p522 = scmp.eq.s32.totalorder %s101, 1
    %p523 = por %p521, %p522
    %p525 = scmp.ne.s32.totalorder %s510, %s524
    %p526 = scmp.eq.s32.totalorder %s101, 0
    %p527 = por %p525, %p526
    %s529 = sadd.s32 %s528, 1
    %p532 = scmp.eq.s32.totalorder %s95, 1
    %p533 = scmp.ne.s32.totalorder %s528, %s530
    %p534 = scmp.eq.s32.totalorder %s95, 0
    %p535 = por %p533, %p534
    %p536 = scmp.ne.s32.totalorder %s528, %s530
    %p537 = scmp.eq.s32.totalorder %s100, 1
    %p538 = por %p536, %p537
    %p539 = scmp.ne.s32.totalorder %s530, %s531
    %p540 = scmp.eq.s32.totalorder %s100, 0
    %p541 = por %p539, %p540
    %p542 = scmp.ne.s32.totalorder %s530, %s531
    %p543 = scmp.eq.s32.totalorder %s101, 1
    %p544 = por %p542, %p543
    %p546 = scmp.ne.s32.totalorder %s531, %s545
    %p547 = scmp.eq.s32.totalorder %s101, 0
    %p548 = por %p546, %p547
    %s550 = sadd.s32 %s549, 1
    %p553 = scmp.eq.s32.totalorder %s95, 1
    %p554 = scmp.ne.s32.totalorder %s549, %s551
    %p555 = scmp.eq.s32.totalorder %s95, 0
    %p556 = por %p554, %p555
    %p557 = scmp.ne.s32.totalorder %s549, %s551
    %p558 = scmp.eq.s32.totalorder %s100, 1
    %p559 = por %p557, %p558
    %p560 = scmp.ne.s32.totalorder %s551, %s552
    %p561 = scmp.eq.s32.totalorder %s100, 0
    %p562 = por %p560, %p561
    %p563 = scmp.ne.s32.totalorder %s551, %s552
    %p564 = scmp.eq.s32.totalorder %s101, 1
    %p565 = por %p563, %p564
    %p567 = scmp.ne.s32.totalorder %s552, %s566
    %p568 = scmp.eq.s32.totalorder %s101, 0
    %p569 = por %p567, %p568
    %s571 = sadd.s32 %s570, 1
    %p574 = scmp.eq.s32.totalorder %s95, 1
    %p575 = scmp.ne.s32.totalorder %s570, %s572
    %p576 = scmp.eq.s32.totalorder %s95, 0
    %p577 = por %p575, %p576
    %p578 = scmp.ne.s32.totalorder %s570, %s572
    %p579 = scmp.eq.s32.totalorder %s100, 1
    %p580 = por %p578, %p579
    %p581 = scmp.ne.s32.totalorder %s572, %s573
    %p582 = scmp.eq.s32.totalorder %s100, 0
    %p583 = por %p581, %p582
    %p584 = scmp.ne.s32.totalorder %s572, %s573
    %p585 = scmp.eq.s32.totalorder %s101, 1
    %p586 = por %p584, %p585
    %p588 = scmp.ne.s32.totalorder %s573, %s587
    %p589 = scmp.eq.s32.totalorder %s101, 0
    %p590 = por %p588, %p589
    %s592 = sadd.s32 %s591, 1
    %p595 = scmp.eq.s32.totalorder %s95, 1
    %p596 = scmp.ne.s32.totalorder %s591, %s593
    %p597 = scmp.eq.s32.totalorder %s95, 0
    %p598 = por %p596, %p597
    %p599 = scmp.ne.s32.totalorder %s591, %s593
    %p600 = scmp.eq.s32.totalorder %s100, 1
    %p601 = por %p599, %p600
    %p602 = scmp.ne.s32.totalorder %s593, %s594
    %p603 = scmp.eq.s32.totalorder %s100, 0
    %p604 = por %p602, %p603
    %p605 = scmp.ne.s32.totalorder %s593, %s594
    %p606 = scmp.eq.s32.totalorder %s101, 1
    %p607 = por %p605, %p606
    %p609 = scmp.ne.s32.totalorder %s594, %s608
    %p610 = scmp.eq.s32.totalorder %s101, 0
    %p611 = por %p609, %p610
    %s613 = sadd.s32 %s612, 1
    %p616 = scmp.eq.s32.totalorder %s95, 1
    %p617 = scmp.ne.s32.totalorder %s612, %s614
    %p618 = scmp.eq.s32.totalorder %s95, 0
    %p619 = por %p617, %p618
    %p620 = scmp.ne.s32.totalorder %s612, %s614
    %p621 = scmp.eq.s32.totalorder %s100, 1
    %p622 = por %p620, %p621
    %p623 = scmp.ne.s32.totalorder %s614, %s615
    %p624 = scmp.eq.s32.totalorder %s100, 0
    %p625 = por %p623, %p624
    %p626 = scmp.ne.s32.totalorder %s614, %s615
    %p627 = scmp.eq.s32.totalorder %s101, 1
    %p628 = por %p626, %p627
    %p630 = scmp.ne.s32.totalorder %s615, %s629
    %p631 = scmp.eq.s32.totalorder %s101, 0
    %p632 = por %p630, %p631
    %s634 = sadd.s32 %s633, 1
    %p637 = scmp.eq.s32.totalorder %s95, 1
    %p638 = scmp.ne.s32.totalorder %s633, %s635
    %p639 = scmp.eq.s32.totalorder %s95, 0
    %p640 = por %p638, %p639
    %p641 = scmp.ne.s32.totalorder %s633, %s635
    %p642 = scmp.eq.s32.totalorder %s100, 1
    %p643 = por %p641, %p642
    %p644 = scmp.ne.s32.totalorder %s635, %s636
    %p645 = scmp.eq.s32.totalorder %s100, 0
    %p646 = por %p644, %p645
    %p647 = scmp.ne.s32.totalorder %s635, %s636
    %p648 = scmp.eq.s32.totalorder %s101, 1
    %p649 = por %p647, %p648
    %p651 = scmp.ne.s32.totalorder %s636, %s650
    %p652 = scmp.eq.s32.totalorder %s101, 0
    %p653 = por %p651, %p652
    %s655 = sadd.s32 %s654, 1
    %p658 = scmp.eq.s32.totalorder %s95, 1
    %p659 = scmp.ne.s32.totalorder %s654, %s656
    %p660 = scmp.eq.s32.totalorder %s95, 0
    %p661 = por %p659, %p660
    %p662 = scmp.ne.s32.totalorder %s654, %s656
    %p663 = scmp.eq.s32.totalorder %s100, 1
    %p664 = por %p662, %p663
    %p665 = scmp.ne.s32.totalorder %s656, %s657
    %p666 = scmp.eq.s32.totalorder %s100, 0
    %p667 = por %p665, %p666
    %p668 = scmp.ne.s32.totalorder %s656, %s657
    %p669 = scmp.eq.s32.totalorder %s101, 1
    %p670 = por %p668, %p669
    %p672 = scmp.ne.s32.totalorder %s657, %s671
    %p673 = scmp.eq.s32.totalorder %s101, 0
    %p674 = por %p672, %p673
    %s676 = sadd.s32 %s675, 1
    %p679 = scmp.eq.s32.totalorder %s95, 1
    %p680 = scmp.ne.s32.totalorder %s675, %s677
    %p681 = scmp.eq.s32.totalorder %s95, 0
    %p682 = por %p680, %p681
    %p683 = scmp.ne.s32.totalorder %s675, %s677
    %p684 = scmp.eq.s32.totalorder %s100, 1
    %p685 = por %p683, %p684
    %p686 = scmp.ne.s32.totalorder %s677, %s678
    %p687 = scmp.eq.s32.totalorder %s100, 0
    %p688 = por %p686, %p687
    %p689 = scmp.ne.s32.totalorder %s677, %s678
    %p690 = scmp.eq.s32.totalorder %s101, 1
    %p691 = por %p689, %p690
    %p693 = scmp.ne.s32.totalorder %s678, %s692
    %p694 = scmp.eq.s32.totalorder %s101, 0
    %p695 = por %p693, %p694
    %s697 = sadd.s32 %s696, 1
    %p700 = scmp.eq.s32.totalorder %s95, 1
    %p701 = scmp.ne.s32.totalorder %s696, %s698
    %p702 = scmp.eq.s32.totalorder %s95, 0
    %p703 = por %p701, %p702
    %p704 = scmp.ne.s32.totalorder %s696, %s698
    %p705 = scmp.eq.s32.totalorder %s100, 1
    %p706 = por %p704, %p705
    %p707 = scmp.ne.s32.totalorder %s698, %s699
    %p708 = scmp.eq.s32.totalorder %s100, 0
    %p709 = por %p707, %p708
    %p710 = scmp.ne.s32.totalorder %s698, %s699
    %p711 = scmp.eq.s32.totalorder %s101, 1
    %p712 = por %p710, %p711
    %p714 = scmp.ne.s32.totalorder %s699, %s713
    %p715 = scmp.eq.s32.totalorder %s101, 0
    %p716 = por %p714, %p715
    %s718 = sadd.s32 %s717, 1
    %p721 = scmp.eq.s32.totalorder %s95, 1
    %p722 = scmp.ne.s32.totalorder %s717, %s719
    %p723 = scmp.eq.s32.totalorder %s95, 0
    %p724 = por %p722, %p723
    %p725 = scmp.ne.s32.totalorder %s717, %s719
    %p726 = scmp.eq.s32.totalorder %s100, 1
    %p727 = por %p725, %p726
    %p728 = scmp.ne.s32.totalorder %s719, %s720
    %p729 = scmp.eq.s32.totalorder %s100, 0
    %p730 = por %p728, %p729
    %p731 = scmp.ne.s32.totalorder %s719, %s720
    %p732 = scmp.eq.s32.totalorder %s101, 1
    %p733 = por %p731, %p732
    %p735 = scmp.ne.s32.totalorder %s720, %s734
    %p736 = scmp.eq.s32.totalorder %s101, 0
    %p737 = por %p735, %p736
    %s739 = sadd.s32 %s738, 1
    %p742 = scmp.eq.s32.totalorder %s95, 1
    %p743 = scmp.ne.s32.totalorder %s738, %s740
    %p744 = scmp.eq.s32.totalorder %s95, 0
    %p745 = por %p743, %p744
    %p746 = scmp.ne.s32.totalorder %s738, %s740
    %p747 = scmp.eq.s32.totalorder %s100, 1
    %p748 = por %p746, %p747
    %p749 = scmp.ne.s32.totalorder %s740, %s741
    %p750 = scmp.eq.s32.totalorder %s100, 0
    %p751 = por %p749, %p750
    %p752 = scmp.ne.s32.totalorder %s740, %s741
    %p753 = scmp.eq.s32.totalorder %s101, 1
    %p754 = por %p752, %p753
    %p756 = scmp.ne.s32.totalorder %s741, %s755
    %p757 = scmp.eq.s32.totalorder %s101, 0
    %p758 = por %p756, %p757
    %s760 = sadd.s32 %s759, 1
    %p763 = scmp.eq.s32.totalorder %s95, 1
    %p764 = scmp.ne.s32.totalorder %s759, %s761
    %p765 = scmp.eq.s32.totalorder %s95, 0
    %p766 = por %p764, %p765
    %p767 = scmp.ne.s32.totalorder %s759, %s761
    %p768 = scmp.eq.s32.totalorder %s100, 1
    %p769 = por %p767, %p768
    %p770 = scmp.ne.s32.totalorder %s761, %s762
    %p771 = scmp.eq.s32.totalorder %s100, 0
    %p772 = por %p770, %p771
    %p773 = scmp.ne.s32.totalorder %s761, %s762
    %p774 = scmp.eq.s32.totalorder %s101, 1
    %p775 = por %p773, %p774
    %p777 = scmp.ne.s32.totalorder %s762, %s776
    %p778 = scmp.eq.s32.totalorder %s101, 0
    %p779 = por %p777, %p778
    %s781 = sadd.s32 %s780, 1
    %p784 = scmp.eq.s32.totalorder %s95, 1
    %p785 = scmp.ne.s32.totalorder %s780, %s782
    %p786 = scmp.eq.s32.totalorder %s95, 0
    %p787 = por %p785, %p786
    %p788 = scmp.ne.s32.totalorder %s780, %s782
    %p789 = scmp.eq.s32.totalorder %s100, 1
    %p790 = por %p788, %p789
    %p791 = scmp.ne.s32.totalorder %s782, %s783
    %p792 = scmp.eq.s32.totalorder %s100, 0
    %p793 = por %p791, %p792
    %p794 = scmp.ne.s32.totalorder %s782, %s783
    %p795 = scmp.eq.s32.totalorder %s101, 1
    %p796 = por %p794, %p795
    %p798 = scmp.ne.s32.totalorder %s783, %s797
    %p799 = scmp.eq.s32.totalorder %s101, 0
    %p800 = por %p798, %p799
    %s802 = sadd.s32 %s801, 1
    %p805 = scmp.eq.s32.totalorder %s95, 1
    %p806 = scmp.ne.s32.totalorder %s801, %s803
    %p807 = scmp.eq.s32.totalorder %s95, 0
    %p808 = por %p806, %p807
    %p809 = scmp.ne.s32.totalorder %s801, %s803
    %p810 = scmp.eq.s32.totalorder %s100, 1
    %p811 = por %p809, %p810
    %p812 = scmp.ne.s32.totalorder %s803, %s804
    %p813 = scmp.eq.s32.totalorder %s100, 0
    %p814 = por %p812, %p813
    %p815 = scmp.ne.s32.totalorder %s803, %s804
    %p816 = scmp.eq.s32.totalorder %s101, 1
    %p817 = por %p815, %p816
    %p819 = scmp.ne.s32.totalorder %s804, %s818
    %p820 = scmp.eq.s32.totalorder %s101, 0
    %p821 = por %p819, %p820
    %s823 = sadd.s32 %s822, 1
    %p826 = scmp.eq.s32.totalorder %s95, 1
    %p827 = scmp.ne.s32.totalorder %s822, %s824
    %p828 = scmp.eq.s32.totalorder %s95, 0
    %p829 = por %p827, %p828
    %p830 = scmp.ne.s32.totalorder %s822, %s824
    %p831 = scmp.eq.s32.totalorder %s100, 1
    %p832 = por %p830, %p831
    %p833 = scmp.ne.s32.totalorder %s824, %s825
    %p834 = scmp.eq.s32.totalorder %s100, 0
    %p835 = por %p833, %p834
    %p836 = scmp.ne.s32.totalorder %s824, %s825
    %p837 = scmp.eq.s32.totalorder %s101, 1
    %p838 = por %p836, %p837
    %p840 = scmp.ne.s32.totalorder %s825, %s839
    %p841 = scmp.eq.s32.totalorder %s101, 0
    %p842 = por %p840, %p841
    %s844 = sadd.s32 %s843, 1
    %p847 = scmp.eq.s32.totalorder %s95, 1
    %p848 = scmp.ne.s32.totalorder %s843, %s845
    %p849 = scmp.eq.s32.totalorder %s95, 0
    %p850 = por %p848, %p849
    %p851 = scmp.ne.s32.totalorder %s843, %s845
    %p852 = scmp.eq.s32.totalorder %s100, 1
    %p853 = por %p851, %p852
    %p854 = scmp.ne.s32.totalorder %s845, %s846
    %p855 = scmp.eq.s32.totalorder %s100, 0
    %p856 = por %p854, %p855
    %p857 = scmp.ne.s32.totalorder %s845, %s846
    %p858 = scmp.eq.s32.totalorder %s101, 1
    %p859 = por %p857, %p858
    %p861 = scmp.ne.s32.totalorder %s846, %s860
    %p862 = scmp.eq.s32.totalorder %s101, 0
    %p863 = por %p861, %p862
    %s865 = sadd.s32 %s864, 1
    %p868 = scmp.eq.s32.totalorder %s95, 1
    %p869 = scmp.ne.s32.totalorder %s864, %s866
    %p870 = scmp.eq.s32.totalorder %s95, 0
    %p871 = por %p869, %p870
    %p872 = scmp.ne.s32.totalorder %s864, %s866
    %p873 = scmp.eq.s32.totalorder %s100, 1
    %p874 = por %p872, %p873
    %p875 = scmp.ne.s32.totalorder %s866, %s867
    %p876 = scmp.eq.s32.totalorder %s100, 0
    %p877 = por %p875, %p876
    %p878 = scmp.ne.s32.totalorder %s866, %s867
    %p879 = scmp.eq.s32.totalorder %s101, 1
    %p880 = por %p878, %p879
    %p882 = scmp.ne.s32.totalorder %s867, %s881
    %p883 = scmp.eq.s32.totalorder %s101, 0
    %p884 = por %p882, %p883
    %s886 = sadd.s32 %s885, 1
    %p889 = scmp.eq.s32.totalorder %s95, 1
    %p890 = scmp.ne.s32.totalorder %s885, %s887
    %p891 = scmp.eq.s32.totalorder %s95, 0
    %p892 = por %p890, %p891
    %p893 = scmp.ne.s32.totalorder %s885, %s887
    %p894 = scmp.eq.s32.totalorder %s100, 1
    %p895 = por %p893, %p894
    %p896 = scmp.ne.s32.totalorder %s887, %s888
    %p897 = scmp.eq.s32.totalorder %s100, 0
    %p898 = por %p896, %p897
    %p899 = scmp.ne.s32.totalorder %s887, %s888
    %p900 = scmp.eq.s32.totalorder %s101, 1
    %p901 = por %p899, %p900
    %p903 = scmp.ne.s32.totalorder %s888, %s902
    %p904 = scmp.eq.s32.totalorder %s101, 0
    %p905 = por %p903, %p904
    %s907 = sadd.s32 %s906, 1
    %p910 = scmp.eq.s32.totalorder %s95, 1
    %p911 = scmp.ne.s32.totalorder %s906, %s908
    %p912 = scmp.eq.s32.totalorder %s95, 0
    %p913 = por %p911, %p912
    %p914 = scmp.ne.s32.totalorder %s906, %s908
    %p915 = scmp.eq.s32.totalorder %s100, 1
    %p916 = por %p914, %p915
    %p917 = scmp.ne.s32.totalorder %s908, %s909
    %p918 = scmp.eq.s32.totalorder %s100, 0
    %p919 = por %p917, %p918
    %p920 = scmp.ne.s32.totalorder %s908, %s909
    %p921 = scmp.eq.s32.totalorder %s101, 1
    %p922 = por %p920, %p921
    %p924 = scmp.ne.s32.totalorder %s909, %s923
    %p925 = scmp.eq.s32.totalorder %s101, 0
    %p926 = por %p924, %p925
    %s928 = sadd.s32 %s927, 1
    %p931 = scmp.eq.s32.totalorder %s95, 1
    %p932 = scmp.ne.s32.totalorder %s927, %s929
    %p933 = scmp.eq.s32.totalorder %s95, 0
    %p934 = por %p932, %p933
    %p935 = scmp.ne.s32.totalorder %s927, %s929
    %p936 = scmp.eq.s32.totalorder %s100, 1
    %p937 = por %p935, %p936
    %p938 = scmp.ne.s32.totalorder %s929, %s930
    %p939 = scmp.eq.s32.totalorder %s100, 0
    %p940 = por %p938, %p939
    %p941 = scmp.ne.s32.totalorder %s929, %s930
    %p942 = scmp.eq.s32.totalorder %s101, 1
    %p943 = por %p941, %p942
    %p945 = scmp.ne.s32.totalorder %s930, %s944
    %p946 = scmp.eq.s32.totalorder %s101, 0
    %p947 = por %p945, %p946
    %s949 = sadd.s32 %s948, 1
    %p952 = scmp.eq.s32.totalorder %s95, 1
    %p953 = scmp.ne.s32.totalorder %s948, %s950
    %p954 = scmp.eq.s32.totalorder %s95, 0
    %p955 = por %p953, %p954
    %p956 = scmp.ne.s32.totalorder %s948, %s950
    %p957 = scmp.eq.s32.totalorder %s100, 1
    %p958 = por %p956, %p957
    %p959 = scmp.ne.s32.totalorder %s950, %s951
    %p960 = scmp.eq.s32.totalorder %s100, 0
    %p961 = por %p959, %p960
    %p962 = scmp.ne.s32.totalorder %s950, %s951
    %p963 = scmp.eq.s32.totalorder %s101, 1
    %p964 = por %p962, %p963
    %p966 = scmp.ne.s32.totalorder %s951, %s965
    %p967 = scmp.eq.s32.totalorder %s101, 0
    %p968 = por %p966, %p967
    %s969 = ssub.s32 %s95, %s102
    %p970 = scmp.eq.s32.totalorder %s969, 0
    %s972 = sadd.s32 %s971, 1
    %s973 = scalar_select %p970, %s971, %s972
    %p976 = pneg %p970
    %p977 = scmp.eq.s32.totalorder %s95, 1
    %p978 = por %p976, %p977
    %p979 = scmp.ne.s32.totalorder %s971, %s974
    %p980 = scmp.eq.s32.totalorder %s95, 0
    %p981 = por %p979, %p980
    %p982 = scmp.ne.s32.totalorder %s971, %s974
    %p983 = scmp.eq.s32.totalorder %s100, 1
    %p984 = por %p982, %p983
    %p985 = scmp.ne.s32.totalorder %s974, %s975
    %p986 = scmp.eq.s32.totalorder %s100, 0
    %p987 = por %p985, %p986
    %p988 = scmp.ne.s32.totalorder %s974, %s975
    %p989 = scmp.eq.s32.totalorder %s101, 1
    %p990 = por %p988, %p989
    %p992 = scmp.ne.s32.totalorder %s975, %s991
    %p993 = scmp.eq.s32.totalorder %s101, 0
    %p994 = por %p992, %p993
    %p995 = scmp.le.s32.totalorder 1, %s95
    %p996 = scmp.lt.s32.totalorder %s95, 3
    %p997 = pnand %p995, %p996
    %p998 = pneg %p997
    // Predicated region
    $region9: #{_lambda_.1} parent=5 // pred_check
      _
    $region10: #{_lambda_.1} parent=5 // pred_check_branch
      %1000 = sbr.rel (%p997) target = $region12
    $region11: #{_lambda_.1} parent=5 // pred_region
      %s1001 = ssub.s32 %s95, 1
      // Predicated region
      $region13: #{_lambda_.1} parent=11 // pred_check
        %p1002 = pneg %p142
      $region14: #{_lambda_.1} parent=11 // pred_check_branch
        %1004 = sbr.rel (%p1002) target = $region16
      $region15: #{_lambda_.1} parent=11 // pred_region
        _
      $region16: #{_lambda_.1} parent=11 // pred_fallthru
        _
      // Predicated region
      $region17: #{_lambda_.1} parent=11 // pred_check
        %p1005 = pneg %p163
      $region18: #{_lambda_.1} parent=11 // pred_check_branch
        %1007 = sbr.rel (%p1005) target = $region20
      $region19: #{_lambda_.1} parent=11 // pred_region
        _
      $region20: #{_lambda_.1} parent=11 // pred_fallthru
        _
      // Predicated region
      $region21: #{_lambda_.1} parent=11 // pred_check
        %p1008 = pneg %p184
      $region22: #{_lambda_.1} parent=11 // pred_check_branch
        %1010 = sbr.rel (%p1008) target = $region24
      $region23: #{_lambda_.1} parent=11 // pred_region
        _
      $region24: #{_lambda_.1} parent=11 // pred_fallthru
        _
      // Predicated region
      $region25: #{_lambda_.1} parent=11 // pred_check
        %p1011 = pneg %p205
      $region26: #{_lambda_.1} parent=11 // pred_check_branch
        %1013 = sbr.rel (%p1011) target = $region28
      $region27: #{_lambda_.1} parent=11 // pred_region
        _
      $region28: #{_lambda_.1} parent=11 // pred_fallthru
        _
      // Predicated region
      $region29: #{_lambda_.1} parent=11 // pred_check
        %p1014 = pneg %p226
      $region30: #{_lambda_.1} parent=11 // pred_check_branch
        %1016 = sbr.rel (%p1014) target = $region32
      $region31: #{_lambda_.1} parent=11 // pred_region
        _
      $region32: #{_lambda_.1} parent=11 // pred_fallthru
        _
      // Predicated region
      $region33: #{_lambda_.1} parent=11 // pred_check
        %p1017 = pneg %p247
      $region34: #{_lambda_.1} parent=11 // pred_check_branch
        %1019 = sbr.rel (%p1017) target = $region36
      $region35: #{_lambda_.1} parent=11 // pred_region
        _
      $region36: #{_lambda_.1} parent=11 // pred_fallthru
        _
      // Predicated region
      $region37: #{_lambda_.1} parent=11 // pred_check
        %p1020 = pneg %p268
      $region38: #{_lambda_.1} parent=11 // pred_check_branch
        %1022 = sbr.rel (%p1020) target = $region40
      $region39: #{_lambda_.1} parent=11 // pred_region
        _
      $region40: #{_lambda_.1} parent=11 // pred_fallthru
        _
      // Predicated region
      $region41: #{_lambda_.1} parent=11 // pred_check
        %p1023 = pneg %p289
      $region42: #{_lambda_.1} parent=11 // pred_check_branch
        %1025 = sbr.rel (%p1023) target = $region44
      $region43: #{_lambda_.1} parent=11 // pred_region
        _
      $region44: #{_lambda_.1} parent=11 // pred_fallthru
        _
      // Predicated region
      $region45: #{_lambda_.1} parent=11 // pred_check
        %p1026 = pneg %p310
      $region46: #{_lambda_.1} parent=11 // pred_check_branch
        %1028 = sbr.rel (%p1026) target = $region48
      $region47: #{_lambda_.1} parent=11 // pred_region
        _
      $region48: #{_lambda_.1} parent=11 // pred_fallthru
        _
      // Predicated region
      $region49: #{_lambda_.1} parent=11 // pred_check
        %p1029 = pneg %p331
      $region50: #{_lambda_.1} parent=11 // pred_check_branch
        %1031 = sbr.rel (%p1029) target = $region52
      $region51: #{_lambda_.1} parent=11 // pred_region
        _
      $region52: #{_lambda_.1} parent=11 // pred_fallthru
        _
      // Predicated region
      $region53: #{_lambda_.1} parent=11 // pred_check
        %p1032 = pneg %p352
      $region54: #{_lambda_.1} parent=11 // pred_check_branch
        %1034 = sbr.rel (%p1032) target = $region56
      $region55: #{_lambda_.1} parent=11 // pred_region
        _
      $region56: #{_lambda_.1} parent=11 // pred_fallthru
        _
      // Predicated region
      $region57: #{_lambda_.1} parent=11 // pred_check
        %p1035 = pneg %p373
      $region58: #{_lambda_.1} parent=11 // pred_check_branch
        %1037 = sbr.rel (%p1035) target = $region60
      $region59: #{_lambda_.1} parent=11 // pred_region
        _
      $region60: #{_lambda_.1} parent=11 // pred_fallthru
        _
      // Predicated region
      $region61: #{_lambda_.1} parent=11 // pred_check
        %p1038 = pneg %p394
      $region62: #{_lambda_.1} parent=11 // pred_check_branch
        %1040 = sbr.rel (%p1038) target = $region64
      $region63: #{_lambda_.1} parent=11 // pred_region
        _
      $region64: #{_lambda_.1} parent=11 // pred_fallthru
        _
      // Predicated region
      $region65: #{_lambda_.1} parent=11 // pred_check
        %p1041 = pneg %p415
      $region66: #{_lambda_.1} parent=11 // pred_check_branch
        %1043 = sbr.rel (%p1041) target = $region68
      $region67: #{_lambda_.1} parent=11 // pred_region
        _
      $region68: #{_lambda_.1} parent=11 // pred_fallthru
        _
      // Predicated region
      $region69: #{_lambda_.1} parent=11 // pred_check
        %p1044 = pneg %p436
      $region70: #{_lambda_.1} parent=11 // pred_check_branch
        %1046 = sbr.rel (%p1044) target = $region72
      $region71: #{_lambda_.1} parent=11 // pred_region
        _
      $region72: #{_lambda_.1} parent=11 // pred_fallthru
        _
      // Predicated region
      $region73: #{_lambda_.1} parent=11 // pred_check
        %p1047 = pneg %p457
      $region74: #{_lambda_.1} parent=11 // pred_check_branch
        %1049 = sbr.rel (%p1047) target = $region76
      $region75: #{_lambda_.1} parent=11 // pred_region
        _
      $region76: #{_lambda_.1} parent=11 // pred_fallthru
        _
      // Predicated region
      $region77: #{_lambda_.1} parent=11 // pred_check
        %p1050 = pneg %p478
      $region78: #{_lambda_.1} parent=11 // pred_check_branch
        %1052 = sbr.rel (%p1050) target = $region80
      $region79: #{_lambda_.1} parent=11 // pred_region
        _
      $region80: #{_lambda_.1} parent=11 // pred_fallthru
        _
      // Predicated region
      $region81: #{_lambda_.1} parent=11 // pred_check
        %p1053 = pneg %p499
      $region82: #{_lambda_.1} parent=11 // pred_check_branch
        %1055 = sbr.rel (%p1053) target = $region84
      $region83: #{_lambda_.1} parent=11 // pred_region
        _
      $region84: #{_lambda_.1} parent=11 // pred_fallthru
        _
      // Predicated region
      $region85: #{_lambda_.1} parent=11 // pred_check
        %p1056 = pneg %p520
      $region86: #{_lambda_.1} parent=11 // pred_check_branch
        %1058 = sbr.rel (%p1056) target = $region88
      $region87: #{_lambda_.1} parent=11 // pred_region
        _
      $region88: #{_lambda_.1} parent=11 // pred_fallthru
        _
      // Predicated region
      $region89: #{_lambda_.1} parent=11 // pred_check
        %p1059 = pneg %p541
      $region90: #{_lambda_.1} parent=11 // pred_check_branch
        %1061 = sbr.rel (%p1059) target = $region92
      $region91: #{_lambda_.1} parent=11 // pred_region
        _
      $region92: #{_lambda_.1} parent=11 // pred_fallthru
        _
      // Predicated region
      $region93: #{_lambda_.1} parent=11 // pred_check
        %p1062 = pneg %p562
      $region94: #{_lambda_.1} parent=11 // pred_check_branch
        %1064 = sbr.rel (%p1062) target = $region96
      $region95: #{_lambda_.1} parent=11 // pred_region
        _
      $region96: #{_lambda_.1} parent=11 // pred_fallthru
        _
      // Predicated region
      $region97: #{_lambda_.1} parent=11 // pred_check
        %p1065 = pneg %p583
      $region98: #{_lambda_.1} parent=11 // pred_check_branch
        %1067 = sbr.rel (%p1065) target = $region100
      $region99: #{_lambda_.1} parent=11 // pred_region
        _
      $region100: #{_lambda_.1} parent=11 // pred_fallthru
        _
      // Predicated region
      $region101: #{_lambda_.1} parent=11 // pred_check
        %p1068 = pneg %p604
      $region102: #{_lambda_.1} parent=11 // pred_check_branch
        %1070 = sbr.rel (%p1068) target = $region104
      $region103: #{_lambda_.1} parent=11 // pred_region
        _
      $region104: #{_lambda_.1} parent=11 // pred_fallthru
        _
      // Predicated region
      $region105: #{_lambda_.1} parent=11 // pred_check
        %p1071 = pneg %p625
      $region106: #{_lambda_.1} parent=11 // pred_check_branch
        %1073 = sbr.rel (%p1071) target = $region108
      $region107: #{_lambda_.1} parent=11 // pred_region
        _
      $region108: #{_lambda_.1} parent=11 // pred_fallthru
        _
      // Predicated region
      $region109: #{_lambda_.1} parent=11 // pred_check
        %p1074 = pneg %p646
      $region110: #{_lambda_.1} parent=11 // pred_check_branch
        %1076 = sbr.rel (%p1074) target = $region112
      $region111: #{_lambda_.1} parent=11 // pred_region
        _
      $region112: #{_lambda_.1} parent=11 // pred_fallthru
        _
      // Predicated region
      $region113: #{_lambda_.1} parent=11 // pred_check
        %p1077 = pneg %p667
      $region114: #{_lambda_.1} parent=11 // pred_check_branch
        %1079 = sbr.rel (%p1077) target = $region116
      $region115: #{_lambda_.1} parent=11 // pred_region
        _
      $region116: #{_lambda_.1} parent=11 // pred_fallthru
        _
      // Predicated region
      $region117: #{_lambda_.1} parent=11 // pred_check
        %p1080 = pneg %p688
      $region118: #{_lambda_.1} parent=11 // pred_check_branch
        %1082 = sbr.rel (%p1080) target = $region120
      $region119: #{_lambda_.1} parent=11 // pred_region
        _
      $region120: #{_lambda_.1} parent=11 // pred_fallthru
        _
      // Predicated region
      $region121: #{_lambda_.1} parent=11 // pred_check
        %p1083 = pneg %p709
      $region122: #{_lambda_.1} parent=11 // pred_check_branch
        %1085 = sbr.rel (%p1083) target = $region124
      $region123: #{_lambda_.1} parent=11 // pred_region
        _
      $region124: #{_lambda_.1} parent=11 // pred_fallthru
        _
      // Predicated region
      $region125: #{_lambda_.1} parent=11 // pred_check
        %p1086 = pneg %p730
      $region126: #{_lambda_.1} parent=11 // pred_check_branch
        %1088 = sbr.rel (%p1086) target = $region128
      $region127: #{_lambda_.1} parent=11 // pred_region
        _
      $region128: #{_lambda_.1} parent=11 // pred_fallthru
        _
      // Predicated region
      $region129: #{_lambda_.1} parent=11 // pred_check
        %p1089 = pneg %p751
      $region130: #{_lambda_.1} parent=11 // pred_check_branch
        %1091 = sbr.rel (%p1089) target = $region132
      $region131: #{_lambda_.1} parent=11 // pred_region
        _
      $region132: #{_lambda_.1} parent=11 // pred_fallthru
        _
      // Predicated region
      $region133: #{_lambda_.1} parent=11 // pred_check
        %p1092 = pneg %p772
      $region134: #{_lambda_.1} parent=11 // pred_check_branch
        %1094 = sbr.rel (%p1092) target = $region136
      $region135: #{_lambda_.1} parent=11 // pred_region
        _
      $region136: #{_lambda_.1} parent=11 // pred_fallthru
        _
      // Predicated region
      $region137: #{_lambda_.1} parent=11 // pred_check
        %p1095 = pneg %p793
      $region138: #{_lambda_.1} parent=11 // pred_check_branch
        %1097 = sbr.rel (%p1095) target = $region140
      $region139: #{_lambda_.1} parent=11 // pred_region
        _
      $region140: #{_lambda_.1} parent=11 // pred_fallthru
        _
      // Predicated region
      $region141: #{_lambda_.1} parent=11 // pred_check
        %p1098 = pneg %p814
      $region142: #{_lambda_.1} parent=11 // pred_check_branch
        %1100 = sbr.rel (%p1098) target = $region144
      $region143: #{_lambda_.1} parent=11 // pred_region
        _
      $region144: #{_lambda_.1} parent=11 // pred_fallthru
        _
      // Predicated region
      $region145: #{_lambda_.1} parent=11 // pred_check
        %p1101 = pneg %p835
      $region146: #{_lambda_.1} parent=11 // pred_check_branch
        %1103 = sbr.rel (%p1101) target = $region148
      $region147: #{_lambda_.1} parent=11 // pred_region
        _
      $region148: #{_lambda_.1} parent=11 // pred_fallthru
        _
      // Predicated region
      $region149: #{_lambda_.1} parent=11 // pred_check
        %p1104 = pneg %p856
      $region150: #{_lambda_.1} parent=11 // pred_check_branch
        %1106 = sbr.rel (%p1104) target = $region152
      $region151: #{_lambda_.1} parent=11 // pred_region
        _
      $region152: #{_lambda_.1} parent=11 // pred_fallthru
        _
      // Predicated region
      $region153: #{_lambda_.1} parent=11 // pred_check
        %p1107 = pneg %p877
      $region154: #{_lambda_.1} parent=11 // pred_check_branch
        %1109 = sbr.rel (%p1107) target = $region156
      $region155: #{_lambda_.1} parent=11 // pred_region
        _
      $region156: #{_lambda_.1} parent=11 // pred_fallthru
        _
      // Predicated region
      $region157: #{_lambda_.1} parent=11 // pred_check
        %p1110 = pneg %p898
      $region158: #{_lambda_.1} parent=11 // pred_check_branch
        %1112 = sbr.rel (%p1110) target = $region160
      $region159: #{_lambda_.1} parent=11 // pred_region
        _
      $region160: #{_lambda_.1} parent=11 // pred_fallthru
        _
      // Predicated region
      $region161: #{_lambda_.1} parent=11 // pred_check
        %p1113 = pneg %p919
      $region162: #{_lambda_.1} parent=11 // pred_check_branch
        %1115 = sbr.rel (%p1113) target = $region164
      $region163: #{_lambda_.1} parent=11 // pred_region
        _
      $region164: #{_lambda_.1} parent=11 // pred_fallthru
        _
      // Predicated region
      $region165: #{_lambda_.1} parent=11 // pred_check
        %p1116 = pneg %p940
      $region166: #{_lambda_.1} parent=11 // pred_check_branch
        %1118 = sbr.rel (%p1116) target = $region168
      $region167: #{_lambda_.1} parent=11 // pred_region
        _
      $region168: #{_lambda_.1} parent=11 // pred_fallthru
        _
      // Predicated region
      $region169: #{_lambda_.1} parent=11 // pred_check
        %p1119 = pneg %p961
      $region170: #{_lambda_.1} parent=11 // pred_check_branch
        %1121 = sbr.rel (%p1119) target = $region172
      $region171: #{_lambda_.1} parent=11 // pred_region
        _
      $region172: #{_lambda_.1} parent=11 // pred_fallthru
        _
    $region12: #{_lambda_.1} parent=5 // pred_fallthru
      _
    %p1122 = scmp.lt.s32.totalorder %s95, 2
    // Predicated region
    $region173: #{_lambda_.1} parent=5 // pred_check
      %p1123 = pneg %p1122
    $region174: #{_lambda_.1} parent=5 // pred_check_branch
      %1125 = sbr.rel (%p1123) target = $region176
    $region175: #{_lambda_.1} parent=5 // pred_region
      // Predicated region
      $region177: #{_lambda_.1} parent=175 // pred_check
        %p1126 = pneg %p115
      $region178: #{_lambda_.1} parent=175 // pred_check_branch
        %1128 = sbr.rel (%p1126) target = $region180
      $region179: #{_lambda_.1} parent=175 // pred_region
        %p1129 = scmp.lt.s32.totalorder %s95, 1
        %s1130 = scalar_select %p1129, %s95, 1
        %s1131 = smul.addr %s1130, 2
        %s1132 = smul.addr %s1131, 4
        %s1133 = scalar_lea.vmem %s1, %s1132
      $region180: #{_lambda_.1} parent=175 // pred_fallthru
        _
    $region176: #{_lambda_.1} parent=5 // pred_fallthru
      _
    %p1134 = scmp.le.s32.totalorder 1, %s95
    %p1135 = scmp.lt.s32.totalorder %s95, 3
    %p1136 = pnand %p1134, %p1135
    %p1137 = pneg %p1136
    // Predicated region
    $region181: #{_lambda_.1} parent=5 // pred_check
      _
    $region182: #{_lambda_.1} parent=5 // pred_check_branch
      %1139 = sbr.rel (%p1136) target = $region184
    $region183: #{_lambda_.1} parent=5 // pred_region
      %s1140 = ssub.s32 %s95, 1
      %p1141 = scmp.lt.s32.totalorder %s100, 1
      %s1142 = scalar_select %p1141, %s100, 1
      %s1143 = smul.addr %s1142, 2
      %s1144 = smul.addr %s1143, 4
      %s1145 = scalar_lea.vmem %s1, %s1144
      %p1146 = pneg %p121
      %p1147 = pneg %p118
      %p1148 = pneg %p142
      %p1149 = pneg %p139
      %p1150 = pneg %p163
      %p1151 = pneg %p160
      %p1152 = pneg %p184
      %p1153 = pneg %p181
      %p1154 = pneg %p205
      %p1155 = pneg %p202
      %p1156 = pneg %p226
      %p1157 = pneg %p223
      %p1158 = pneg %p247
      %p1159 = pneg %p244
      %p1160 = pneg %p268
      %p1161 = pneg %p265
      %p1162 = pneg %p289
      %p1163 = pneg %p286
      %p1164 = pneg %p310
      %p1165 = pneg %p307
      %p1166 = pneg %p331
      %p1167 = pneg %p328
      %p1168 = pneg %p352
      %p1169 = pneg %p349
      %p1170 = pneg %p373
      %p1171 = pneg %p370
      %p1172 = pneg %p394
      %p1173 = pneg %p391
      %p1174 = pneg %p415
      %p1175 = pneg %p412
      %p1176 = pneg %p436
      %p1177 = pneg %p433
      %p1178 = pneg %p457
      %p1179 = pneg %p454
      %p1180 = pneg %p478
      %p1181 = pneg %p475
      %p1182 = pneg %p499
      %p1183 = pneg %p496
      %p1184 = pneg %p520
      %p1185 = pneg %p517
      %p1186 = pneg %p541
      %p1187 = pneg %p538
      %p1188 = pneg %p562
      %p1189 = pneg %p559
      %p1190 = pneg %p583
      %p1191 = pneg %p580
      %p1192 = pneg %p604
      %p1193 = pneg %p601
      %p1194 = pneg %p625
      %p1195 = pneg %p622
      %p1196 = pneg %p646
      %p1197 = pneg %p643
      %p1198 = pneg %p667
      %p1199 = pneg %p664
      %p1200 = pneg %p688
      %p1201 = pneg %p685
      %p1202 = pneg %p709
      %p1203 = pneg %p706
      %p1204 = pneg %p730
      %p1205 = pneg %p727
      %p1206 = pneg %p751
      %p1207 = pneg %p748
      %p1208 = pneg %p772
      %p1209 = pneg %p769
      %p1210 = pneg %p793
      %p1211 = pneg %p790
      %p1212 = pneg %p814
      %p1213 = pneg %p811
      %p1214 = pneg %p835
      %p1215 = pneg %p832
      %p1216 = pneg %p856
      %p1217 = pneg %p853
      %p1218 = pneg %p877
      %p1219 = pneg %p874
      %p1220 = pneg %p898
      %p1221 = pneg %p895
      %p1222 = pneg %p919
      %p1223 = pneg %p916
      %p1224 = pneg %p940
      %p1225 = pneg %p937
      %p1226 = pneg %p961
      %p1227 = pneg %p958
      %p1228 = pneg %p987
      %p1229 = pneg %p984
      %p1230 = scmp.lt.s32.totalorder %s100, 1
      %s1231 = scalar_select %p1230, %s100, 1
      %s1232 = smul.addr %s1231, 2
      %s1233 = scalar_lea.vmem %s83, %s1232
      %p1234 = scmp.lt.s32.totalorder %s100, 1
      %s1235 = scalar_select %p1234, %s100, 1
      %s1236 = smul.addr %s1235, 2
      %s1237 = smul.addr %s1236, 4
      %s1238 = scalar_lea.vmem %s1, %s1237
      %p1239 = scmp.lt.s32.totalorder %s100, 1
      %s1240 = scalar_select %p1239, %s100, 1
      %s1241 = smul.addr %s1240, 2
      %s1242 = scalar_lea.vmem %s83, %s1241
      %v1244 = vld [vmem:[%s1238] sm:$0xff]
      %v1245 = vunpack.c.l.bf16 %v1244
      %v1246 = vunpack.c.h.bf16 %v1244
      %v1247 = vlaneseq
      %v1248 = vand.u32 %v1247, 127
      %v1249 = vadd.s32 %v1248, 128
      %vm1250 = vcmp.lt.s32.totalorder %v1248, 0
      %v1251 = vsub.s32 0, %v1248
      %v1252 = vsel %vm1250, %v1251, %v1248
      %v1253 = vshrl.u32 %v1252, 4
      %v1254 = vand.u32 %v1252, 15
      %v1255 = vsub.s32 0, %v1254
      %v1256 = vsel %vm1250, %v1255, %v1254
      %vm1257 = vcmp.lt.s32.totalorder %v1249, 0
      %v1258 = vsub.s32 0, %v1249
      %v1259 = vsel %vm1257, %v1258, %v1249
      %v1260 = vshrl.u32 %v1259, 4
      %v1261 = vand.u32 %v1259, 15
      %v1262 = vsub.s32 0, %v1261
      %v1263 = vsel %vm1257, %v1262, %v1261
      %vm1264 = vcmp.ne.s32.totalorder %v1256, 0
      %vm1265 = vcmp.ne.s32.totalorder %v1263, 0
      %vm1266 = vcmp.lt.s32.totalorder %v1256, 0
      %vm1267 = vcmp.lt.s32.totalorder %v1263, 0
      %vm1268 = vmand %vm1266, %vm1264
      %vm1269 = vmand %vm1267, %vm1265
      %v1270 = vadd.s32 %v1256, 16
      %v1271 = vadd.s32 %v1263, 16
      %v1272 = vsel %vm1268, %v1270, %v1256
      %v1273 = vsel %vm1269, %v1271, %v1263
      %vm1274 = vcmp.ne.s32.totalorder %v1272, 0
      %vm1275 = vcmp.ne.s32.totalorder %v1273, 0
      %vm1276 = vcmp.ne.s32.totalorder %v1272, 15
      %vm1277 = vcmp.ne.s32.totalorder %v1273, 15
      %vm1278 = vcmask 138240
      %1279 = vst.msk [vmem:[#allocation2] sm:$0xff] %vm1278, 0.0
      %1282 = vrot.lane.b32.xlu0 %v1245, 17
      %v1283 = vpop.permute.xlu0 %1282
      %1284 = vrot.lane.b32.xlu0 %v1246, 17
      %v1285 = vpop.permute.xlu0 %1284
      %v1286 = vsel %vm1278, %v1283, %v1285
      %vm1290 = vcmask 1047688
      %1291 = vst.msk [vmem:[#allocation2] sm:$0xff] %vm1290, %v1283
      %1292 = vst [vmem:[#allocation2 + $0x8] sm:$0xff] %v1286
      %1293 = vst.msk [vmem:[#allocation2 + $0x10] sm:$0xff] %vm1278, %v1285
      %vm1294 = vcmask 277640
      %1295 = vst.msk [vmem:[#allocation2 + $0x10] sm:$0xff] %vm1294, 0.0
      %v1296 = vld [vmem:[#allocation2] sm:$0xff]
      %v1297 = vld [vmem:[#allocation2 + $0x8] sm:$0xff]
      %v1298 = vsel %vm1274, 1, 0
      %v1299 = vsel %vm1275, 1, 0
      %vm1300 = vcmp.eq.s32.totalorder %v1298, 1
      %vm1301 = vcmp.eq.s32.totalorder %v1299, 1
      %v1302 = vsel %vm1300, %v1296, 0.0
      %v1303 = vsel %vm1301, %v1297, 0.0
      %1304 = vst [vmem:[#allocation3] sm:$0xff] %v1302
      %1305 = vst [vmem:[#allocation3 + $0x8] sm:$0xff] %v1303
      %v1306 = vld [vmem:[#allocation2] sm:$0xff]
      %v1307 = vld [vmem:[#allocation2 + $0x8] sm:$0xff]
      %v1308 = vld [vmem:[#allocation2 + $0x10] sm:$0xff]
      %1312 = vrot.lane.b32.xlu0 %v1306, 127
      %v1313 = vpop.permute.xlu0 %1312
      %1314 = vrot.lane.b32.xlu0 %v1307, 127
      %v1315 = vpop.permute.xlu0 %1314
      %1316 = vrot.lane.b32.xlu0 %v1308, 127
      %v1317 = vpop.permute.xlu0 %1316
      %vm1318 = vcmask 1039360
      %v1319 = vsel %vm1318, %v1313, %v1315
      %v1320 = vsel %vm1318, %v1315, %v1317
      %1323 = vst [vmem:[#allocation3 + $0x10] sm:$0xff] %v1319
      %1324 = vst [vmem:[#allocation3 + $0x18] sm:$0xff] %v1320
      %v1325 = vld [vmem:[#allocation2] sm:$0xff]
      %v1326 = vld [vmem:[#allocation2 + $0x8] sm:$0xff]
      %v1327 = vld [vmem:[#allocation2 + $0x10] sm:$0xff]
      %v1328 = vsel %vm1276, 1, 0
      %v1329 = vsel %vm1277, 1, 0
      %vm1330 = vcmp.eq.s32.totalorder %v1328, 1
      %vm1331 = vcmp.eq.s32.totalorder %v1329, 1
      %1335 = vrot.lane.b32.xlu0 %v1325, 126
      %v1336 = vpop.permute.xlu0 %1335
      %1337 = vrot.lane.b32.xlu0 %v1326, 126
      %v1338 = vpop.permute.xlu0 %1337
      %1339 = vrot.lane.b32.xlu0 %v1327, 126
      %v1340 = vpop.permute.xlu0 %1339
      %vm1341 = vcmask 1031168
      %v1342 = vsel %vm1341, %v1336, %v1338
      %v1343 = vsel %vm1341, %v1338, %v1340
      %v1346 = vsel %vm1330, %v1342, 0.0
      %v1347 = vsel %vm1331, %v1343, 0.0
      %1348 = vst [vmem:[#allocation3 + $0x20] sm:$0xff] %v1346
      %1349 = vst [vmem:[#allocation3 + $0x28] sm:$0xff] %v1347
      %v1350 = vld [vmem:[#allocation2] sm:$0xff]
      %v1351 = vld [vmem:[#allocation2 + $0x8] sm:$0xff]
      %v1352 = vld [vmem:[#allocation2 + $0x10] sm:$0xff]
      %1356 = vrot.lane.b32.xlu0 %v1350, 112
      %v1357 = vpop.permute.xlu0 %1356
      %1358 = vrot.lane.b32.xlu0 %v1351, 112
      %v1359 = vpop.permute.xlu0 %1358
      %1360 = vrot.lane.b32.xlu0 %v1352, 112
      %v1361 = vpop.permute.xlu0 %1360
      %vm1362 = vcmask 916480
      %v1363 = vsel %vm1362, %v1357, %v1359
      %v1364 = vsel %vm1362, %v1359, %v1361
      %v1367 = vsel %vm1300, %v1363, 0.0
      %v1368 = vsel %vm1301, %v1364, 0.0
      %1369 = vst [vmem:[#allocation3 + $0x30] sm:$0xff] %v1367
      %1370 = vst [vmem:[#allocation3 + $0x38] sm:$0xff] %v1368
      %v1371 = vld [vmem:[#allocation2] sm:$0xff]
      %v1372 = vld [vmem:[#allocation2 + $0x8] sm:$0xff]
      %v1373 = vld [vmem:[#allocation2 + $0x10] sm:$0xff]
      %1377 = vrot.lane.b32.xlu0 %v1371, 111
      %v1378 = vpop.permute.xlu0 %1377
      %1379 = vrot.lane.b32.xlu0 %v1372, 111
      %v1380 = vpop.permute.xlu0 %1379
      %1381 = vrot.lane.b32.xlu0 %v1373, 111
      %v1382 = vpop.permute.xlu0 %1381
      %vm1383 = vcmask 908288
      %v1384 = vsel %vm1383, %v1378, %v1380
      %v1385 = vsel %vm1383, %v1380, %v1382
      %1388 = vst [vmem:[#allocation3 + $0x40] sm:$0xff] %v1384
      %1389 = vst [vmem:[#allocation3 + $0x48] sm:$0xff] %v1385
      %v1390 = vld [vmem:[#allocation2] sm:$0xff]
      %v1391 = vld [vmem:[#allocation2 + $0x8] sm:$0xff]
      %v1392 = vld [vmem:[#allocation2 + $0x10] sm:$0xff]
      %1396 = vrot.lane.b32.xlu0 %v1390, 110
      %v1397 = vpop.permute.xlu0 %1396
      %1398 = vrot.lane.b32.xlu0 %v1391, 110
      %v1399 = vpop.permute.xlu0 %1398
      %1400 = vrot.lane.b32.xlu0 %v1392, 110
      %v1401 = vpop.permute.xlu0 %1400
      %vm1402 = vcmask 900096
      %v1403 = vsel %vm1402, %v1397, %v1399
      %v1404 = vsel %vm1402, %v1399, %v1401
      %v1407 = vsel %vm1330, %v1403, 0.0
      %v1408 = vsel %vm1331, %v1404, 0.0
      %1409 = vst [vmem:[#allocation3 + $0x50] sm:$0xff] %v1407
      %1410 = vst [vmem:[#allocation3 + $0x58] sm:$0xff] %v1408
      %v1411 = vld [vmem:[#allocation2] sm:$0xff]
      %v1412 = vld [vmem:[#allocation2 + $0x8] sm:$0xff]
      %v1413 = vld [vmem:[#allocation2 + $0x10] sm:$0xff]
      %1417 = vrot.lane.b32.xlu0 %v1411, 96
      %v1418 = vpop.permute.xlu0 %1417
      %1419 = vrot.lane.b32.xlu0 %v1412, 96
      %v1420 = vpop.permute.xlu0 %1419
      %1421 = vrot.lane.b32.xlu0 %v1413, 96
      %v1422 = vpop.permute.xlu0 %1421
      %vm1423 = vcmask 785408
      %v1424 = vsel %vm1423, %v1418, %v1420
      %v1425 = vsel %vm1423, %v1420, %v1422
      %v1428 = vsel %vm1300, %v1424, 0.0
      %v1429 = vsel %vm1301, %v1425, 0.0
      %1430 = vst [vmem:[#allocation3 + $0x60] sm:$0xff] %v1428
      %1431 = vst [vmem:[#allocation3 + $0x68] sm:$0xff] %v1429
      %v1432 = vld [vmem:[#allocation2] sm:$0xff]
      %v1433 = vld [vmem:[#allocation2 + $0x8] sm:$0xff]
      %v1434 = vld [vmem:[#allocation2 + $0x10] sm:$0xff]
      %1438 = vrot.lane.b32.xlu0 %v1432, 95
      %v1439 = vpop.permute.xlu0 %1438
      %1440 = vrot.lane.b32.xlu0 %v1433, 95
      %v1441 = vpop.permute.xlu0 %1440
      %1442 = vrot.lane.b32.xlu0 %v1434, 95
      %v1443 = vpop.permute.xlu0 %1442
      %vm1444 = vcmask 777216
      %v1445 = vsel %vm1444, %v1439, %v1441
      %v1446 = vsel %vm1444, %v1441, %v1443
      %1449 = vst [vmem:[#allocation3 + $0x70] sm:$0xff] %v1445
      %1450 = vst [vmem:[#allocation3 + $0x78] sm:$0xff] %v1446
      %v1451 = vld [vmem:[#allocation2] sm:$0xff]
      %v1452 = vld [vmem:[#allocation2 + $0x8] sm:$0xff]
      %v1453 = vld [vmem:[#allocation2 + $0x10] sm:$0xff]
      %1457 = vrot.lane.b32.xlu0 %v1451, 94
      %v1458 = vpop.permute.xlu0 %1457
      %1459 = vrot.lane.b32.xlu0 %v1452, 94
      %v1460 = vpop.permute.xlu0 %1459
      %1461 = vrot.lane.b32.xlu0 %v1453, 94
      %v1462 = vpop.permute.xlu0 %1461
      %vm1463 = vcmask 769024
      %v1464 = vsel %vm1463, %v1458, %v1460
      %v1465 = vsel %vm1463, %v1460, %v1462
      %v1468 = vsel %vm1330, %v1464, 0.0
      %v1469 = vsel %vm1331, %v1465, 0.0
      %1470 = vst [vmem:[#allocation3 + $0x80] sm:$0xff] %v1468
      %1471 = vst [vmem:[#allocation3 + $0x88] sm:$0xff] %v1469
      %v1472 = vld [vmem:[#allocation3] sm:$0xff]
      %v1473 = vld [vmem:[#allocation3 + $0x8] sm:$0xff]
      %v1474 = vld [vmem:[#allocation3 + $0x10] sm:$0xff]
      %v1475 = vld [vmem:[#allocation3 + $0x18] sm:$0xff]
      %v1476 = vld [vmem:[#allocation3 + $0x20] sm:$0xff]
      %v1477 = vld [vmem:[#allocation3 + $0x28] sm:$0xff]
      %v1478 = vld [vmem:[#allocation3 + $0x30] sm:$0xff]
      %v1479 = vld [vmem:[#allocation3 + $0x38] sm:$0xff]
      %v1480 = vld [vmem:[#allocation3 + $0x40] sm:$0xff]
      %v1481 = vld [vmem:[#allocation3 + $0x48] sm:$0xff]
      %v1482 = vld [vmem:[#allocation3 + $0x50] sm:$0xff]
      %v1483 = vld [vmem:[#allocation3 + $0x58] sm:$0xff]
      %v1484 = vld [vmem:[#allocation3 + $0x60] sm:$0xff]
      %v1485 = vld [vmem:[#allocation3 + $0x68] sm:$0xff]
      %v1486 = vld [vmem:[#allocation3 + $0x70] sm:$0xff]
      %v1487 = vld [vmem:[#allocation3 + $0x78] sm:$0xff]
      %v1488 = vld [vmem:[#allocation3 + $0x80] sm:$0xff]
      %v1489 = vld [vmem:[#allocation3 + $0x88] sm:$0xff]
      %v1490 = vpack.c.bf16 %v1474, %v1472
      %v1491 = vpack.c.bf16 %v1475, %v1473
      %v1492 = vpack.c.bf16 %v1478, %v1476
      %v1493 = vpack.c.bf16 %v1479, %v1477
      %v1494 = vpack.c.bf16 %v1482, %v1480
      %v1495 = vpack.c.bf16 %v1483, %v1481
      %v1496 = vpack.c.bf16 %v1486, %v1484
      %v1497 = vpack.c.bf16 %v1487, %v1485
      %v1498 = vpack.c.bf16 %v1488, %v1488
      %v1499 = vpack.c.bf16 %v1489, %v1489
      %v1500 = vld [vmem:[%s3] sm:$0xf]
      %v1501 = vld [vmem:[%s5] sm:$0xff]
      %1503 = vset.pattern.permute.xlu0 0
      %1504 = vperm.xlu0 %1503, %v1501
      %v1505 = vpop.permute.xlu0 %1504
      %vm1507 = vcmask 588800
      %v1509 = vsel %vm1507, %v1500, 0
      %vm1511 = vcmask 1043456
      %v1513 = vsel %vm1511, %v1498, 0
      %v1516 = vsel %vm1511, %v1499, 0
      %1518 = vmatprep.subr.bf16.mxu0 0
      %1519 = vmatpush1.bf16.msra.mxu0 0
      %1520 = vmatprep.subr.bf16.mxu0 0
      %1521 = vmatpush1.bf16.msra.mxu0 0
      %1522 = vmatprep.subr.bf16.mxu0 0
      %1523 = vmatpush1.bf16.msra.mxu0 0
      %1524 = vmatprep.subr.bf16.mxu0 %v1516
      %1525 = vmatpush1.bf16.msra.mxu0 %v1513
      %1526 = vmatprep.subr.bf16.mxu0 %v1497
      %1527 = vmatpush1.bf16.msra.mxu0 %v1496
      %1528 = vmatprep.subr.bf16.mxu0 %v1495
      %1529 = vmatpush1.bf16.msra.mxu0 %v1494
      %1530 = vmatprep.subr.bf16.mxu0 %v1493
      %1531 = vmatpush1.bf16.msra.mxu0 %v1492
      %1532 = vmatprep.subr.bf16.mxu0 %v1491
      %1533 = vmatpush1.bf16.msra.mxu0 %v1490
      %1534 = vmatprep.subr.bf16.mxu0 0
      %1535 = vmatpush2.bf16.msra.mxu0 0
      %1536 = vmatprep.subr.bf16.mxu0 0
      %1537 = vmatpush2.bf16.msra.mxu0 0
      %1538 = vmatprep.subr.bf16.mxu0 0
      %1539 = vmatpush2.bf16.msra.mxu0 0
      %1540 = vmatprep.subr.bf16.mxu0 0
      %1541 = vmatpush2.bf16.msra.mxu0 0
      %1542 = vmatprep.subr.bf16.mxu0 0
      %1543 = vmatpush2.bf16.msra.mxu0 0
      %1544 = vmatprep.subr.bf16.mxu0 0
      %1545 = vmatpush2.bf16.msra.mxu0 0
      %1546 = vmatprep.subr.bf16.mxu0 0
      %1547 = vmatpush2.bf16.msra.mxu0 0
      %1548 = vmatprep.subr.bf16.mxu0 0
      %1549 = vmatpush2.bf16.msra.mxu0 0
      %1550 = vmatprep.mubr.bf16.mxu0 0
      %1551 = vmatmul.mubr.bf16.gmra.mxu0 %v1509
      %v1552 = vpop.f32.mrf.mxu0
      %v1553 = vadd.f32 %v1505, %v1552
      %v1554 = vpop.f32.mrf.mxu0
      %v1555 = vadd.f32 %v1505, %v1554
      %v1556 = vpop.f32.mrf.mxu0
      %v1557 = vpop.f32.mrf.mxu0
      %1558 = vdwg.mxu0
      %v1559 = vmax.f32 %v1553, 0.0
      %v1560 = vmax.f32 %v1555, 0.0
      %1561 = vst.msk [vmem:[#allocation2] sm:$0xff] %vm1278, 0.0
      %1564 = vrot.lane.b32.xlu0 %v1559, 17
      %v1565 = vpop.permute.xlu0 %1564
      %1566 = vrot.lane.b32.xlu0 %v1560, 17
      %v1567 = vpop.permute.xlu0 %1566
      %v1568 = vsel %vm1278, %v1565, %v1567
      %1572 = vst.msk [vmem:[#allocation2] sm:$0xff] %vm1290, %v1565
      %1573 = vst [vmem:[#allocation2 + $0x8] sm:$0xff] %v1568
      %1574 = vst.msk [vmem:[#allocation2 + $0x10] sm:$0xff] %vm1278, %v1567
      %1575 = vst.msk [vmem:[#allocation2 + $0x10] sm:$0xff] %vm1294, 0.0
      %v1576 = vld [vmem:[#allocation2] sm:$0xff]
      %v1577 = vld [vmem:[#allocation2 + $0x8] sm:$0xff]
      %v1578 = vsel %vm1300, %v1576, 0.0
      %v1579 = vsel %vm1301, %v1577, 0.0
      %1580 = vst [vmem:[#allocation3] sm:$0xff] %v1578
      %1581 = vst [vmem:[#allocation3 + $0x8] sm:$0xff] %v1579
      %v1582 = vld [vmem:[#allocation2] sm:$0xff]
      %v1583 = vld [vmem:[#allocation2 + $0x8] sm:$0xff]
      %v1584 = vld [vmem:[#allocation2 + $0x10] sm:$0xff]
      %1588 = vrot.lane.b32.xlu0 %v1582, 127
      %v1589 = vpop.permute.xlu0 %1588
      %1590 = vrot.lane.b32.xlu0 %v1583, 127
      %v1591 = vpop.permute.xlu0 %1590
      %1592 = vrot.lane.b32.xlu0 %v1584, 127
      %v1593 = vpop.permute.xlu0 %1592
      %v1594 = vsel %vm1318, %v1589, %v1591
      %v1595 = vsel %vm1318, %v1591, %v1593
      %1598 = vst [vmem:[#allocation3 + $0x10] sm:$0xff] %v1594
      %1599 = vst [vmem:[#allocation3 + $0x18] sm:$0xff] %v1595
      %v1600 = vld [vmem:[#allocation2] sm:$0xff]
      %v1601 = vld [vmem:[#allocation2 + $0x8] sm:$0xff]
      %v1602 = vld [vmem:[#allocation2 + $0x10] sm:$0xff]
      %1606 = vrot.lane.b32.xlu0 %v1600, 126
      %v1607 = vpop.permute.xlu0 %1606
      %1608 = vrot.lane.b32.xlu0 %v1601, 126
      %v1609 = vpop.permute.xlu0 %1608
      %1610 = vrot.lane.b32.xlu0 %v1602, 126
      %v1611 = vpop.permute.xlu0 %1610
      %v1612 = vsel %vm1341, %v1607, %v1609
      %v1613 = vsel %vm1341, %v1609, %v1611
      %v1616 = vsel %vm1330, %v1612, 0.0
      %v1617 = vsel %vm1331, %v1613, 0.0
      %1618 = vst [vmem:[#allocation3 + $0x20] sm:$0xff] %v1616
      %1619 = vst [vmem:[#allocation3 + $0x28] sm:$0xff] %v1617
      %v1620 = vld [vmem:[#allocation2] sm:$0xff]
      %v1621 = vld [vmem:[#allocation2 + $0x8] sm:$0xff]
      %v1622 = vld [vmem:[#allocation2 + $0x10] sm:$0xff]
      %1626 = vrot.lane.b32.xlu0 %v1620, 112
      %v1627 = vpop.permute.xlu0 %1626
      %1628 = vrot.lane.b32.xlu0 %v1621, 112
      %v1629 = vpop.permute.xlu0 %1628
      %1630 = vrot.lane.b32.xlu0 %v1622, 112
      %v1631 = vpop.permute.xlu0 %1630
      %v1632 = vsel %vm1362, %v1627, %v1629
      %v1633 = vsel %vm1362, %v1629, %v1631
      %v1636 = vsel %vm1300, %v1632, 0.0
      %v1637 = vsel %vm1301, %v1633, 0.0
      %1638 = vst [vmem:[#allocation3 + $0x30] sm:$0xff] %v1636
      %1639 = vst [vmem:[#allocation3 + $0x38] sm:$0xff] %v1637
      %v1640 = vld [vmem:[#allocation2] sm:$0xff]
      %v1641 = vld [vmem:[#allocation2 + $0x8] sm:$0xff]
      %v1642 = vld [vmem:[#allocation2 + $0x10] sm:$0xff]
      %1646 = vrot.lane.b32.xlu0 %v1640, 111
      %v1647 = vpop.permute.xlu0 %1646
      %1648 = vrot.lane.b32.xlu0 %v1641, 111
      %v1649 = vpop.permute.xlu0 %1648
      %1650 = vrot.lane.b32.xlu0 %v1642, 111
      %v1651 = vpop.permute.xlu0 %1650
      %v1652 = vsel %vm1383, %v1647, %v1649
      %v1653 = vsel %vm1383, %v1649, %v1651
      %1656 = vst [vmem:[#allocation3 + $0x40] sm:$0xff] %v1652
      %1657 = vst [vmem:[#allocation3 + $0x48] sm:$0xff] %v1653
      %v1658 = vld [vmem:[#allocation2] sm:$0xff]
      %v1659 = vld [vmem:[#allocation2 + $0x8] sm:$0xff]
      %v1660 = vld [vmem:[#allocation2 + $0x10] sm:$0xff]
      %1664 = vrot.lane.b32.xlu0 %v1658, 110
      %v1665 = vpop.permute.xlu0 %1664
      %1666 = vrot.lane.b32.xlu0 %v1659, 110
      %v1667 = vpop.permute.xlu0 %1666
      %1668 = vrot.lane.b32.xlu0 %v1660, 110
      %v1669 = vpop.permute.xlu0 %1668
      %v1670 = vsel %vm1402, %v1665, %v1667
      %v1671 = vsel %vm1402, %v1667, %v1669
      %v1674 = vsel %vm1330, %v1670, 0.0
      %v1675 = vsel %vm1331, %v1671, 0.0
      %1676 = vst [vmem:[#allocation3 + $0x50] sm:$0xff] %v1674
      %1677 = vst [vmem:[#allocation3 + $0x58] sm:$0xff] %v1675
      %v1678 = vld [vmem:[#allocation2] sm:$0xff]
      %v1679 = vld [vmem:[#allocation2 + $0x8] sm:$0xff]
      %v1680 = vld [vmem:[#allocation2 + $0x10] sm:$0xff]
      %1684 = vrot.lane.b32.xlu0 %v1678, 96
      %v1685 = vpop.permute.xlu0 %1684
      %1686 = vrot.lane.b32.xlu0 %v1679, 96
      %v1687 = vpop.permute.xlu0 %1686
      %1688 = vrot.lane.b32.xlu0 %v1680, 96
      %v1689 = vpop.permute.xlu0 %1688
      %v1690 = vsel %vm1423, %v1685, %v1687
      %v1691 = vsel %vm1423, %v1687, %v1689
      %v1694 = vsel %vm1300, %v1690, 0.0
      %v1695 = vsel %vm1301, %v1691, 0.0
      %1696 = vst [vmem:[#allocation3 + $0x60] sm:$0xff] %v1694
      %1697 = vst [vmem:[#allocation3 + $0x68] sm:$0xff] %v1695
      %v1698 = vld [vmem:[#allocation2] sm:$0xff]
      %v1699 = vld [vmem:[#allocation2 + $0x8] sm:$0xff]
      %v1700 = vld [vmem:[#allocation2 + $0x10] sm:$0xff]
      %1704 = vrot.lane.b32.xlu0 %v1698, 95
      %v1705 = vpop.permute.xlu0 %1704
      %1706 = vrot.lane.b32.xlu0 %v1699, 95
      %v1707 = vpop.permute.xlu0 %1706
      %1708 = vrot.lane.b32.xlu0 %v1700, 95
      %v1709 = vpop.permute.xlu0 %1708
      %v1710 = vsel %vm1444, %v1705, %v1707
      %v1711 = vsel %vm1444, %v1707, %v1709
      %1714 = vst [vmem:[#allocation3 + $0x70] sm:$0xff] %v1710
      %1715 = vst [vmem:[#allocation3 + $0x78] sm:$0xff] %v1711
      %v1716 = vld [vmem:[#allocation2] sm:$0xff]
      %v1717 = vld [vmem:[#allocation2 + $0x8] sm:$0xff]
      %v1718 = vld [vmem:[#allocation2 + $0x10] sm:$0xff]
      %1722 = vrot.lane.b32.xlu0 %v1716, 94
      %v1723 = vpop.permute.xlu0 %1722
      %1724 = vrot.lane.b32.xlu0 %v1717, 94
      %v1725 = vpop.permute.xlu0 %1724
      %1726 = vrot.lane.b32.xlu0 %v1718, 94
      %v1727 = vpop.permute.xlu0 %1726
      %v1728 = vsel %vm1463, %v1723, %v1725
      %v1729 = vsel %vm1463, %v1725, %v1727
      %v1732 = vsel %vm1330, %v1728, 0.0
      %v1733 = vsel %vm1331, %v1729, 0.0
      %1734 = vst [vmem:[#allocation3 + $0x80] sm:$0xff] %v1732
      %1735 = vst [vmem:[#allocation3 + $0x88] sm:$0xff] %v1733
      %v1736 = vld [vmem:[#allocation3] sm:$0xff]
      %v1737 = vld [vmem:[#allocation3 + $0x8] sm:$0xff]
      %v1738 = vld [vmem:[#allocation3 + $0x10] sm:$0xff]
      %v1739 = vld [vmem:[#allocation3 + $0x18] sm:$0xff]
      %v1740 = vld [vmem:[#allocation3 + $0x20] sm:$0xff]
      %v1741 = vld [vmem:[#allocation3 + $0x28] sm:$0xff]
      %v1742 = vld [vmem:[#allocation3 + $0x30] sm:$0xff]
      %v1743 = vld [vmem:[#allocation3 + $0x38] sm:$0xff]
      %v1744 = vld [vmem:[#allocation3 + $0x40] sm:$0xff]
      %v1745 = vld [vmem:[#allocation3 + $0x48] sm:$0xff]
      %v1746 = vld [vmem:[#allocation3 + $0x50] sm:$0xff]
      %v1747 = vld [vmem:[#allocation3 + $0x58] sm:$0xff]
      %v1748 = vld [vmem:[#allocation3 + $0x60] sm:$0xff]
      %v1749 = vld [vmem:[#allocation3 + $0x68] sm:$0xff]
      %v1750 = vld [vmem:[#allocation3 + $0x70] sm:$0xff]
      %v1751 = vld [vmem:[#allocation3 + $0x78] sm:$0xff]
      %v1752 = vld [vmem:[#allocation3 + $0x80] sm:$0xff]
      %v1753 = vld [vmem:[#allocation3 + $0x88] sm:$0xff]
      %v1754 = vpack.c.bf16 %v1738, %v1736
      %v1755 = vpack.c.bf16 %v1739, %v1737
      %v1756 = vpack.c.bf16 %v1742, %v1740
      %v1757 = vpack.c.bf16 %v1743, %v1741
      %v1758 = vpack.c.bf16 %v1746, %v1744
      %v1759 = vpack.c.bf16 %v1747, %v1745
      %v1760 = vpack.c.bf16 %v1750, %v1748
      %v1761 = vpack.c.bf16 %v1751, %v1749
      %v1762 = vpack.c.bf16 %v1752, %v1752
      %v1763 = vpack.c.bf16 %v1753, %v1753
      %v1764 = vld [vmem:[%s7] sm:$0xf]
      %v1765 = vld [vmem:[%s9] sm:$0xff]
      %1767 = vset.pattern.permute.xlu0 0
      %1768 = vperm.xlu0 %1767, %v1765
      %v1769 = vpop.permute.xlu0 %1768
      %v1772 = vsel %vm1507, %v1764, 0
      %v1775 = vsel %vm1511, %v1762, 0
      %v1778 = vsel %vm1511, %v1763, 0
      %1780 = vmatprep.subr.bf16.mxu0 0
      %1781 = vmatpush1.bf16.msra.mxu0 0
      %1782 = vmatprep.subr.bf16.mxu0 0
      %1783 = vmatpush1.bf16.msra.mxu0 0
      %1784 = vmatprep.subr.bf16.mxu0 0
      %1785 = vmatpush1.bf16.msra.mxu0 0
      %1786 = vmatprep.subr.bf16.mxu0 %v1778
      %1787 = vmatpush1.bf16.msra.mxu0 %v1775
      %1788 = vmatprep.subr.bf16.mxu0 %v1761
      %1789 = vmatpush1.bf16.msra.mxu0 %v1760
      %1790 = vmatprep.subr.bf16.mxu0 %v1759
      %1791 = vmatpush1.bf16.msra.mxu0 %v1758
      %1792 = vmatprep.subr.bf16.mxu0 %v1757
      %1793 = vmatpush1.bf16.msra.mxu0 %v1756
      %1794 = vmatprep.subr.bf16.mxu0 %v1755
      %1795 = vmatpush1.bf16.msra.mxu0 %v1754
      %1796 = vmatprep.subr.bf16.mxu0 0
      %1797 = vmatpush2.bf16.msra.mxu0 0
      %1798 = vmatprep.subr.bf16.mxu0 0
      %1799 = vmatpush2.bf16.msra.mxu0 0
      %1800 = vmatprep.subr.bf16.mxu0 0
      %1801 = vmatpush2.bf16.msra.mxu0 0
      %1802 = vmatprep.subr.bf16.mxu0 0
      %1803 = vmatpush2.bf16.msra.mxu0 0
      %1804 = vmatprep.subr.bf16.mxu0 0
      %1805 = vmatpush2.bf16.msra.mxu0 0
      %1806 = vmatprep.subr.bf16.mxu0 0
      %1807 = vmatpush2.bf16.msra.mxu0 0
      %1808 = vmatprep.subr.bf16.mxu0 0
      %1809 = vmatpush2.bf16.msra.mxu0 0
      %1810 = vmatprep.subr.bf16.mxu0 0
      %1811 = vmatpush2.bf16.msra.mxu0 0
      %1812 = vmatprep.mubr.bf16.mxu0 0
      %1813 = vmatmul.mubr.bf16.gmra.mxu0 %v1772
      %v1814 = vpop.f32.mrf.mxu0
      %v1815 = vadd.f32 %v1769, %v1814
      %v1816 = vpop.f32.mrf.mxu0
      %v1817 = vadd.f32 %v1769, %v1816
      %v1818 = vpop.f32.mrf.mxu0
      %v1819 = vpop.f32.mrf.mxu0
      %1820 = vdwg.mxu0
      %v1821 = vmax.f32 %v1815, 0.0
      %v1822 = vmax.f32 %v1817, 0.0
      %1823 = vst [vmem:[#allocation2] sm:$0xff] %v1821
      %1824 = vst [vmem:[#allocation2 + $0x8] sm:$0xff] %v1822
      %1825 = vst.msk [vmem:[#allocation2 + $0x10] sm:$0xff] %vm1278, 0.0
      %v1826 = vld [vmem:[#allocation2] sm:$0xff]
      %v1827 = vld [vmem:[#allocation2 + $0x8] sm:$0xff]
      %v1828 = vld [vmem:[#allocation2 + $0x10] sm:$0xff]
      %1832 = vrot.lane.b32.xlu0 %v1826, 127
      %v1833 = vpop.permute.xlu0 %1832
      %1834 = vrot.lane.b32.xlu0 %v1827, 127
      %v1835 = vpop.permute.xlu0 %1834
      %1836 = vrot.lane.b32.xlu0 %v1828, 127
      %v1837 = vpop.permute.xlu0 %1836
      %v1838 = vsel %vm1318, %v1833, %v1835
      %v1839 = vsel %vm1318, %v1835, %v1837
      %v1842 = vmax.f32 %v1821, %v1838
      %v1843 = vmax.f32 %v1822, %v1839
      %v1845 = vmax.f32 %v1826, %v1838
      %v1846 = vmax.f32 %v1827, %v1839
      %v1847 = vmax.f32 %v1828, %v1837
      %1851 = vrot.lane.b32.xlu0 %v1845, 112
      %v1852 = vpop.permute.xlu0 %1851
      %1853 = vrot.lane.b32.xlu0 %v1846, 112
      %v1854 = vpop.permute.xlu0 %1853
      %1855 = vrot.lane.b32.xlu0 %v1847, 112
      %v1856 = vpop.permute.xlu0 %1855
      %v1857 = vsel %vm1362, %v1852, %v1854
      %v1858 = vsel %vm1362, %v1854, %v1856
      %v1861 = vmax.f32 %v1842, %v1857
      %v1862 = vmax.f32 %v1843, %v1858
      %v1863 = vpack.c.bf16 %v1861, %v1861
      %v1864 = vpack.c.bf16 %v1862, %v1862
      %v1865 = vld [vmem:[%s11] sm:$0xf]
      %v1866 = vld [vmem:[%s11 + $0x4] sm:$0xf]
      %v1867 = vld [vmem:[%s11 + $0x8] sm:$0xf]
      %v1868 = vld [vmem:[%s11 + $0xc] sm:$0xf]
      %v1869 = vld [vmem:[%s11 + $0x10] sm:$0xf]
      %v1870 = vld [vmem:[%s11 + $0x14] sm:$0xf]
      %v1871 = vld [vmem:[%s11 + $0x18] sm:$0xf]
      %v1872 = vld [vmem:[%s11 + $0x1c] sm:$0xf]
      %v1873 = vld [vmem:[%s11 + $0x20] sm:$0xf]
      %v1874 = vld [vmem:[%s11 + $0x24] sm:$0xf]
      %v1875 = vld [vmem:[%s11 + $0x28] sm:$0xf]
      %v1876 = vld [vmem:[%s11 + $0x2c] sm:$0xf]
      %v1877 = vld [vmem:[%s11 + $0x30] sm:$0xf]
      %v1878 = vld [vmem:[%s11 + $0x34] sm:$0xf]
      %v1879 = vld [vmem:[%s11 + $0x38] sm:$0xf]
      %v1880 = vld [vmem:[%s11 + $0x3c] sm:$0xf]
      %v1881 = vld [vmem:[%s11 + $0x40] sm:$0xf]
      %v1882 = vld [vmem:[%s11 + $0x44] sm:$0xf]
      %v1883 = vld [vmem:[%s11 + $0x48] sm:$0xf]
      %v1884 = vld [vmem:[%s11 + $0x4c] sm:$0xf]
      %v1885 = vld [vmem:[%s11 + $0x50] sm:$0xf]
      %v1886 = vld [vmem:[%s11 + $0x54] sm:$0xf]
      %v1887 = vld [vmem:[%s11 + $0x58] sm:$0xf]
      %v1888 = vld [vmem:[%s11 + $0x5c] sm:$0xf]
      %v1889 = vld [vmem:[%s11 + $0x60] sm:$0xf]
      %v1890 = vld [vmem:[%s11 + $0x64] sm:$0xf]
      %v1891 = vld [vmem:[%s11 + $0x68] sm:$0xf]
      %v1892 = vld [vmem:[%s11 + $0x6c] sm:$0xf]
      %v1893 = vld [vmem:[%s11 + $0x70] sm:$0xf]
      %v1894 = vld [vmem:[%s11 + $0x74] sm:$0xf]
      %v1895 = vld [vmem:[%s11 + $0x78] sm:$0xf]
      %v1896 = vld [vmem:[%s11 + $0x7c] sm:$0xf]
      %v1929 = vunpack.c.l.b16 %v1865
      %v1930 = vunpack.c.l.b16 %v1866
      %v1931 = vunpack.c.l.b16 %v1867
      %v1932 = vunpack.c.l.b16 %v1868
      %v1933 = vunpack.c.l.b16 %v1869
      %v1934 = vunpack.c.l.b16 %v1870
      %v1935 = vunpack.c.l.b16 %v1871
      %v1936 = vunpack.c.l.b16 %v1872
      %v1937 = vunpack.c.l.b16 %v1873
      %v1938 = vunpack.c.l.b16 %v1874
      %v1939 = vunpack.c.l.b16 %v1875
      %v1940 = vunpack.c.l.b16 %v1876
      %v1941 = vunpack.c.l.b16 %v1877
      %v1942 = vunpack.c.l.b16 %v1878
      %v1943 = vunpack.c.l.b16 %v1879
      %v1944 = vunpack.c.l.b16 %v1880
      %v1945 = vunpack.c.l.b16 %v1881
      %v1946 = vunpack.c.l.b16 %v1882
      %v1947 = vunpack.c.l.b16 %v1883
      %v1948 = vunpack.c.l.b16 %v1884
      %v1949 = vunpack.c.l.b16 %v1885
      %v1950 = vunpack.c.l.b16 %v1886
      %v1951 = vunpack.c.l.b16 %v1887
      %v1952 = vunpack.c.l.b16 %v1888
      %v1953 = vunpack.c.l.b16 %v1889
      %v1954 = vunpack.c.l.b16 %v1890
      %v1955 = vunpack.c.l.b16 %v1891
      %v1956 = vunpack.c.l.b16 %v1892
      %v1957 = vunpack.c.l.b16 %v1893
      %v1958 = vunpack.c.l.b16 %v1894
      %v1959 = vunpack.c.l.b16 %v1895
      %v1960 = vunpack.c.l.b16 %v1896
      %v1961 = vpack.c.b16 %v1930, %v1929
      %v1962 = vpack.c.b16 %v1932, %v1931
      %v1963 = vpack.c.b16 %v1934, %v1933
      %v1964 = vpack.c.b16 %v1936, %v1935
      %v1965 = vpack.c.b16 %v1938, %v1937
      %v1966 = vpack.c.b16 %v1940, %v1939
      %v1967 = vpack.c.b16 %v1942, %v1941
      %v1968 = vpack.c.b16 %v1944, %v1943
      %v1969 = vpack.c.b16 %v1946, %v1945
      %v1970 = vpack.c.b16 %v1948, %v1947
      %v1971 = vpack.c.b16 %v1950, %v1949
      %v1972 = vpack.c.b16 %v1952, %v1951
      %v1973 = vpack.c.b16 %v1954, %v1953
      %v1974 = vpack.c.b16 %v1956, %v1955
      %v1975 = vpack.c.b16 %v1958, %v1957
      %v1976 = vpack.c.b16 %v1960, %v1959
      %1993 = vmatprep.subr.bf16.mxu0 0
      %1994 = vmatpush1.bf16.msra.mxu0 %v1968
      %1995 = vmatprep.subr.bf16.mxu0 0
      %1996 = vmatpush1.bf16.msra.mxu0 %v1967
      %1997 = vmatprep.subr.bf16.mxu0 0
      %1998 = vmatpush1.bf16.msra.mxu0 %v1966
      %1999 = vmatprep.subr.bf16.mxu0 0
      %2000 = vmatpush1.bf16.msra.mxu0 %v1965
      %2001 = vmatprep.subr.bf16.mxu0 0
      %2002 = vmatpush1.bf16.msra.mxu0 %v1964
      %2003 = vmatprep.subr.bf16.mxu0 0
      %2004 = vmatpush1.bf16.msra.mxu0 %v1963
      %2005 = vmatprep.subr.bf16.mxu0 0
      %2006 = vmatpush1.bf16.msra.mxu0 %v1962
      %2007 = vmatprep.subr.bf16.mxu0 0
      %2008 = vmatpush1.bf16.msra.mxu0 %v1961
      %2009 = vmatprep.subr.bf16.mxu0 0
      %2010 = vmatpush2.bf16.msra.mxu0 %v1976
      %2011 = vmatprep.subr.bf16.mxu0 0
      %2012 = vmatpush2.bf16.msra.mxu0 %v1975
      %2013 = vmatprep.subr.bf16.mxu0 0
      %2014 = vmatpush2.bf16.msra.mxu0 %v1974
      %2015 = vmatprep.subr.bf16.mxu0 0
      %2016 = vmatpush2.bf16.msra.mxu0 %v1973
      %2017 = vmatprep.subr.bf16.mxu0 0
      %2018 = vmatpush2.bf16.msra.mxu0 %v1972
      %2019 = vmatprep.subr.bf16.mxu0 0
      %2020 = vmatpush2.bf16.msra.mxu0 %v1971
      %2021 = vmatprep.subr.bf16.mxu0 0
      %2022 = vmatpush2.bf16.msra.mxu0 %v1970
      %2023 = vmatprep.subr.bf16.mxu0 0
      %2024 = vmatpush2.bf16.msra.mxu0 %v1969
      %2025 = vmatprep.mubr.bf16.mxu0 %v1864
      %2026 = vmatmul.mubr.bf16.gmra.mxu0 %v1863
      %v2027 = vpop.f32.mrf.mxu0
      %v2028 = vadd.f32 0.0, %v2027
      %v2029 = vpop.f32.mrf.mxu0
      %v2030 = vpop.f32.mrf.mxu0
      %v2031 = vpop.f32.mrf.mxu0
      %2032 = vdwg.mxu0
      %vm2033 = vcmp.lt.s32.totalorder %v1248, 0
      %v2034 = vsub.s32 0, %v1248
      %v2035 = vsel %vm2033, %v2034, %v1248
      %v2036 = vshrl.u32 %v2035, 3
      %v2037 = vand.u32 %v2035, 7
      %v2038 = vsub.s32 0, %v2037
      %v2039 = vsel %vm2033, %v2038, %v2037
      %vm2040 = vcmp.ne.s32.totalorder %v2039, 0
      %vm2041 = vcmp.lt.s32.totalorder %v2039, 0
      %vm2042 = vmand %vm2041, %vm2040
      %v2043 = vadd.s32 %v2039, 8
      %v2044 = vsel %vm2042, %v2043, %v2039
      %vm2045 = vcmp.ne.s32.totalorder %v2044, 0
      %vm2046 = vcmp.ne.s32.totalorder %v2044, 7
      %vm2047 = vcmask 72704
      %2048 = vst.msk [vmem:[#allocation2] sm:$0xff] %vm2047, 0.0
      %2050 = vrot.lane.b32.xlu0 %v2028, 9
      %v2051 = vpop.permute.xlu0 %2050
      %vm2053 = vcmask 597064
      %2054 = vst.msk [vmem:[#allocation2] sm:$0xff] %vm2053, %v2051
      %vm2055 = vcmask 671304
      %2056 = vst.msk [vmem:[#allocation2] sm:$0xff] %vm2055, 0.0
      %v2057 = vld [vmem:[#allocation2] sm:$0xff]
      %v2058 = vsel %vm2045, 1, 0
      %vm2059 = vcmp.eq.s32.totalorder %v2058, 1
      %v2060 = vsel %vm2059, %v2057, 0.0
      %vm2061 = vcmask 523264
      %2062 = vst.msk [vmem:[#allocation3] sm:$0xff] %vm2061, %v2060
      %v2063 = vld [vmem:[#allocation2] sm:$0xff]
      %2065 = vrot.lane.b32.xlu0 %v2063, 127
      %v2066 = vpop.permute.xlu0 %2065
      %2068 = vst.msk [vmem:[#allocation3 + $0x10] sm:$0xff] %vm2061, %v2066
      %v2069 = vld [vmem:[#allocation2] sm:$0xff]
      %v2070 = vsel %vm2046, 1, 0
      %vm2071 = vcmp.eq.s32.totalorder %v2070, 1
      %2073 = vrot.lane.b32.xlu0 %v2069, 126
      %v2074 = vpop.permute.xlu0 %2073
      %v2076 = vsel %vm2071, %v2074, 0.0
      %2077 = vst.msk [vmem:[#allocation3 + $0x20] sm:$0xff] %vm2061, %v2076
      %v2078 = vld [vmem:[#allocation2] sm:$0xff]
      %2080 = vrot.lane.b32.xlu0 %v2078, 120
      %v2081 = vpop.permute.xlu0 %2080
      %v2083 = vsel %vm2059, %v2081, 0.0
      %2084 = vst.msk [vmem:[#allocation3 + $0x30] sm:$0xff] %vm2061, %v2083
      %v2085 = vld [vmem:[#allocation2] sm:$0xff]
      %2087 = vrot.lane.b32.xlu0 %v2085, 119
      %v2088 = vpop.permute.xlu0 %2087
      %2090 = vst.msk [vmem:[#allocation3 + $0x40] sm:$0xff] %vm2061, %v2088
      %v2091 = vld [vmem:[#allocation2] sm:$0xff]
      %2093 = vrot.lane.b32.xlu0 %v2091, 118
      %v2094 = vpop.permute.xlu0 %2093
      %v2096 = vsel %vm2071, %v2094, 0.0
      %2097 = vst.msk [vmem:[#allocation3 + $0x50] sm:$0xff] %vm2061, %v2096
      %v2098 = vld [vmem:[#allocation2] sm:$0xff]
      %2100 = vrot.lane.b32.xlu0 %v2098, 112
      %v2101 = vpop.permute.xlu0 %2100
      %v2103 = vsel %vm2059, %v2101, 0.0
      %2104 = vst.msk [vmem:[#allocation3 + $0x60] sm:$0xff] %vm2061, %v2103
      %v2105 = vld [vmem:[#allocation2] sm:$0xff]
      %2107 = vrot.lane.b32.xlu0 %v2105, 111
      %v2108 = vpop.permute.xlu0 %2107
      %2110 = vst.msk [vmem:[#allocation3 + $0x70] sm:$0xff] %vm2061, %v2108
      %v2111 = vld [vmem:[#allocation2] sm:$0xff]
      %2113 = vrot.lane.b32.xlu0 %v2111, 110
      %v2114 = vpop.permute.xlu0 %2113
      %v2116 = vsel %vm2071, %v2114, 0.0
      %2117 = vst.msk [vmem:[#allocation3 + $0x80] sm:$0xff] %vm2061, %v2116
      %v2118 = vld [vmem:[#allocation3] sm:$0xff]
      %v2119 = vld [vmem:[#allocation3 + $0x10] sm:$0xff]
      %v2120 = vld [vmem:[#allocation3 + $0x20] sm:$0xff]
      %v2121 = vld [vmem:[#allocation3 + $0x30] sm:$0xff]
      %v2122 = vld [vmem:[#allocation3 + $0x40] sm:$0xff]
      %v2123 = vld [vmem:[#allocation3 + $0x50] sm:$0xff]
      %v2124 = vld [vmem:[#allocation3 + $0x60] sm:$0xff]
      %v2125 = vld [vmem:[#allocation3 + $0x70] sm:$0xff]
      %v2126 = vld [vmem:[#allocation3 + $0x80] sm:$0xff]
      %v2127 = vpack.c.bf16 %v2119, %v2118
      %v2128 = vpack.c.bf16 %v2121, %v2120
      %v2129 = vpack.c.bf16 %v2123, %v2122
      %v2130 = vpack.c.bf16 %v2125, %v2124
      %v2131 = vpack.c.bf16 %v2126, %v2126
      %v2132 = vld [vmem:[%s13] sm:$0xf]
      %v2133 = vld [vmem:[%s13 + $0x4] sm:$0xf]
      %v2134 = vld [vmem:[%s15] sm:$0xff]
      %v2135 = vld [vmem:[%s15 + $0x8] sm:$0xff]
      %2137 = vset.pattern.permute.xlu0 0
      %2138 = vperm.xlu0 %2137, %v2134
      %v2139 = vpop.permute.xlu0 %2138
      %2142 = vset.pattern.permute.xlu0 0
      %2143 = vperm.xlu0 %2142, %v2135
      %v2144 = vpop.permute.xlu0 %2143
      %v2148 = vunpack.c.l.b16 %v2132
      %v2149 = vunpack.c.l.b16 %v2133
      %v2150 = vpack.c.b16 %v2149, %v2148
      %v2152 = vsel %vm1507, %v2150, 0
      %v2155 = vsel %vm1511, %v2131, 0
      %2157 = vmatprep.subr.bf16.mxu0 0
      %2158 = vmatpush1.bf16.msra.mxu0 0
      %2159 = vmatprep.subr.bf16.mxu0 0
      %2160 = vmatpush1.bf16.msra.mxu0 0
      %2161 = vmatprep.subr.bf16.mxu0 0
      %2162 = vmatpush1.bf16.msra.mxu0 0
      %2163 = vmatprep.subr.bf16.mxu0 0
      %2164 = vmatpush1.bf16.msra.mxu0 %v2155
      %2165 = vmatprep.subr.bf16.mxu0 0
      %2166 = vmatpush1.bf16.msra.mxu0 %v2130
      %2167 = vmatprep.subr.bf16.mxu0 0
      %2168 = vmatpush1.bf16.msra.mxu0 %v2129
      %2169 = vmatprep.subr.bf16.mxu0 0
      %2170 = vmatpush1.bf16.msra.mxu0 %v2128
      %2171 = vmatprep.subr.bf16.mxu0 0
      %2172 = vmatpush1.bf16.msra.mxu0 %v2127
      %2173 = vmatprep.subr.bf16.mxu0 0
      %2174 = vmatpush2.bf16.msra.mxu0 0
      %2175 = vmatprep.subr.bf16.mxu0 0
      %2176 = vmatpush2.bf16.msra.mxu0 0
      %2177 = vmatprep.subr.bf16.mxu0 0
      %2178 = vmatpush2.bf16.msra.mxu0 0
      %2179 = vmatprep.subr.bf16.mxu0 0
      %2180 = vmatpush2.bf16.msra.mxu0 0
      %2181 = vmatprep.subr.bf16.mxu0 0
      %2182 = vmatpush2.bf16.msra.mxu0 0
      %2183 = vmatprep.subr.bf16.mxu0 0
      %2184 = vmatpush2.bf16.msra.mxu0 0
      %2185 = vmatprep.subr.bf16.mxu0 0
      %2186 = vmatpush2.bf16.msra.mxu0 0
      %2187 = vmatprep.subr.bf16.mxu0 0
      %2188 = vmatpush2.bf16.msra.mxu0 0
      %2189 = vmatprep.mubr.bf16.mxu0 0
      %2190 = vmatmul.mubr.bf16.gmra.mxu0 %v2152
      %v2191 = vpop.f32.mrf.mxu0
      %v2192 = vadd.f32 %v2139, %v2191
      %v2193 = vpop.f32.mrf.mxu0
      %v2194 = vpop.f32.mrf.mxu0
      %v2195 = vadd.f32 %v2144, %v2194
      %v2196 = vpop.f32.mrf.mxu0
      %2197 = vdwg.mxu0
      %v2198 = vmax.f32 %v2192, 0.0
      %v2199 = vmax.f32 %v2195, 0.0
      %2200 = vst.msk [vmem:[#allocation2] sm:$0xff] %vm2047, 0.0
      %2201 = vst.msk [vmem:[#allocation2 + $0x18] sm:$0xff] %vm2047, 0.0
      %2204 = vrot.lane.b32.xlu0 %v2198, 9
      %v2205 = vpop.permute.xlu0 %2204
      %2206 = vrot.lane.b32.xlu0 %v2199, 9
      %v2207 = vpop.permute.xlu0 %2206
      %2210 = vst.msk [vmem:[#allocation2] sm:$0xff] %vm2053, %v2205
      %2211 = vst.msk [vmem:[#allocation2 + $0x18] sm:$0xff] %vm2053, %v2207
      %2212 = vst.msk [vmem:[#allocation2] sm:$0xff] %vm2055, 0.0
      %2213 = vst.msk [vmem:[#allocation2 + $0x18] sm:$0xff] %vm2055, 0.0
      %v2214 = vld [vmem:[#allocation2] sm:$0xff]
      %v2215 = vld [vmem:[#allocation2 + $0x18] sm:$0xff]
      %v2216 = vsel %vm2059, %v2214, 0.0
      %v2217 = vsel %vm2059, %v2215, 0.0
      %2218 = vst.msk [vmem:[#allocation3] sm:$0xff] %vm2061, %v2216
      %2219 = vst.msk [vmem:[#allocation3 + $0x10] sm:$0xff] %vm2061, %v2217
      %v2220 = vld [vmem:[#allocation2] sm:$0xff]
      %v2221 = vld [vmem:[#allocation2 + $0x18] sm:$0xff]
      %2224 = vrot.lane.b32.xlu0 %v2220, 127
      %v2225 = vpop.permute.xlu0 %2224
      %2226 = vrot.lane.b32.xlu0 %v2221, 127
      %v2227 = vpop.permute.xlu0 %2226
      %2230 = vst.msk [vmem:[#allocation3 + $0x20] sm:$0xff] %vm2061, %v2225
      %2231 = vst.msk [vmem:[#allocation3 + $0x30] sm:$0xff] %vm2061, %v2227
      %v2232 = vld [vmem:[#allocation2] sm:$0xff]
      %v2233 = vld [vmem:[#allocation2 + $0x18] sm:$0xff]
      %2236 = vrot.lane.b32.xlu0 %v2232, 126
      %v2237 = vpop.permute.xlu0 %2236
      %2238 = vrot.lane.b32.xlu0 %v2233, 126
      %v2239 = vpop.permute.xlu0 %2238
      %v2242 = vsel %vm2071, %v2237, 0.0
      %v2243 = vsel %vm2071, %v2239, 0.0
      %2244 = vst.msk [vmem:[#allocation3 + $0x40] sm:$0xff] %vm2061, %v2242
      %2245 = vst.msk [vmem:[#allocation3 + $0x50] sm:$0xff] %vm2061, %v2243
      %v2246 = vld [vmem:[#allocation2] sm:$0xff]
      %v2247 = vld [vmem:[#allocation2 + $0x18] sm:$0xff]
      %2250 = vrot.lane.b32.xlu0 %v2246, 120
      %v2251 = vpop.permute.xlu0 %2250
      %2252 = vrot.lane.b32.xlu0 %v2247, 120
      %v2253 = vpop.permute.xlu0 %2252
      %v2256 = vsel %vm2059, %v2251, 0.0
      %v2257 = vsel %vm2059, %v2253, 0.0
      %2258 = vst.msk [vmem:[#allocation3 + $0x60] sm:$0xff] %vm2061, %v2256
      %2259 = vst.msk [vmem:[#allocation3 + $0x70] sm:$0xff] %vm2061, %v2257
      %v2260 = vld [vmem:[#allocation2] sm:$0xff]
      %v2261 = vld [vmem:[#allocation2 + $0x18] sm:$0xff]
      %2264 = vrot.lane.b32.xlu0 %v2260, 119
      %v2265 = vpop.permute.xlu0 %2264
      %2266 = vrot.lane.b32.xlu0 %v2261, 119
      %v2267 = vpop.permute.xlu0 %2266
      %2270 = vst.msk [vmem:[#allocation3 + $0x80] sm:$0xff] %vm2061, %v2265
      %2271 = vst.msk [vmem:[#allocation3 + $0x90] sm:$0xff] %vm2061, %v2267
      %v2272 = vld [vmem:[#allocation2] sm:$0xff]
      %v2273 = vld [vmem:[#allocation2 + $0x18] sm:$0xff]
      %2276 = vrot.lane.b32.xlu0 %v2272, 118
      %v2277 = vpop.permute.xlu0 %2276
      %2278 = vrot.lane.b32.xlu0 %v2273, 118
      %v2279 = vpop.permute.xlu0 %2278
      %v2282 = vsel %vm2071, %v2277, 0.0
      %v2283 = vsel %vm2071, %v2279, 0.0
      %2284 = vst.msk [vmem:[#allocation3 + $0xa0] sm:$0xff] %vm2061, %v2282
      %2285 = vst.msk [vmem:[#allocation3 + $0xb0] sm:$0xff] %vm2061, %v2283
      %v2286 = vld [vmem:[#allocation2] sm:$0xff]
      %v2287 = vld [vmem:[#allocation2 + $0x18] sm:$0xff]
      %2290 = vrot.lane.b32.xlu0 %v2286, 112
      %v2291 = vpop.permute.xlu0 %2290
      %2292 = vrot.lane.b32.xlu0 %v2287, 112
      %v2293 = vpop.permute.xlu0 %2292
      %v2296 = vsel %vm2059, %v2291, 0.0
      %v2297 = vsel %vm2059, %v2293, 0.0
      %2298 = vst.msk [vmem:[#allocation3 + $0xc0] sm:$0xff] %vm2061, %v2296
      %2299 = vst.msk [vmem:[#allocation3 + $0xd0] sm:$0xff] %vm2061, %v2297
      %v2300 = vld [vmem:[#allocation2] sm:$0xff]
      %v2301 = vld [vmem:[#allocation2 + $0x18] sm:$0xff]
      %2304 = vrot.lane.b32.xlu0 %v2300, 111
      %v2305 = vpop.permute.xlu0 %2304
      %2306 = vrot.lane.b32.xlu0 %v2301, 111
      %v2307 = vpop.permute.xlu0 %2306
      %2310 = vst.msk [vmem:[#allocation3 + $0xe0] sm:$0xff] %vm2061, %v2305
      %2311 = vst.msk [vmem:[#allocation3 + $0xf0] sm:$0xff] %vm2061, %v2307
      %v2312 = vld [vmem:[#allocation2] sm:$0xff]
      %v2313 = vld [vmem:[#allocation2 + $0x18] sm:$0xff]
      %2316 = vrot.lane.b32.xlu0 %v2312, 110
      %v2317 = vpop.permute.xlu0 %2316
      %2318 = vrot.lane.b32.xlu0 %v2313, 110
      %v2319 = vpop.permute.xlu0 %2318
      %v2322 = vsel %vm2071, %v2317, 0.0
      %v2323 = vsel %vm2071, %v2319, 0.0
      %2324 = vst.msk [vmem:[#allocation3 + $0x100] sm:$0xff] %vm2061, %v2322
      %2325 = vst.msk [vmem:[#allocation3 + $0x110] sm:$0xff] %vm2061, %v2323
      %v2326 = vld [vmem:[#allocation3] sm:$0xff]
      %v2327 = vld [vmem:[#allocation3 + $0x10] sm:$0xff]
      %v2328 = vld [vmem:[#allocation3 + $0x20] sm:$0xff]
      %v2329 = vld [vmem:[#allocation3 + $0x30] sm:$0xff]
      %v2330 = vld [vmem:[#allocation3 + $0x40] sm:$0xff]
      %v2331 = vld [vmem:[#allocation3 + $0x50] sm:$0xff]
      %v2332 = vld [vmem:[#allocation3 + $0x60] sm:$0xff]
      %v2333 = vld [vmem:[#allocation3 + $0x70] sm:$0xff]
      %v2334 = vld [vmem:[#allocation3 + $0x80] sm:$0xff]
      %v2335 = vld [vmem:[#allocation3 + $0x90] sm:$0xff]
      %v2336 = vld [vmem:[#allocation3 + $0xa0] sm:$0xff]
      %v2337 = vld [vmem:[#allocation3 + $0xb0] sm:$0xff]
      %v2338 = vld [vmem:[#allocation3 + $0xc0] sm:$0xff]
      %v2339 = vld [vmem:[#allocation3 + $0xd0] sm:$0xff]
      %v2340 = vld [vmem:[#allocation3 + $0xe0] sm:$0xff]
      %v2341 = vld [vmem:[#allocation3 + $0xf0] sm:$0xff]
      %v2342 = vld [vmem:[#allocation3 + $0x100] sm:$0xff]
      %v2343 = vld [vmem:[#allocation3 + $0x110] sm:$0xff]
      %v2344 = vpack.c.bf16 %v2327, %v2326
      %v2345 = vpack.c.bf16 %v2329, %v2328
      %v2346 = vpack.c.bf16 %v2331, %v2330
      %v2347 = vpack.c.bf16 %v2333, %v2332
      %v2348 = vpack.c.bf16 %v2335, %v2334
      %v2349 = vpack.c.bf16 %v2337, %v2336
      %v2350 = vpack.c.bf16 %v2339, %v2338
      %v2351 = vpack.c.bf16 %v2341, %v2340
      %v2352 = vpack.c.bf16 %v2343, %v2342
      %v2353 = vld [vmem:[%s17] sm:$0xff]
      %v2354 = vld [vmem:[%s17 + $0x8] sm:$0xff]
      %v2355 = vld [vmem:[%s19] sm:$0xff]
      %v2356 = vld [vmem:[%s19 + $0x8] sm:$0xff]
      %2358 = vset.pattern.permute.xlu0 0
      %2359 = vperm.xlu0 %2358, %v2355
      %v2360 = vpop.permute.xlu0 %2359
      %2363 = vset.pattern.permute.xlu0 0
      %2364 = vperm.xlu0 %2363, %v2356
      %v2365 = vpop.permute.xlu0 %2364
      %v2369 = vunpack.c.l.b16 %v2353
      %v2370 = vunpack.c.h.b16 %v2353
      %v2371 = vunpack.c.l.b16 %v2354
      %v2372 = vunpack.c.h.b16 %v2354
      %v2373 = vpack.c.b16 %v2371, %v2369
      %v2374 = vpack.c.b16 %v2372, %v2370
      %vm2376 = vcmask 130048
      %v2378 = vsel %vm2376, %v2374, 0
      %2380 = vmatprep.subr.bf16.mxu0 0
      %2381 = vmatpush1.bf16.msra.mxu0 %v2351
      %2382 = vmatprep.subr.bf16.mxu0 0
      %2383 = vmatpush1.bf16.msra.mxu0 %v2350
      %2384 = vmatprep.subr.bf16.mxu0 0
      %2385 = vmatpush1.bf16.msra.mxu0 %v2349
      %2386 = vmatprep.subr.bf16.mxu0 0
      %2387 = vmatpush1.bf16.msra.mxu0 %v2348
      %2388 = vmatprep.subr.bf16.mxu0 0
      %2389 = vmatpush1.bf16.msra.mxu0 %v2347
      %2390 = vmatprep.subr.bf16.mxu0 0
      %2391 = vmatpush1.bf16.msra.mxu0 %v2346
      %2392 = vmatprep.subr.bf16.mxu0 0
      %2393 = vmatpush1.bf16.msra.mxu0 %v2345
      %2394 = vmatprep.subr.bf16.mxu0 0
      %2395 = vmatpush1.bf16.msra.mxu0 %v2344
      %2396 = vmatprep.subr.bf16.mxu0 0
      %2397 = vmatpush2.bf16.msra.mxu0 0
      %2398 = vmatprep.subr.bf16.mxu0 0
      %2399 = vmatpush2.bf16.msra.mxu0 0
      %2400 = vmatprep.subr.bf16.mxu0 0
      %2401 = vmatpush2.bf16.msra.mxu0 0
      %2402 = vmatprep.subr.bf16.mxu0 0
      %2403 = vmatpush2.bf16.msra.mxu0 0
      %2404 = vmatprep.subr.bf16.mxu0 0
      %2405 = vmatpush2.bf16.msra.mxu0 0
      %2406 = vmatprep.subr.bf16.mxu0 0
      %2407 = vmatpush2.bf16.msra.mxu0 0
      %2408 = vmatprep.subr.bf16.mxu0 0
      %2409 = vmatpush2.bf16.msra.mxu0 0
      %2410 = vmatprep.subr.bf16.mxu0 0
      %2411 = vmatpush2.bf16.msra.mxu0 %v2352
      %2412 = vmatprep.mubr.bf16.mxu0 %v2378
      %2413 = vmatmul.mubr.bf16.gmra.mxu0 %v2373
      %v2414 = vpop.f32.mrf.mxu0
      %v2415 = vadd.f32 %v2360, %v2414
      %v2416 = vpop.f32.mrf.mxu0
      %v2417 = vpop.f32.mrf.mxu0
      %v2418 = vadd.f32 %v2365, %v2417
      %v2419 = vpop.f32.mrf.mxu0
      %2420 = vdwg.mxu0
      %v2421 = vmax.f32 %v2415, 0.0
      %v2422 = vmax.f32 %v2418, 0.0
      %2423 = vst.msk [vmem:[#allocation2] sm:$0xff] %vm2061, %v2421
      %2424 = vst.msk [vmem:[#allocation2 + $0x18] sm:$0xff] %vm2061, %v2422
      %vm2425 = vcmask 597504
      %2426 = vst.msk [vmem:[#allocation2] sm:$0xff] %vm2425, 0.0
      %2427 = vst.msk [vmem:[#allocation2 + $0x18] sm:$0xff] %vm2425, 0.0
      %v2428 = vld [vmem:[#allocation2] sm:$0xff]
      %v2429 = vld [vmem:[#allocation2 + $0x18] sm:$0xff]
      %2432 = vrot.lane.b32.xlu0 %v2428, 127
      %v2433 = vpop.permute.xlu0 %2432
      %2434 = vrot.lane.b32.xlu0 %v2429, 127
      %v2435 = vpop.permute.xlu0 %2434
      %v2438 = vmax.f32 %v2421, %v2433
      %v2439 = vmax.f32 %v2422, %v2435
      %v2440 = vmax.f32 %v2428, %v2433
      %v2441 = vmax.f32 %v2429, %v2435
      %2444 = vrot.lane.b32.xlu0 %v2440, 120
      %v2445 = vpop.permute.xlu0 %2444
      %2446 = vrot.lane.b32.xlu0 %v2441, 120
      %v2447 = vpop.permute.xlu0 %2446
      %v2450 = vmax.f32 %v2438, %v2445
      %v2451 = vmax.f32 %v2439, %v2447
      %v2452 = vpack.c.bf16 %v2451, %v2450
      %v2453 = vld [vmem:[%s21] sm:$0xf]
      %v2454 = vld [vmem:[%s21 + $0x4] sm:$0xf]
      %v2455 = vld [vmem:[%s21 + $0x8] sm:$0xf]
      %v2456 = vld [vmem:[%s21 + $0xc] sm:$0xf]
      %v2457 = vld [vmem:[%s21 + $0x10] sm:$0xf]
      %v2458 = vld [vmem:[%s21 + $0x14] sm:$0xf]
      %v2459 = vld [vmem:[%s21 + $0x18] sm:$0xf]
      %v2460 = vld [vmem:[%s21 + $0x1c] sm:$0xf]
      %v2469 = vunpack.c.l.b16 %v2453
      %v2470 = vunpack.c.l.b16 %v2454
      %v2471 = vunpack.c.l.b16 %v2455
      %v2472 = vunpack.c.l.b16 %v2456
      %v2473 = vunpack.c.l.b16 %v2457
      %v2474 = vunpack.c.l.b16 %v2458
      %v2475 = vunpack.c.l.b16 %v2459
      %v2476 = vunpack.c.l.b16 %v2460
      %v2477 = vpack.c.b16 %v2470, %v2469
      %v2478 = vpack.c.b16 %v2472, %v2471
      %v2479 = vpack.c.b16 %v2474, %v2473
      %v2480 = vpack.c.b16 %v2476, %v2475
      %v2486 = vsel %vm2061, %v2452, 0
      %2488 = vmatprep.subr.bf16.mxu0 0
      %2489 = vmatpush1.bf16.msra.mxu0 0
      %2490 = vmatprep.subr.bf16.mxu0 0
      %2491 = vmatpush1.bf16.msra.mxu0 0
      %2492 = vmatprep.subr.bf16.mxu0 0
      %2493 = vmatpush1.bf16.msra.mxu0 0
      %2494 = vmatprep.subr.bf16.mxu0 0
      %2495 = vmatpush1.bf16.msra.mxu0 0
      %2496 = vmatprep.subr.bf16.mxu0 0
      %2497 = vmatpush1.bf16.msra.mxu0 %v2480
      %2498 = vmatprep.subr.bf16.mxu0 0
      %2499 = vmatpush1.bf16.msra.mxu0 %v2479
      %2500 = vmatprep.subr.bf16.mxu0 0
      %2501 = vmatpush1.bf16.msra.mxu0 %v2478
      %2502 = vmatprep.subr.bf16.mxu0 0
      %2503 = vmatpush1.bf16.msra.mxu0 %v2477
      %2504 = vmatprep.subr.bf16.mxu0 0
      %2505 = vmatpush2.bf16.msra.mxu0 0
      %2506 = vmatprep.subr.bf16.mxu0 0
      %2507 = vmatpush2.bf16.msra.mxu0 0
      %2508 = vmatprep.subr.bf16.mxu0 0
      %2509 = vmatpush2.bf16.msra.mxu0 0
      %2510 = vmatprep.subr.bf16.mxu0 0
      %2511 = vmatpush2.bf16.msra.mxu0 0
      %2512 = vmatprep.subr.bf16.mxu0 0
      %2513 = vmatpush2.bf16.msra.mxu0 0
      %2514 = vmatprep.subr.bf16.mxu0 0
      %2515 = vmatpush2.bf16.msra.mxu0 0
      %2516 = vmatprep.subr.bf16.mxu0 0
      %2517 = vmatpush2.bf16.msra.mxu0 0
      %2518 = vmatprep.subr.bf16.mxu0 0
      %2519 = vmatpush2.bf16.msra.mxu0 0
      %2520 = vmatprep.mubr.bf16.mxu0 0
      %2521 = vmatmul.mubr.bf16.gmra.mxu0 %v2486
      %v2522 = vpop.f32.mrf.mxu0
      %v2523 = vadd.f32 0.0, %v2522
      %v2524 = vpop.f32.mrf.mxu0
      %v2525 = vpop.f32.mrf.mxu0
      %v2526 = vadd.f32 0.0, %v2525
      %v2527 = vpop.f32.mrf.mxu0
      %2528 = vdwg.mxu0
      %vm2529 = vcmp.lt.s32.totalorder %v1248, 0
      %v2530 = vsub.s32 0, %v1248
      %v2531 = vsel %vm2529, %v2530, %v1248
      %v2532 = vshrl.u32 %v2531, 2
      %v2533 = vand.u32 %v2531, 3
      %v2534 = vsub.s32 0, %v2533
      %v2535 = vsel %vm2529, %v2534, %v2533
      %vm2536 = vcmp.ne.s32.totalorder %v2535, 0
      %vm2537 = vcmp.lt.s32.totalorder %v2535, 0
      %vm2538 = vmand %vm2537, %vm2536
      %v2539 = vadd.s32 %v2535, 4
      %v2540 = vsel %vm2538, %v2539, %v2535
      %vm2541 = vcmp.ne.s32.totalorder %v2540, 0
      %vm2542 = vcmp.ne.s32.totalorder %v2540, 3
      %vm2543 = vcmask 39936
      %2544 = vst.msk [vmem:[#allocation2] sm:$0xff] %vm2543, 0.0
      %2545 = vst.msk [vmem:[#allocation2 + $0x18] sm:$0xff] %vm2543, 0.0
      %2548 = vrot.lane.b32.xlu0 %v2523, 5
      %v2549 = vpop.permute.xlu0 %2548
      %2550 = vrot.lane.b32.xlu0 %v2526, 5
      %v2551 = vpop.permute.xlu0 %2550
      %vm2554 = vcmask 171048
      %2555 = vst.msk [vmem:[#allocation2] sm:$0xff] %vm2554, %v2549
      %2556 = vst.msk [vmem:[#allocation2 + $0x18] sm:$0xff] %vm2554, %v2551
      %vm2557 = vcmask 212136
      %2558 = vst.msk [vmem:[#allocation2] sm:$0xff] %vm2557, 0.0
      %2559 = vst.msk [vmem:[#allocation2 + $0x18] sm:$0xff] %vm2557, 0.0
      %v2560 = vld [vmem:[#allocation2] sm:$0xff]
      %v2561 = vld [vmem:[#allocation2 + $0x18] sm:$0xff]
      %v2562 = vsel %vm2541, 1, 0
      %vm2563 = vcmp.eq.s32.totalorder %v2562, 1
      %v2564 = vsel %vm2563, %v2560, 0.0
      %v2565 = vsel %vm2563, %v2561, 0.0
      %2566 = vst.msk [vmem:[#allocation3] sm:$0xff] %vm2376, %v2564
      %2567 = vst.msk [vmem:[#allocation3 + $0x10] sm:$0xff] %vm2376, %v2565
      %v2568 = vld [vmem:[#allocation2] sm:$0xff]
      %v2569 = vld [vmem:[#allocation2 + $0x18] sm:$0xff]
      %2572 = vrot.lane.b32.xlu0 %v2568, 127
      %v2573 = vpop.permute.xlu0 %2572
      %2574 = vrot.lane.b32.xlu0 %v2569, 127
      %v2575 = vpop.permute.xlu0 %2574
      %2578 = vst.msk [vmem:[#allocation3 + $0x20] sm:$0xff] %vm2376, %v2573
      %2579 = vst.msk [vmem:[#allocation3 + $0x30] sm:$0xff] %vm2376, %v2575
      %v2580 = vld [vmem:[#allocation2] sm:$0xff]
      %v2581 = vld [vmem:[#allocation2 + $0x18] sm:$0xff]
      %v2582 = vsel %vm2542, 1, 0
      %vm2583 = vcmp.eq.s32.totalorder %v2582, 1
      %2586 = vrot.lane.b32.xlu0 %v2580, 126
      %v2587 = vpop.permute.xlu0 %2586
      %2588 = vrot.lane.b32.xlu0 %v2581, 126
      %v2589 = vpop.permute.xlu0 %2588
      %v2592 = vsel %vm2583, %v2587, 0.0
      %v2593 = vsel %vm2583, %v2589, 0.0
      %2594 = vst.msk [vmem:[#allocation3 + $0x40] sm:$0xff] %vm2376, %v2592
      %2595 = vst.msk [vmem:[#allocation3 + $0x50] sm:$0xff] %vm2376, %v2593
      %v2596 = vld [vmem:[#allocation2] sm:$0xff]
      %v2597 = vld [vmem:[#allocation2 + $0x18] sm:$0xff]
      %2600 = vrot.lane.b32.xlu0 %v2596, 124
      %v2601 = vpop.permute.xlu0 %2600
      %2602 = vrot.lane.b32.xlu0 %v2597, 124
      %v2603 = vpop.permute.xlu0 %2602
      %v2606 = vsel %vm2563, %v2601, 0.0
      %v2607 = vsel %vm2563, %v2603, 0.0
      %2608 = vst.msk [vmem:[#allocation3 + $0x60] sm:$0xff] %vm2376, %v2606
      %2609 = vst.msk [vmem:[#allocation3 + $0x70] sm:$0xff] %vm2376, %v2607
      %v2610 = vld [vmem:[#allocation2] sm:$0xff]
      %v2611 = vld [vmem:[#allocation2 + $0x18] sm:$0xff]
      %2614 = vrot.lane.b32.xlu0 %v2610, 123
      %v2615 = vpop.permute.xlu0 %2614
      %2616 = vrot.lane.b32.xlu0 %v2611, 123
      %v2617 = vpop.permute.xlu0 %2616
      %2620 = vst.msk [vmem:[#allocation3 + $0x80] sm:$0xff] %vm2376, %v2615
      %2621 = vst.msk [vmem:[#allocation3 + $0x90] sm:$0xff] %vm2376, %v2617
      %v2622 = vld [vmem:[#allocation2] sm:$0xff]
      %v2623 = vld [vmem:[#allocation2 + $0x18] sm:$0xff]
      %2626 = vrot.lane.b32.xlu0 %v2622, 122
      %v2627 = vpop.permute.xlu0 %2626
      %2628 = vrot.lane.b32.xlu0 %v2623, 122
      %v2629 = vpop.permute.xlu0 %2628
      %v2632 = vsel %vm2583, %v2627, 0.0
      %v2633 = vsel %vm2583, %v2629, 0.0
      %2634 = vst.msk [vmem:[#allocation3 + $0xa0] sm:$0xff] %vm2376, %v2632
      %2635 = vst.msk [vmem:[#allocation3 + $0xb0] sm:$0xff] %vm2376, %v2633
      %v2636 = vld [vmem:[#allocation2] sm:$0xff]
      %v2637 = vld [vmem:[#allocation2 + $0x18] sm:$0xff]
      %2640 = vrot.lane.b32.xlu0 %v2636, 120
      %v2641 = vpop.permute.xlu0 %2640
      %2642 = vrot.lane.b32.xlu0 %v2637, 120
      %v2643 = vpop.permute.xlu0 %2642
      %v2646 = vsel %vm2563, %v2641, 0.0
      %v2647 = vsel %vm2563, %v2643, 0.0
      %2648 = vst.msk [vmem:[#allocation3 + $0xc0] sm:$0xff] %vm2376, %v2646
      %2649 = vst.msk [vmem:[#allocation3 + $0xd0] sm:$0xff] %vm2376, %v2647
      %v2650 = vld [vmem:[#allocation2] sm:$0xff]
      %v2651 = vld [vmem:[#allocation2 + $0x18] sm:$0xff]
      %2654 = vrot.lane.b32.xlu0 %v2650, 119
      %v2655 = vpop.permute.xlu0 %2654
      %2656 = vrot.lane.b32.xlu0 %v2651, 119
      %v2657 = vpop.permute.xlu0 %2656
      %2660 = vst.msk [vmem:[#allocation3 + $0xe0] sm:$0xff] %vm2376, %v2655
      %2661 = vst.msk [vmem:[#allocation3 + $0xf0] sm:$0xff] %vm2376, %v2657
      %v2662 = vld [vmem:[#allocation2] sm:$0xff]
      %v2663 = vld [vmem:[#allocation2 + $0x18] sm:$0xff]
      %2666 = vrot.lane.b32.xlu0 %v2662, 118
      %v2667 = vpop.permute.xlu0 %2666
      %2668 = vrot.lane.b32.xlu0 %v2663, 118
      %v2669 = vpop.permute.xlu0 %2668
      %v2672 = vsel %vm2583, %v2667, 0.0
      %v2673 = vsel %vm2583, %v2669, 0.0
      %2674 = vst.msk [vmem:[#allocation3 + $0x100] sm:$0xff] %vm2376, %v2672
      %2675 = vst.msk [vmem:[#allocation3 + $0x110] sm:$0xff] %vm2376, %v2673
      %v2676 = vld [vmem:[#allocation3] sm:$0xff]
      %v2677 = vld [vmem:[#allocation3 + $0x10] sm:$0xff]
      %v2678 = vld [vmem:[#allocation3 + $0x20] sm:$0xff]
      %v2679 = vld [vmem:[#allocation3 + $0x30] sm:$0xff]
      %v2680 = vld [vmem:[#allocation3 + $0x40] sm:$0xff]
      %v2681 = vld [vmem:[#allocation3 + $0x50] sm:$0xff]
      %v2682 = vld [vmem:[#allocation3 + $0x60] sm:$0xff]
      %v2683 = vld [vmem:[#allocation3 + $0x70] sm:$0xff]
      %v2684 = vld [vmem:[#allocation3 + $0x80] sm:$0xff]
      %v2685 = vld [vmem:[#allocation3 + $0x90] sm:$0xff]
      %v2686 = vld [vmem:[#allocation3 + $0xa0] sm:$0xff]
      %v2687 = vld [vmem:[#allocation3 + $0xb0] sm:$0xff]
      %v2688 = vld [vmem:[#allocation3 + $0xc0] sm:$0xff]
      %v2689 = vld [vmem:[#allocation3 + $0xd0] sm:$0xff]
      %v2690 = vld [vmem:[#allocation3 + $0xe0] sm:$0xff]
      %v2691 = vld [vmem:[#allocation3 + $0xf0] sm:$0xff]
      %v2692 = vld [vmem:[#allocation3 + $0x100] sm:$0xff]
      %v2693 = vld [vmem:[#allocation3 + $0x110] sm:$0xff]
      %v2694 = vpack.c.bf16 %v2677, %v2676
      %v2695 = vpack.c.bf16 %v2679, %v2678
      %v2696 = vpack.c.bf16 %v2681, %v2680
      %v2697 = vpack.c.bf16 %v2683, %v2682
      %v2698 = vpack.c.bf16 %v2685, %v2684
      %v2699 = vpack.c.bf16 %v2687, %v2686
      %v2700 = vpack.c.bf16 %v2689, %v2688
      %v2701 = vpack.c.bf16 %v2691, %v2690
      %v2702 = vpack.c.bf16 %v2693, %v2692
      %v2703 = vld [vmem:[%s23] sm:$0xff]
      %v2704 = vld [vmem:[%s23 + $0x8] sm:$0xff]
      %v2705 = vld [vmem:[%s23 + $0x10] sm:$0xff]
      %v2706 = vld [vmem:[%s23 + $0x18] sm:$0xff]
      %v2707 = vld [vmem:[%s25] sm:$0xff]
      %v2708 = vld [vmem:[%s25 + $0x8] sm:$0xff]
      %v2709 = vld [vmem:[%s25 + $0x10] sm:$0xff]
      %v2710 = vld [vmem:[%s25 + $0x18] sm:$0xff]
      %2712 = vset.pattern.permute.xlu0 0
      %2713 = vperm.xlu0 %2712, %v2707
      %v2714 = vpop.permute.xlu0 %2713
      %2717 = vset.pattern.permute.xlu0 0
      %2718 = vperm.xlu0 %2717, %v2708
      %v2719 = vpop.permute.xlu0 %2718
      %2722 = vset.pattern.permute.xlu0 0
      %2723 = vperm.xlu0 %2722, %v2709
      %v2724 = vpop.permute.xlu0 %2723
      %2727 = vset.pattern.permute.xlu0 0
      %2728 = vperm.xlu0 %2727, %v2710
      %v2729 = vpop.permute.xlu0 %2728
      %v2735 = vunpack.c.l.b16 %v2703
      %v2736 = vunpack.c.h.b16 %v2703
      %v2737 = vunpack.c.l.b16 %v2704
      %v2738 = vunpack.c.h.b16 %v2704
      %v2739 = vunpack.c.l.b16 %v2705
      %v2740 = vunpack.c.h.b16 %v2705
      %v2741 = vunpack.c.l.b16 %v2706
      %v2742 = vunpack.c.h.b16 %v2706
      %v2743 = vpack.c.b16 %v2737, %v2735
      %v2744 = vpack.c.b16 %v2738, %v2736
      %v2745 = vpack.c.b16 %v2741, %v2739
      %v2746 = vpack.c.b16 %v2742, %v2740
      %v2750 = vsel %vm2376, %v2744, 0
      %v2753 = vsel %vm2376, %v2746, 0
      %2755 = vmatprep.subr.bf16.mxu0 0
      %2756 = vmatpush1.bf16.msra.mxu0 %v2701
      %2757 = vmatprep.subr.bf16.mxu0 0
      %2758 = vmatpush1.bf16.msra.mxu0 %v2700
      %2759 = vmatprep.subr.bf16.mxu0 0
      %2760 = vmatpush1.bf16.msra.mxu0 %v2699
      %2761 = vmatprep.subr.bf16.mxu0 0
      %2762 = vmatpush1.bf16.msra.mxu0 %v2698
      %2763 = vmatprep.subr.bf16.mxu0 0
      %2764 = vmatpush1.bf16.msra.mxu0 %v2697
      %2765 = vmatprep.subr.bf16.mxu0 0
      %2766 = vmatpush1.bf16.msra.mxu0 %v2696
      %2767 = vmatprep.subr.bf16.mxu0 0
      %2768 = vmatpush1.bf16.msra.mxu0 %v2695
      %2769 = vmatprep.subr.bf16.mxu0 0
      %2770 = vmatpush1.bf16.msra.mxu0 %v2694
      %2771 = vmatprep.subr.bf16.mxu0 0
      %2772 = vmatpush2.bf16.msra.mxu0 0
      %2773 = vmatprep.subr.bf16.mxu0 0
      %2774 = vmatpush2.bf16.msra.mxu0 0
      %2775 = vmatprep.subr.bf16.mxu0 0
      %2776 = vmatpush2.bf16.msra.mxu0 0
      %2777 = vmatprep.subr.bf16.mxu0 0
      %2778 = vmatpush2.bf16.msra.mxu0 0
      %2779 = vmatprep.subr.bf16.mxu0 0
      %2780 = vmatpush2.bf16.msra.mxu0 0
      %2781 = vmatprep.subr.bf16.mxu0 0
      %2782 = vmatpush2.bf16.msra.mxu0 0
      %2783 = vmatprep.subr.bf16.mxu0 0
      %2784 = vmatpush2.bf16.msra.mxu0 0
      %2785 = vmatprep.subr.bf16.mxu0 0
      %2786 = vmatpush2.bf16.msra.mxu0 %v2702
      %2787 = vmatprep.mubr.bf16.mxu0 %v2750
      %2788 = vmatmul.mubr.bf16.gmra.mxu0 %v2743
      %v2789 = vpop.f32.mrf.mxu0
      %v2790 = vadd.f32 %v2714, %v2789
      %v2791 = vpop.f32.mrf.mxu0
      %v2792 = vpop.f32.mrf.mxu0
      %v2793 = vadd.f32 %v2719, %v2792
      %v2794 = vpop.f32.mrf.mxu0
      %2795 = vmatprep.mubr.bf16.mxu0 %v2753
      %2796 = vmatmul.mubr.bf16.gmra.mxu0 %v2745
      %v2797 = vpop.f32.mrf.mxu0
      %v2798 = vadd.f32 %v2724, %v2797
      %v2799 = vpop.f32.mrf.mxu0
      %v2800 = vpop.f32.mrf.mxu0
      %v2801 = vadd.f32 %v2729, %v2800
      %v2802 = vpop.f32.mrf.mxu0
      %2803 = vdwg.mxu0
      %v2804 = vmax.f32 %v2790, 0.0
      %v2805 = vmax.f32 %v2793, 0.0
      %v2806 = vmax.f32 %v2798, 0.0
      %v2807 = vmax.f32 %v2801, 0.0
      %2808 = vst.msk [vmem:[#allocation2] sm:$0xff] %vm2543, 0.0
      %2809 = vst.msk [vmem:[#allocation2 + $0x18] sm:$0xff] %vm2543, 0.0
      %2810 = vst.msk [vmem:[#allocation2 + $0x30] sm:$0xff] %vm2543, 0.0
      %2811 = vst.msk [vmem:[#allocation2 + $0x48] sm:$0xff] %vm2543, 0.0
      %2816 = vrot.lane.b32.xlu0 %v2804, 5
      %v2817 = vpop.permute.xlu0 %2816
      %2818 = vrot.lane.b32.xlu0 %v2805, 5
      %v2819 = vpop.permute.xlu0 %2818
      %2820 = vrot.lane.b32.xlu0 %v2806, 5
      %v2821 = vpop.permute.xlu0 %2820
      %2822 = vrot.lane.b32.xlu0 %v2807, 5
      %v2823 = vpop.permute.xlu0 %2822
      %2828 = vst.msk [vmem:[#allocation2] sm:$0xff] %vm2554, %v2817
      %2829 = vst.msk [vmem:[#allocation2 + $0x18] sm:$0xff] %vm2554, %v2819
      %2830 = vst.msk [vmem:[#allocation2 + $0x30] sm:$0xff] %vm2554, %v2821
      %2831 = vst.msk [vmem:[#allocation2 + $0x48] sm:$0xff] %vm2554, %v2823
      %2832 = vst.msk [vmem:[#allocation2] sm:$0xff] %vm2557, 0.0
      %2833 = vst.msk [vmem:[#allocation2 + $0x18] sm:$0xff] %vm2557, 0.0
      %2834 = vst.msk [vmem:[#allocation2 + $0x30] sm:$0xff] %vm2557, 0.0
      %2835 = vst.msk [vmem:[#allocation2 + $0x48] sm:$0xff] %vm2557, 0.0
      %v2836 = vld [vmem:[#allocation2] sm:$0xff]
      %v2837 = vld [vmem:[#allocation2 + $0x18] sm:$0xff]
      %v2838 = vld [vmem:[#allocation2 + $0x30] sm:$0xff]
      %v2839 = vld [vmem:[#allocation2 + $0x48] sm:$0xff]
      %v2840 = vsel %vm2563, %v2836, 0.0
      %v2841 = vsel %vm2563, %v2837, 0.0
      %v2842 = vsel %vm2563, %v2838, 0.0
      %v2843 = vsel %vm2563, %v2839, 0.0
      %2844 = vst.msk [vmem:[#allocation3] sm:$0xff] %vm2376, %v2840
      %2845 = vst.msk [vmem:[#allocation3 + $0x10] sm:$0xff] %vm2376, %v2841
      %2846 = vst.msk [vmem:[#allocation3 + $0x20] sm:$0xff] %vm2376, %v2842
      %2847 = vst.msk [vmem:[#allocation3 + $0x30] sm:$0xff] %vm2376, %v2843
      %v2848 = vld [vmem:[#allocation2] sm:$0xff]
      %v2849 = vld [vmem:[#allocation2 + $0x18] sm:$0xff]
      %v2850 = vld [vmem:[#allocation2 + $0x30] sm:$0xff]
      %v2851 = vld [vmem:[#allocation2 + $0x48] sm:$0xff]
      %2856 = vrot.lane.b32.xlu0 %v2848, 127
      %v2857 = vpop.permute.xlu0 %2856
      %2858 = vrot.lane.b32.xlu0 %v2849, 127
      %v2859 = vpop.permute.xlu0 %2858
      %2860 = vrot.lane.b32.xlu0 %v2850, 127
      %v2861 = vpop.permute.xlu0 %2860
      %2862 = vrot.lane.b32.xlu0 %v2851, 127
      %v2863 = vpop.permute.xlu0 %2862
      %2868 = vst.msk [vmem:[#allocation3 + $0x40] sm:$0xff] %vm2376, %v2857
      %2869 = vst.msk [vmem:[#allocation3 + $0x50] sm:$0xff] %vm2376, %v2859
      %2870 = vst.msk [vmem:[#allocation3 + $0x60] sm:$0xff] %vm2376, %v2861
      %2871 = vst.msk [vmem:[#allocation3 + $0x70] sm:$0xff] %vm2376, %v2863
      %v2872 = vld [vmem:[#allocation2] sm:$0xff]
      %v2873 = vld [vmem:[#allocation2 + $0x18] sm:$0xff]
      %v2874 = vld [vmem:[#allocation2 + $0x30] sm:$0xff]
      %v2875 = vld [vmem:[#allocation2 + $0x48] sm:$0xff]
      %2880 = vrot.lane.b32.xlu0 %v2872, 126
      %v2881 = vpop.permute.xlu0 %2880
      %2882 = vrot.lane.b32.xlu0 %v2873, 126
      %v2883 = vpop.permute.xlu0 %2882
      %2884 = vrot.lane.b32.xlu0 %v2874, 126
      %v2885 = vpop.permute.xlu0 %2884
      %2886 = vrot.lane.b32.xlu0 %v2875, 126
      %v2887 = vpop.permute.xlu0 %2886
      %v2892 = vsel %vm2583, %v2881, 0.0
      %v2893 = vsel %vm2583, %v2883, 0.0
      %v2894 = vsel %vm2583, %v2885, 0.0
      %v2895 = vsel %vm2583, %v2887, 0.0
      %2896 = vst.msk [vmem:[#allocation3 + $0x80] sm:$0xff] %vm2376, %v2892
      %2897 = vst.msk [vmem:[#allocation3 + $0x90] sm:$0xff] %vm2376, %v2893
      %2898 = vst.msk [vmem:[#allocation3 + $0xa0] sm:$0xff] %vm2376, %v2894
      %2899 = vst.msk [vmem:[#allocation3 + $0xb0] sm:$0xff] %vm2376, %v2895
      %v2900 = vld [vmem:[#allocation2] sm:$0xff]
      %v2901 = vld [vmem:[#allocation2 + $0x18] sm:$0xff]
      %v2902 = vld [vmem:[#allocation2 + $0x30] sm:$0xff]
      %v2903 = vld [vmem:[#allocation2 + $0x48] sm:$0xff]
      %2908 = vrot.lane.b32.xlu0 %v2900, 124
      %v2909 = vpop.permute.xlu0 %2908
      %2910 = vrot.lane.b32.xlu0 %v2901, 124
      %v2911 = vpop.permute.xlu0 %2910
      %2912 = vrot.lane.b32.xlu0 %v2902, 124
      %v2913 = vpop.permute.xlu0 %2912
      %2914 = vrot.lane.b32.xlu0 %v2903, 124
      %v2915 = vpop.permute.xlu0 %2914
      %v2920 = vsel %vm2563, %v2909, 0.0
      %v2921 = vsel %vm2563, %v2911, 0.0
      %v2922 = vsel %vm2563, %v2913, 0.0
      %v2923 = vsel %vm2563, %v2915, 0.0
      %2924 = vst.msk [vmem:[#allocation3 + $0xc0] sm:$0xff] %vm2376, %v2920
      %2925 = vst.msk [vmem:[#allocation3 + $0xd0] sm:$0xff] %vm2376, %v2921
      %2926 = vst.msk [vmem:[#allocation3 + $0xe0] sm:$0xff] %vm2376, %v2922
      %2927 = vst.msk [vmem:[#allocation3 + $0xf0] sm:$0xff] %vm2376, %v2923
      %v2928 = vld [vmem:[#allocation2] sm:$0xff]
      %v2929 = vld [vmem:[#allocation2 + $0x18] sm:$0xff]
      %v2930 = vld [vmem:[#allocation2 + $0x30] sm:$0xff]
      %v2931 = vld [vmem:[#allocation2 + $0x48] sm:$0xff]
      %2936 = vrot.lane.b32.xlu0 %v2928, 123
      %v2937 = vpop.permute.xlu0 %2936
      %2938 = vrot.lane.b32.xlu0 %v2929, 123
      %v2939 = vpop.permute.xlu0 %2938
      %2940 = vrot.lane.b32.xlu0 %v2930, 123
      %v2941 = vpop.permute.xlu0 %2940
      %2942 = vrot.lane.b32.xlu0 %v2931, 123
      %v2943 = vpop.permute.xlu0 %2942
      %2948 = vst.msk [vmem:[#allocation3 + $0x100] sm:$0xff] %vm2376, %v2937
      %2949 = vst.msk [vmem:[#allocation3 + $0x110] sm:$0xff] %vm2376, %v2939
      %2950 = vst.msk [vmem:[#allocation3 + $0x120] sm:$0xff] %vm2376, %v2941
      %2951 = vst.msk [vmem:[#allocation3 + $0x130] sm:$0xff] %vm2376, %v2943
      %v2952 = vld [vmem:[#allocation2] sm:$0xff]
      %v2953 = vld [vmem:[#allocation2 + $0x18] sm:$0xff]
      %v2954 = vld [vmem:[#allocation2 + $0x30] sm:$0xff]
      %v2955 = vld [vmem:[#allocation2 + $0x48] sm:$0xff]
      %2960 = vrot.lane.b32.xlu0 %v2952, 122
      %v2961 = vpop.permute.xlu0 %2960
      %2962 = vrot.lane.b32.xlu0 %v2953, 122
      %v2963 = vpop.permute.xlu0 %2962
      %2964 = vrot.lane.b32.xlu0 %v2954, 122
      %v2965 = vpop.permute.xlu0 %2964
      %2966 = vrot.lane.b32.xlu0 %v2955, 122
      %v2967 = vpop.permute.xlu0 %2966
      %v2972 = vsel %vm2583, %v2961, 0.0
      %v2973 = vsel %vm2583, %v2963, 0.0
      %v2974 = vsel %vm2583, %v2965, 0.0
      %v2975 = vsel %vm2583, %v2967, 0.0
      %2976 = vst.msk [vmem:[#allocation3 + $0x140] sm:$0xff] %vm2376, %v2972
      %2977 = vst.msk [vmem:[#allocation3 + $0x150] sm:$0xff] %vm2376, %v2973
      %2978 = vst.msk [vmem:[#allocation3 + $0x160] sm:$0xff] %vm2376, %v2974
      %2979 = vst.msk [vmem:[#allocation3 + $0x170] sm:$0xff] %vm2376, %v2975
      %v2980 = vld [vmem:[#allocation2] sm:$0xff]
      %v2981 = vld [vmem:[#allocation2 + $0x18] sm:$0xff]
      %v2982 = vld [vmem:[#allocation2 + $0x30] sm:$0xff]
      %v2983 = vld [vmem:[#allocation2 + $0x48] sm:$0xff]
      %2988 = vrot.lane.b32.xlu0 %v2980, 120
      %v2989 = vpop.permute.xlu0 %2988
      %2990 = vrot.lane.b32.xlu0 %v2981, 120
      %v2991 = vpop.permute.xlu0 %2990
      %2992 = vrot.lane.b32.xlu0 %v2982, 120
      %v2993 = vpop.permute.xlu0 %2992
      %2994 = vrot.lane.b32.xlu0 %v2983, 120
      %v2995 = vpop.permute.xlu0 %2994
      %v3000 = vsel %vm2563, %v2989, 0.0
      %v3001 = vsel %vm2563, %v2991, 0.0
      %v3002 = vsel %vm2563, %v2993, 0.0
      %v3003 = vsel %vm2563, %v2995, 0.0
      %3004 = vst.msk [vmem:[#allocation3 + $0x180] sm:$0xff] %vm2376, %v3000
      %3005 = vst.msk [vmem:[#allocation3 + $0x190] sm:$0xff] %vm2376, %v3001
      %3006 = vst.msk [vmem:[#allocation3 + $0x1a0] sm:$0xff] %vm2376, %v3002
      %3007 = vst.msk [vmem:[#allocation3 + $0x1b0] sm:$0xff] %vm2376, %v3003
      %v3008 = vld [vmem:[#allocation2] sm:$0xff]
      %v3009 = vld [vmem:[#allocation2 + $0x18] sm:$0xff]
      %v3010 = vld [vmem:[#allocation2 + $0x30] sm:$0xff]
      %v3011 = vld [vmem:[#allocation2 + $0x48] sm:$0xff]
      %3016 = vrot.lane.b32.xlu0 %v3008, 119
      %v3017 = vpop.permute.xlu0 %3016
      %3018 = vrot.lane.b32.xlu0 %v3009, 119
      %v3019 = vpop.permute.xlu0 %3018
      %3020 = vrot.lane.b32.xlu0 %v3010, 119
      %v3021 = vpop.permute.xlu0 %3020
      %3022 = vrot.lane.b32.xlu0 %v3011, 119
      %v3023 = vpop.permute.xlu0 %3022
      %3028 = vst.msk [vmem:[#allocation3 + $0x1c0] sm:$0xff] %vm2376, %v3017
      %3029 = vst.msk [vmem:[#allocation3 + $0x1d0] sm:$0xff] %vm2376, %v3019
      %3030 = vst.msk [vmem:[#allocation3 + $0x1e0] sm:$0xff] %vm2376, %v3021
      %3031 = vst.msk [vmem:[#allocation3 + $0x1f0] sm:$0xff] %vm2376, %v3023
      %v3032 = vld [vmem:[#allocation2] sm:$0xff]
      %v3033 = vld [vmem:[#allocation2 + $0x18] sm:$0xff]
      %v3034 = vld [vmem:[#allocation2 + $0x30] sm:$0xff]
      %v3035 = vld [vmem:[#allocation2 + $0x48] sm:$0xff]
      %3040 = vrot.lane.b32.xlu0 %v3032, 118
      %v3041 = vpop.permute.xlu0 %3040
      %3042 = vrot.lane.b32.xlu0 %v3033, 118
      %v3043 = vpop.permute.xlu0 %3042
      %3044 = vrot.lane.b32.xlu0 %v3034, 118
      %v3045 = vpop.permute.xlu0 %3044
      %3046 = vrot.lane.b32.xlu0 %v3035, 118
      %v3047 = vpop.permute.xlu0 %3046
      %v3052 = vsel %vm2583, %v3041, 0.0
      %v3053 = vsel %vm2583, %v3043, 0.0
      %v3054 = vsel %vm2583, %v3045, 0.0
      %v3055 = vsel %vm2583, %v3047, 0.0
      %3056 = vst.msk [vmem:[#allocation3 + $0x200] sm:$0xff] %vm2376, %v3052
      %3057 = vst.msk [vmem:[#allocation3 + $0x210] sm:$0xff] %vm2376, %v3053
      %3058 = vst.msk [vmem:[#allocation3 + $0x220] sm:$0xff] %vm2376, %v3054
      %3059 = vst.msk [vmem:[#allocation3 + $0x230] sm:$0xff] %vm2376, %v3055
      %v3060 = vld [vmem:[#allocation3] sm:$0xff]
      %v3061 = vld [vmem:[#allocation3 + $0x10] sm:$0xff]
      %v3062 = vld [vmem:[#allocation3 + $0x20] sm:$0xff]
      %v3063 = vld [vmem:[#allocation3 + $0x30] sm:$0xff]
      %v3064 = vld [vmem:[#allocation3 + $0x40] sm:$0xff]
      %v3065 = vld [vmem:[#allocation3 + $0x50] sm:$0xff]
      %v3066 = vld [vmem:[#allocation3 + $0x60] sm:$0xff]
      %v3067 = vld [vmem:[#allocation3 + $0x70] sm:$0xff]
      %v3068 = vld [vmem:[#allocation3 + $0x80] sm:$0xff]
      %v3069 = vld [vmem:[#allocation3 + $0x90] sm:$0xff]
      %v3070 = vld [vmem:[#allocation3 + $0xa0] sm:$0xff]
      %v3071 = vld [vmem:[#allocation3 + $0xb0] sm:$0xff]
      %v3072 = vld [vmem:[#allocation3 + $0xc0] sm:$0xff]
      %v3073 = vld [vmem:[#allocation3 + $0xd0] sm:$0xff]
      %v3074 = vld [vmem:[#allocation3 + $0xe0] sm:$0xff]
      %v3075 = vld [vmem:[#allocation3 + $0xf0] sm:$0xff]
      %v3076 = vld [vmem:[#allocation3 + $0x100] sm:$0xff]
      %v3077 = vld [vmem:[#allocation3 + $0x110] sm:$0xff]
      %v3078 = vld [vmem:[#allocation3 + $0x120] sm:$0xff]
      %v3079 = vld [vmem:[#allocation3 + $0x130] sm:$0xff]
      %v3080 = vld [vmem:[#allocation3 + $0x140] sm:$0xff]
      %v3081 = vld [vmem:[#allocation3 + $0x150] sm:$0xff]
      %v3082 = vld [vmem:[#allocation3 + $0x160] sm:$0xff]
      %v3083 = vld [vmem:[#allocation3 + $0x170] sm:$0xff]
      %v3084 = vld [vmem:[#allocation3 + $0x180] sm:$0xff]
      %v3085 = vld [vmem:[#allocation3 + $0x190] sm:$0xff]
      %v3086 = vld [vmem:[#allocation3 + $0x1a0] sm:$0xff]
      %v3087 = vld [vmem:[#allocation3 + $0x1b0] sm:$0xff]
      %v3088 = vld [vmem:[#allocation3 + $0x1c0] sm:$0xff]
      %v3089 = vld [vmem:[#allocation3 + $0x1d0] sm:$0xff]
      %v3090 = vld [vmem:[#allocation3 + $0x1e0] sm:$0xff]
      %v3091 = vld [vmem:[#allocation3 + $0x1f0] sm:$0xff]
      %v3092 = vld [vmem:[#allocation3 + $0x200] sm:$0xff]
      %v3093 = vld [vmem:[#allocation3 + $0x210] sm:$0xff]
      %v3094 = vld [vmem:[#allocation3 + $0x220] sm:$0xff]
      %v3095 = vld [vmem:[#allocation3 + $0x230] sm:$0xff]
      %v3096 = vpack.c.bf16 %v3061, %v3060
      %v3097 = vpack.c.bf16 %v3063, %v3062
      %v3098 = vpack.c.bf16 %v3065, %v3064
      %v3099 = vpack.c.bf16 %v3067, %v3066
      %v3100 = vpack.c.bf16 %v3069, %v3068
      %v3101 = vpack.c.bf16 %v3071, %v3070
      %v3102 = vpack.c.bf16 %v3073, %v3072
      %v3103 = vpack.c.bf16 %v3075, %v3074
      %v3104 = vpack.c.bf16 %v3077, %v3076
      %v3105 = vpack.c.bf16 %v3079, %v3078
      %v3106 = vpack.c.bf16 %v3081, %v3080
      %v3107 = vpack.c.bf16 %v3083, %v3082
      %v3108 = vpack.c.bf16 %v3085, %v3084
      %v3109 = vpack.c.bf16 %v3087, %v3086
      %v3110 = vpack.c.bf16 %v3089, %v3088
      %v3111 = vpack.c.bf16 %v3091, %v3090
      %v3112 = vpack.c.bf16 %v3093, %v3092
      %v3113 = vpack.c.bf16 %v3095, %v3094
      %v3114 = vld [vmem:[%s27] sm:$0xff]
      %v3115 = vld [vmem:[%s27 + $0x8] sm:$0xf]
      %v3116 = vld [vmem:[%s27 + $0xc] sm:$0xff]
      %v3117 = vld [vmem:[%s27 + $0x14] sm:$0xf]
      %v3118 = vld [vmem:[%s27 + $0x18] sm:$0xff]
      %v3119 = vld [vmem:[%s27 + $0x20] sm:$0xf]
      %v3120 = vld [vmem:[%s27 + $0x24] sm:$0xff]
      %v3121 = vld [vmem:[%s27 + $0x2c] sm:$0xf]
      %v3122 = vld [vmem:[%s29] sm:$0xff]
      %v3123 = vld [vmem:[%s29 + $0x8] sm:$0xff]
      %v3124 = vld [vmem:[%s29 + $0x10] sm:$0xff]
      %v3125 = vld [vmem:[%s29 + $0x18] sm:$0xff]
      %3127 = vset.pattern.permute.xlu0 0
      %3128 = vperm.xlu0 %3127, %v3122
      %v3129 = vpop.permute.xlu0 %3128
      %3132 = vset.pattern.permute.xlu0 0
      %3133 = vperm.xlu0 %3132, %v3123
      %v3134 = vpop.permute.xlu0 %3133
      %3137 = vset.pattern.permute.xlu0 0
      %3138 = vperm.xlu0 %3137, %v3124
      %v3139 = vpop.permute.xlu0 %3138
      %3142 = vset.pattern.permute.xlu0 0
      %3143 = vperm.xlu0 %3142, %v3125
      %v3144 = vpop.permute.xlu0 %3143
      %v3154 = vunpack.c.l.b16 %v3114
      %v3155 = vunpack.c.h.b16 %v3114
      %v3156 = vunpack.c.l.b16 %v3115
      %v3157 = vunpack.c.l.b16 %v3116
      %v3158 = vunpack.c.h.b16 %v3116
      %v3159 = vunpack.c.l.b16 %v3117
      %v3160 = vunpack.c.l.b16 %v3118
      %v3161 = vunpack.c.h.b16 %v3118
      %v3162 = vunpack.c.l.b16 %v3119
      %v3163 = vunpack.c.l.b16 %v3120
      %v3164 = vunpack.c.h.b16 %v3120
      %v3165 = vunpack.c.l.b16 %v3121
      %v3166 = vpack.c.b16 %v3157, %v3154
      %v3167 = vpack.c.b16 %v3158, %v3155
      %v3168 = vpack.c.b16 %v3159, %v3156
      %v3169 = vpack.c.b16 %v3163, %v3160
      %v3170 = vpack.c.b16 %v3164, %v3161
      %v3171 = vpack.c.b16 %v3165, %v3162
      %vm3176 = vcmask 261120
      %v3178 = vsel %vm3176, %v3168, 0
      %v3181 = vsel %vm3176, %v3171, 0
      %3183 = vmatprep.subr.bf16.mxu0 0
      %3184 = vmatpush1.bf16.msra.mxu0 %v3103
      %3185 = vmatprep.subr.bf16.mxu0 0
      %3186 = vmatpush1.bf16.msra.mxu0 %v3102
      %3187 = vmatprep.subr.bf16.mxu0 0
      %3188 = vmatpush1.bf16.msra.mxu0 %v3101
      %3189 = vmatprep.subr.bf16.mxu0 0
      %3190 = vmatpush1.bf16.msra.mxu0 %v3100
      %3191 = vmatprep.subr.bf16.mxu0 0
      %3192 = vmatpush1.bf16.msra.mxu0 %v3099
      %3193 = vmatprep.subr.bf16.mxu0 0
      %3194 = vmatpush1.bf16.msra.mxu0 %v3098
      %3195 = vmatprep.subr.bf16.mxu0 0
      %3196 = vmatpush1.bf16.msra.mxu0 %v3097
      %3197 = vmatprep.subr.bf16.mxu0 0
      %3198 = vmatpush1.bf16.msra.mxu0 %v3096
      %3199 = vmatprep.subr.bf16.mxu0 0
      %3200 = vmatpush2.bf16.msra.mxu0 %v3111
      %3201 = vmatprep.subr.bf16.mxu0 0
      %3202 = vmatpush2.bf16.msra.mxu0 %v3110
      %3203 = vmatprep.subr.bf16.mxu0 0
      %3204 = vmatpush2.bf16.msra.mxu0 %v3109
      %3205 = vmatprep.subr.bf16.mxu0 0
      %3206 = vmatpush2.bf16.msra.mxu0 %v3108
      %3207 = vmatprep.subr.bf16.mxu0 0
      %3208 = vmatpush2.bf16.msra.mxu0 %v3107
      %3209 = vmatprep.subr.bf16.mxu0 0
      %3210 = vmatpush2.bf16.msra.mxu0 %v3106
      %3211 = vmatprep.subr.bf16.mxu0 0
      %3212 = vmatpush2.bf16.msra.mxu0 %v3105
      %3213 = vmatprep.subr.bf16.mxu0 0
      %3214 = vmatpush2.bf16.msra.mxu0 %v3104
      %3215 = vmatprep.mubr.bf16.mxu0 %v3167
      %3216 = vmatmul.mubr.bf16.gmra.mxu0 %v3166
      %v3217 = vpop.f32.mrf.mxu0
      %v3218 = vadd.f32 %v3129, %v3217
      %v3219 = vpop.f32.mrf.mxu0
      %v3220 = vpop.f32.mrf.mxu0
      %v3221 = vadd.f32 %v3134, %v3220
      %v3222 = vpop.f32.mrf.mxu0
      %3223 = vmatprep.mubr.bf16.mxu0 %v3170
      %3224 = vmatmul.mubr.bf16.gmra.mxu0 %v3169
      %v3225 = vpop.f32.mrf.mxu0
      %v3226 = vadd.f32 %v3139, %v3225
      %v3227 = vpop.f32.mrf.mxu0
      %v3228 = vpop.f32.mrf.mxu0
      %v3229 = vadd.f32 %v3144, %v3228
      %v3230 = vpop.f32.mrf.mxu0
      %3231 = vdwg.mxu0
      %3232 = vmatprep.subr.bf16.mxu0 0
      %3233 = vmatpush1.bf16.msra.mxu0 0
      %3234 = vmatprep.subr.bf16.mxu0 0
      %3235 = vmatpush1.bf16.msra.mxu0 0
      %3236 = vmatprep.subr.bf16.mxu0 0
      %3237 = vmatpush1.bf16.msra.mxu0 0
      %3238 = vmatprep.subr.bf16.mxu0 0
      %3239 = vmatpush1.bf16.msra.mxu0 0
      %3240 = vmatprep.subr.bf16.mxu0 0
      %3241 = vmatpush1.bf16.msra.mxu0 0
      %3242 = vmatprep.subr.bf16.mxu0 0
      %3243 = vmatpush1.bf16.msra.mxu0 0
      %3244 = vmatprep.subr.bf16.mxu0 0
      %3245 = vmatpush1.bf16.msra.mxu0 %v3113
      %3246 = vmatprep.subr.bf16.mxu0 0
      %3247 = vmatpush1.bf16.msra.mxu0 %v3112
      %3248 = vmatprep.subr.bf16.mxu0 0
      %3249 = vmatpush2.bf16.msra.mxu0 0
      %3250 = vmatprep.subr.bf16.mxu0 0
      %3251 = vmatpush2.bf16.msra.mxu0 0
      %3252 = vmatprep.subr.bf16.mxu0 0
      %3253 = vmatpush2.bf16.msra.mxu0 0
      %3254 = vmatprep.subr.bf16.mxu0 0
      %3255 = vmatpush2.bf16.msra.mxu0 0
      %3256 = vmatprep.subr.bf16.mxu0 0
      %3257 = vmatpush2.bf16.msra.mxu0 0
      %3258 = vmatprep.subr.bf16.mxu0 0
      %3259 = vmatpush2.bf16.msra.mxu0 0
      %3260 = vmatprep.subr.bf16.mxu0 0
      %3261 = vmatpush2.bf16.msra.mxu0 0
      %3262 = vmatprep.subr.bf16.mxu0 0
      %3263 = vmatpush2.bf16.msra.mxu0 0
      %3264 = vmatprep.mubr.bf16.mxu0 0
      %3265 = vmatmul.mubr.bf16.gmra.mxu0 %v3178
      %v3266 = vpop.f32.mrf.mxu0
      %v3267 = vadd.f32 %v3218, %v3266
      %v3268 = vpop.f32.mrf.mxu0
      %v3269 = vpop.f32.mrf.mxu0
      %v3270 = vadd.f32 %v3221, %v3269
      %v3271 = vpop.f32.mrf.mxu0
      %3272 = vmatprep.mubr.bf16.mxu0 0
      %3273 = vmatmul.mubr.bf16.gmra.mxu0 %v3181
      %v3274 = vpop.f32.mrf.mxu0
      %v3275 = vadd.f32 %v3226, %v3274
      %v3276 = vpop.f32.mrf.mxu0
      %v3277 = vpop.f32.mrf.mxu0
      %v3278 = vadd.f32 %v3229, %v3277
      %v3279 = vpop.f32.mrf.mxu0
      %3280 = vdwg.mxu0
      %v3281 = vmax.f32 %v3267, 0.0
      %v3282 = vmax.f32 %v3270, 0.0
      %v3283 = vmax.f32 %v3275, 0.0
      %v3284 = vmax.f32 %v3278, 0.0
      %v3285 = vpack.c.bf16 %v3282, %v3281
      %v3286 = vpack.c.bf16 %v3284, %v3283
      %v3287 = vld [vmem:[%s31] sm:$0xf]
      %v3288 = vld [vmem:[%s31 + $0x4] sm:$0xf]
      %v3291 = vunpack.c.l.b16 %v3287
      %v3292 = vunpack.c.l.b16 %v3288
      %v3293 = vpack.c.b16 %v3292, %v3291
      %v3296 = vsel %vm2376, %v3285, 0
      %v3299 = vsel %vm2376, %v3286, 0
      %3301 = vmatprep.subr.bf16.mxu0 0
      %3302 = vmatpush1.bf16.msra.mxu0 0
      %3303 = vmatprep.subr.bf16.mxu0 0
      %3304 = vmatpush1.bf16.msra.mxu0 0
      %3305 = vmatprep.subr.bf16.mxu0 0
      %3306 = vmatpush1.bf16.msra.mxu0 0
      %3307 = vmatprep.subr.bf16.mxu0 0
      %3308 = vmatpush1.bf16.msra.mxu0 0
      %3309 = vmatprep.subr.bf16.mxu0 0
      %3310 = vmatpush1.bf16.msra.mxu0 0
      %3311 = vmatprep.subr.bf16.mxu0 0
      %3312 = vmatpush1.bf16.msra.mxu0 0
      %3313 = vmatprep.subr.bf16.mxu0 0
      %3314 = vmatpush1.bf16.msra.mxu0 0
      %3315 = vmatprep.subr.bf16.mxu0 0
      %3316 = vmatpush1.bf16.msra.mxu0 %v3293
      %3317 = vmatprep.subr.bf16.mxu0 0
      %3318 = vmatpush2.bf16.msra.mxu0 0
      %3319 = vmatprep.subr.bf16.mxu0 0
      %3320 = vmatpush2.bf16.msra.mxu0 0
      %3321 = vmatprep.subr.bf16.mxu0 0
      %3322 = vmatpush2.bf16.msra.mxu0 0
      %3323 = vmatprep.subr.bf16.mxu0 0
      %3324 = vmatpush2.bf16.msra.mxu0 0
      %3325 = vmatprep.subr.bf16.mxu0 0
      %3326 = vmatpush2.bf16.msra.mxu0 0
      %3327 = vmatprep.subr.bf16.mxu0 0
      %3328 = vmatpush2.bf16.msra.mxu0 0
      %3329 = vmatprep.subr.bf16.mxu0 0
      %3330 = vmatpush2.bf16.msra.mxu0 0
      %3331 = vmatprep.subr.bf16.mxu0 0
      %3332 = vmatpush2.bf16.msra.mxu0 0
      %3333 = vmatprep.mubr.bf16.mxu0 0
      %3334 = vmatmul.mubr.bf16.gmra.mxu0 %v3296
      %v3335 = vpop.f32.mrf.mxu0
      %v3336 = vadd.f32 0.0, %v3335
      %v3337 = vpop.f32.mrf.mxu0
      %v3338 = vpop.f32.mrf.mxu0
      %v3339 = vadd.f32 0.0, %v3338
      %v3340 = vpop.f32.mrf.mxu0
      %3341 = vmatprep.mubr.bf16.mxu0 0
      %3342 = vmatmul.mubr.bf16.gmra.mxu0 %v3299
      %v3343 = vpop.f32.mrf.mxu0
      %v3344 = vadd.f32 0.0, %v3343
      %v3345 = vpop.f32.mrf.mxu0
      %v3346 = vpop.f32.mrf.mxu0
      %v3347 = vadd.f32 0.0, %v3346
      %v3348 = vpop.f32.mrf.mxu0
      %3349 = vdwg.mxu0
      %v3350 = vld [vmem:[%s33] sm:$0xf]
      %v3351 = vpack.c.bf16 %v3339, %v3336
      %v3352 = vpack.c.bf16 %v3347, %v3344
      %v3353 = vld [vmem:[%s35] sm:$0xff]
      %3355 = vset.pattern.permute.xlu0 0
      %3356 = vperm.xlu0 %3355, %v3353
      %v3357 = vpop.permute.xlu0 %3356
      %v3360 = vsel %vm3176, %v3350, 0
      %3362 = vmatprep.subr.bf16.mxu0 0
      %3363 = vmatpush1.bf16.msra.mxu0 0
      %3364 = vmatprep.subr.bf16.mxu0 0
      %3365 = vmatpush1.bf16.msra.mxu0 0
      %3366 = vmatprep.subr.bf16.mxu0 0
      %3367 = vmatpush1.bf16.msra.mxu0 0
      %3368 = vmatprep.subr.bf16.mxu0 0
      %3369 = vmatpush1.bf16.msra.mxu0 0
      %3370 = vmatprep.subr.bf16.mxu0 0
      %3371 = vmatpush1.bf16.msra.mxu0 0
      %3372 = vmatprep.subr.bf16.mxu0 0
      %3373 = vmatpush1.bf16.msra.mxu0 0
      %3374 = vmatprep.subr.bf16.mxu0 0
      %3375 = vmatpush1.bf16.msra.mxu0 %v3352
      %3376 = vmatprep.subr.bf16.mxu0 0
      %3377 = vmatpush1.bf16.msra.mxu0 %v3351
      %3378 = vmatprep.subr.bf16.mxu0 0
      %3379 = vmatpush2.bf16.msra.mxu0 0
      %3380 = vmatprep.subr.bf16.mxu0 0
      %3381 = vmatpush2.bf16.msra.mxu0 0
      %3382 = vmatprep.subr.bf16.mxu0 0
      %3383 = vmatpush2.bf16.msra.mxu0 0
      %3384 = vmatprep.subr.bf16.mxu0 0
      %3385 = vmatpush2.bf16.msra.mxu0 0
      %3386 = vmatprep.subr.bf16.mxu0 0
      %3387 = vmatpush2.bf16.msra.mxu0 0
      %3388 = vmatprep.subr.bf16.mxu0 0
      %3389 = vmatpush2.bf16.msra.mxu0 0
      %3390 = vmatprep.subr.bf16.mxu0 0
      %3391 = vmatpush2.bf16.msra.mxu0 0
      %3392 = vmatprep.subr.bf16.mxu0 0
      %3393 = vmatpush2.bf16.msra.mxu0 0
      %3394 = vmatprep.mubr.bf16.mxu0 0
      %3395 = vmatmul.mubr.bf16.gmra.mxu0 %v3360
      %v3396 = vpop.f32.mrf.mxu0
      %v3397 = vadd.f32 %v3357, %v3396
      %v3398 = vpop.f32.mrf.mxu0
      %v3399 = vpop.f32.mrf.mxu0
      %v3400 = vpop.f32.mrf.mxu0
      %3401 = vdwg.mxu0
      %v3402 = vld [vmem:[%s37] sm:$0xf]
      %v3403 = vpack.c.bf16 %v2422, %v2421
      %v3404 = vld [vmem:[%s39] sm:$0xff]
      %3406 = vset.pattern.permute.xlu0 0
      %3407 = vperm.xlu0 %3406, %v3404
      %v3408 = vpop.permute.xlu0 %3407
      %v3411 = vsel %vm2376, %v3402, 0
      %3413 = vmatprep.subr.bf16.mxu0 0
      %3414 = vmatpush1.bf16.msra.mxu0 0
      %3415 = vmatprep.subr.bf16.mxu0 0
      %3416 = vmatpush1.bf16.msra.mxu0 0
      %3417 = vmatprep.subr.bf16.mxu0 0
      %3418 = vmatpush1.bf16.msra.mxu0 0
      %3419 = vmatprep.subr.bf16.mxu0 0
      %3420 = vmatpush1.bf16.msra.mxu0 0
      %3421 = vmatprep.subr.bf16.mxu0 0
      %3422 = vmatpush1.bf16.msra.mxu0 0
      %3423 = vmatprep.subr.bf16.mxu0 0
      %3424 = vmatpush1.bf16.msra.mxu0 0
      %3425 = vmatprep.subr.bf16.mxu0 0
      %3426 = vmatpush1.bf16.msra.mxu0 0
      %3427 = vmatprep.subr.bf16.mxu0 0
      %3428 = vmatpush1.bf16.msra.mxu0 %v3403
      %3429 = vmatprep.subr.bf16.mxu0 0
      %3430 = vmatpush2.bf16.msra.mxu0 0
      %3431 = vmatprep.subr.bf16.mxu0 0
      %3432 = vmatpush2.bf16.msra.mxu0 0
      %3433 = vmatprep.subr.bf16.mxu0 0
      %3434 = vmatpush2.bf16.msra.mxu0 0
      %3435 = vmatprep.subr.bf16.mxu0 0
      %3436 = vmatpush2.bf16.msra.mxu0 0
      %3437 = vmatprep.subr.bf16.mxu0 0
      %3438 = vmatpush2.bf16.msra.mxu0 0
      %3439 = vmatprep.subr.bf16.mxu0 0
      %3440 = vmatpush2.bf16.msra.mxu0 0
      %3441 = vmatprep.subr.bf16.mxu0 0
      %3442 = vmatpush2.bf16.msra.mxu0 0
      %3443 = vmatprep.subr.bf16.mxu0 0
      %3444 = vmatpush2.bf16.msra.mxu0 0
      %3445 = vmatprep.mubr.bf16.mxu0 0
      %3446 = vmatmul.mubr.bf16.gmra.mxu0 %v3411
      %v3447 = vpop.f32.mrf.mxu0
      %v3448 = vadd.f32 %v3408, %v3447
      %v3449 = vpop.f32.mrf.mxu0
      %v3450 = vpop.f32.mrf.mxu0
      %v3451 = vpop.f32.mrf.mxu0
      %3452 = vdwg.mxu0
      %v3453 = vadd.f32 %v3397, %v3448
      %v3454 = vmax.f32 %v3453, 0.0
      %v3455 = vld [vmem:[%s41] sm:$0xff]
      %3457 = vset.pattern.permute.xlu0 0
      %3458 = vperm.xlu0 %3457, %v3455
      %v3459 = vpop.permute.xlu0 %3458
      %v3461 = vmul.f32 %v3454, %v3459
      %v3462 = vsel %vm2061, %v3461, 0.0
      %v3463 = vrot.slane %v3462, 4
      %v3464 = vadd.f32 %v3462, %v3463
      %v3465 = vrot.slane %v3464, 2
      %v3466 = vadd.f32 %v3464, %v3465
      %v3467 = vrot.slane %v3466, 1
      %v3468 = vadd.f32 %v3466, %v3467
      %v3469 = vld [vmem:[#allocation4] sm:$0x1]
      %3471 = vset.pattern.permute.xlu0 0
      %3472 = vperm.xlu0 %3471, %v3469
      %v3473 = vpop.permute.xlu0 %3472
      %v3475 = vlaneseq
      %v3476 = vshrl.u32 %v3475, 7
      %v3477 = vsub.s32 0, %v3476
      %v3478 = vrot.slane %v3473, %v3477
      %v3479 = vadd.f32 %v3468, %v3478
      %v3480 = vsub.f32 0.0, %v3479
      %v3481 = vmul.f32 %v3480, 1.442695
      %v3482 = vpow.pop %v3481
      %v3483 = vadd.f32 %v3482, 1.0
      %v3484 = vrcp.pop %v3483
      %v3485 = vmul.f32 1.0, %v3484
      %v3486 = vmul.f32 %v2421, %v3485
      %v3487 = vmul.f32 %v2422, %v3485
      %3488 = vst.msk [vmem:[#allocation2] sm:$0xff] %vm2047, 0.0
      %3489 = vst.msk [vmem:[#allocation2 + $0x18] sm:$0xff] %vm2047, 0.0
      %3490 = vst.msk [vmem:[#allocation2 + $0x30] sm:$0xff] %vm2047, 0.0
      %3491 = vst.msk [vmem:[#allocation2 + $0x48] sm:$0xff] %vm2047, 0.0
      %3496 = vrot.lane.b32.xlu0 %v3336, 9
      %v3497 = vpop.permute.xlu0 %3496
      %3498 = vrot.lane.b32.xlu0 %v3339, 9
      %v3499 = vpop.permute.xlu0 %3498
      %3500 = vrot.lane.b32.xlu0 %v3344, 9
      %v3501 = vpop.permute.xlu0 %3500
      %3502 = vrot.lane.b32.xlu0 %v3347, 9
      %v3503 = vpop.permute.xlu0 %3502
      %3508 = vst.msk [vmem:[#allocation2] sm:$0xff] %vm2053, %v3497
      %3509 = vst.msk [vmem:[#allocation2 + $0x18] sm:$0xff] %vm2053, %v3499
      %3510 = vst.msk [vmem:[#allocation2 + $0x30] sm:$0xff] %vm2053, %v3501
      %3511 = vst.msk [vmem:[#allocation2 + $0x48] sm:$0xff] %vm2053, %v3503
      %3512 = vst.msk [vmem:[#allocation2] sm:$0xff] %vm2055, 0.0
      %3513 = vst.msk [vmem:[#allocation2 + $0x18] sm:$0xff] %vm2055, 0.0
      %3514 = vst.msk [vmem:[#allocation2 + $0x30] sm:$0xff] %vm2055, 0.0
      %3515 = vst.msk [vmem:[#allocation2 + $0x48] sm:$0xff] %vm2055, 0.0
      %v3516 = vld [vmem:[#allocation2] sm:$0xff]
      %v3517 = vld [vmem:[#allocation2 + $0x18] sm:$0xff]
      %v3518 = vld [vmem:[#allocation2 + $0x30] sm:$0xff]
      %v3519 = vld [vmem:[#allocation2 + $0x48] sm:$0xff]
      %v3520 = vsel %vm2059, %v3516, 0.0
      %v3521 = vsel %vm2059, %v3517, 0.0
      %v3522 = vsel %vm2059, %v3518, 0.0
      %v3523 = vsel %vm2059, %v3519, 0.0
      %3524 = vst.msk [vmem:[#allocation3] sm:$0xff] %vm2061, %v3520
      %3525 = vst.msk [vmem:[#allocation3 + $0x10] sm:$0xff] %vm2061, %v3521
      %3526 = vst.msk [vmem:[#allocation3 + $0x20] sm:$0xff] %vm2061, %v3522
      %3527 = vst.msk [vmem:[#allocation3 + $0x30] sm:$0xff] %vm2061, %v3523
      %v3528 = vld [vmem:[#allocation2] sm:$0xff]
      %v3529 = vld [vmem:[#allocation2 + $0x18] sm:$0xff]
      %v3530 = vld [vmem:[#allocation2 + $0x30] sm:$0xff]
      %v3531 = vld [vmem:[#allocation2 + $0x48] sm:$0xff]
      %3536 = vrot.lane.b32.xlu0 %v3528, 127
      %v3537 = vpop.permute.xlu0 %3536
      %3538 = vrot.lane.b32.xlu0 %v3529, 127
      %v3539 = vpop.permute.xlu0 %3538
      %3540 = vrot.lane.b32.xlu0 %v3530, 127
      %v3541 = vpop.permute.xlu0 %3540
      %3542 = vrot.lane.b32.xlu0 %v3531, 127
      %v3543 = vpop.permute.xlu0 %3542
      %3548 = vst.msk [vmem:[#allocation3 + $0x40] sm:$0xff] %vm2061, %v3537
      %3549 = vst.msk [vmem:[#allocation3 + $0x50] sm:$0xff] %vm2061, %v3539
      %3550 = vst.msk [vmem:[#allocation3 + $0x60] sm:$0xff] %vm2061, %v3541
      %3551 = vst.msk [vmem:[#allocation3 + $0x70] sm:$0xff] %vm2061, %v3543
      %v3552 = vld [vmem:[#allocation2] sm:$0xff]
      %v3553 = vld [vmem:[#allocation2 + $0x18] sm:$0xff]
      %v3554 = vld [vmem:[#allocation2 + $0x30] sm:$0xff]
      %v3555 = vld [vmem:[#allocation2 + $0x48] sm:$0xff]
      %3560 = vrot.lane.b32.xlu0 %v3552, 126
      %v3561 = vpop.permute.xlu0 %3560
      %3562 = vrot.lane.b32.xlu0 %v3553, 126
      %v3563 = vpop.permute.xlu0 %3562
      %3564 = vrot.lane.b32.xlu0 %v3554, 126
      %v3565 = vpop.permute.xlu0 %3564
      %3566 = vrot.lane.b32.xlu0 %v3555, 126
      %v3567 = vpop.permute.xlu0 %3566
      %v3572 = vsel %vm2071, %v3561, 0.0
      %v3573 = vsel %vm2071, %v3563, 0.0
      %v3574 = vsel %vm2071, %v3565, 0.0
      %v3575 = vsel %vm2071, %v3567, 0.0
      %3576 = vst.msk [vmem:[#allocation3 + $0x80] sm:$0xff] %vm2061, %v3572
      %3577 = vst.msk [vmem:[#allocation3 + $0x90] sm:$0xff] %vm2061, %v3573
      %3578 = vst.msk [vmem:[#allocation3 + $0xa0] sm:$0xff] %vm2061, %v3574
      %3579 = vst.msk [vmem:[#allocation3 + $0xb0] sm:$0xff] %vm2061, %v3575
      %v3580 = vld [vmem:[#allocation2] sm:$0xff]
      %v3581 = vld [vmem:[#allocation2 + $0x18] sm:$0xff]
      %v3582 = vld [vmem:[#allocation2 + $0x30] sm:$0xff]
      %v3583 = vld [vmem:[#allocation2 + $0x48] sm:$0xff]
      %3588 = vrot.lane.b32.xlu0 %v3580, 120
      %v3589 = vpop.permute.xlu0 %3588
      %3590 = vrot.lane.b32.xlu0 %v3581, 120
      %v3591 = vpop.permute.xlu0 %3590
      %3592 = vrot.lane.b32.xlu0 %v3582, 120
      %v3593 = vpop.permute.xlu0 %3592
      %3594 = vrot.lane.b32.xlu0 %v3583, 120
      %v3595 = vpop.permute.xlu0 %3594
      %v3600 = vsel %vm2059, %v3589, 0.0
      %v3601 = vsel %vm2059, %v3591, 0.0
      %v3602 = vsel %vm2059, %v3593, 0.0
      %v3603 = vsel %vm2059, %v3595, 0.0
      %3604 = vst.msk [vmem:[#allocation3 + $0xc0] sm:$0xff] %vm2061, %v3600
      %3605 = vst.msk [vmem:[#allocation3 + $0xd0] sm:$0xff] %vm2061, %v3601
      %3606 = vst.msk [vmem:[#allocation3 + $0xe0] sm:$0xff] %vm2061, %v3602
      %3607 = vst.msk [vmem:[#allocation3 + $0xf0] sm:$0xff] %vm2061, %v3603
      %v3608 = vld [vmem:[#allocation2] sm:$0xff]
      %v3609 = vld [vmem:[#allocation2 + $0x18] sm:$0xff]
      %v3610 = vld [vmem:[#allocation2 + $0x30] sm:$0xff]
      %v3611 = vld [vmem:[#allocation2 + $0x48] sm:$0xff]
      %3616 = vrot.lane.b32.xlu0 %v3608, 119
      %v3617 = vpop.permute.xlu0 %3616
      %3618 = vrot.lane.b32.xlu0 %v3609, 119
      %v3619 = vpop.permute.xlu0 %3618
      %3620 = vrot.lane.b32.xlu0 %v3610, 119
      %v3621 = vpop.permute.xlu0 %3620
      %3622 = vrot.lane.b32.xlu0 %v3611, 119
      %v3623 = vpop.permute.xlu0 %3622
      %3628 = vst.msk [vmem:[#allocation3 + $0x100] sm:$0xff] %vm2061, %v3617
      %3629 = vst.msk [vmem:[#allocation3 + $0x110] sm:$0xff] %vm2061, %v3619
      %3630 = vst.msk [vmem:[#allocation3 + $0x120] sm:$0xff] %vm2061, %v3621
      %3631 = vst.msk [vmem:[#allocation3 + $0x130] sm:$0xff] %vm2061, %v3623
      %v3632 = vld [vmem:[#allocation2] sm:$0xff]
      %v3633 = vld [vmem:[#allocation2 + $0x18] sm:$0xff]
      %v3634 = vld [vmem:[#allocation2 + $0x30] sm:$0xff]
      %v3635 = vld [vmem:[#allocation2 + $0x48] sm:$0xff]
      %3640 = vrot.lane.b32.xlu0 %v3632, 118
      %v3641 = vpop.permute.xlu0 %3640
      %3642 = vrot.lane.b32.xlu0 %v3633, 118
      %v3643 = vpop.permute.xlu0 %3642
      %3644 = vrot.lane.b32.xlu0 %v3634, 118
      %v3645 = vpop.permute.xlu0 %3644
      %3646 = vrot.lane.b32.xlu0 %v3635, 118
      %v3647 = vpop.permute.xlu0 %3646
      %v3652 = vsel %vm2071, %v3641, 0.0
      %v3653 = vsel %vm2071, %v3643, 0.0
      %v3654 = vsel %vm2071, %v3645, 0.0
      %v3655 = vsel %vm2071, %v3647, 0.0
      %3656 = vst.msk [vmem:[#allocation3 + $0x140] sm:$0xff] %vm2061, %v3652
      %3657 = vst.msk [vmem:[#allocation3 + $0x150] sm:$0xff] %vm2061, %v3653
      %3658 = vst.msk [vmem:[#allocation3 + $0x160] sm:$0xff] %vm2061, %v3654
      %3659 = vst.msk [vmem:[#allocation3 + $0x170] sm:$0xff] %vm2061, %v3655
      %v3660 = vld [vmem:[#allocation2] sm:$0xff]
      %v3661 = vld [vmem:[#allocation2 + $0x18] sm:$0xff]
      %v3662 = vld [vmem:[#allocation2 + $0x30] sm:$0xff]
      %v3663 = vld [vmem:[#allocation2 + $0x48] sm:$0xff]
      %3668 = vrot.lane.b32.xlu0 %v3660, 112
      %v3669 = vpop.permute.xlu0 %3668
      %3670 = vrot.lane.b32.xlu0 %v3661, 112
      %v3671 = vpop.permute.xlu0 %3670
      %3672 = vrot.lane.b32.xlu0 %v3662, 112
      %v3673 = vpop.permute.xlu0 %3672
      %3674 = vrot.lane.b32.xlu0 %v3663, 112
      %v3675 = vpop.permute.xlu0 %3674
      %v3680 = vsel %vm2059, %v3669, 0.0
      %v3681 = vsel %vm2059, %v3671, 0.0
      %v3682 = vsel %vm2059, %v3673, 0.0
      %v3683 = vsel %vm2059, %v3675, 0.0
      %3684 = vst.msk [vmem:[#allocation3 + $0x180] sm:$0xff] %vm2061, %v3680
      %3685 = vst.msk [vmem:[#allocation3 + $0x190] sm:$0xff] %vm2061, %v3681
      %3686 = vst.msk [vmem:[#allocation3 + $0x1a0] sm:$0xff] %vm2061, %v3682
      %3687 = vst.msk [vmem:[#allocation3 + $0x1b0] sm:$0xff] %vm2061, %v3683
      %v3688 = vld [vmem:[#allocation2] sm:$0xff]
      %v3689 = vld [vmem:[#allocation2 + $0x18] sm:$0xff]
      %v3690 = vld [vmem:[#allocation2 + $0x30] sm:$0xff]
      %v3691 = vld [vmem:[#allocation2 + $0x48] sm:$0xff]
      %3696 = vrot.lane.b32.xlu0 %v3688, 111
      %v3697 = vpop.permute.xlu0 %3696
      %3698 = vrot.lane.b32.xlu0 %v3689, 111
      %v3699 = vpop.permute.xlu0 %3698
      %3700 = vrot.lane.b32.xlu0 %v3690, 111
      %v3701 = vpop.permute.xlu0 %3700
      %3702 = vrot.lane.b32.xlu0 %v3691, 111
      %v3703 = vpop.permute.xlu0 %3702
      %3708 = vst.msk [vmem:[#allocation3 + $0x1c0] sm:$0xff] %vm2061, %v3697
      %3709 = vst.msk [vmem:[#allocation3 + $0x1d0] sm:$0xff] %vm2061, %v3699
      %3710 = vst.msk [vmem:[#allocation3 + $0x1e0] sm:$0xff] %vm2061, %v3701
      %3711 = vst.msk [vmem:[#allocation3 + $0x1f0] sm:$0xff] %vm2061, %v3703
      %v3712 = vld [vmem:[#allocation2] sm:$0xff]
      %v3713 = vld [vmem:[#allocation2 + $0x18] sm:$0xff]
      %v3714 = vld [vmem:[#allocation2 + $0x30] sm:$0xff]
      %v3715 = vld [vmem:[#allocation2 + $0x48] sm:$0xff]
      %3720 = vrot.lane.b32.xlu0 %v3712, 110
      %v3721 = vpop.permute.xlu0 %3720
      %3722 = vrot.lane.b32.xlu0 %v3713, 110
      %v3723 = vpop.permute.xlu0 %3722
      %3724 = vrot.lane.b32.xlu0 %v3714, 110
      %v3725 = vpop.permute.xlu0 %3724
      %3726 = vrot.lane.b32.xlu0 %v3715, 110
      %v3727 = vpop.permute.xlu0 %3726
      %v3732 = vsel %vm2071, %v3721, 0.0
      %v3733 = vsel %vm2071, %v3723, 0.0
      %v3734 = vsel %vm2071, %v3725, 0.0
      %v3735 = vsel %vm2071, %v3727, 0.0
      %3736 = vst.msk [vmem:[#allocation3 + $0x200] sm:$0xff] %vm2061, %v3732
      %3737 = vst.msk [vmem:[#allocation3 + $0x210] sm:$0xff] %vm2061, %v3733
      %3738 = vst.msk [vmem:[#allocation3 + $0x220] sm:$0xff] %vm2061, %v3734
      %3739 = vst.msk [vmem:[#allocation3 + $0x230] sm:$0xff] %vm2061, %v3735
      %v3740 = vld [vmem:[#allocation3] sm:$0xff]
      %v3741 = vld [vmem:[#allocation3 + $0x10] sm:$0xff]
      %v3742 = vld [vmem:[#allocation3 + $0x20] sm:$0xff]
      %v3743 = vld [vmem:[#allocation3 + $0x30] sm:$0xff]
      %v3744 = vld [vmem:[#allocation3 + $0x40] sm:$0xff]
      %v3745 = vld [vmem:[#allocation3 + $0x50] sm:$0xff]
      %v3746 = vld [vmem:[#allocation3 + $0x60] sm:$0xff]
      %v3747 = vld [vmem:[#allocation3 + $0x70] sm:$0xff]
      %v3748 = vld [vmem:[#allocation3 + $0x80] sm:$0xff]
      %v3749 = vld [vmem:[#allocation3 + $0x90] sm:$0xff]
      %v3750 = vld [vmem:[#allocation3 + $0xa0] sm:$0xff]
      %v3751 = vld [vmem:[#allocation3 + $0xb0] sm:$0xff]
      %v3752 = vld [vmem:[#allocation3 + $0xc0] sm:$0xff]
      %v3753 = vld [vmem:[#allocation3 + $0xd0] sm:$0xff]
      %v3754 = vld [vmem:[#allocation3 + $0xe0] sm:$0xff]
      %v3755 = vld [vmem:[#allocation3 + $0xf0] sm:$0xff]
      %v3756 = vld [vmem:[#allocation3 + $0x100] sm:$0xff]
      %v3757 = vld [vmem:[#allocation3 + $0x110] sm:$0xff]
      %v3758 = vld [vmem:[#allocation3 + $0x120] sm:$0xff]
      %v3759 = vld [vmem:[#allocation3 + $0x130] sm:$0xff]
      %v3760 = vld [vmem:[#allocation3 + $0x140] sm:$0xff]
      %v3761 = vld [vmem:[#allocation3 + $0x150] sm:$0xff]
      %v3762 = vld [vmem:[#allocation3 + $0x160] sm:$0xff]
      %v3763 = vld [vmem:[#allocation3 + $0x170] sm:$0xff]
      %v3764 = vld [vmem:[#allocation3 + $0x180] sm:$0xff]
      %v3765 = vld [vmem:[#allocation3 + $0x190] sm:$0xff]
      %v3766 = vld [vmem:[#allocation3 + $0x1a0] sm:$0xff]
      %v3767 = vld [vmem:[#allocation3 + $0x1b0] sm:$0xff]
      %v3768 = vld [vmem:[#allocation3 + $0x1c0] sm:$0xff]
      %v3769 = vld [vmem:[#allocation3 + $0x1d0] sm:$0xff]
      %v3770 = vld [vmem:[#allocation3 + $0x1e0] sm:$0xff]
      %v3771 = vld [vmem:[#allocation3 + $0x1f0] sm:$0xff]
      %v3772 = vld [vmem:[#allocation3 + $0x200] sm:$0xff]
      %v3773 = vld [vmem:[#allocation3 + $0x210] sm:$0xff]
      %v3774 = vld [vmem:[#allocation3 + $0x220] sm:$0xff]
      %v3775 = vld [vmem:[#allocation3 + $0x230] sm:$0xff]
      %v3776 = vpack.c.bf16 %v3741, %v3740
      %v3777 = vpack.c.bf16 %v3743, %v3742
      %v3778 = vpack.c.bf16 %v3745, %v3744
      %v3779 = vpack.c.bf16 %v3747, %v3746
      %v3780 = vpack.c.bf16 %v3749, %v3748
      %v3781 = vpack.c.bf16 %v3751, %v3750
      %v3782 = vpack.c.bf16 %v3753, %v3752
      %v3783 = vpack.c.bf16 %v3755, %v3754
      %v3784 = vpack.c.bf16 %v3757, %v3756
      %v3785 = vpack.c.bf16 %v3759, %v3758
      %v3786 = vpack.c.bf16 %v3761, %v3760
      %v3787 = vpack.c.bf16 %v3763, %v3762
      %v3788 = vpack.c.bf16 %v3765, %v3764
      %v3789 = vpack.c.bf16 %v3767, %v3766
      %v3790 = vpack.c.bf16 %v3769, %v3768
      %v3791 = vpack.c.bf16 %v3771, %v3770
      %v3792 = vpack.c.bf16 %v3773, %v3772
      %v3793 = vpack.c.bf16 %v3775, %v3774
      %v3794 = vld [vmem:[%s45] sm:$0xff]
      %v3795 = vld [vmem:[%s45 + $0x8] sm:$0xf]
      %v3796 = vld [vmem:[%s45 + $0xc] sm:$0xff]
      %v3797 = vld [vmem:[%s45 + $0x14] sm:$0xf]
      %3798 = vst.msk [vmem:[#allocation2] sm:$0xff] %vm2047, 0.0
      %3799 = vst.msk [vmem:[#allocation2 + $0x18] sm:$0xff] %vm2047, 0.0
      %3802 = vrot.lane.b32.xlu0 %v3486, 9
      %v3803 = vpop.permute.xlu0 %3802
      %3804 = vrot.lane.b32.xlu0 %v3487, 9
      %v3805 = vpop.permute.xlu0 %3804
      %3808 = vst.msk [vmem:[#allocation2] sm:$0xff] %vm2053, %v3803
      %3809 = vst.msk [vmem:[#allocation2 + $0x18] sm:$0xff] %vm2053, %v3805
      %3810 = vst.msk [vmem:[#allocation2] sm:$0xff] %vm2055, 0.0
      %3811 = vst.msk [vmem:[#allocation2 + $0x18] sm:$0xff] %vm2055, 0.0
      %v3812 = vld [vmem:[#allocation2] sm:$0xff]
      %v3813 = vld [vmem:[#allocation2 + $0x18] sm:$0xff]
      %v3814 = vsel %vm2059, %v3812, 0.0
      %v3815 = vsel %vm2059, %v3813, 0.0
      %3816 = vst.msk [vmem:[#allocation3] sm:$0xff] %vm2061, %v3814
      %3817 = vst.msk [vmem:[#allocation3 + $0x10] sm:$0xff] %vm2061, %v3815
      %v3818 = vld [vmem:[#allocation2] sm:$0xff]
      %v3819 = vld [vmem:[#allocation2 + $0x18] sm:$0xff]
      %3822 = vrot.lane.b32.xlu0 %v3818, 127
      %v3823 = vpop.permute.xlu0 %3822
      %3824 = vrot.lane.b32.xlu0 %v3819, 127
      %v3825 = vpop.permute.xlu0 %3824
      %3828 = vst.msk [vmem:[#allocation3 + $0x20] sm:$0xff] %vm2061, %v3823
      %3829 = vst.msk [vmem:[#allocation3 + $0x30] sm:$0xff] %vm2061, %v3825
      %v3830 = vld [vmem:[#allocation2] sm:$0xff]
      %v3831 = vld [vmem:[#allocation2 + $0x18] sm:$0xff]
      %3834 = vrot.lane.b32.xlu0 %v3830, 126
      %v3835 = vpop.permute.xlu0 %3834
      %3836 = vrot.lane.b32.xlu0 %v3831, 126
      %v3837 = vpop.permute.xlu0 %3836
      %v3840 = vsel %vm2071, %v3835, 0.0
      %v3841 = vsel %vm2071, %v3837, 0.0
      %3842 = vst.msk [vmem:[#allocation3 + $0x40] sm:$0xff] %vm2061, %v3840
      %3843 = vst.msk [vmem:[#allocation3 + $0x50] sm:$0xff] %vm2061, %v3841
      %v3844 = vld [vmem:[#allocation2] sm:$0xff]
      %v3845 = vld [vmem:[#allocation2 + $0x18] sm:$0xff]
      %3848 = vrot.lane.b32.xlu0 %v3844, 120
      %v3849 = vpop.permute.xlu0 %3848
      %3850 = vrot.lane.b32.xlu0 %v3845, 120
      %v3851 = vpop.permute.xlu0 %3850
      %v3854 = vsel %vm2059, %v3849, 0.0
      %v3855 = vsel %vm2059, %v3851, 0.0
      %3856 = vst.msk [vmem:[#allocation3 + $0x60] sm:$0xff] %vm2061, %v3854
      %3857 = vst.msk [vmem:[#allocation3 + $0x70] sm:$0xff] %vm2061, %v3855
      %v3858 = vld [vmem:[#allocation2] sm:$0xff]
      %v3859 = vld [vmem:[#allocation2 + $0x18] sm:$0xff]
      %3862 = vrot.lane.b32.xlu0 %v3858, 119
      %v3863 = vpop.permute.xlu0 %3862
      %3864 = vrot.lane.b32.xlu0 %v3859, 119
      %v3865 = vpop.permute.xlu0 %3864
      %3868 = vst.msk [vmem:[#allocation3 + $0x80] sm:$0xff] %vm2061, %v3863
      %3869 = vst.msk [vmem:[#allocation3 + $0x90] sm:$0xff] %vm2061, %v3865
      %v3870 = vld [vmem:[#allocation2] sm:$0xff]
      %v3871 = vld [vmem:[#allocation2 + $0x18] sm:$0xff]
      %3874 = vrot.lane.b32.xlu0 %v3870, 118
      %v3875 = vpop.permute.xlu0 %3874
      %3876 = vrot.lane.b32.xlu0 %v3871, 118
      %v3877 = vpop.permute.xlu0 %3876
      %v3880 = vsel %vm2071, %v3875, 0.0
      %v3881 = vsel %vm2071, %v3877, 0.0
      %3882 = vst.msk [vmem:[#allocation3 + $0xa0] sm:$0xff] %vm2061, %v3880
      %3883 = vst.msk [vmem:[#allocation3 + $0xb0] sm:$0xff] %vm2061, %v3881
      %v3884 = vld [vmem:[#allocation2] sm:$0xff]
      %v3885 = vld [vmem:[#allocation2 + $0x18] sm:$0xff]
      %3888 = vrot.lane.b32.xlu0 %v3884, 112
      %v3889 = vpop.permute.xlu0 %3888
      %3890 = vrot.lane.b32.xlu0 %v3885, 112
      %v3891 = vpop.permute.xlu0 %3890
      %v3894 = vsel %vm2059, %v3889, 0.0
      %v3895 = vsel %vm2059, %v3891, 0.0
      %3896 = vst.msk [vmem:[#allocation3 + $0xc0] sm:$0xff] %vm2061, %v3894
      %3897 = vst.msk [vmem:[#allocation3 + $0xd0] sm:$0xff] %vm2061, %v3895
      %v3898 = vld [vmem:[#allocation2] sm:$0xff]
      %v3899 = vld [vmem:[#allocation2 + $0x18] sm:$0xff]
      %3902 = vrot.lane.b32.xlu0 %v3898, 111
      %v3903 = vpop.permute.xlu0 %3902
      %3904 = vrot.lane.b32.xlu0 %v3899, 111
      %v3905 = vpop.permute.xlu0 %3904
      %3908 = vst.msk [vmem:[#allocation3 + $0xe0] sm:$0xff] %vm2061, %v3903
      %3909 = vst.msk [vmem:[#allocation3 + $0xf0] sm:$0xff] %vm2061, %v3905
      %v3910 = vld [vmem:[#allocation2] sm:$0xff]
      %v3911 = vld [vmem:[#allocation2 + $0x18] sm:$0xff]
      %3914 = vrot.lane.b32.xlu0 %v3910, 110
      %v3915 = vpop.permute.xlu0 %3914
      %3916 = vrot.lane.b32.xlu0 %v3911, 110
      %v3917 = vpop.permute.xlu0 %3916
      %v3920 = vsel %vm2071, %v3915, 0.0
      %v3921 = vsel %vm2071, %v3917, 0.0
      %3922 = vst.msk [vmem:[#allocation3 + $0x100] sm:$0xff] %vm2061, %v3920
      %3923 = vst.msk [vmem:[#allocation3 + $0x110] sm:$0xff] %vm2061, %v3921
      %v3924 = vld [vmem:[#allocation3] sm:$0xff]
      %v3925 = vld [vmem:[#allocation3 + $0x10] sm:$0xff]
      %v3926 = vld [vmem:[#allocation3 + $0x20] sm:$0xff]
      %v3927 = vld [vmem:[#allocation3 + $0x30] sm:$0xff]
      %v3928 = vld [vmem:[#allocation3 + $0x40] sm:$0xff]
      %v3929 = vld [vmem:[#allocation3 + $0x50] sm:$0xff]
      %v3930 = vld [vmem:[#allocation3 + $0x60] sm:$0xff]
      %v3931 = vld [vmem:[#allocation3 + $0x70] sm:$0xff]
      %v3932 = vld [vmem:[#allocation3 + $0x80] sm:$0xff]
      %v3933 = vld [vmem:[#allocation3 + $0x90] sm:$0xff]
      %v3934 = vld [vmem:[#allocation3 + $0xa0] sm:$0xff]
      %v3935 = vld [vmem:[#allocation3 + $0xb0] sm:$0xff]
      %v3936 = vld [vmem:[#allocation3 + $0xc0] sm:$0xff]
      %v3937 = vld [vmem:[#allocation3 + $0xd0] sm:$0xff]
      %v3938 = vld [vmem:[#allocation3 + $0xe0] sm:$0xff]
      %v3939 = vld [vmem:[#allocation3 + $0xf0] sm:$0xff]
      %v3940 = vld [vmem:[#allocation3 + $0x100] sm:$0xff]
      %v3941 = vld [vmem:[#allocation3 + $0x110] sm:$0xff]
      %v3942 = vpack.c.bf16 %v3925, %v3924
      %v3943 = vpack.c.bf16 %v3927, %v3926
      %v3944 = vpack.c.bf16 %v3929, %v3928
      %v3945 = vpack.c.bf16 %v3931, %v3930
      %v3946 = vpack.c.bf16 %v3933, %v3932
      %v3947 = vpack.c.bf16 %v3935, %v3934
      %v3948 = vpack.c.bf16 %v3937, %v3936
      %v3949 = vpack.c.bf16 %v3939, %v3938
      %v3950 = vpack.c.bf16 %v3941, %v3940
      %v3951 = vld [vmem:[%s47] sm:$0xff]
      %v3952 = vld [vmem:[%s47 + $0x8] sm:$0xff]
      %v3955 = vunpack.c.l.b16 %v3951
      %v3956 = vunpack.c.h.b16 %v3951
      %v3957 = vunpack.c.l.b16 %v3952
      %v3958 = vunpack.c.h.b16 %v3952
      %v3959 = vpack.c.b16 %v3957, %v3955
      %v3960 = vpack.c.b16 %v3958, %v3956
      %v3963 = vsel %vm2376, %v3960, 0
      %3965 = vmatprep.subr.bf16.mxu0 0
      %3966 = vmatpush1.bf16.msra.mxu0 %v3949
      %3967 = vmatprep.subr.bf16.mxu0 0
      %3968 = vmatpush1.bf16.msra.mxu0 %v3948
      %3969 = vmatprep.subr.bf16.mxu0 0
      %3970 = vmatpush1.bf16.msra.mxu0 %v3947
      %3971 = vmatprep.subr.bf16.mxu0 0
      %3972 = vmatpush1.bf16.msra.mxu0 %v3946
      %3973 = vmatprep.subr.bf16.mxu0 0
      %3974 = vmatpush1.bf16.msra.mxu0 %v3945
      %3975 = vmatprep.subr.bf16.mxu0 0
      %3976 = vmatpush1.bf16.msra.mxu0 %v3944
      %3977 = vmatprep.subr.bf16.mxu0 0
      %3978 = vmatpush1.bf16.msra.mxu0 %v3943
      %3979 = vmatprep.subr.bf16.mxu0 0
      %3980 = vmatpush1.bf16.msra.mxu0 %v3942
      %3981 = vmatprep.subr.bf16.mxu0 0
      %3982 = vmatpush2.bf16.msra.mxu0 0
      %3983 = vmatprep.subr.bf16.mxu0 0
      %3984 = vmatpush2.bf16.msra.mxu0 0
      %3985 = vmatprep.subr.bf16.mxu0 0
      %3986 = vmatpush2.bf16.msra.mxu0 0
      %3987 = vmatprep.subr.bf16.mxu0 0
      %3988 = vmatpush2.bf16.msra.mxu0 0
      %3989 = vmatprep.subr.bf16.mxu0 0
      %3990 = vmatpush2.bf16.msra.mxu0 0
      %3991 = vmatprep.subr.bf16.mxu0 0
      %3992 = vmatpush2.bf16.msra.mxu0 0
      %3993 = vmatprep.subr.bf16.mxu0 0
      %3994 = vmatpush2.bf16.msra.mxu0 0
      %3995 = vmatprep.subr.bf16.mxu0 0
      %3996 = vmatpush2.bf16.msra.mxu0 %v3950
      %3997 = vmatprep.mubr.bf16.mxu0 %v3963
      %3998 = vmatmul.mubr.bf16.gmra.mxu0 %v3959
      %v3999 = vpop.f32.mrf.mxu0
      %v4000 = vadd.f32 0.0, %v3999
      %v4001 = vpop.f32.mrf.mxu0
      %v4002 = vpop.f32.mrf.mxu0
      %v4003 = vadd.f32 0.0, %v4002
      %v4004 = vpop.f32.mrf.mxu0
      %4005 = vdwg.mxu0
      %v4010 = vunpack.c.l.b16 %v3794
      %v4011 = vunpack.c.h.b16 %v3794
      %v4012 = vunpack.c.l.b16 %v3795
      %v4013 = vunpack.c.l.b16 %v3796
      %v4014 = vunpack.c.h.b16 %v3796
      %v4015 = vunpack.c.l.b16 %v3797
      %v4016 = vpack.c.b16 %v4013, %v4010
      %v4017 = vpack.c.b16 %v4014, %v4011
      %v4018 = vpack.c.b16 %v4015, %v4012
      %v4022 = vsel %vm3176, %v4018, 0
      %4024 = vmatprep.subr.bf16.mxu0 0
      %4025 = vmatpush1.bf16.msra.mxu0 %v3783
      %4026 = vmatprep.subr.bf16.mxu0 0
      %4027 = vmatpush1.bf16.msra.mxu0 %v3782
      %4028 = vmatprep.subr.bf16.mxu0 0
      %4029 = vmatpush1.bf16.msra.mxu0 %v3781
      %4030 = vmatprep.subr.bf16.mxu0 0
      %4031 = vmatpush1.bf16.msra.mxu0 %v3780
      %4032 = vmatprep.subr.bf16.mxu0 0
      %4033 = vmatpush1.bf16.msra.mxu0 %v3779
      %4034 = vmatprep.subr.bf16.mxu0 0
      %4035 = vmatpush1.bf16.msra.mxu0 %v3778
      %4036 = vmatprep.subr.bf16.mxu0 0
      %4037 = vmatpush1.bf16.msra.mxu0 %v3777
      %4038 = vmatprep.subr.bf16.mxu0 0
      %4039 = vmatpush1.bf16.msra.mxu0 %v3776
      %4040 = vmatprep.subr.bf16.mxu0 0
      %4041 = vmatpush2.bf16.msra.mxu0 %v3791
      %4042 = vmatprep.subr.bf16.mxu0 0
      %4043 = vmatpush2.bf16.msra.mxu0 %v3790
      %4044 = vmatprep.subr.bf16.mxu0 0
      %4045 = vmatpush2.bf16.msra.mxu0 %v3789
      %4046 = vmatprep.subr.bf16.mxu0 0
      %4047 = vmatpush2.bf16.msra.mxu0 %v3788
      %4048 = vmatprep.subr.bf16.mxu0 0
      %4049 = vmatpush2.bf16.msra.mxu0 %v3787
      %4050 = vmatprep.subr.bf16.mxu0 0
      %4051 = vmatpush2.bf16.msra.mxu0 %v3786
      %4052 = vmatprep.subr.bf16.mxu0 0
      %4053 = vmatpush2.bf16.msra.mxu0 %v3785
      %4054 = vmatprep.subr.bf16.mxu0 0
      %4055 = vmatpush2.bf16.msra.mxu0 %v3784
      %4056 = vmatprep.mubr.bf16.mxu0 %v4017
      %4057 = vmatmul.mubr.bf16.gmra.mxu0 %v4016
      %v4058 = vpop.f32.mrf.mxu0
      %v4059 = vadd.f32 %v4000, %v4058
      %v4060 = vpop.f32.mrf.mxu0
      %v4061 = vpop.f32.mrf.mxu0
      %v4062 = vadd.f32 %v4003, %v4061
      %v4063 = vpop.f32.mrf.mxu0
      %4064 = vdwg.mxu0
      %4065 = vmatprep.subr.bf16.mxu0 0
      %4066 = vmatpush1.bf16.msra.mxu0 0
      %4067 = vmatprep.subr.bf16.mxu0 0
      %4068 = vmatpush1.bf16.msra.mxu0 0
      %4069 = vmatprep.subr.bf16.mxu0 0
      %4070 = vmatpush1.bf16.msra.mxu0 0
      %4071 = vmatprep.subr.bf16.mxu0 0
      %4072 = vmatpush1.bf16.msra.mxu0 0
      %4073 = vmatprep.subr.bf16.mxu0 0
      %4074 = vmatpush1.bf16.msra.mxu0 0
      %4075 = vmatprep.subr.bf16.mxu0 0
      %4076 = vmatpush1.bf16.msra.mxu0 0
      %4077 = vmatprep.subr.bf16.mxu0 0
      %4078 = vmatpush1.bf16.msra.mxu0 %v3793
      %4079 = vmatprep.subr.bf16.mxu0 0
      %4080 = vmatpush1.bf16.msra.mxu0 %v3792
      %4081 = vmatprep.subr.bf16.mxu0 0
      %4082 = vmatpush2.bf16.msra.mxu0 0
      %4083 = vmatprep.subr.bf16.mxu0 0
      %4084 = vmatpush2.bf16.msra.mxu0 0
      %4085 = vmatprep.subr.bf16.mxu0 0
      %4086 = vmatpush2.bf16.msra.mxu0 0
      %4087 = vmatprep.subr.bf16.mxu0 0
      %4088 = vmatpush2.bf16.msra.mxu0 0
      %4089 = vmatprep.subr.bf16.mxu0 0
      %4090 = vmatpush2.bf16.msra.mxu0 0
      %4091 = vmatprep.subr.bf16.mxu0 0
      %4092 = vmatpush2.bf16.msra.mxu0 0
      %4093 = vmatprep.subr.bf16.mxu0 0
      %4094 = vmatpush2.bf16.msra.mxu0 0
      %4095 = vmatprep.subr.bf16.mxu0 0
      %4096 = vmatpush2.bf16.msra.mxu0 0
      %4097 = vmatprep.mubr.bf16.mxu0 0
      %4098 = vmatmul.mubr.bf16.gmra.mxu0 %v4022
      %v4099 = vpop.f32.mrf.mxu0
      %v4100 = vadd.f32 %v4059, %v4099
      %v4101 = vpop.f32.mrf.mxu0
      %v4102 = vpop.f32.mrf.mxu0
      %v4103 = vadd.f32 %v4062, %v4102
      %v4104 = vpop.f32.mrf.mxu0
      %4105 = vdwg.mxu0
      %v4106 = vld [vmem:[%s49] sm:$0xff]
      %v4107 = vld [vmem:[%s49 + $0x8] sm:$0xff]
      %4109 = vset.pattern.permute.xlu0 0
      %4110 = vperm.xlu0 %4109, %v4106
      %v4111 = vpop.permute.xlu0 %4110
      %4114 = vset.pattern.permute.xlu0 0
      %4115 = vperm.xlu0 %4114, %v4107
      %v4116 = vpop.permute.xlu0 %4115
      %v4118 = vadd.f32 %v4100, %v4111
      %v4119 = vadd.f32 %v4103, %v4116
      %v4120 = vmax.f32 %v4118, 0.0
      %v4121 = vmax.f32 %v4119, 0.0
      %4122 = vst.msk [vmem:[#allocation2] sm:$0xff] %vm2047, 0.0
      %4123 = vst.msk [vmem:[#allocation2 + $0x18] sm:$0xff] %vm2047, 0.0
      %4126 = vrot.lane.b32.xlu0 %v4120, 9
      %v4127 = vpop.permute.xlu0 %4126
      %4128 = vrot.lane.b32.xlu0 %v4121, 9
      %v4129 = vpop.permute.xlu0 %4128
      %4132 = vst.msk [vmem:[#allocation2] sm:$0xff] %vm2053, %v4127
      %4133 = vst.msk [vmem:[#allocation2 + $0x18] sm:$0xff] %vm2053, %v4129
      %4134 = vst.msk [vmem:[#allocation2] sm:$0xff] %vm2055, 0.0
      %4135 = vst.msk [vmem:[#allocation2 + $0x18] sm:$0xff] %vm2055, 0.0
      %v4136 = vld [vmem:[#allocation2] sm:$0xff]
      %v4137 = vld [vmem:[#allocation2 + $0x18] sm:$0xff]
      %v4138 = vsel %vm2059, %v4136, 0.0
      %v4139 = vsel %vm2059, %v4137, 0.0
      %4140 = vst.msk [vmem:[#allocation3] sm:$0xff] %vm2061, %v4138
      %4141 = vst.msk [vmem:[#allocation3 + $0x10] sm:$0xff] %vm2061, %v4139
      %v4142 = vld [vmem:[#allocation2] sm:$0xff]
      %v4143 = vld [vmem:[#allocation2 + $0x18] sm:$0xff]
      %4146 = vrot.lane.b32.xlu0 %v4142, 127
      %v4147 = vpop.permute.xlu0 %4146
      %4148 = vrot.lane.b32.xlu0 %v4143, 127
      %v4149 = vpop.permute.xlu0 %4148
      %4152 = vst.msk [vmem:[#allocation3 + $0x20] sm:$0xff] %vm2061, %v4147
      %4153 = vst.msk [vmem:[#allocation3 + $0x30] sm:$0xff] %vm2061, %v4149
      %v4154 = vld [vmem:[#allocation2] sm:$0xff]
      %v4155 = vld [vmem:[#allocation2 + $0x18] sm:$0xff]
      %4158 = vrot.lane.b32.xlu0 %v4154, 126
      %v4159 = vpop.permute.xlu0 %4158
      %4160 = vrot.lane.b32.xlu0 %v4155, 126
      %v4161 = vpop.permute.xlu0 %4160
      %v4164 = vsel %vm2071, %v4159, 0.0
      %v4165 = vsel %vm2071, %v4161, 0.0
      %4166 = vst.msk [vmem:[#allocation3 + $0x40] sm:$0xff] %vm2061, %v4164
      %4167 = vst.msk [vmem:[#allocation3 + $0x50] sm:$0xff] %vm2061, %v4165
      %v4168 = vld [vmem:[#allocation2] sm:$0xff]
      %v4169 = vld [vmem:[#allocation2 + $0x18] sm:$0xff]
      %4172 = vrot.lane.b32.xlu0 %v4168, 120
      %v4173 = vpop.permute.xlu0 %4172
      %4174 = vrot.lane.b32.xlu0 %v4169, 120
      %v4175 = vpop.permute.xlu0 %4174
      %v4178 = vsel %vm2059, %v4173, 0.0
      %v4179 = vsel %vm2059, %v4175, 0.0
      %4180 = vst.msk [vmem:[#allocation3 + $0x60] sm:$0xff] %vm2061, %v4178
      %4181 = vst.msk [vmem:[#allocation3 + $0x70] sm:$0xff] %vm2061, %v4179
      %v4182 = vld [vmem:[#allocation2] sm:$0xff]
      %v4183 = vld [vmem:[#allocation2 + $0x18] sm:$0xff]
      %4186 = vrot.lane.b32.xlu0 %v4182, 119
      %v4187 = vpop.permute.xlu0 %4186
      %4188 = vrot.lane.b32.xlu0 %v4183, 119
      %v4189 = vpop.permute.xlu0 %4188
      %4192 = vst.msk [vmem:[#allocation3 + $0x80] sm:$0xff] %vm2061, %v4187
      %4193 = vst.msk [vmem:[#allocation3 + $0x90] sm:$0xff] %vm2061, %v4189
      %v4194 = vld [vmem:[#allocation2] sm:$0xff]
      %v4195 = vld [vmem:[#allocation2 + $0x18] sm:$0xff]
      %4198 = vrot.lane.b32.xlu0 %v4194, 118
      %v4199 = vpop.permute.xlu0 %4198
      %4200 = vrot.lane.b32.xlu0 %v4195, 118
      %v4201 = vpop.permute.xlu0 %4200
      %v4204 = vsel %vm2071, %v4199, 0.0
      %v4205 = vsel %vm2071, %v4201, 0.0
      %4206 = vst.msk [vmem:[#allocation3 + $0xa0] sm:$0xff] %vm2061, %v4204
      %4207 = vst.msk [vmem:[#allocation3 + $0xb0] sm:$0xff] %vm2061, %v4205
      %v4208 = vld [vmem:[#allocation2] sm:$0xff]
      %v4209 = vld [vmem:[#allocation2 + $0x18] sm:$0xff]
      %4212 = vrot.lane.b32.xlu0 %v4208, 112
      %v4213 = vpop.permute.xlu0 %4212
      %4214 = vrot.lane.b32.xlu0 %v4209, 112
      %v4215 = vpop.permute.xlu0 %4214
      %v4218 = vsel %vm2059, %v4213, 0.0
      %v4219 = vsel %vm2059, %v4215, 0.0
      %4220 = vst.msk [vmem:[#allocation3 + $0xc0] sm:$0xff] %vm2061, %v4218
      %4221 = vst.msk [vmem:[#allocation3 + $0xd0] sm:$0xff] %vm2061, %v4219
      %v4222 = vld [vmem:[#allocation2] sm:$0xff]
      %v4223 = vld [vmem:[#allocation2 + $0x18] sm:$0xff]
      %4226 = vrot.lane.b32.xlu0 %v4222, 111
      %v4227 = vpop.permute.xlu0 %4226
      %4228 = vrot.lane.b32.xlu0 %v4223, 111
      %v4229 = vpop.permute.xlu0 %4228
      %4232 = vst.msk [vmem:[#allocation3 + $0xe0] sm:$0xff] %vm2061, %v4227
      %4233 = vst.msk [vmem:[#allocation3 + $0xf0] sm:$0xff] %vm2061, %v4229
      %v4234 = vld [vmem:[#allocation2] sm:$0xff]
      %v4235 = vld [vmem:[#allocation2 + $0x18] sm:$0xff]
      %4238 = vrot.lane.b32.xlu0 %v4234, 110
      %v4239 = vpop.permute.xlu0 %4238
      %4240 = vrot.lane.b32.xlu0 %v4235, 110
      %v4241 = vpop.permute.xlu0 %4240
      %v4244 = vsel %vm2071, %v4239, 0.0
      %v4245 = vsel %vm2071, %v4241, 0.0
      %4246 = vst.msk [vmem:[#allocation3 + $0x100] sm:$0xff] %vm2061, %v4244
      %4247 = vst.msk [vmem:[#allocation3 + $0x110] sm:$0xff] %vm2061, %v4245
      %v4248 = vld [vmem:[#allocation3] sm:$0xff]
      %v4249 = vld [vmem:[#allocation3 + $0x10] sm:$0xff]
      %v4250 = vld [vmem:[#allocation3 + $0x20] sm:$0xff]
      %v4251 = vld [vmem:[#allocation3 + $0x30] sm:$0xff]
      %v4252 = vld [vmem:[#allocation3 + $0x40] sm:$0xff]
      %v4253 = vld [vmem:[#allocation3 + $0x50] sm:$0xff]
      %v4254 = vld [vmem:[#allocation3 + $0x60] sm:$0xff]
      %v4255 = vld [vmem:[#allocation3 + $0x70] sm:$0xff]
      %v4256 = vld [vmem:[#allocation3 + $0x80] sm:$0xff]
      %v4257 = vld [vmem:[#allocation3 + $0x90] sm:$0xff]
      %v4258 = vld [vmem:[#allocation3 + $0xa0] sm:$0xff]
      %v4259 = vld [vmem:[#allocation3 + $0xb0] sm:$0xff]
      %v4260 = vld [vmem:[#allocation3 + $0xc0] sm:$0xff]
      %v4261 = vld [vmem:[#allocation3 + $0xd0] sm:$0xff]
      %v4262 = vld [vmem:[#allocation3 + $0xe0] sm:$0xff]
      %v4263 = vld [vmem:[#allocation3 + $0xf0] sm:$0xff]
      %v4264 = vld [vmem:[#allocation3 + $0x100] sm:$0xff]
      %v4265 = vld [vmem:[#allocation3 + $0x110] sm:$0xff]
      %v4266 = vpack.c.bf16 %v4249, %v4248
      %v4267 = vpack.c.bf16 %v4251, %v4250
      %v4268 = vpack.c.bf16 %v4253, %v4252
      %v4269 = vpack.c.bf16 %v4255, %v4254
      %v4270 = vpack.c.bf16 %v4257, %v4256
      %v4271 = vpack.c.bf16 %v4259, %v4258
      %v4272 = vpack.c.bf16 %v4261, %v4260
      %v4273 = vpack.c.bf16 %v4263, %v4262
      %v4274 = vpack.c.bf16 %v4265, %v4264
      %v4275 = vld [vmem:[%s51] sm:$0xff]
      %v4276 = vld [vmem:[%s51 + $0x8] sm:$0xff]
      %v4277 = vld [vmem:[%s53] sm:$0xff]
      %v4278 = vld [vmem:[%s53 + $0x8] sm:$0xff]
      %4280 = vset.pattern.permute.xlu0 0
      %4281 = vperm.xlu0 %4280, %v4277
      %v4282 = vpop.permute.xlu0 %4281
      %4285 = vset.pattern.permute.xlu0 0
      %4286 = vperm.xlu0 %4285, %v4278
      %v4287 = vpop.permute.xlu0 %4286
      %v4291 = vunpack.c.l.b16 %v4275
      %v4292 = vunpack.c.h.b16 %v4275
      %v4293 = vunpack.c.l.b16 %v4276
      %v4294 = vunpack.c.h.b16 %v4276
      %v4295 = vpack.c.b16 %v4293, %v4291
      %v4296 = vpack.c.b16 %v4294, %v4292
      %v4299 = vsel %vm2376, %v4296, 0
      %4301 = vmatprep.subr.bf16.mxu0 0
      %4302 = vmatpush1.bf16.msra.mxu0 %v4273
      %4303 = vmatprep.subr.bf16.mxu0 0
      %4304 = vmatpush1.bf16.msra.mxu0 %v4272
      %4305 = vmatprep.subr.bf16.mxu0 0
      %4306 = vmatpush1.bf16.msra.mxu0 %v4271
      %4307 = vmatprep.subr.bf16.mxu0 0
      %4308 = vmatpush1.bf16.msra.mxu0 %v4270
      %4309 = vmatprep.subr.bf16.mxu0 0
      %4310 = vmatpush1.bf16.msra.mxu0 %v4269
      %4311 = vmatprep.subr.bf16.mxu0 0
      %4312 = vmatpush1.bf16.msra.mxu0 %v4268
      %4313 = vmatprep.subr.bf16.mxu0 0
      %4314 = vmatpush1.bf16.msra.mxu0 %v4267
      %4315 = vmatprep.subr.bf16.mxu0 0
      %4316 = vmatpush1.bf16.msra.mxu0 %v4266
      %4317 = vmatprep.subr.bf16.mxu0 0
      %4318 = vmatpush2.bf16.msra.mxu0 0
      %4319 = vmatprep.subr.bf16.mxu0 0
      %4320 = vmatpush2.bf16.msra.mxu0 0
      %4321 = vmatprep.subr.bf16.mxu0 0
      %4322 = vmatpush2.bf16.msra.mxu0 0
      %4323 = vmatprep.subr.bf16.mxu0 0
      %4324 = vmatpush2.bf16.msra.mxu0 0
      %4325 = vmatprep.subr.bf16.mxu0 0
      %4326 = vmatpush2.bf16.msra.mxu0 0
      %4327 = vmatprep.subr.bf16.mxu0 0
      %4328 = vmatpush2.bf16.msra.mxu0 0
      %4329 = vmatprep.subr.bf16.mxu0 0
      %4330 = vmatpush2.bf16.msra.mxu0 0
      %4331 = vmatprep.subr.bf16.mxu0 0
      %4332 = vmatpush2.bf16.msra.mxu0 %v4274
      %4333 = vmatprep.mubr.bf16.mxu0 %v4299
      %4334 = vmatmul.mubr.bf16.gmra.mxu0 %v4295
      %v4335 = vpop.f32.mrf.mxu0
      %v4336 = vadd.f32 %v4282, %v4335
      %v4337 = vpop.f32.mrf.mxu0
      %v4338 = vpop.f32.mrf.mxu0
      %v4339 = vadd.f32 %v4287, %v4338
      %v4340 = vpop.f32.mrf.mxu0
      %4341 = vdwg.mxu0
      %v4342 = vmax.f32 %v4336, 0.0
      %v4343 = vmax.f32 %v4339, 0.0
      %v4344 = vpack.c.bf16 %v4343, %v4342
      %v4345 = vld [vmem:[%s55] sm:$0xff]
      %v4346 = vld [vmem:[%s55 + $0x8] sm:$0xff]
      %v4347 = vld [vmem:[%s55 + $0x10] sm:$0xff]
      %v4348 = vld [vmem:[%s55 + $0x18] sm:$0xff]
      %v4349 = vld [vmem:[%s55 + $0x20] sm:$0xff]
      %v4350 = vld [vmem:[%s55 + $0x28] sm:$0xff]
      %v4351 = vld [vmem:[%s55 + $0x30] sm:$0xff]
      %v4352 = vld [vmem:[%s55 + $0x38] sm:$0xff]
      %v4361 = vunpack.c.l.b16 %v4345
      %v4362 = vunpack.c.h.b16 %v4345
      %v4363 = vunpack.c.l.b16 %v4346
      %v4364 = vunpack.c.h.b16 %v4346
      %v4365 = vunpack.c.l.b16 %v4347
      %v4366 = vunpack.c.h.b16 %v4347
      %v4367 = vunpack.c.l.b16 %v4348
      %v4368 = vunpack.c.h.b16 %v4348
      %v4369 = vunpack.c.l.b16 %v4349
      %v4370 = vunpack.c.h.b16 %v4349
      %v4371 = vunpack.c.l.b16 %v4350
      %v4372 = vunpack.c.h.b16 %v4350
      %v4373 = vunpack.c.l.b16 %v4351
      %v4374 = vunpack.c.h.b16 %v4351
      %v4375 = vunpack.c.l.b16 %v4352
      %v4376 = vunpack.c.h.b16 %v4352
      %v4377 = vpack.c.b16 %v4363, %v4361
      %v4378 = vpack.c.b16 %v4364, %v4362
      %v4379 = vpack.c.b16 %v4367, %v4365
      %v4380 = vpack.c.b16 %v4368, %v4366
      %v4381 = vpack.c.b16 %v4371, %v4369
      %v4382 = vpack.c.b16 %v4372, %v4370
      %v4383 = vpack.c.b16 %v4375, %v4373
      %v4384 = vpack.c.b16 %v4376, %v4374
      %v4394 = vsel %vm2061, %v4344, 0
      %4396 = vmatprep.subr.bf16.mxu0 0
      %4397 = vmatpush1.bf16.msra.mxu0 0
      %4398 = vmatprep.subr.bf16.mxu0 0
      %4399 = vmatpush1.bf16.msra.mxu0 0
      %4400 = vmatprep.subr.bf16.mxu0 0
      %4401 = vmatpush1.bf16.msra.mxu0 0
      %4402 = vmatprep.subr.bf16.mxu0 0
      %4403 = vmatpush1.bf16.msra.mxu0 0
      %4404 = vmatprep.subr.bf16.mxu0 %v4384
      %4405 = vmatpush1.bf16.msra.mxu0 %v4383
      %4406 = vmatprep.subr.bf16.mxu0 %v4382
      %4407 = vmatpush1.bf16.msra.mxu0 %v4381
      %4408 = vmatprep.subr.bf16.mxu0 %v4380
      %4409 = vmatpush1.bf16.msra.mxu0 %v4379
      %4410 = vmatprep.subr.bf16.mxu0 %v4378
      %4411 = vmatpush1.bf16.msra.mxu0 %v4377
      %4412 = vmatprep.subr.bf16.mxu0 0
      %4413 = vmatpush2.bf16.msra.mxu0 0
      %4414 = vmatprep.subr.bf16.mxu0 0
      %4415 = vmatpush2.bf16.msra.mxu0 0
      %4416 = vmatprep.subr.bf16.mxu0 0
      %4417 = vmatpush2.bf16.msra.mxu0 0
      %4418 = vmatprep.subr.bf16.mxu0 0
      %4419 = vmatpush2.bf16.msra.mxu0 0
      %4420 = vmatprep.subr.bf16.mxu0 0
      %4421 = vmatpush2.bf16.msra.mxu0 0
      %4422 = vmatprep.subr.bf16.mxu0 0
      %4423 = vmatpush2.bf16.msra.mxu0 0
      %4424 = vmatprep.subr.bf16.mxu0 0
      %4425 = vmatpush2.bf16.msra.mxu0 0
      %4426 = vmatprep.subr.bf16.mxu0 0
      %4427 = vmatpush2.bf16.msra.mxu0 0
      %4428 = vmatprep.mubr.bf16.mxu0 0
      %4429 = vmatmul.mubr.bf16.gmra.mxu0 %v4394
      %v4430 = vpop.f32.mrf.mxu0
      %v4431 = vadd.f32 0.0, %v4430
      %v4432 = vpop.f32.mrf.mxu0
      %v4433 = vadd.f32 0.0, %v4432
      %v4434 = vpop.f32.mrf.mxu0
      %v4435 = vadd.f32 0.0, %v4434
      %v4436 = vpop.f32.mrf.mxu0
      %v4437 = vadd.f32 0.0, %v4436
      %4438 = vdwg.mxu0
      %v4439 = vld [vmem:[%s57] sm:$0x3]
      %v4440 = vpack.c.bf16 %v4435, %v4431
      %v4441 = vpack.c.bf16 %v4437, %v4433
      %v4442 = vld [vmem:[%s59] sm:$0xf]
      %4444 = vset.pattern.permute.xlu0 0
      %4445 = vperm.xlu0 %4444, %v4442
      %v4446 = vpop.permute.xlu0 %4445
      %v4449 = vsel %vm2376, %v4439, 0
      %4451 = vmatprep.subr.bf16.mxu0 0
      %4452 = vmatpush1.bf16.msra.mxu0 0
      %4453 = vmatprep.subr.bf16.mxu0 0
      %4454 = vmatpush1.bf16.msra.mxu0 0
      %4455 = vmatprep.subr.bf16.mxu0 0
      %4456 = vmatpush1.bf16.msra.mxu0 0
      %4457 = vmatprep.subr.bf16.mxu0 0
      %4458 = vmatpush1.bf16.msra.mxu0 0
      %4459 = vmatprep.subr.bf16.mxu0 0
      %4460 = vmatpush1.bf16.msra.mxu0 0
      %4461 = vmatprep.subr.bf16.mxu0 0
      %4462 = vmatpush1.bf16.msra.mxu0 0
      %4463 = vmatprep.subr.bf16.mxu0 0
      %4464 = vmatpush1.bf16.msra.mxu0 0
      %4465 = vmatprep.subr.bf16.mxu0 %v4441
      %4466 = vmatpush1.bf16.msra.mxu0 %v4440
      %4467 = vmatprep.subr.bf16.mxu0 0
      %4468 = vmatpush2.bf16.msra.mxu0 0
      %4469 = vmatprep.subr.bf16.mxu0 0
      %4470 = vmatpush2.bf16.msra.mxu0 0
      %4471 = vmatprep.subr.bf16.mxu0 0
      %4472 = vmatpush2.bf16.msra.mxu0 0
      %4473 = vmatprep.subr.bf16.mxu0 0
      %4474 = vmatpush2.bf16.msra.mxu0 0
      %4475 = vmatprep.subr.bf16.mxu0 0
      %4476 = vmatpush2.bf16.msra.mxu0 0
      %4477 = vmatprep.subr.bf16.mxu0 0
      %4478 = vmatpush2.bf16.msra.mxu0 0
      %4479 = vmatprep.subr.bf16.mxu0 0
      %4480 = vmatpush2.bf16.msra.mxu0 0
      %4481 = vmatprep.subr.bf16.mxu0 0
      %4482 = vmatpush2.bf16.msra.mxu0 0
      %4483 = vmatprep.mubr.bf16.mxu0 0
      %4484 = vmatmul.mubr.bf16.gmra.mxu0 %v4449
      %v4485 = vpop.f32.mrf.mxu0
      %v4486 = vadd.f32 %v4446, %v4485
      %v4487 = vpop.f32.mrf.mxu0
      %v4488 = vadd.f32 %v4446, %v4487
      %v4489 = vpop.f32.mrf.mxu0
      %v4490 = vpop.f32.mrf.mxu0
      %4491 = vdwg.mxu0
      %v4492 = vld [vmem:[%s61] sm:$0x3]
      %v4493 = vpack.c.bf16 %v1821, %v1821
      %v4494 = vpack.c.bf16 %v1822, %v1822
      %v4495 = vld [vmem:[%s63] sm:$0xf]
      %4497 = vset.pattern.permute.xlu0 0
      %4498 = vperm.xlu0 %4497, %v4495
      %v4499 = vpop.permute.xlu0 %4498
      %vm4501 = vcmask 64512
      %v4503 = vsel %vm4501, %v4492, 0
      %v4506 = vsel %vm1511, %v4493, 0
      %v4509 = vsel %vm1511, %v4494, 0
      %4511 = vmatprep.subr.bf16.mxu0 0
      %4512 = vmatpush1.bf16.msra.mxu0 0
      %4513 = vmatprep.subr.bf16.mxu0 0
      %4514 = vmatpush1.bf16.msra.mxu0 0
      %4515 = vmatprep.subr.bf16.mxu0 0
      %4516 = vmatpush1.bf16.msra.mxu0 0
      %4517 = vmatprep.subr.bf16.mxu0 0
      %4518 = vmatpush1.bf16.msra.mxu0 0
      %4519 = vmatprep.subr.bf16.mxu0 0
      %4520 = vmatpush1.bf16.msra.mxu0 0
      %4521 = vmatprep.subr.bf16.mxu0 0
      %4522 = vmatpush1.bf16.msra.mxu0 0
      %4523 = vmatprep.subr.bf16.mxu0 0
      %4524 = vmatpush1.bf16.msra.mxu0 0
      %4525 = vmatprep.subr.bf16.mxu0 %v4509
      %4526 = vmatpush1.bf16.msra.mxu0 %v4506
      %4527 = vmatprep.subr.bf16.mxu0 0
      %4528 = vmatpush2.bf16.msra.mxu0 0
      %4529 = vmatprep.subr.bf16.mxu0 0
      %4530 = vmatpush2.bf16.msra.mxu0 0
      %4531 = vmatprep.subr.bf16.mxu0 0
      %4532 = vmatpush2.bf16.msra.mxu0 0
      %4533 = vmatprep.subr.bf16.mxu0 0
      %4534 = vmatpush2.bf16.msra.mxu0 0
      %4535 = vmatprep.subr.bf16.mxu0 0
      %4536 = vmatpush2.bf16.msra.mxu0 0
      %4537 = vmatprep.subr.bf16.mxu0 0
      %4538 = vmatpush2.bf16.msra.mxu0 0
      %4539 = vmatprep.subr.bf16.mxu0 0
      %4540 = vmatpush2.bf16.msra.mxu0 0
      %4541 = vmatprep.subr.bf16.mxu0 0
      %4542 = vmatpush2.bf16.msra.mxu0 0
      %4543 = vmatprep.mubr.bf16.mxu0 0
      %4544 = vmatmul.mubr.bf16.gmra.mxu0 %v4503
      %v4545 = vpop.f32.mrf.mxu0
      %v4546 = vadd.f32 %v4499, %v4545
      %v4547 = vpop.f32.mrf.mxu0
      %v4548 = vadd.f32 %v4499, %v4547
      %v4549 = vpop.f32.mrf.mxu0
      %v4550 = vpop.f32.mrf.mxu0
      %4551 = vdwg.mxu0
      %v4552 = vadd.f32 %v4486, %v4546
      %v4553 = vadd.f32 %v4488, %v4548
      %v4554 = vmax.f32 %v4552, 0.0
      %v4555 = vmax.f32 %v4553, 0.0
      %v4556 = vld [vmem:[%s65] sm:$0xf]
      %4558 = vset.pattern.permute.xlu0 0
      %4559 = vperm.xlu0 %4558, %v4556
      %v4560 = vpop.permute.xlu0 %4559
      %v4562 = vmul.f32 %v4554, %v4560
      %v4563 = vmul.f32 %v4555, %v4560
      %v4564 = vsel %vm1511, %v4562, 0.0
      %v4565 = vrot.slane %v4564, 4
      %v4566 = vadd.f32 %v4564, %v4565
      %v4567 = vrot.slane %v4566, 2
      %v4568 = vadd.f32 %v4566, %v4567
      %v4569 = vrot.slane %v4568, 1
      %v4570 = vadd.f32 %v4568, %v4569
      %v4571 = vsel %vm1511, %v4563, 0.0
      %v4572 = vrot.slane %v4571, 4
      %v4573 = vadd.f32 %v4571, %v4572
      %v4574 = vrot.slane %v4573, 2
      %v4575 = vadd.f32 %v4573, %v4574
      %v4576 = vrot.slane %v4575, 1
      %v4577 = vadd.f32 %v4575, %v4576
      %v4578 = vld [vmem:[#allocation5] sm:$0x1]
      %4580 = vset.pattern.permute.xlu0 0
      %4581 = vperm.xlu0 %4580, %v4578
      %v4582 = vpop.permute.xlu0 %4581
      %v4584 = vlaneseq
      %v4585 = vshrl.u32 %v4584, 7
      %v4586 = vsub.s32 0, %v4585
      %v4587 = vrot.slane %v4582, %v4586
      %v4588 = vadd.f32 %v4570, %v4587
      %v4589 = vadd.f32 %v4577, %v4587
      %v4590 = vsub.f32 0.0, %v4588
      %v4591 = vsub.f32 0.0, %v4589
      %v4592 = vmul.f32 %v4590, 1.442695
      %v4593 = vpow.pop %v4592
      %v4594 = vmul.f32 %v4591, 1.442695
      %v4595 = vpow.pop %v4594
      %v4596 = vadd.f32 %v4593, 1.0
      %v4597 = vadd.f32 %v4595, 1.0
      %v4598 = vrcp.pop %v4596
      %v4599 = vmul.f32 1.0, %v4598
      %v4600 = vrcp.pop %v4597
      %v4601 = vmul.f32 1.0, %v4600
      %v4602 = vmul.f32 %v1821, %v4599
      %v4603 = vmul.f32 %v1822, %v4601
      %4604 = vst.msk [vmem:[#allocation2] sm:$0xff] %vm1278, 0.0
      %4605 = vst.msk [vmem:[#allocation2 + $0x18] sm:$0xff] %vm1278, 0.0
      %4610 = vrot.lane.b32.xlu0 %v4431, 17
      %v4611 = vpop.permute.xlu0 %4610
      %4612 = vrot.lane.b32.xlu0 %v4433, 17
      %v4613 = vpop.permute.xlu0 %4612
      %4614 = vrot.lane.b32.xlu0 %v4435, 17
      %v4615 = vpop.permute.xlu0 %4614
      %4616 = vrot.lane.b32.xlu0 %v4437, 17
      %v4617 = vpop.permute.xlu0 %4616
      %v4618 = vsel %vm1278, %v4611, %v4613
      %v4619 = vsel %vm1278, %v4615, %v4617
      %4626 = vst.msk [vmem:[#allocation2] sm:$0xff] %vm1290, %v4611
      %4627 = vst [vmem:[#allocation2 + $0x8] sm:$0xff] %v4618
      %4628 = vst.msk [vmem:[#allocation2 + $0x10] sm:$0xff] %vm1278, %v4613
      %4629 = vst.msk [vmem:[#allocation2 + $0x18] sm:$0xff] %vm1290, %v4615
      %4630 = vst [vmem:[#allocation2 + $0x20] sm:$0xff] %v4619
      %4631 = vst.msk [vmem:[#allocation2 + $0x28] sm:$0xff] %vm1278, %v4617
      %4632 = vst.msk [vmem:[#allocation2 + $0x10] sm:$0xff] %vm1294, 0.0
      %4633 = vst.msk [vmem:[#allocation2 + $0x28] sm:$0xff] %vm1294, 0.0
      %v4634 = vld [vmem:[#allocation2] sm:$0xff]
      %v4635 = vld [vmem:[#allocation2 + $0x8] sm:$0xff]
      %v4636 = vld [vmem:[#allocation2 + $0x18] sm:$0xff]
      %v4637 = vld [vmem:[#allocation2 + $0x20] sm:$0xff]
      %v4638 = vsel %vm1300, %v4634, 0.0
      %v4639 = vsel %vm1301, %v4635, 0.0
      %v4640 = vsel %vm1300, %v4636, 0.0
      %v4641 = vsel %vm1301, %v4637, 0.0
      %4642 = vst [vmem:[#allocation3] sm:$0xff] %v4638
      %4643 = vst [vmem:[#allocation3 + $0x8] sm:$0xff] %v4639
      %4644 = vst [vmem:[#allocation3 + $0x10] sm:$0xff] %v4640
      %4645 = vst [vmem:[#allocation3 + $0x18] sm:$0xff] %v4641
      %v4646 = vld [vmem:[#allocation2] sm:$0xff]
      %v4647 = vld [vmem:[#allocation2 + $0x8] sm:$0xff]
      %v4648 = vld [vmem:[#allocation2 + $0x10] sm:$0xff]
      %v4649 = vld [vmem:[#allocation2 + $0x18] sm:$0xff]
      %v4650 = vld [vmem:[#allocation2 + $0x20] sm:$0xff]
      %v4651 = vld [vmem:[#allocation2 + $0x28] sm:$0xff]
      %4658 = vrot.lane.b32.xlu0 %v4646, 127
      %v4659 = vpop.permute.xlu0 %4658
      %4660 = vrot.lane.b32.xlu0 %v4647, 127
      %v4661 = vpop.permute.xlu0 %4660
      %4662 = vrot.lane.b32.xlu0 %v4648, 127
      %v4663 = vpop.permute.xlu0 %4662
      %4664 = vrot.lane.b32.xlu0 %v4649, 127
      %v4665 = vpop.permute.xlu0 %4664
      %4666 = vrot.lane.b32.xlu0 %v4650, 127
      %v4667 = vpop.permute.xlu0 %4666
      %4668 = vrot.lane.b32.xlu0 %v4651, 127
      %v4669 = vpop.permute.xlu0 %4668
      %v4670 = vsel %vm1318, %v4659, %v4661
      %v4671 = vsel %vm1318, %v4661, %v4663
      %v4672 = vsel %vm1318, %v4665, %v4667
      %v4673 = vsel %vm1318, %v4667, %v4669
      %4678 = vst [vmem:[#allocation3 + $0x20] sm:$0xff] %v4670
      %4679 = vst [vmem:[#allocation3 + $0x28] sm:$0xff] %v4671
      %4680 = vst [vmem:[#allocation3 + $0x30] sm:$0xff] %v4672
      %4681 = vst [vmem:[#allocation3 + $0x38] sm:$0xff] %v4673
      %v4682 = vld [vmem:[#allocation2] sm:$0xff]
      %v4683 = vld [vmem:[#allocation2 + $0x8] sm:$0xff]
      %v4684 = vld [vmem:[#allocation2 + $0x10] sm:$0xff]
      %v4685 = vld [vmem:[#allocation2 + $0x18] sm:$0xff]
      %v4686 = vld [vmem:[#allocation2 + $0x20] sm:$0xff]
      %v4687 = vld [vmem:[#allocation2 + $0x28] sm:$0xff]
      %4694 = vrot.lane.b32.xlu0 %v4682, 126
      %v4695 = vpop.permute.xlu0 %4694
      %4696 = vrot.lane.b32.xlu0 %v4683, 126
      %v4697 = vpop.permute.xlu0 %4696
      %4698 = vrot.lane.b32.xlu0 %v4684, 126
      %v4699 = vpop.permute.xlu0 %4698
      %4700 = vrot.lane.b32.xlu0 %v4685, 126
      %v4701 = vpop.permute.xlu0 %4700
      %4702 = vrot.lane.b32.xlu0 %v4686, 126
      %v4703 = vpop.permute.xlu0 %4702
      %4704 = vrot.lane.b32.xlu0 %v4687, 126
      %v4705 = vpop.permute.xlu0 %4704
      %v4706 = vsel %vm1341, %v4695, %v4697
      %v4707 = vsel %vm1341, %v4697, %v4699
      %v4708 = vsel %vm1341, %v4701, %v4703
      %v4709 = vsel %vm1341, %v4703, %v4705
      %v4714 = vsel %vm1330, %v4706, 0.0
      %v4715 = vsel %vm1331, %v4707, 0.0
      %v4716 = vsel %vm1330, %v4708, 0.0
      %v4717 = vsel %vm1331, %v4709, 0.0
      %4718 = vst [vmem:[#allocation3 + $0x40] sm:$0xff] %v4714
      %4719 = vst [vmem:[#allocation3 + $0x48] sm:$0xff] %v4715
      %4720 = vst [vmem:[#allocation3 + $0x50] sm:$0xff] %v4716
      %4721 = vst [vmem:[#allocation3 + $0x58] sm:$0xff] %v4717
      %v4722 = vld [vmem:[#allocation2] sm:$0xff]
      %v4723 = vld [vmem:[#allocation2 + $0x8] sm:$0xff]
      %v4724 = vld [vmem:[#allocation2 + $0x10] sm:$0xff]
      %v4725 = vld [vmem:[#allocation2 + $0x18] sm:$0xff]
      %v4726 = vld [vmem:[#allocation2 + $0x20] sm:$0xff]
      %v4727 = vld [vmem:[#allocation2 + $0x28] sm:$0xff]
      %4734 = vrot.lane.b32.xlu0 %v4722, 112
      %v4735 = vpop.permute.xlu0 %4734
      %4736 = vrot.lane.b32.xlu0 %v4723, 112
      %v4737 = vpop.permute.xlu0 %4736
      %4738 = vrot.lane.b32.xlu0 %v4724, 112
      %v4739 = vpop.permute.xlu0 %4738
      %4740 = vrot.lane.b32.xlu0 %v4725, 112
      %v4741 = vpop.permute.xlu0 %4740
      %4742 = vrot.lane.b32.xlu0 %v4726, 112
      %v4743 = vpop.permute.xlu0 %4742
      %4744 = vrot.lane.b32.xlu0 %v4727, 112
      %v4745 = vpop.permute.xlu0 %4744
      %v4746 = vsel %vm1362, %v4735, %v4737
      %v4747 = vsel %vm1362, %v4737, %v4739
      %v4748 = vsel %vm1362, %v4741, %v4743
      %v4749 = vsel %vm1362, %v4743, %v4745
      %v4754 = vsel %vm1300, %v4746, 0.0
      %v4755 = vsel %vm1301, %v4747, 0.0
      %v4756 = vsel %vm1300, %v4748, 0.0
      %v4757 = vsel %vm1301, %v4749, 0.0
      %4758 = vst [vmem:[#allocation3 + $0x60] sm:$0xff] %v4754
      %4759 = vst [vmem:[#allocation3 + $0x68] sm:$0xff] %v4755
      %4760 = vst [vmem:[#allocation3 + $0x70] sm:$0xff] %v4756
      %4761 = vst [vmem:[#allocation3 + $0x78] sm:$0xff] %v4757
      %v4762 = vld [vmem:[#allocation2] sm:$0xff]
      %v4763 = vld [vmem:[#allocation2 + $0x8] sm:$0xff]
      %v4764 = vld [vmem:[#allocation2 + $0x10] sm:$0xff]
      %v4765 = vld [vmem:[#allocation2 + $0x18] sm:$0xff]
      %v4766 = vld [vmem:[#allocation2 + $0x20] sm:$0xff]
      %v4767 = vld [vmem:[#allocation2 + $0x28] sm:$0xff]
      %4774 = vrot.lane.b32.xlu0 %v4762, 111
      %v4775 = vpop.permute.xlu0 %4774
      %4776 = vrot.lane.b32.xlu0 %v4763, 111
      %v4777 = vpop.permute.xlu0 %4776
      %4778 = vrot.lane.b32.xlu0 %v4764, 111
      %v4779 = vpop.permute.xlu0 %4778
      %4780 = vrot.lane.b32.xlu0 %v4765, 111
      %v4781 = vpop.permute.xlu0 %4780
      %4782 = vrot.lane.b32.xlu0 %v4766, 111
      %v4783 = vpop.permute.xlu0 %4782
      %4784 = vrot.lane.b32.xlu0 %v4767, 111
      %v4785 = vpop.permute.xlu0 %4784
      %v4786 = vsel %vm1383, %v4775, %v4777
      %v4787 = vsel %vm1383, %v4777, %v4779
      %v4788 = vsel %vm1383, %v4781, %v4783
      %v4789 = vsel %vm1383, %v4783, %v4785
      %4794 = vst [vmem:[#allocation3 + $0x80] sm:$0xff] %v4786
      %4795 = vst [vmem:[#allocation3 + $0x88] sm:$0xff] %v4787
      %4796 = vst [vmem:[#allocation3 + $0x90] sm:$0xff] %v4788
      %4797 = vst [vmem:[#allocation3 + $0x98] sm:$0xff] %v4789
      %v4798 = vld [vmem:[#allocation2] sm:$0xff]
      %v4799 = vld [vmem:[#allocation2 + $0x8] sm:$0xff]
      %v4800 = vld [vmem:[#allocation2 + $0x10] sm:$0xff]
      %v4801 = vld [vmem:[#allocation2 + $0x18] sm:$0xff]
      %v4802 = vld [vmem:[#allocation2 + $0x20] sm:$0xff]
      %v4803 = vld [vmem:[#allocation2 + $0x28] sm:$0xff]
      %4810 = vrot.lane.b32.xlu0 %v4798, 110
      %v4811 = vpop.permute.xlu0 %4810
      %4812 = vrot.lane.b32.xlu0 %v4799, 110
      %v4813 = vpop.permute.xlu0 %4812
      %4814 = vrot.lane.b32.xlu0 %v4800, 110
      %v4815 = vpop.permute.xlu0 %4814
      %4816 = vrot.lane.b32.xlu0 %v4801, 110
      %v4817 = vpop.permute.xlu0 %4816
      %4818 = vrot.lane.b32.xlu0 %v4802, 110
      %v4819 = vpop.permute.xlu0 %4818
      %4820 = vrot.lane.b32.xlu0 %v4803, 110
      %v4821 = vpop.permute.xlu0 %4820
      %v4822 = vsel %vm1402, %v4811, %v4813
      %v4823 = vsel %vm1402, %v4813, %v4815
      %v4824 = vsel %vm1402, %v4817, %v4819
      %v4825 = vsel %vm1402, %v4819, %v4821
      %v4830 = vsel %vm1330, %v4822, 0.0
      %v4831 = vsel %vm1331, %v4823, 0.0
      %v4832 = vsel %vm1330, %v4824, 0.0
      %v4833 = vsel %vm1331, %v4825, 0.0
      %4834 = vst [vmem:[#allocation3 + $0xa0] sm:$0xff] %v4830
      %4835 = vst [vmem:[#allocation3 + $0xa8] sm:$0xff] %v4831
      %4836 = vst [vmem:[#allocation3 + $0xb0] sm:$0xff] %v4832
      %4837 = vst [vmem:[#allocation3 + $0xb8] sm:$0xff] %v4833
      %v4838 = vld [vmem:[#allocation2] sm:$0xff]
      %v4839 = vld [vmem:[#allocation2 + $0x8] sm:$0xff]
      %v4840 = vld [vmem:[#allocation2 + $0x10] sm:$0xff]
      %v4841 = vld [vmem:[#allocation2 + $0x18] sm:$0xff]
      %v4842 = vld [vmem:[#allocation2 + $0x20] sm:$0xff]
      %v4843 = vld [vmem:[#allocation2 + $0x28] sm:$0xff]
      %4850 = vrot.lane.b32.xlu0 %v4838, 96
      %v4851 = vpop.permute.xlu0 %4850
      %4852 = vrot.lane.b32.xlu0 %v4839, 96
      %v4853 = vpop.permute.xlu0 %4852
      %4854 = vrot.lane.b32.xlu0 %v4840, 96
      %v4855 = vpop.permute.xlu0 %4854
      %4856 = vrot.lane.b32.xlu0 %v4841, 96
      %v4857 = vpop.permute.xlu0 %4856
      %4858 = vrot.lane.b32.xlu0 %v4842, 96
      %v4859 = vpop.permute.xlu0 %4858
      %4860 = vrot.lane.b32.xlu0 %v4843, 96
      %v4861 = vpop.permute.xlu0 %4860
      %v4862 = vsel %vm1423, %v4851, %v4853
      %v4863 = vsel %vm1423, %v4853, %v4855
      %v4864 = vsel %vm1423, %v4857, %v4859
      %v4865 = vsel %vm1423, %v4859, %v4861
      %v4870 = vsel %vm1300, %v4862, 0.0
      %v4871 = vsel %vm1301, %v4863, 0.0
      %v4872 = vsel %vm1300, %v4864, 0.0
      %v4873 = vsel %vm1301, %v4865, 0.0
      %4874 = vst [vmem:[#allocation3 + $0xc0] sm:$0xff] %v4870
      %4875 = vst [vmem:[#allocation3 + $0xc8] sm:$0xff] %v4871
      %4876 = vst [vmem:[#allocation3 + $0xd0] sm:$0xff] %v4872
      %4877 = vst [vmem:[#allocation3 + $0xd8] sm:$0xff] %v4873
      %v4878 = vld [vmem:[#allocation2] sm:$0xff]
      %v4879 = vld [vmem:[#allocation2 + $0x8] sm:$0xff]
      %v4880 = vld [vmem:[#allocation2 + $0x10] sm:$0xff]
      %v4881 = vld [vmem:[#allocation2 + $0x18] sm:$0xff]
      %v4882 = vld [vmem:[#allocation2 + $0x20] sm:$0xff]
      %v4883 = vld [vmem:[#allocation2 + $0x28] sm:$0xff]
      %4890 = vrot.lane.b32.xlu0 %v4878, 95
      %v4891 = vpop.permute.xlu0 %4890
      %4892 = vrot.lane.b32.xlu0 %v4879, 95
      %v4893 = vpop.permute.xlu0 %4892
      %4894 = vrot.lane.b32.xlu0 %v4880, 95
      %v4895 = vpop.permute.xlu0 %4894
      %4896 = vrot.lane.b32.xlu0 %v4881, 95
      %v4897 = vpop.permute.xlu0 %4896
      %4898 = vrot.lane.b32.xlu0 %v4882, 95
      %v4899 = vpop.permute.xlu0 %4898
      %4900 = vrot.lane.b32.xlu0 %v4883, 95
      %v4901 = vpop.permute.xlu0 %4900
      %v4902 = vsel %vm1444, %v4891, %v4893
      %v4903 = vsel %vm1444, %v4893, %v4895
      %v4904 = vsel %vm1444, %v4897, %v4899
      %v4905 = vsel %vm1444, %v4899, %v4901
      %4910 = vst [vmem:[#allocation3 + $0xe0] sm:$0xff] %v4902
      %4911 = vst [vmem:[#allocation3 + $0xe8] sm:$0xff] %v4903
      %4912 = vst [vmem:[#allocation3 + $0xf0] sm:$0xff] %v4904
      %4913 = vst [vmem:[#allocation3 + $0xf8] sm:$0xff] %v4905
      %v4914 = vld [vmem:[#allocation2] sm:$0xff]
      %v4915 = vld [vmem:[#allocation2 + $0x8] sm:$0xff]
      %v4916 = vld [vmem:[#allocation2 + $0x10] sm:$0xff]
      %v4917 = vld [vmem:[#allocation2 + $0x18] sm:$0xff]
      %v4918 = vld [vmem:[#allocation2 + $0x20] sm:$0xff]
      %v4919 = vld [vmem:[#allocation2 + $0x28] sm:$0xff]
      %4926 = vrot.lane.b32.xlu0 %v4914, 94
      %v4927 = vpop.permute.xlu0 %4926
      %4928 = vrot.lane.b32.xlu0 %v4915, 94
      %v4929 = vpop.permute.xlu0 %4928
      %4930 = vrot.lane.b32.xlu0 %v4916, 94
      %v4931 = vpop.permute.xlu0 %4930
      %4932 = vrot.lane.b32.xlu0 %v4917, 94
      %v4933 = vpop.permute.xlu0 %4932
      %4934 = vrot.lane.b32.xlu0 %v4918, 94
      %v4935 = vpop.permute.xlu0 %4934
      %4936 = vrot.lane.b32.xlu0 %v4919, 94
      %v4937 = vpop.permute.xlu0 %4936
      %v4938 = vsel %vm1463, %v4927, %v4929
      %v4939 = vsel %vm1463, %v4929, %v4931
      %v4940 = vsel %vm1463, %v4933, %v4935
      %v4941 = vsel %vm1463, %v4935, %v4937
      %v4946 = vsel %vm1330, %v4938, 0.0
      %v4947 = vsel %vm1331, %v4939, 0.0
      %v4948 = vsel %vm1330, %v4940, 0.0
      %v4949 = vsel %vm1331, %v4941, 0.0
      %4950 = vst [vmem:[#allocation3 + $0x100] sm:$0xff] %v4946
      %4951 = vst [vmem:[#allocation3 + $0x108] sm:$0xff] %v4947
      %4952 = vst [vmem:[#allocation3 + $0x110] sm:$0xff] %v4948
      %4953 = vst [vmem:[#allocation3 + $0x118] sm:$0xff] %v4949
      %v4954 = vld [vmem:[#allocation3] sm:$0xff]
      %v4955 = vld [vmem:[#allocation3 + $0x8] sm:$0xff]
      %v4956 = vld [vmem:[#allocation3 + $0x10] sm:$0xff]
      %v4957 = vld [vmem:[#allocation3 + $0x18] sm:$0xff]
      %v4958 = vld [vmem:[#allocation3 + $0x20] sm:$0xff]
      %v4959 = vld [vmem:[#allocation3 + $0x28] sm:$0xff]
      %v4960 = vld [vmem:[#allocation3 + $0x30] sm:$0xff]
      %v4961 = vld [vmem:[#allocation3 + $0x38] sm:$0xff]
      %v4962 = vld [vmem:[#allocation3 + $0x40] sm:$0xff]
      %v4963 = vld [vmem:[#allocation3 + $0x48] sm:$0xff]
      %v4964 = vld [vmem:[#allocation3 + $0x50] sm:$0xff]
      %v4965 = vld [vmem:[#allocation3 + $0x58] sm:$0xff]
      %v4966 = vld [vmem:[#allocation3 + $0x60] sm:$0xff]
      %v4967 = vld [vmem:[#allocation3 + $0x68] sm:$0xff]
      %v4968 = vld [vmem:[#allocation3 + $0x70] sm:$0xff]
      %v4969 = vld [vmem:[#allocation3 + $0x78] sm:$0xff]
      %v4970 = vld [vmem:[#allocation3 + $0x80] sm:$0xff]
      %v4971 = vld [vmem:[#allocation3 + $0x88] sm:$0xff]
      %v4972 = vld [vmem:[#allocation3 + $0x90] sm:$0xff]
      %v4973 = vld [vmem:[#allocation3 + $0x98] sm:$0xff]
      %v4974 = vld [vmem:[#allocation3 + $0xa0] sm:$0xff]
      %v4975 = vld [vmem:[#allocation3 + $0xa8] sm:$0xff]
      %v4976 = vld [vmem:[#allocation3 + $0xb0] sm:$0xff]
      %v4977 = vld [vmem:[#allocation3 + $0xb8] sm:$0xff]
      %v4978 = vld [vmem:[#allocation3 + $0xc0] sm:$0xff]
      %v4979 = vld [vmem:[#allocation3 + $0xc8] sm:$0xff]
      %v4980 = vld [vmem:[#allocation3 + $0xd0] sm:$0xff]
      %v4981 = vld [vmem:[#allocation3 + $0xd8] sm:$0xff]
      %v4982 = vld [vmem:[#allocation3 + $0xe0] sm:$0xff]
      %v4983 = vld [vmem:[#allocation3 + $0xe8] sm:$0xff]
      %v4984 = vld [vmem:[#allocation3 + $0xf0] sm:$0xff]
      %v4985 = vld [vmem:[#allocation3 + $0xf8] sm:$0xff]
      %v4986 = vld [vmem:[#allocation3 + $0x100] sm:$0xff]
      %v4987 = vld [vmem:[#allocation3 + $0x108] sm:$0xff]
      %v4988 = vld [vmem:[#allocation3 + $0x110] sm:$0xff]
      %v4989 = vld [vmem:[#allocation3 + $0x118] sm:$0xff]
      %v4990 = vpack.c.bf16 %v4956, %v4954
      %v4991 = vpack.c.bf16 %v4957, %v4955
      %v4992 = vpack.c.bf16 %v4960, %v4958
      %v4993 = vpack.c.bf16 %v4961, %v4959
      %v4994 = vpack.c.bf16 %v4964, %v4962
      %v4995 = vpack.c.bf16 %v4965, %v4963
      %v4996 = vpack.c.bf16 %v4968, %v4966
      %v4997 = vpack.c.bf16 %v4969, %v4967
      %v4998 = vpack.c.bf16 %v4972, %v4970
      %v4999 = vpack.c.bf16 %v4973, %v4971
      %v5000 = vpack.c.bf16 %v4976, %v4974
      %v5001 = vpack.c.bf16 %v4977, %v4975
      %v5002 = vpack.c.bf16 %v4980, %v4978
      %v5003 = vpack.c.bf16 %v4981, %v4979
      %v5004 = vpack.c.bf16 %v4984, %v4982
      %v5005 = vpack.c.bf16 %v4985, %v4983
      %v5006 = vpack.c.bf16 %v4988, %v4986
      %v5007 = vpack.c.bf16 %v4989, %v4987
      %v5008 = vld [vmem:[%s69] sm:$0xff]
      %5009 = vst.msk [vmem:[#allocation2] sm:$0xff] %vm1278, 0.0
      %5012 = vrot.lane.b32.xlu0 %v4602, 17
      %v5013 = vpop.permute.xlu0 %5012
      %5014 = vrot.lane.b32.xlu0 %v4603, 17
      %v5015 = vpop.permute.xlu0 %5014
      %v5016 = vsel %vm1278, %v5013, %v5015
      %5020 = vst.msk [vmem:[#allocation2] sm:$0xff] %vm1290, %v5013
      %5021 = vst [vmem:[#allocation2 + $0x8] sm:$0xff] %v5016
      %5022 = vst.msk [vmem:[#allocation2 + $0x10] sm:$0xff] %vm1278, %v5015
      %5023 = vst.msk [vmem:[#allocation2 + $0x10] sm:$0xff] %vm1294, 0.0
      %v5024 = vld [vmem:[#allocation2] sm:$0xff]
      %v5025 = vld [vmem:[#allocation2 + $0x8] sm:$0xff]
      %v5026 = vsel %vm1300, %v5024, 0.0
      %v5027 = vsel %vm1301, %v5025, 0.0
      %5028 = vst [vmem:[#allocation3] sm:$0xff] %v5026
      %5029 = vst [vmem:[#allocation3 + $0x8] sm:$0xff] %v5027
      %v5030 = vld [vmem:[#allocation2] sm:$0xff]
      %v5031 = vld [vmem:[#allocation2 + $0x8] sm:$0xff]
      %v5032 = vld [vmem:[#allocation2 + $0x10] sm:$0xff]
      %5036 = vrot.lane.b32.xlu0 %v5030, 127
      %v5037 = vpop.permute.xlu0 %5036
      %5038 = vrot.lane.b32.xlu0 %v5031, 127
      %v5039 = vpop.permute.xlu0 %5038
      %5040 = vrot.lane.b32.xlu0 %v5032, 127
      %v5041 = vpop.permute.xlu0 %5040
      %v5042 = vsel %vm1318, %v5037, %v5039
      %v5043 = vsel %vm1318, %v5039, %v5041
      %5046 = vst [vmem:[#allocation3 + $0x10] sm:$0xff] %v5042
      %5047 = vst [vmem:[#allocation3 + $0x18] sm:$0xff] %v5043
      %v5048 = vld [vmem:[#allocation2] sm:$0xff]
      %v5049 = vld [vmem:[#allocation2 + $0x8] sm:$0xff]
      %v5050 = vld [vmem:[#allocation2 + $0x10] sm:$0xff]
      %5054 = vrot.lane.b32.xlu0 %v5048, 126
      %v5055 = vpop.permute.xlu0 %5054
      %5056 = vrot.lane.b32.xlu0 %v5049, 126
      %v5057 = vpop.permute.xlu0 %5056
      %5058 = vrot.lane.b32.xlu0 %v5050, 126
      %v5059 = vpop.permute.xlu0 %5058
      %v5060 = vsel %vm1341, %v5055, %v5057
      %v5061 = vsel %vm1341, %v5057, %v5059
      %v5064 = vsel %vm1330, %v5060, 0.0
      %v5065 = vsel %vm1331, %v5061, 0.0
      %5066 = vst [vmem:[#allocation3 + $0x20] sm:$0xff] %v5064
      %5067 = vst [vmem:[#allocation3 + $0x28] sm:$0xff] %v5065
      %v5068 = vld [vmem:[#allocation2] sm:$0xff]
      %v5069 = vld [vmem:[#allocation2 + $0x8] sm:$0xff]
      %v5070 = vld [vmem:[#allocation2 + $0x10] sm:$0xff]
      %5074 = vrot.lane.b32.xlu0 %v5068, 112
      %v5075 = vpop.permute.xlu0 %5074
      %5076 = vrot.lane.b32.xlu0 %v5069, 112
      %v5077 = vpop.permute.xlu0 %5076
      %5078 = vrot.lane.b32.xlu0 %v5070, 112
      %v5079 = vpop.permute.xlu0 %5078
      %v5080 = vsel %vm1362, %v5075, %v5077
      %v5081 = vsel %vm1362, %v5077, %v5079
      %v5084 = vsel %vm1300, %v5080, 0.0
      %v5085 = vsel %vm1301, %v5081, 0.0
      %5086 = vst [vmem:[#allocation3 + $0x30] sm:$0xff] %v5084
      %5087 = vst [vmem:[#allocation3 + $0x38] sm:$0xff] %v5085
      %v5088 = vld [vmem:[#allocation2] sm:$0xff]
      %v5089 = vld [vmem:[#allocation2 + $0x8] sm:$0xff]
      %v5090 = vld [vmem:[#allocation2 + $0x10] sm:$0xff]
      %5094 = vrot.lane.b32.xlu0 %v5088, 111
      %v5095 = vpop.permute.xlu0 %5094
      %5096 = vrot.lane.b32.xlu0 %v5089, 111
      %v5097 = vpop.permute.xlu0 %5096
      %5098 = vrot.lane.b32.xlu0 %v5090, 111
      %v5099 = vpop.permute.xlu0 %5098
      %v5100 = vsel %vm1383, %v5095, %v5097
      %v5101 = vsel %vm1383, %v5097, %v5099
      %5104 = vst [vmem:[#allocation3 + $0x40] sm:$0xff] %v5100
      %5105 = vst [vmem:[#allocation3 + $0x48] sm:$0xff] %v5101
      %v5106 = vld [vmem:[#allocation2] sm:$0xff]
      %v5107 = vld [vmem:[#allocation2 + $0x8] sm:$0xff]
      %v5108 = vld [vmem:[#allocation2 + $0x10] sm:$0xff]
      %5112 = vrot.lane.b32.xlu0 %v5106, 110
      %v5113 = vpop.permute.xlu0 %5112
      %5114 = vrot.lane.b32.xlu0 %v5107, 110
      %v5115 = vpop.permute.xlu0 %5114
      %5116 = vrot.lane.b32.xlu0 %v5108, 110
      %v5117 = vpop.permute.xlu0 %5116
      %v5118 = vsel %vm1402, %v5113, %v5115
      %v5119 = vsel %vm1402, %v5115, %v5117
      %v5122 = vsel %vm1330, %v5118, 0.0
      %v5123 = vsel %vm1331, %v5119, 0.0
      %5124 = vst [vmem:[#allocation3 + $0x50] sm:$0xff] %v5122
      %5125 = vst [vmem:[#allocation3 + $0x58] sm:$0xff] %v5123
      %v5126 = vld [vmem:[#allocation2] sm:$0xff]
      %v5127 = vld [vmem:[#allocation2 + $0x8] sm:$0xff]
      %v5128 = vld [vmem:[#allocation2 + $0x10] sm:$0xff]
      %5132 = vrot.lane.b32.xlu0 %v5126, 96
      %v5133 = vpop.permute.xlu0 %5132
      %5134 = vrot.lane.b32.xlu0 %v5127, 96
      %v5135 = vpop.permute.xlu0 %5134
      %5136 = vrot.lane.b32.xlu0 %v5128, 96
      %v5137 = vpop.permute.xlu0 %5136
      %v5138 = vsel %vm1423, %v5133, %v5135
      %v5139 = vsel %vm1423, %v5135, %v5137
      %v5142 = vsel %vm1300, %v5138, 0.0
      %v5143 = vsel %vm1301, %v5139, 0.0
      %5144 = vst [vmem:[#allocation3 + $0x60] sm:$0xff] %v5142
      %5145 = vst [vmem:[#allocation3 + $0x68] sm:$0xff] %v5143
      %v5146 = vld [vmem:[#allocation2] sm:$0xff]
      %v5147 = vld [vmem:[#allocation2 + $0x8] sm:$0xff]
      %v5148 = vld [vmem:[#allocation2 + $0x10] sm:$0xff]
      %5152 = vrot.lane.b32.xlu0 %v5146, 95
      %v5153 = vpop.permute.xlu0 %5152
      %5154 = vrot.lane.b32.xlu0 %v5147, 95
      %v5155 = vpop.permute.xlu0 %5154
      %5156 = vrot.lane.b32.xlu0 %v5148, 95
      %v5157 = vpop.permute.xlu0 %5156
      %v5158 = vsel %vm1444, %v5153, %v5155
      %v5159 = vsel %vm1444, %v5155, %v5157
      %5162 = vst [vmem:[#allocation3 + $0x70] sm:$0xff] %v5158
      %5163 = vst [vmem:[#allocation3 + $0x78] sm:$0xff] %v5159
      %v5164 = vld [vmem:[#allocation2] sm:$0xff]
      %v5165 = vld [vmem:[#allocation2 + $0x8] sm:$0xff]
      %v5166 = vld [vmem:[#allocation2 + $0x10] sm:$0xff]
      %5170 = vrot.lane.b32.xlu0 %v5164, 94
      %v5171 = vpop.permute.xlu0 %5170
      %5172 = vrot.lane.b32.xlu0 %v5165, 94
      %v5173 = vpop.permute.xlu0 %5172
      %5174 = vrot.lane.b32.xlu0 %v5166, 94
      %v5175 = vpop.permute.xlu0 %5174
      %v5176 = vsel %vm1463, %v5171, %v5173
      %v5177 = vsel %vm1463, %v5173, %v5175
      %v5180 = vsel %vm1330, %v5176, 0.0
      %v5181 = vsel %vm1331, %v5177, 0.0
      %5182 = vst [vmem:[#allocation3 + $0x80] sm:$0xff] %v5180
      %5183 = vst [vmem:[#allocation3 + $0x88] sm:$0xff] %v5181
      %v5184 = vld [vmem:[#allocation3] sm:$0xff]
      %v5185 = vld [vmem:[#allocation3 + $0x8] sm:$0xff]
      %v5186 = vld [vmem:[#allocation3 + $0x10] sm:$0xff]
      %v5187 = vld [vmem:[#allocation3 + $0x18] sm:$0xff]
      %v5188 = vld [vmem:[#allocation3 + $0x20] sm:$0xff]
      %v5189 = vld [vmem:[#allocation3 + $0x28] sm:$0xff]
      %v5190 = vld [vmem:[#allocation3 + $0x30] sm:$0xff]
      %v5191 = vld [vmem:[#allocation3 + $0x38] sm:$0xff]
      %v5192 = vld [vmem:[#allocation3 + $0x40] sm:$0xff]
      %v5193 = vld [vmem:[#allocation3 + $0x48] sm:$0xff]
      %v5194 = vld [vmem:[#allocation3 + $0x50] sm:$0xff]
      %v5195 = vld [vmem:[#allocation3 + $0x58] sm:$0xff]
      %v5196 = vld [vmem:[#allocation3 + $0x60] sm:$0xff]
      %v5197 = vld [vmem:[#allocation3 + $0x68] sm:$0xff]
      %v5198 = vld [vmem:[#allocation3 + $0x70] sm:$0xff]
      %v5199 = vld [vmem:[#allocation3 + $0x78] sm:$0xff]
      %v5200 = vld [vmem:[#allocation3 + $0x80] sm:$0xff]
      %v5201 = vld [vmem:[#allocation3 + $0x88] sm:$0xff]
      %v5202 = vpack.c.bf16 %v5186, %v5184
      %v5203 = vpack.c.bf16 %v5187, %v5185
      %v5204 = vpack.c.bf16 %v5190, %v5188
      %v5205 = vpack.c.bf16 %v5191, %v5189
      %v5206 = vpack.c.bf16 %v5194, %v5192
      %v5207 = vpack.c.bf16 %v5195, %v5193
      %v5208 = vpack.c.bf16 %v5198, %v5196
      %v5209 = vpack.c.bf16 %v5199, %v5197
      %v5210 = vpack.c.bf16 %v5200, %v5200
      %v5211 = vpack.c.bf16 %v5201, %v5201
      %v5212 = vld [vmem:[%s71] sm:$0xf]
      %v5214 = vsel %vm1507, %v5212, 0
      %v5217 = vsel %vm1511, %v5210, 0
      %v5220 = vsel %vm1511, %v5211, 0
      %5222 = vmatprep.subr.bf16.mxu0 0
      %5223 = vmatpush1.bf16.msra.mxu0 0
      %5224 = vmatprep.subr.bf16.mxu0 0
      %5225 = vmatpush1.bf16.msra.mxu0 0
      %5226 = vmatprep.subr.bf16.mxu0 0
      %5227 = vmatpush1.bf16.msra.mxu0 0
      %5228 = vmatprep.subr.bf16.mxu0 %v5220
      %5229 = vmatpush1.bf16.msra.mxu0 %v5217
      %5230 = vmatprep.subr.bf16.mxu0 %v5209
      %5231 = vmatpush1.bf16.msra.mxu0 %v5208
      %5232 = vmatprep.subr.bf16.mxu0 %v5207
      %5233 = vmatpush1.bf16.msra.mxu0 %v5206
      %5234 = vmatprep.subr.bf16.mxu0 %v5205
      %5235 = vmatpush1.bf16.msra.mxu0 %v5204
      %5236 = vmatprep.subr.bf16.mxu0 %v5203
      %5237 = vmatpush1.bf16.msra.mxu0 %v5202
      %5238 = vmatprep.subr.bf16.mxu0 0
      %5239 = vmatpush2.bf16.msra.mxu0 0
      %5240 = vmatprep.subr.bf16.mxu0 0
      %5241 = vmatpush2.bf16.msra.mxu0 0
      %5242 = vmatprep.subr.bf16.mxu0 0
      %5243 = vmatpush2.bf16.msra.mxu0 0
      %5244 = vmatprep.subr.bf16.mxu0 0
      %5245 = vmatpush2.bf16.msra.mxu0 0
      %5246 = vmatprep.subr.bf16.mxu0 0
      %5247 = vmatpush2.bf16.msra.mxu0 0
      %5248 = vmatprep.subr.bf16.mxu0 0
      %5249 = vmatpush2.bf16.msra.mxu0 0
      %5250 = vmatprep.subr.bf16.mxu0 0
      %5251 = vmatpush2.bf16.msra.mxu0 0
      %5252 = vmatprep.subr.bf16.mxu0 0
      %5253 = vmatpush2.bf16.msra.mxu0 0
      %5254 = vmatprep.mubr.bf16.mxu0 0
      %5255 = vmatmul.mubr.bf16.gmra.mxu0 %v5214
      %v5256 = vpop.f32.mrf.mxu0
      %v5257 = vadd.f32 0.0, %v5256
      %v5258 = vpop.f32.mrf.mxu0
      %v5259 = vadd.f32 0.0, %v5258
      %v5260 = vpop.f32.mrf.mxu0
      %v5261 = vpop.f32.mrf.mxu0
      %5262 = vdwg.mxu0
      %v5264 = vunpack.c.l.b16 %v5008
      %v5265 = vunpack.c.h.b16 %v5008
      %v5266 = vpack.c.b16 %v5264, %v5264
      %v5267 = vpack.c.b16 %v5265, %v5265
      %v5270 = vsel %vm2376, %v5267, 0
      %5272 = vmatprep.subr.bf16.mxu0 %v5005
      %5273 = vmatpush1.bf16.msra.mxu0 %v5004
      %5274 = vmatprep.subr.bf16.mxu0 %v5003
      %5275 = vmatpush1.bf16.msra.mxu0 %v5002
      %5276 = vmatprep.subr.bf16.mxu0 %v5001
      %5277 = vmatpush1.bf16.msra.mxu0 %v5000
      %5278 = vmatprep.subr.bf16.mxu0 %v4999
      %5279 = vmatpush1.bf16.msra.mxu0 %v4998
      %5280 = vmatprep.subr.bf16.mxu0 %v4997
      %5281 = vmatpush1.bf16.msra.mxu0 %v4996
      %5282 = vmatprep.subr.bf16.mxu0 %v4995
      %5283 = vmatpush1.bf16.msra.mxu0 %v4994
      %5284 = vmatprep.subr.bf16.mxu0 %v4993
      %5285 = vmatpush1.bf16.msra.mxu0 %v4992
      %5286 = vmatprep.subr.bf16.mxu0 %v4991
      %5287 = vmatpush1.bf16.msra.mxu0 %v4990
      %5288 = vmatprep.subr.bf16.mxu0 0
      %5289 = vmatpush2.bf16.msra.mxu0 0
      %5290 = vmatprep.subr.bf16.mxu0 0
      %5291 = vmatpush2.bf16.msra.mxu0 0
      %5292 = vmatprep.subr.bf16.mxu0 0
      %5293 = vmatpush2.bf16.msra.mxu0 0
      %5294 = vmatprep.subr.bf16.mxu0 0
      %5295 = vmatpush2.bf16.msra.mxu0 0
      %5296 = vmatprep.subr.bf16.mxu0 0
      %5297 = vmatpush2.bf16.msra.mxu0 0
      %5298 = vmatprep.subr.bf16.mxu0 0
      %5299 = vmatpush2.bf16.msra.mxu0 0
      %5300 = vmatprep.subr.bf16.mxu0 0
      %5301 = vmatpush2.bf16.msra.mxu0 0
      %5302 = vmatprep.subr.bf16.mxu0 %v5007
      %5303 = vmatpush2.bf16.msra.mxu0 %v5006
      %5304 = vmatprep.mubr.bf16.mxu0 %v5270
      %5305 = vmatmul.mubr.bf16.gmra.mxu0 %v5266
      %v5306 = vpop.f32.mrf.mxu0
      %v5307 = vadd.f32 %v5257, %v5306
      %v5308 = vpop.f32.mrf.mxu0
      %v5309 = vadd.f32 %v5259, %v5308
      %v5310 = vpop.f32.mrf.mxu0
      %v5311 = vpop.f32.mrf.mxu0
      %5312 = vdwg.mxu0
      %v5313 = vld [vmem:[%s73] sm:$0xff]
      %5315 = vset.pattern.permute.xlu0 0
      %5316 = vperm.xlu0 %5315, %v5313
      %v5317 = vpop.permute.xlu0 %5316
      %v5319 = vadd.f32 %v5307, %v5317
      %v5320 = vadd.f32 %v5309, %v5317
      %v5321 = vmax.f32 %v5319, 0.0
      %v5322 = vmax.f32 %v5320, 0.0
      %5323 = vst.msk [vmem:[#allocation2] sm:$0xff] %vm1278, 0.0
      %5326 = vrot.lane.b32.xlu0 %v5321, 17
      %v5327 = vpop.permute.xlu0 %5326
      %5328 = vrot.lane.b32.xlu0 %v5322, 17
      %v5329 = vpop.permute.xlu0 %5328
      %v5330 = vsel %vm1278, %v5327, %v5329
      %5334 = vst.msk [vmem:[#allocation2] sm:$0xff] %vm1290, %v5327
      %5335 = vst [vmem:[#allocation2 + $0x8] sm:$0xff] %v5330
      %5336 = vst.msk [vmem:[#allocation2 + $0x10] sm:$0xff] %vm1278, %v5329
      %5337 = vst.msk [vmem:[#allocation2 + $0x10] sm:$0xff] %vm1294, 0.0
      %v5338 = vld [vmem:[#allocation2] sm:$0xff]
      %v5339 = vld [vmem:[#allocation2 + $0x8] sm:$0xff]
      %v5340 = vsel %vm1300, %v5338, 0.0
      %v5341 = vsel %vm1301, %v5339, 0.0
      %5342 = vst [vmem:[#allocation3] sm:$0xff] %v5340
      %5343 = vst [vmem:[#allocation3 + $0x8] sm:$0xff] %v5341
      %v5344 = vld [vmem:[#allocation2] sm:$0xff]
      %v5345 = vld [vmem:[#allocation2 + $0x8] sm:$0xff]
      %v5346 = vld [vmem:[#allocation2 + $0x10] sm:$0xff]
      %5350 = vrot.lane.b32.xlu0 %v5344, 127
      %v5351 = vpop.permute.xlu0 %5350
      %5352 = vrot.lane.b32.xlu0 %v5345, 127
      %v5353 = vpop.permute.xlu0 %5352
      %5354 = vrot.lane.b32.xlu0 %v5346, 127
      %v5355 = vpop.permute.xlu0 %5354
      %v5356 = vsel %vm1318, %v5351, %v5353
      %v5357 = vsel %vm1318, %v5353, %v5355
      %5360 = vst [vmem:[#allocation3 + $0x10] sm:$0xff] %v5356
      %5361 = vst [vmem:[#allocation3 + $0x18] sm:$0xff] %v5357
      %v5362 = vld [vmem:[#allocation2] sm:$0xff]
      %v5363 = vld [vmem:[#allocation2 + $0x8] sm:$0xff]
      %v5364 = vld [vmem:[#allocation2 + $0x10] sm:$0xff]
      %5368 = vrot.lane.b32.xlu0 %v5362, 126
      %v5369 = vpop.permute.xlu0 %5368
      %5370 = vrot.lane.b32.xlu0 %v5363, 126
      %v5371 = vpop.permute.xlu0 %5370
      %5372 = vrot.lane.b32.xlu0 %v5364, 126
      %v5373 = vpop.permute.xlu0 %5372
      %v5374 = vsel %vm1341, %v5369, %v5371
      %v5375 = vsel %vm1341, %v5371, %v5373
      %v5378 = vsel %vm1330, %v5374, 0.0
      %v5379 = vsel %vm1331, %v5375, 0.0
      %5380 = vst [vmem:[#allocation3 + $0x20] sm:$0xff] %v5378
      %5381 = vst [vmem:[#allocation3 + $0x28] sm:$0xff] %v5379
      %v5382 = vld [vmem:[#allocation2] sm:$0xff]
      %v5383 = vld [vmem:[#allocation2 + $0x8] sm:$0xff]
      %v5384 = vld [vmem:[#allocation2 + $0x10] sm:$0xff]
      %5388 = vrot.lane.b32.xlu0 %v5382, 112
      %v5389 = vpop.permute.xlu0 %5388
      %5390 = vrot.lane.b32.xlu0 %v5383, 112
      %v5391 = vpop.permute.xlu0 %5390
      %5392 = vrot.lane.b32.xlu0 %v5384, 112
      %v5393 = vpop.permute.xlu0 %5392
      %v5394 = vsel %vm1362, %v5389, %v5391
      %v5395 = vsel %vm1362, %v5391, %v5393
      %v5398 = vsel %vm1300, %v5394, 0.0
      %v5399 = vsel %vm1301, %v5395, 0.0
      %5400 = vst [vmem:[#allocation3 + $0x30] sm:$0xff] %v5398
      %5401 = vst [vmem:[#allocation3 + $0x38] sm:$0xff] %v5399
      %v5402 = vld [vmem:[#allocation2] sm:$0xff]
      %v5403 = vld [vmem:[#allocation2 + $0x8] sm:$0xff]
      %v5404 = vld [vmem:[#allocation2 + $0x10] sm:$0xff]
      %5408 = vrot.lane.b32.xlu0 %v5402, 111
      %v5409 = vpop.permute.xlu0 %5408
      %5410 = vrot.lane.b32.xlu0 %v5403, 111
      %v5411 = vpop.permute.xlu0 %5410
      %5412 = vrot.lane.b32.xlu0 %v5404, 111
      %v5413 = vpop.permute.xlu0 %5412
      %v5414 = vsel %vm1383, %v5409, %v5411
      %v5415 = vsel %vm1383, %v5411, %v5413
      %5418 = vst [vmem:[#allocation3 + $0x40] sm:$0xff] %v5414
      %5419 = vst [vmem:[#allocation3 + $0x48] sm:$0xff] %v5415
      %v5420 = vld [vmem:[#allocation2] sm:$0xff]
      %v5421 = vld [vmem:[#allocation2 + $0x8] sm:$0xff]
      %v5422 = vld [vmem:[#allocation2 + $0x10] sm:$0xff]
      %5426 = vrot.lane.b32.xlu0 %v5420, 110
      %v5427 = vpop.permute.xlu0 %5426
      %5428 = vrot.lane.b32.xlu0 %v5421, 110
      %v5429 = vpop.permute.xlu0 %5428
      %5430 = vrot.lane.b32.xlu0 %v5422, 110
      %v5431 = vpop.permute.xlu0 %5430
      %v5432 = vsel %vm1402, %v5427, %v5429
      %v5433 = vsel %vm1402, %v5429, %v5431
      %v5436 = vsel %vm1330, %v5432, 0.0
      %v5437 = vsel %vm1331, %v5433, 0.0
      %5438 = vst [vmem:[#allocation3 + $0x50] sm:$0xff] %v5436
      %5439 = vst [vmem:[#allocation3 + $0x58] sm:$0xff] %v5437
      %v5440 = vld [vmem:[#allocation2] sm:$0xff]
      %v5441 = vld [vmem:[#allocation2 + $0x8] sm:$0xff]
      %v5442 = vld [vmem:[#allocation2 + $0x10] sm:$0xff]
      %5446 = vrot.lane.b32.xlu0 %v5440, 96
      %v5447 = vpop.permute.xlu0 %5446
      %5448 = vrot.lane.b32.xlu0 %v5441, 96
      %v5449 = vpop.permute.xlu0 %5448
      %5450 = vrot.lane.b32.xlu0 %v5442, 96
      %v5451 = vpop.permute.xlu0 %5450
      %v5452 = vsel %vm1423, %v5447, %v5449
      %v5453 = vsel %vm1423, %v5449, %v5451
      %v5456 = vsel %vm1300, %v5452, 0.0
      %v5457 = vsel %vm1301, %v5453, 0.0
      %5458 = vst [vmem:[#allocation3 + $0x60] sm:$0xff] %v5456
      %5459 = vst [vmem:[#allocation3 + $0x68] sm:$0xff] %v5457
      %v5460 = vld [vmem:[#allocation2] sm:$0xff]
      %v5461 = vld [vmem:[#allocation2 + $0x8] sm:$0xff]
      %v5462 = vld [vmem:[#allocation2 + $0x10] sm:$0xff]
      %5466 = vrot.lane.b32.xlu0 %v5460, 95
      %v5467 = vpop.permute.xlu0 %5466
      %5468 = vrot.lane.b32.xlu0 %v5461, 95
      %v5469 = vpop.permute.xlu0 %5468
      %5470 = vrot.lane.b32.xlu0 %v5462, 95
      %v5471 = vpop.permute.xlu0 %5470
      %v5472 = vsel %vm1444, %v5467, %v5469
      %v5473 = vsel %vm1444, %v5469, %v5471
      %5476 = vst [vmem:[#allocation3 + $0x70] sm:$0xff] %v5472
      %5477 = vst [vmem:[#allocation3 + $0x78] sm:$0xff] %v5473
      %v5478 = vld [vmem:[#allocation2] sm:$0xff]
      %v5479 = vld [vmem:[#allocation2 + $0x8] sm:$0xff]
      %v5480 = vld [vmem:[#allocation2 + $0x10] sm:$0xff]
      %5484 = vrot.lane.b32.xlu0 %v5478, 94
      %v5485 = vpop.permute.xlu0 %5484
      %5486 = vrot.lane.b32.xlu0 %v5479, 94
      %v5487 = vpop.permute.xlu0 %5486
      %5488 = vrot.lane.b32.xlu0 %v5480, 94
      %v5489 = vpop.permute.xlu0 %5488
      %v5490 = vsel %vm1463, %v5485, %v5487
      %v5491 = vsel %vm1463, %v5487, %v5489
      %v5494 = vsel %vm1330, %v5490, 0.0
      %v5495 = vsel %vm1331, %v5491, 0.0
      %5496 = vst [vmem:[#allocation3 + $0x80] sm:$0xff] %v5494
      %5497 = vst [vmem:[#allocation3 + $0x88] sm:$0xff] %v5495
      %v5498 = vld [vmem:[#allocation3] sm:$0xff]
      %v5499 = vld [vmem:[#allocation3 + $0x8] sm:$0xff]
      %v5500 = vld [vmem:[#allocation3 + $0x10] sm:$0xff]
      %v5501 = vld [vmem:[#allocation3 + $0x18] sm:$0xff]
      %v5502 = vld [vmem:[#allocation3 + $0x20] sm:$0xff]
      %v5503 = vld [vmem:[#allocation3 + $0x28] sm:$0xff]
      %v5504 = vld [vmem:[#allocation3 + $0x30] sm:$0xff]
      %v5505 = vld [vmem:[#allocation3 + $0x38] sm:$0xff]
      %v5506 = vld [vmem:[#allocation3 + $0x40] sm:$0xff]
      %v5507 = vld [vmem:[#allocation3 + $0x48] sm:$0xff]
      %v5508 = vld [vmem:[#allocation3 + $0x50] sm:$0xff]
      %v5509 = vld [vmem:[#allocation3 + $0x58] sm:$0xff]
      %v5510 = vld [vmem:[#allocation3 + $0x60] sm:$0xff]
      %v5511 = vld [vmem:[#allocation3 + $0x68] sm:$0xff]
      %v5512 = vld [vmem:[#allocation3 + $0x70] sm:$0xff]
      %v5513 = vld [vmem:[#allocation3 + $0x78] sm:$0xff]
      %v5514 = vld [vmem:[#allocation3 + $0x80] sm:$0xff]
      %v5515 = vld [vmem:[#allocation3 + $0x88] sm:$0xff]
      %v5516 = vpack.c.bf16 %v5500, %v5498
      %v5517 = vpack.c.bf16 %v5501, %v5499
      %v5518 = vpack.c.bf16 %v5504, %v5502
      %v5519 = vpack.c.bf16 %v5505, %v5503
      %v5520 = vpack.c.bf16 %v5508, %v5506
      %v5521 = vpack.c.bf16 %v5509, %v5507
      %v5522 = vpack.c.bf16 %v5512, %v5510
      %v5523 = vpack.c.bf16 %v5513, %v5511
      %v5524 = vpack.c.bf16 %v5514, %v5514
      %v5525 = vpack.c.bf16 %v5515, %v5515
      %v5526 = vld [vmem:[%s75] sm:$0xf]
      %v5527 = vld [vmem:[%s77] sm:$0xff]
      %5529 = vset.pattern.permute.xlu0 0
      %5530 = vperm.xlu0 %5529, %v5527
      %v5531 = vpop.permute.xlu0 %5530
      %v5534 = vsel %vm1507, %v5526, 0
      %v5537 = vsel %vm1511, %v5524, 0
      %v5540 = vsel %vm1511, %v5525, 0
      %5542 = vmatprep.subr.bf16.mxu0 0
      %5543 = vmatpush1.bf16.msra.mxu0 0
      %5544 = vmatprep.subr.bf16.mxu0 0
      %5545 = vmatpush1.bf16.msra.mxu0 0
      %5546 = vmatprep.subr.bf16.mxu0 0
      %5547 = vmatpush1.bf16.msra.mxu0 0
      %5548 = vmatprep.subr.bf16.mxu0 %v5540
      %5549 = vmatpush1.bf16.msra.mxu0 %v5537
      %5550 = vmatprep.subr.bf16.mxu0 %v5523
      %5551 = vmatpush1.bf16.msra.mxu0 %v5522
      %5552 = vmatprep.subr.bf16.mxu0 %v5521
      %5553 = vmatpush1.bf16.msra.mxu0 %v5520
      %5554 = vmatprep.subr.bf16.mxu0 %v5519
      %5555 = vmatpush1.bf16.msra.mxu0 %v5518
      %5556 = vmatprep.subr.bf16.mxu0 %v5517
      %5557 = vmatpush1.bf16.msra.mxu0 %v5516
      %5558 = vmatprep.subr.bf16.mxu0 0
      %5559 = vmatpush2.bf16.msra.mxu0 0
      %5560 = vmatprep.subr.bf16.mxu0 0
      %5561 = vmatpush2.bf16.msra.mxu0 0
      %5562 = vmatprep.subr.bf16.mxu0 0
      %5563 = vmatpush2.bf16.msra.mxu0 0
      %5564 = vmatprep.subr.bf16.mxu0 0
      %5565 = vmatpush2.bf16.msra.mxu0 0
      %5566 = vmatprep.subr.bf16.mxu0 0
      %5567 = vmatpush2.bf16.msra.mxu0 0
      %5568 = vmatprep.subr.bf16.mxu0 0
      %5569 = vmatpush2.bf16.msra.mxu0 0
      %5570 = vmatprep.subr.bf16.mxu0 0
      %5571 = vmatpush2.bf16.msra.mxu0 0
      %5572 = vmatprep.subr.bf16.mxu0 0
      %5573 = vmatpush2.bf16.msra.mxu0 0
      %5574 = vmatprep.mubr.bf16.mxu0 0
      %5575 = vmatmul.mubr.bf16.gmra.mxu0 %v5534
      %v5576 = vpop.f32.mrf.mxu0
      %v5577 = vadd.f32 %v5531, %v5576
      %v5578 = vpop.f32.mrf.mxu0
      %v5579 = vadd.f32 %v5531, %v5578
      %v5580 = vpop.f32.mrf.mxu0
      %v5581 = vpop.f32.mrf.mxu0
      %5582 = vdwg.mxu0
      %v5583 = vmax.f32 %v5577, 0.0
      %v5584 = vmax.f32 %v5579, 0.0
      %v5585 = vld [vmem:[%s79] sm:$0xff]
      %5587 = vset.pattern.permute.xlu0 0
      %5588 = vperm.xlu0 %5587, %v5585
      %v5589 = vpop.permute.xlu0 %5588
      %v5591 = vmul.f32 %v5583, %v5589
      %v5592 = vmul.f32 %v5584, %v5589
      %v5593 = vrot.slane %v5591, 4
      %v5594 = vadd.f32 %v5591, %v5593
      %v5595 = vrot.slane %v5594, 2
      %v5596 = vadd.f32 %v5594, %v5595
      %v5597 = vrot.slane %v5596, 1
      %v5598 = vadd.f32 %v5596, %v5597
      %v5599 = vrot.slane %v5592, 4
      %v5600 = vadd.f32 %v5592, %v5599
      %v5601 = vrot.slane %v5600, 2
      %v5602 = vadd.f32 %v5600, %v5601
      %v5603 = vrot.slane %v5602, 1
      %v5604 = vadd.f32 %v5602, %v5603
      %v5605 = vld [vmem:[#allocation6] sm:$0x1]
      %5607 = vset.pattern.permute.xlu0 0
      %5608 = vperm.xlu0 %5607, %v5605
      %v5609 = vpop.permute.xlu0 %5608
      %v5611 = vlaneseq
      %v5612 = vshrl.u32 %v5611, 7
      %v5613 = vsub.s32 0, %v5612
      %v5614 = vrot.slane %v5609, %v5613
      %v5615 = vadd.f32 %v5598, %v5614
      %v5616 = vadd.f32 %v5604, %v5614
      %v5617 = vsub.f32 0.0, %v5615
      %v5618 = vsub.f32 0.0, %v5616
      %v5619 = vmul.f32 %v5617, 1.442695
      %v5620 = vpow.pop %v5619
      %v5621 = vmul.f32 %v5618, 1.442695
      %v5622 = vpow.pop %v5621
      %v5623 = vadd.f32 %v5620, 1.0
      %v5624 = vadd.f32 %v5622, 1.0
      %v5625 = vrcp.pop %v5623
      %v5626 = vmul.f32 1.0, %v5625
      %v5627 = vrcp.pop %v5624
      %v5628 = vmul.f32 1.0, %v5627
      %v5631 = vcombine.low %v5626, %v5628
      %v5633 = vunpack.c.l.s4 1966171168
      %v5634 = vunpack.c.0.s8 %v5633
      %v5635 = vlaneseq
      %v5636 = vshrl.u32 %v5635, 7
      %v5637 = vsub.s32 %v5634, %v5636
      %v5638 = vrot.slane %v5631, %v5637
      %v5640 = vunpack.c.l.s4 1966171168
      %v5641 = vunpack.c.0.s8 %v5640
      %v5642 = vlaneseq
      %v5643 = vshrl.u32 %v5642, 7
      %v5644 = vsub.s32 %v5641, %v5643
      %v5645 = vrot.slane %v5638, %v5644
      %v5647 = vlaneseq
      %vm5648 = vcmp.ge.s32.totalorder %v5647, 0
      %vm5649 = vcmp.lt.s32.totalorder %v5647, 256
      %vm5650 = vmand %vm5648, %vm5649
      %5651 = vst.msk [vmem:[%s1242] sm:$0x3] %vm5650, %v5645
      %p5652 = scmp.lt.s32.totalorder %s100, 1
      %s5653 = scalar_select %p5652, %s100, 1
      %s5654 = smul.addr %s5653, 2
      %s5655 = scalar_lea.vmem %s83, %s5654
      // Predicated region
      $region185: #{_lambda_.1} parent=183 // pred_check
        %p5656 = pneg %p984
      $region186: #{_lambda_.1} parent=183 // pred_check_branch
        %5658 = sbr.rel (%p5656) target = $region188
      $region187: #{_lambda_.1} parent=183 // pred_region
        _
      $region188: #{_lambda_.1} parent=183 // pred_fallthru
        _
    $region184: #{_lambda_.1} parent=5 // pred_fallthru
      _
    %p5659 = scmp.le.s32.totalorder 2, %s95
    // Predicated region
    $region189: #{_lambda_.1} parent=5 // pred_check
      %p5660 = pneg %p5659
    $region190: #{_lambda_.1} parent=5 // pred_check_branch
      %5662 = sbr.rel (%p5660) target = $region192
    $region191: #{_lambda_.1} parent=5 // pred_region
      %s5663 = ssub.s32 %s95, 2
      // Predicated region
      $region193: #{_lambda_.1} parent=191 // pred_check
        %p5664 = pneg %p990
      $region194: #{_lambda_.1} parent=191 // pred_check_branch
        %5666 = sbr.rel (%p5664) target = $region196
      $region195: #{_lambda_.1} parent=191 // pred_region
        %p5667 = scmp.lt.s32.totalorder %s101, 1
        %s5668 = scalar_select %p5667, %s101, 1
        %s5669 = smul.addr %s5668, 2
        %s5670 = scalar_lea.vmem %s83, %s5669
      $region196: #{_lambda_.1} parent=191 // pred_fallthru
        _
    $region192: #{_lambda_.1} parent=5 // pred_fallthru
      _
  $region6: #{_lambda_.1} parent=0 // loop_footer
    %s99 = sadd.s32 1, %s95
  $region7: #{_lambda_.1} parent=0 // loop_footer_branch
    %94 = sbr.rel target = $region3
  $region8: #{_lambda_.1} parent=0 // loop_exit
    _

</llo_original>
